<compile_context>
chip_gen: v6e
topology: v6e:2x2x1
jax: 0.10.0
libtpu: 0.0.40
codegen_flags: <defaults>
</compile_context>

<pallas_src>
import jax
import jax.numpy as jnp
from jax import lax
from jax.experimental import pallas as pl
from jax.experimental.pallas import tpu as pltpu

NEG_SLOPE = 0.01                 # torch.nn.functional.leaky_relu default
MXU_DTYPE = jnp.bfloat16         # matmul operand dtype (accumulation stays f32)

# sizes fixed by the YumiNet architecture (per graph)
ENC_NODES, ENC_FEAT, ENC_EDGE_FEAT = 6, 6, 3
DEC_NODES, DEC_EDGE_FEAT = 14, 6
Z_FEAT = 64
Z_FLAT = DEC_NODES * Z_FEAT      # 896
OUT_LANES = 128                  # fused output slab: z in lanes [0,64), angle in lane 64


# ----------------------------------------------------------------------------
# fused kernel builder: one grid step == one block of `b` graphs
# ----------------------------------------------------------------------------
def _make_kernel(b, e_enc, e_dec):
    enb = ENC_NODES * b          # encoder node rows (node-major: node*b + graph)
    dnb = DEC_NODES * b          # decoder node rows (node-major)
    eeb = e_enc * b              # encoder edge rows (graph-major)
    edb = e_dec * b              # decoder edge rows (graph-major)
    off_lu = enb                 # row offsets inside the packed f32 slab
    off_eae = off_lu + dnb
    off_ead = off_eae + eeb

    def one_hots(src_col, dst_col, dst_row, n_rows):
        """Block-diagonal gather (E,N)/(E,N) and scatter (N,E) one-hot matrices."""
        e = src_col.shape[0]
        col = lax.broadcasted_iota(jnp.int32, (e, n_rows), 1)
        g_src = jnp.where(col == src_col, 1.0, 0.0).astype(MXU_DTYPE)   # [E, N]
        g_dst = jnp.where(col == dst_col, 1.0, 0.0).astype(MXU_DTYPE)   # [E, N]
        nid = lax.broadcasted_iota(jnp.int32, (n_rows, e), 0)
        scat = jnp.where(nid == dst_row, 1.0, 0.0).astype(MXU_DTYPE)    # [N, E]
        return g_src, g_dst, scat

    def spatial_block(p, e_attr, g_src, g_dst, scat, we, bias, cout):
        """SpatialBasicBlock: scatter_add(leaky_relu(lin([x_i,x_j,e]))) + upsample(x).

        p = x @ [Wi | Wj | Wu] (single projection matmul); projection is pushed
        inside the gathers ((G@x)@W == G@(x@W)).
        """
        pi = p[:, 0:cout]                    # x_i (destination-node) projection
        pj = p[:, cout:2 * cout]             # x_j (source-node) projection
        pu = p[:, 2 * cout:3 * cout]         # upsample residual
        msg = (jnp.dot(g_dst, pi.astype(MXU_DTYPE), preferred_element_type=jnp.float32)
               + jnp.dot(g_src, pj.astype(MXU_DTYPE), preferred_element_type=jnp.float32)
               + jnp.dot(e_attr.astype(MXU_DTYPE), we, preferred_element_type=jnp.float32)
               + bias[0:1, :])
        msg = jnp.where(msg >= 0.0, msg, NEG_SLOPE * msg)                # leaky_relu
        agg = jnp.dot(scat, msg.astype(MXU_DTYPE), preferred_element_type=jnp.float32)
        return agg + pu + bias[1:2, :]

    def kernel(fd_ref, ic_ref, ir_ref,
               e1w_ref, e1we_ref, e1b_ref,
               e2w_ref, e2we_ref, e2b_ref,
               e3w_ref, e3we_ref, e3b_ref,
               wt_ref, bt_ref,
               d1wz_ref, d1lu_ref, d1we_ref, d1b_ref,
               d2w_ref, d2we_ref, d2b_ref,
               d3w_ref, d3we_ref, d3b_ref,
               o_ref):
        # -------- unpack the packed per-step data (3 refs instead of 11) --------
        x = fd_ref[0:enb, 0:ENC_FEAT]                          # [6B, 6]   node-major
        lo = fd_ref[off_lu:off_lu + dnb, 0:1]                  # [14B, 1]  node-major
        hi = fd_ref[off_lu:off_lu + dnb, 1:2]
        eae = fd_ref[off_eae:off_eae + eeb, 0:ENC_EDGE_FEAT]   # [10B, 3]  graph-major
        ead = fd_ref[off_ead:off_ead + edb, 0:DEC_EDGE_FEAT]   # [26B, 6]
        src_e = ic_ref[0:eeb, 0:1]                             # node-row indices
        dst_e = ic_ref[0:eeb, 1:2]
        src_d = ic_ref[eeb:eeb + edb, 0:1]
        dst_d = ic_ref[eeb:eeb + edb, 1:2]
        dst_e_row = ir_ref[0:1, 0:eeb]
        dst_d_row = ir_ref[1:2, 0:edb]

        gs_e, gd_e, sc_e = one_hots(src_e, dst_e, dst_e_row, enb)
        gs_d, gd_d, sc_d = one_hots(src_d, dst_d, dst_d_row, dnb)

        # ---------------- encoder (3 SpatialBasicBlocks, B graphs at once) -------
        h = x
        for w_ref, we_ref, b_ref, cout in ((e1w_ref, e1we_ref, e1b_ref, 16),
                                           (e2w_ref, e2we_ref, e2b_ref, 32),
                                           (e3w_ref, e3we_ref, e3b_ref, 64)):
            p = jnp.dot(h.astype(MXU_DTYPE), w_ref[...],
                        preferred_element_type=jnp.float32)
            h = spatial_block(p, eae, gs_e, gd_e, sc_e, we_ref[...], b_ref[...], cout)
        # h: [6B, 64] node-major

        # -------- transform: Linear(6*64 -> 14*64) + tanh, M=B matmuls -----------
        zf = bt_ref[...]                                       # [1, 896] f32
        for n in range(ENC_NODES):
            zf = zf + jnp.dot(h[n * b:(n + 1) * b, :].astype(MXU_DTYPE),
                              wt_ref[n * Z_FEAT:(n + 1) * Z_FEAT, :],
                              preferred_element_type=jnp.float32)
        zf = jnp.tanh(zf)                                      # [B, 896]

        # unflatten [B, 14*64] -> node-major [14B, 64] with static lane slices
        # (no 896-wide selector matmul, no iota masks); written straight into the
        # fused output slab and read back for the decoder.
        o_ref[...] = jnp.zeros((dnb, OUT_LANES), jnp.float32)
        for nd in range(DEC_NODES):
            o_ref[nd * b:(nd + 1) * b, 0:Z_FEAT] = zf[:, nd * Z_FEAT:(nd + 1) * Z_FEAT]
        z = o_ref[:, 0:Z_FEAT]                                 # [14B, 64]

        # ---------------- decoder (3 SpatialBasicBlocks) -------------------------
        # cat([z, lower, upper], dim=1) is kept split: z via MXU, lower/upper via VPU
        p1 = (jnp.dot(z.astype(MXU_DTYPE), d1wz_ref[...],
                      preferred_element_type=jnp.float32)
              + lo * d1lu_ref[0:1, :] + hi * d1lu_ref[1:2, :])
        h1 = spatial_block(p1, ead, gs_d, gd_d, sc_d, d1we_ref[...], d1b_ref[...], 32)

        p2 = jnp.dot(h1.astype(MXU_DTYPE), d2w_ref[...],
                     preferred_element_type=jnp.float32)
        h2 = spatial_block(p2, ead, gs_d, gd_d, sc_d, d2we_ref[...], d2b_ref[...], 16)

        p3 = jnp.dot(h2.astype(MXU_DTYPE), d3w_ref[...],
                     preferred_element_type=jnp.float32)
        a = spatial_block(p3, ead, gs_d, gd_d, sc_d, d3we_ref[...], d3b_ref[...], 1)
        a = jnp.tanh(a)                                        # [14B, 1]

        # fused joint-limit rescale: ang = lower + (upper - lower) * (a + 1) / 2
        ang = lo + (hi - lo) * (a + 1.0) * 0.5
        o_ref[:, Z_FEAT:Z_FEAT + 1] = ang                      # lane 64 of the slab

    return kernel


def _cost_per_call(nblk, b, e_e, e_d):
    enb, dnb = ENC_NODES * b, DEC_NODES * b
    eeb, edb = e_e * b, e_d * b
    mm = []
    for cin, cout in ((ENC_FEAT, 16), (16, 32), (32, 64)):
        mm += [(enb, cin, 3 * cout), (eeb, ENC_EDGE_FEAT, cout),
               (eeb, enb, cout), (eeb, enb, cout), (enb, eeb, cout)]
    mm += [(b, Z_FEAT, Z_FLAT)] * ENC_NODES
    for cin, cout in ((Z_FEAT, 32), (32, 16), (16, 1)):
        mm += [(dnb, cin, 3 * cout), (edb, DEC_EDGE_FEAT, cout),
               (edb, dnb, cout), (edb, dnb, cout), (dnb, edb, cout)]
    flops = 2 * sum(m * k * n for m, k, n in mm) * nblk
    transcendentals = nblk * (b * Z_FLAT + dnb)                # tanh
    return int(flops), int(transcendentals)


# ----------------------------------------------------------------------------
# parameter init (deterministic; shapes follow the torch module __init__)
# ----------------------------------------------------------------------------
def _init_linear(key, fan_in, fan_out):
    kw, kb = jax.random.split(key)
    bound = 1.0 / float(fan_in) ** 0.5
    w = jax.random.uniform(kw, (fan_in, fan_out), jnp.float32, -bound, bound)
    # keep master weights exactly representable in bf16 so the bf16 MXU operands
    # match the f32 reference up to activation rounding only
    w = w.astype(jnp.bfloat16).astype(jnp.float32)
    bias = jax.random.uniform(kb, (1, fan_out), jnp.float32, -bound, bound)
    return w, bias


def _init_block(key, cin, cout, ce):
    k1, k2 = jax.random.split(key)
    w_lin, b_lin = _init_linear(k1, 2 * cin + ce, cout)    # lin: cat([x_i, x_j, e]) -> cout
    w_up, b_up = _init_linear(k2, cin, cout)               # upsample: cin -> cout
    # Note: torch's (out, in) weights must be transposed to (in, out) before slicing
    # when porting real checkpoints.
    return (w_lin, b_lin, w_up, b_up)


class YumiNetPallas:
    def __init__(self, key, batch_per_step=8):
        assert batch_per_step % 8 == 0, "batch_per_step must be a multiple of 8"
        self.batch = batch_per_step
        keys = jax.random.split(key, 7)
        # Encoder(channels=6, dim=3)
        self.enc = [_init_block(keys[0], ENC_FEAT, 16, ENC_EDGE_FEAT),
                    _init_block(keys[1], 16, 32, ENC_EDGE_FEAT),
                    _init_block(keys[2], 32, 64, ENC_EDGE_FEAT)]
        # transform = Linear(6*64, 14*64) + Tanh
        self.wt, self.bt = _init_linear(keys[3], ENC_NODES * Z_FEAT, Z_FLAT)
        # Decoder(channels=1, dim=6): in = 64 + 2 (lower, upper)
        self.dec = [_init_block(keys[4], Z_FEAT + 2, 32, DEC_EDGE_FEAT),
                    _init_block(keys[5], 32, 16, DEC_EDGE_FEAT),
                    _init_block(keys[6], 16, 1, DEC_EDGE_FEAT)]
        self._weights = self._pack_weights()

    def _pack_weights(self):
        def pack(block, cin):
            w_lin, b_lin, w_up, b_up = block
            wcat = jnp.concatenate([w_lin[:cin], w_lin[cin:2 * cin], w_up], axis=1)
            we = w_lin[2 * cin:]
            bias = jnp.concatenate([b_lin, b_up], axis=0)      # [2, cout] f32
            return wcat, we, bias

        flat = []
        for block, cin in zip(self.enc, (ENC_FEAT, 16, 32)):
            wcat, we, bias = pack(block, cin)
            flat += [wcat.astype(MXU_DTYPE), we.astype(MXU_DTYPE), bias]
        flat += [self.wt.astype(MXU_DTYPE), self.bt]           # [384,896] bf16, [1,896] f32
        # dec1: split the (z | lower | upper) rows so no in-kernel concat is needed
        wcat, we, bias = pack(self.dec[0], Z_FEAT + 2)         # wcat: [66, 96]
        flat += [wcat[:Z_FEAT].astype(MXU_DTYPE),              # z rows      [64, 96] bf16
                 wcat[Z_FEAT:Z_FEAT + 2],                      # lo/hi rows  [2, 96]  f32
                 we.astype(MXU_DTYPE), bias]
        for block, cin in zip(self.dec[1:], (32, 16)):
            wcat, we, bias = pack(block, cin)
            flat += [wcat.astype(MXU_DTYPE), we.astype(MXU_DTYPE), bias]
        return flat                                            # 21 shared refs

    # ------------------------------------------------------------------ forward
    def forward(self, data, target):
        x, src_e, dst_e, eattr_e = data                # [G,6,6], [G,Ee], [G,Ee], [G,Ee,3]
        src_d, dst_d, eattr_d, lower, upper = target   # [G,Ed], [G,Ed], [G,Ed,6], [G,14,1]x2
        g = x.shape[0]
        b = self.batch
        e_e, e_d = src_e.shape[1], src_d.shape[1]
        nblk = (g + b - 1) // b
        g_pad = nblk * b

        def padg(a):
            if g_pad == g:
                return a
            return jnp.concatenate(
                [a, jnp.zeros((g_pad - g,) + a.shape[1:], a.dtype)], axis=0)

        x, eattr_e, eattr_d, lower, upper = map(padg, (x, eattr_e, eattr_d, lower, upper))
        src_e, dst_e, src_d, dst_d = map(padg, (src_e, dst_e, src_d, dst_d))

        # ---- packed per-step data slabs (3 DMAs / step instead of 11) ----------
        g_in_blk = (jnp.arange(g_pad, dtype=jnp.int32) % b)[:, None]

        def node_rows(idx):          # local node id -> node-major node row (node*b + g)
            r = idx.astype(jnp.int32) * b + g_in_blk
            return r.reshape(nblk, b * idx.shape[1])

        se_r, de_r = node_rows(src_e), node_rows(dst_e)
        sd_r, dd_r = node_rows(src_d), node_rows(dst_d)
        idx_col = jnp.concatenate([jnp.stack([se_r, de_r], axis=-1),
                                   jnp.stack([sd_r, dd_r], axis=-1)], axis=1)
        e_max = max(e_e, e_d) * b

        def pad_lane(a):
            return jnp.pad(a, ((0, 0), (0, e_max - a.shape[1])), constant_values=-1)

        idx_row = jnp.stack([pad_lane(de_r), pad_lane(dd_r)], axis=1)   # [nblk, 2, e_max]

        def node_major(a, n):        # [G, n, c] -> [nblk, n*b, c]
            c = a.shape[-1]
            return (a.reshape(nblk, b, n, c).transpose(0, 2, 1, 3).reshape(nblk, n * b, c))

        def pad8(a):
            return jnp.pad(a, ((0, 0), (0, 0), (0, 8 - a.shape[-1])))

        fdata = jnp.concatenate(
            [pad8(node_major(x, ENC_NODES)),
             pad8(node_major(jnp.concatenate([lower, upper], axis=-1), DEC_NODES)),
             pad8(eattr_e.reshape(nblk, b * e_e, -1)),
             pad8(eattr_d.reshape(nblk, b * e_d, -1))], axis=1).astype(jnp.float32)

        data_arrays = [fdata, idx_col.astype(jnp.int32), idx_row.astype(jnp.int32)]

        def step_spec(a):
            nd = a.ndim
            return pl.BlockSpec((None,) + a.shape[1:],
                                lambda i, _nd=nd: (i,) + (0,) * (_nd - 1))

        def shared_spec(a):
            zeros = (0,) * a.ndim
            return pl.BlockSpec(a.shape, lambda i, _z=zeros: _z)

        in_specs = ([step_spec(a) for a in data_arrays]
                    + [shared_spec(w) for w in self._weights])

        out_shape = jax.ShapeDtypeStruct((nblk, DEC_NODES * b, OUT_LANES), jnp.float32)
        out_specs = pl.BlockSpec((None, DEC_NODES * b, OUT_LANES), lambda i: (i, 0, 0))

        kernel = _make_kernel(b, e_e, e_d)
        flops, transc = _cost_per_call(nblk, b, e_e, e_d)
        bytes_accessed = int(sum(int(a.size) * a.dtype.itemsize
                                 for a in data_arrays + list(self._weights))
                             + nblk * DEC_NODES * b * OUT_LANES * 4)

        out = pl.pallas_call(
            kernel,
            out_shape=out_shape,
            grid=(nblk,),
            in_specs=in_specs,
            out_specs=out_specs,
            compiler_params=pltpu.CompilerParams(
                dimension_semantics=("parallel",),        # v7x 2-TC sharding
                vmem_limit_bytes=32 * 1024 * 1024),       # raises v5e's 16 MiB default
            cost_estimate=pl.CostEstimate(flops=flops, transcendentals=transc,
                                          bytes_accessed=bytes_accessed),
        )(*data_arrays, *self._weights)

        # node-major [nblk, 14B, 128] -> per-graph [G, 14, 128]
        out = (out.reshape(nblk, DEC_NODES, b, OUT_LANES)
                  .transpose(0, 2, 1, 3)
                  .reshape(g_pad, DEC_NODES, OUT_LANES)[:g])
        z = out[:, :, :Z_FEAT].reshape(g * DEC_NODES, Z_FEAT)
        ang = out[:, :, Z_FEAT:Z_FEAT + 1].reshape(g * DEC_NODES, 1)
        # TODO(synk): ForwardKinematicsURDF (self.fk) is not defined in the provided
        # source; pos/rot/global_pos outputs are omitted.
        return (ang, None, z, None, None, None, None)

    # ---------------------------------------------------------------- reference
    def reference_forward(self, data, target):
        """Pure-JAX f32 reference of YumiNet.forward (for validation)."""
        x, src_e, dst_e, eattr_e = data
        src_d, dst_d, eattr_d, lower, upper = target

        def blk(xv, eattr, src, dst, params):
            w_lin, b_lin, w_up, b_up = params
            zc = jnp.concatenate([xv[dst], xv[src], eattr], axis=1)
            m = zc @ w_lin + b_lin
            m = jnp.where(m >= 0.0, m, NEG_SLOPE * m)
            agg = jnp.zeros((xv.shape[0], w_lin.shape[1]), jnp.float32).at[dst].add(m)
            return agg + xv @ w_up + b_up

        def single(x1, se, de, eae, sd, dd, ead, lo, hi):
            h = x1
            for p in self.enc:
                h = blk(h, eae, se, de, p)
            zf = jnp.tanh(h.reshape(1, -1) @ self.wt + self.bt)
            z = zf.reshape(DEC_NODES, Z_FEAT)
            hh = jnp.concatenate([z, lo, hi], axis=1)
            for p in self.dec:
                hh = blk(hh, ead, sd, dd, p)
            a = jnp.tanh(hh)
            ang = lo + (hi - lo) * (a + 1.0) * 0.5
            return ang, z

        ang, z = jax.vmap(single)(x, src_e, dst_e, eattr_e,
                                  src_d, dst_d, eattr_d, lower, upper)
        g = x.shape[0]
        return ang.reshape(g * DEC_NODES, 1), z.reshape(g * DEC_NODES, Z_FEAT)


# ----------------------------------------------------------------------------
# graph construction helper (bidirectional chain, local per-graph indices)
# ----------------------------------------------------------------------------
def make_chain_edges(n_nodes):
    src, dst = [], []
    for i in range(n_nodes - 1):
        src += [i, i + 1]
        dst += [i + 1, i]
    return jnp.array(src, jnp.int32), jnp.array(dst, jnp.int32)


if __name__ == "__main__":
    key = jax.random.PRNGKey(0)
    k_model, k_x, k_ea, k_eb, k_lo, k_hi = jax.random.split(key, 6)

    num_graphs = 16                                    # 2 grid steps of 8 graphs each

    # encoder graphs: 6 nodes, 6 node features, chain (10 edges), 3 edge feats
    src_e1, dst_e1 = make_chain_edges(ENC_NODES)
    src_e = jnp.tile(src_e1[None], (num_graphs, 1))
    dst_e = jnp.tile(dst_e1[None], (num_graphs, 1))
    x = jax.random.normal(k_x, (num_graphs, ENC_NODES, ENC_FEAT), jnp.float32)
    eattr_e = jax.random.normal(k_ea, (num_graphs, src_e1.shape[0], ENC_EDGE_FEAT),
                                jnp.float32)

    # decoder graphs: 14 nodes, chain (26 edges), 6 edge feats, joint limits
    src_d1, dst_d1 = make_chain_edges(DEC_NODES)
    src_d = jnp.tile(src_d1[None], (num_graphs, 1))
    dst_d = jnp.tile(dst_d1[None], (num_graphs, 1))
    eattr_d = jax.random.normal(k_eb, (num_graphs, src_d1.shape[0], DEC_EDGE_FEAT),
                                jnp.float32)
    lower = -jnp.abs(jax.random.normal(k_lo, (num_graphs, DEC_NODES, 1), jnp.float32)) - 0.5
    upper = jnp.abs(jax.random.normal(k_hi, (num_graphs, DEC_NODES, 1), jnp.float32)) + 0.5

    model = YumiNetPallas(k_model, batch_per_step=8)
    data = (x, src_e, dst_e, eattr_e)
    target = (src_d, dst_d, eattr_d, lower, upper)

    ang, _, z, _, _, _, _ = model.forward(data, target)
    jax.block_until_ready(ang)
    jax.block_until_ready(z)

    assert ang.shape == (num_graphs * DEC_NODES, 1)
    assert z.shape == (num_graphs * DEC_NODES, Z_FEAT)

    # rescaled angles must lie inside the joint limits
    assert bool(jnp.all(ang >= lower.reshape(-1, 1) - 1e-3))
    assert bool(jnp.all(ang <= upper.reshape(-1, 1) + 1e-3))

    # validate against a pure-JAX f32 reference (bf16 MXU operands -> loose tolerance)
    ang_ref, z_ref = model.reference_forward(data, target)
    err_ang = float(jnp.max(jnp.abs(ang - ang_ref)))
    err_z = float(jnp.max(jnp.abs(z - z_ref)))
    assert err_ang < 1e-1 and err_z < 1e-1, (err_ang, err_z)

    print("KERNEL_OK")
</pallas_src>

<mosaic_0001>
module attributes {stable_mosaic.version = 11 : i64} {
  func.func @kernel(%arg0: i32, %arg1: memref<1x448x8xf32, #tpu.memory_space<vmem>>, %arg2: memref<1x288x2xi32, #tpu.memory_space<vmem>>, %arg3: memref<1x2x208xi32, #tpu.memory_space<vmem>>, %arg4: memref<6x48xbf16, #tpu.memory_space<vmem>>, %arg5: memref<3x16xbf16, #tpu.memory_space<vmem>>, %arg6: memref<2x16xf32, #tpu.memory_space<vmem>>, %arg7: memref<16x96xbf16, #tpu.memory_space<vmem>>, %arg8: memref<3x32xbf16, #tpu.memory_space<vmem>>, %arg9: memref<2x32xf32, #tpu.memory_space<vmem>>, %arg10: memref<32x192xbf16, #tpu.memory_space<vmem>>, %arg11: memref<3x64xbf16, #tpu.memory_space<vmem>>, %arg12: memref<2x64xf32, #tpu.memory_space<vmem>>, %arg13: memref<384x896xbf16, #tpu.memory_space<vmem>>, %arg14: memref<1x896xf32, #tpu.memory_space<vmem>>, %arg15: memref<64x96xbf16, #tpu.memory_space<vmem>>, %arg16: memref<2x96xf32, #tpu.memory_space<vmem>>, %arg17: memref<6x32xbf16, #tpu.memory_space<vmem>>, %arg18: memref<2x32xf32, #tpu.memory_space<vmem>>, %arg19: memref<32x48xbf16, #tpu.memory_space<vmem>>, %arg20: memref<6x16xbf16, #tpu.memory_space<vmem>>, %arg21: memref<2x16xf32, #tpu.memory_space<vmem>>, %arg22: memref<16x3xbf16, #tpu.memory_space<vmem>>, %arg23: memref<6x1xbf16, #tpu.memory_space<vmem>>, %arg24: memref<2x1xf32, #tpu.memory_space<vmem>>, %arg25: memref<1x112x128xf32, #tpu.memory_space<vmem>>) attributes {dimension_semantics = [#tpu.dimension_semantics<parallel>], iteration_bounds = array<i64: 2>, scalar_prefetch = 0 : i64, scratch_operands = 0 : i64, tpu.core_type = #tpu.core_type<tc>, window_params = [{transform_indices = @transform_0, window_bounds = array<i64: 1, 448, 8>}, {transform_indices = @transform_1, window_bounds = array<i64: 1, 288, 2>}, {transform_indices = @transform_2, window_bounds = array<i64: 1, 2, 208>}, {pipeline_mode = #tpu.pipeline_mode<synchronous>, transform_indices = @transform_3, window_bounds = array<i64: 6, 48>}, {pipeline_mode = #tpu.pipeline_mode<synchronous>, transform_indices = @transform_4, window_bounds = array<i64: 3, 16>}, {pipeline_mode = #tpu.pipeline_mode<synchronous>, transform_indices = @transform_5, window_bounds = array<i64: 2, 16>}, {pipeline_mode = #tpu.pipeline_mode<synchronous>, transform_indices = @transform_6, window_bounds = array<i64: 16, 96>}, {pipeline_mode = #tpu.pipeline_mode<synchronous>, transform_indices = @transform_7, window_bounds = array<i64: 3, 32>}, {pipeline_mode = #tpu.pipeline_mode<synchronous>, transform_indices = @transform_8, window_bounds = array<i64: 2, 32>}, {pipeline_mode = #tpu.pipeline_mode<synchronous>, transform_indices = @transform_9, window_bounds = array<i64: 32, 192>}, {pipeline_mode = #tpu.pipeline_mode<synchronous>, transform_indices = @transform_10, window_bounds = array<i64: 3, 64>}, {pipeline_mode = #tpu.pipeline_mode<synchronous>, transform_indices = @transform_11, window_bounds = array<i64: 2, 64>}, {pipeline_mode = #tpu.pipeline_mode<synchronous>, transform_indices = @transform_12, window_bounds = array<i64: 384, 896>}, {pipeline_mode = #tpu.pipeline_mode<synchronous>, transform_indices = @transform_13, window_bounds = array<i64: 1, 896>}, {pipeline_mode = #tpu.pipeline_mode<synchronous>, transform_indices = @transform_14, window_bounds = array<i64: 64, 96>}, {pipeline_mode = #tpu.pipeline_mode<synchronous>, transform_indices = @transform_15, window_bounds = array<i64: 2, 96>}, {pipeline_mode = #tpu.pipeline_mode<synchronous>, transform_indices = @transform_16, window_bounds = array<i64: 6, 32>}, {pipeline_mode = #tpu.pipeline_mode<synchronous>, transform_indices = @transform_17, window_bounds = array<i64: 2, 32>}, {pipeline_mode = #tpu.pipeline_mode<synchronous>, transform_indices = @transform_18, window_bounds = array<i64: 32, 48>}, {pipeline_mode = #tpu.pipeline_mode<synchronous>, transform_indices = @transform_19, window_bounds = array<i64: 6, 16>}, {pipeline_mode = #tpu.pipeline_mode<synchronous>, transform_indices = @transform_20, window_bounds = array<i64: 2, 16>}, {pipeline_mode = #tpu.pipeline_mode<synchronous>, transform_indices = @transform_21, window_bounds = array<i64: 16, 3>}, {pipeline_mode = #tpu.pipeline_mode<synchronous>, transform_indices = @transform_22, window_bounds = array<i64: 6, 1>}, {pipeline_mode = #tpu.pipeline_mode<synchronous>, transform_indices = @transform_23, window_bounds = array<i64: 2, 1>}, {transform_indices = @transform_24, window_bounds = array<i64: 1, 112, 128>}]} {
    %c0 = arith.constant 0 : index
    %c0_0 = arith.constant 0 : index
    %c0_1 = arith.constant 0 : index
    %0 = vector.load %arg1[%c0, %c0_0, %c0_1] : memref<1x448x8xf32, #tpu.memory_space<vmem>>, vector<1x48x6xf32>
    %1 = vector.shape_cast %0 : vector<1x48x6xf32> to vector<48x6xf32>
    %c0_2 = arith.constant 0 : index
    %c48 = arith.constant 48 : index
    %c0_3 = arith.constant 0 : index
    %2 = vector.load %arg1[%c0_2, %c48, %c0_3] : memref<1x448x8xf32, #tpu.memory_space<vmem>>, vector<1x112x1xf32>
    %3 = vector.shape_cast %2 : vector<1x112x1xf32> to vector<112x1xf32>
    %c0_4 = arith.constant 0 : index
    %c48_5 = arith.constant 48 : index
    %c1 = arith.constant 1 : index
    %4 = vector.load %arg1[%c0_4, %c48_5, %c1] : memref<1x448x8xf32, #tpu.memory_space<vmem>>, vector<1x112x1xf32>
    %5 = vector.shape_cast %4 : vector<1x112x1xf32> to vector<112x1xf32>
    %c0_6 = arith.constant 0 : index
    %c160 = arith.constant 160 : index
    %c0_7 = arith.constant 0 : index
    %6 = vector.load %arg1[%c0_6, %c160, %c0_7] : memref<1x448x8xf32, #tpu.memory_space<vmem>>, vector<1x80x3xf32>
    %7 = vector.shape_cast %6 : vector<1x80x3xf32> to vector<80x3xf32>
    %c0_8 = arith.constant 0 : index
    %c240 = arith.constant 240 : index
    %c0_9 = arith.constant 0 : index
    %8 = vector.load %arg1[%c0_8, %c240, %c0_9] : memref<1x448x8xf32, #tpu.memory_space<vmem>>, vector<1x208x6xf32>
    %9 = vector.shape_cast %8 : vector<1x208x6xf32> to vector<208x6xf32>
    %c0_10 = arith.constant 0 : index
    %c0_11 = arith.constant 0 : index
    %c0_12 = arith.constant 0 : index
    %10 = vector.load %arg2[%c0_10, %c0_11, %c0_12] : memref<1x288x2xi32, #tpu.memory_space<vmem>>, vector<1x80x1xi32>
    %11 = vector.shape_cast %10 : vector<1x80x1xi32> to vector<80x1xi32>
    %c0_13 = arith.constant 0 : index
    %c0_14 = arith.constant 0 : index
    %c1_15 = arith.constant 1 : index
    %12 = vector.load %arg2[%c0_13, %c0_14, %c1_15] : memref<1x288x2xi32, #tpu.memory_space<vmem>>, vector<1x80x1xi32>
    %13 = vector.shape_cast %12 : vector<1x80x1xi32> to vector<80x1xi32>
    %c0_16 = arith.constant 0 : index
    %c80 = arith.constant 80 : index
    %c0_17 = arith.constant 0 : index
    %14 = vector.load %arg2[%c0_16, %c80, %c0_17] : memref<1x288x2xi32, #tpu.memory_space<vmem>>, vector<1x208x1xi32>
    %15 = vector.shape_cast %14 : vector<1x208x1xi32> to vector<208x1xi32>
    %c0_18 = arith.constant 0 : index
    %c80_19 = arith.constant 80 : index
    %c1_20 = arith.constant 1 : index
    %16 = vector.load %arg2[%c0_18, %c80_19, %c1_20] : memref<1x288x2xi32, #tpu.memory_space<vmem>>, vector<1x208x1xi32>
    %17 = vector.shape_cast %16 : vector<1x208x1xi32> to vector<208x1xi32>
    %c0_21 = arith.constant 0 : index
    %c0_22 = arith.constant 0 : index
    %c0_23 = arith.constant 0 : index
    %18 = vector.load %arg3[%c0_21, %c0_22, %c0_23] : memref<1x2x208xi32, #tpu.memory_space<vmem>>, vector<1x1x80xi32>
    %19 = vector.shape_cast %18 : vector<1x1x80xi32> to vector<1x80xi32>
    %c0_24 = arith.constant 0 : index
    %c1_25 = arith.constant 1 : index
    %c0_26 = arith.constant 0 : index
    %20 = vector.load %arg3[%c0_24, %c1_25, %c0_26] : memref<1x2x208xi32, #tpu.memory_space<vmem>>, vector<1x1x208xi32>
    %21 = vector.shape_cast %20 : vector<1x1x208xi32> to vector<1x208xi32>
    %22 = tpu.iota {dimensions = array<i32: 1>} : vector<80x48xi32>
    %23 = vector.broadcast %11 : vector<80x1xi32> to vector<80x48xi32>
    %24 = arith.cmpi eq, %22, %23 : vector<80x48xi32>
    %cst = arith.constant 1.000000e+00 : f32
    %cst_27 = arith.constant 0.000000e+00 : f32
    %25 = vector.broadcast %cst : f32 to vector<80x48xf32>
    %26 = vector.broadcast %cst_27 : f32 to vector<80x48xf32>
    %27 = arith.select %24, %25, %26 : vector<80x48xi1>, vector<80x48xf32>
    %28 = arith.truncf %27 : vector<80x48xf32> to vector<80x48xbf16>
    %29 = vector.broadcast %13 : vector<80x1xi32> to vector<80x48xi32>
    %30 = arith.cmpi eq, %22, %29 : vector<80x48xi32>
    %cst_28 = arith.constant 1.000000e+00 : f32
    %cst_29 = arith.constant 0.000000e+00 : f32
    %31 = vector.broadcast %cst_28 : f32 to vector<80x48xf32>
    %32 = vector.broadcast %cst_29 : f32 to vector<80x48xf32>
    %33 = arith.select %30, %31, %32 : vector<80x48xi1>, vector<80x48xf32>
    %34 = arith.truncf %33 : vector<80x48xf32> to vector<80x48xbf16>
    %35 = tpu.iota {dimensions = array<i32: 0>} : vector<48x80xi32>
    %36 = vector.broadcast %19 : vector<1x80xi32> to vector<48x80xi32>
    %37 = arith.cmpi eq, %35, %36 : vector<48x80xi32>
    %cst_30 = arith.constant 1.000000e+00 : f32
    %cst_31 = arith.constant 0.000000e+00 : f32
    %38 = vector.broadcast %cst_30 : f32 to vector<48x80xf32>
    %39 = vector.broadcast %cst_31 : f32 to vector<48x80xf32>
    %40 = arith.select %37, %38, %39 : vector<48x80xi1>, vector<48x80xf32>
    %41 = arith.truncf %40 : vector<48x80xf32> to vector<48x80xbf16>
    %42 = tpu.iota {dimensions = array<i32: 1>} : vector<208x112xi32>
    %43 = vector.broadcast %15 : vector<208x1xi32> to vector<208x112xi32>
    %44 = arith.cmpi eq, %42, %43 : vector<208x112xi32>
    %cst_32 = arith.constant 1.000000e+00 : f32
    %cst_33 = arith.constant 0.000000e+00 : f32
    %45 = vector.broadcast %cst_32 : f32 to vector<208x112xf32>
    %46 = vector.broadcast %cst_33 : f32 to vector<208x112xf32>
    %47 = arith.select %44, %45, %46 : vector<208x112xi1>, vector<208x112xf32>
    %48 = arith.truncf %47 : vector<208x112xf32> to vector<208x112xbf16>
    %49 = vector.broadcast %17 : vector<208x1xi32> to vector<208x112xi32>
    %50 = arith.cmpi eq, %42, %49 : vector<208x112xi32>
    %cst_34 = arith.constant 1.000000e+00 : f32
    %cst_35 = arith.constant 0.000000e+00 : f32
    %51 = vector.broadcast %cst_34 : f32 to vector<208x112xf32>
    %52 = vector.broadcast %cst_35 : f32 to vector<208x112xf32>
    %53 = arith.select %50, %51, %52 : vector<208x112xi1>, vector<208x112xf32>
    %54 = arith.truncf %53 : vector<208x112xf32> to vector<208x112xbf16>
    %55 = tpu.iota {dimensions = array<i32: 0>} : vector<112x208xi32>
    %56 = vector.broadcast %21 : vector<1x208xi32> to vector<112x208xi32>
    %57 = arith.cmpi eq, %55, %56 : vector<112x208xi32>
    %cst_36 = arith.constant 1.000000e+00 : f32
    %cst_37 = arith.constant 0.000000e+00 : f32
    %58 = vector.broadcast %cst_36 : f32 to vector<112x208xf32>
    %59 = vector.broadcast %cst_37 : f32 to vector<112x208xf32>
    %60 = arith.select %57, %58, %59 : vector<112x208xi1>, vector<112x208xf32>
    %61 = arith.truncf %60 : vector<112x208xf32> to vector<112x208xbf16>
    %62 = arith.truncf %1 : vector<48x6xf32> to vector<48x6xbf16>
    %c0_38 = arith.constant 0 : index
    %c0_39 = arith.constant 0 : index
    %63 = vector.load %arg4[%c0_38, %c0_39] : memref<6x48xbf16, #tpu.memory_space<vmem>>, vector<6x48xbf16>
    %cst_40 = arith.constant dense<0.000000e+00> : vector<48x48xf32>
    %64 = tpu.matmul %62, %63, %cst_40 {dimension_numbers = #tpu.dot_dimension_numbers<[1], [0], [0], [1], [0, 0, 1, 1], [], []>} : vector<48x6xbf16>, vector<6x48xbf16>, vector<48x48xf32> -> vector<48x48xf32>
    %c0_41 = arith.constant 0 : index
    %c0_42 = arith.constant 0 : index
    %65 = vector.load %arg5[%c0_41, %c0_42] : memref<3x16xbf16, #tpu.memory_space<vmem>>, vector<3x16xbf16>
    %c0_43 = arith.constant 0 : index
    %c0_44 = arith.constant 0 : index
    %66 = vector.load %arg6[%c0_43, %c0_44] : memref<2x16xf32, #tpu.memory_space<vmem>>, vector<2x16xf32>
    %67 = vector.extract_strided_slice %64 {offsets = [0, 0], sizes = [48, 16], strides = [1, 1]} : vector<48x48xf32> to vector<48x16xf32>
    %68 = vector.extract_strided_slice %64 {offsets = [0, 16], sizes = [48, 16], strides = [1, 1]} : vector<48x48xf32> to vector<48x16xf32>
    %69 = vector.extract_strided_slice %64 {offsets = [0, 32], sizes = [48, 16], strides = [1, 1]} : vector<48x48xf32> to vector<48x16xf32>
    %70 = arith.truncf %67 : vector<48x16xf32> to vector<48x16xbf16>
    %cst_45 = arith.constant dense<0.000000e+00> : vector<80x16xf32>
    %71 = tpu.matmul %34, %70, %cst_45 {dimension_numbers = #tpu.dot_dimension_numbers<[1], [0], [0], [1], [0, 0, 1, 1], [], []>} : vector<80x48xbf16>, vector<48x16xbf16>, vector<80x16xf32> -> vector<80x16xf32>
    %72 = arith.truncf %68 : vector<48x16xf32> to vector<48x16xbf16>
    %cst_46 = arith.constant dense<0.000000e+00> : vector<80x16xf32>
    %73 = tpu.matmul %28, %72, %cst_46 {dimension_numbers = #tpu.dot_dimension_numbers<[1], [0], [0], [1], [0, 0, 1, 1], [], []>} : vector<80x48xbf16>, vector<48x16xbf16>, vector<80x16xf32> -> vector<80x16xf32>
    %74 = arith.addf %71, %73 : vector<80x16xf32>
    %75 = arith.truncf %7 : vector<80x3xf32> to vector<80x3xbf16>
    %cst_47 = arith.constant dense<0.000000e+00> : vector<80x16xf32>
    %76 = tpu.matmul %75, %65, %cst_47 {dimension_numbers = #tpu.dot_dimension_numbers<[1], [0], [0], [1], [0, 0, 1, 1], [], []>} : vector<80x3xbf16>, vector<3x16xbf16>, vector<80x16xf32> -> vector<80x16xf32>
    %77 = arith.addf %74, %76 : vector<80x16xf32>
    %78 = vector.extract_strided_slice %66 {offsets = [0, 0], sizes = [1, 16], strides = [1, 1]} : vector<2x16xf32> to vector<1x16xf32>
    %79 = vector.broadcast %78 : vector<1x16xf32> to vector<80x16xf32>
    %80 = arith.addf %77, %79 : vector<80x16xf32>
    %cst_48 = arith.constant 0.000000e+00 : f32
    %81 = vector.broadcast %cst_48 : f32 to vector<80x16xf32>
    %82 = arith.cmpf oge, %80, %81 : vector<80x16xf32>
    %cst_49 = arith.constant 0.00999999977 : f32
    %83 = vector.broadcast %cst_49 : f32 to vector<80x16xf32>
    %84 = arith.mulf %83, %80 : vector<80x16xf32>
    %85 = arith.select %82, %80, %84 : vector<80x16xi1>, vector<80x16xf32>
    %86 = arith.truncf %85 : vector<80x16xf32> to vector<80x16xbf16>
    %cst_50 = arith.constant dense<0.000000e+00> : vector<48x16xf32>
    %87 = tpu.matmul %41, %86, %cst_50 {dimension_numbers = #tpu.dot_dimension_numbers<[1], [0], [0], [1], [0, 0, 1, 1], [], []>} : vector<48x80xbf16>, vector<80x16xbf16>, vector<48x16xf32> -> vector<48x16xf32>
    %88 = arith.addf %87, %69 : vector<48x16xf32>
    %89 = vector.extract_strided_slice %66 {offsets = [1, 0], sizes = [1, 16], strides = [1, 1]} : vector<2x16xf32> to vector<1x16xf32>
    %90 = vector.broadcast %89 : vector<1x16xf32> to vector<48x16xf32>
    %91 = arith.addf %88, %90 : vector<48x16xf32>
    %92 = arith.truncf %91 : vector<48x16xf32> to vector<48x16xbf16>
    %c0_51 = arith.constant 0 : index
    %c0_52 = arith.constant 0 : index
    %93 = vector.load %arg7[%c0_51, %c0_52] : memref<16x96xbf16, #tpu.memory_space<vmem>>, vector<16x96xbf16>
    %cst_53 = arith.constant dense<0.000000e+00> : vector<48x96xf32>
    %94 = tpu.matmul %92, %93, %cst_53 {dimension_numbers = #tpu.dot_dimension_numbers<[1], [0], [0], [1], [0, 0, 1, 1], [], []>} : vector<48x16xbf16>, vector<16x96xbf16>, vector<48x96xf32> -> vector<48x96xf32>
    %c0_54 = arith.constant 0 : index
    %c0_55 = arith.constant 0 : index
    %95 = vector.load %arg8[%c0_54, %c0_55] : memref<3x32xbf16, #tpu.memory_space<vmem>>, vector<3x32xbf16>
    %c0_56 = arith.constant 0 : index
    %c0_57 = arith.constant 0 : index
    %96 = vector.load %arg9[%c0_56, %c0_57] : memref<2x32xf32, #tpu.memory_space<vmem>>, vector<2x32xf32>
    %97 = vector.extract_strided_slice %94 {offsets = [0, 0], sizes = [48, 32], strides = [1, 1]} : vector<48x96xf32> to vector<48x32xf32>
    %98 = vector.extract_strided_slice %94 {offsets = [0, 32], sizes = [48, 32], strides = [1, 1]} : vector<48x96xf32> to vector<48x32xf32>
    %99 = vector.extract_strided_slice %94 {offsets = [0, 64], sizes = [48, 32], strides = [1, 1]} : vector<48x96xf32> to vector<48x32xf32>
    %100 = arith.truncf %97 : vector<48x32xf32> to vector<48x32xbf16>
    %cst_58 = arith.constant dense<0.000000e+00> : vector<80x32xf32>
    %101 = tpu.matmul %34, %100, %cst_58 {dimension_numbers = #tpu.dot_dimension_numbers<[1], [0], [0], [1], [0, 0, 1, 1], [], []>} : vector<80x48xbf16>, vector<48x32xbf16>, vector<80x32xf32> -> vector<80x32xf32>
    %102 = arith.truncf %98 : vector<48x32xf32> to vector<48x32xbf16>
    %cst_59 = arith.constant dense<0.000000e+00> : vector<80x32xf32>
    %103 = tpu.matmul %28, %102, %cst_59 {dimension_numbers = #tpu.dot_dimension_numbers<[1], [0], [0], [1], [0, 0, 1, 1], [], []>} : vector<80x48xbf16>, vector<48x32xbf16>, vector<80x32xf32> -> vector<80x32xf32>
    %104 = arith.addf %101, %103 : vector<80x32xf32>
    %105 = arith.truncf %7 : vector<80x3xf32> to vector<80x3xbf16>
    %cst_60 = arith.constant dense<0.000000e+00> : vector<80x32xf32>
    %106 = tpu.matmul %105, %95, %cst_60 {dimension_numbers = #tpu.dot_dimension_numbers<[1], [0], [0], [1], [0, 0, 1, 1], [], []>} : vector<80x3xbf16>, vector<3x32xbf16>, vector<80x32xf32> -> vector<80x32xf32>
    %107 = arith.addf %104, %106 : vector<80x32xf32>
    %108 = vector.extract_strided_slice %96 {offsets = [0, 0], sizes = [1, 32], strides = [1, 1]} : vector<2x32xf32> to vector<1x32xf32>
    %109 = vector.broadcast %108 : vector<1x32xf32> to vector<80x32xf32>
    %110 = arith.addf %107, %109 : vector<80x32xf32>
    %cst_61 = arith.constant 0.000000e+00 : f32
    %111 = vector.broadcast %cst_61 : f32 to vector<80x32xf32>
    %112 = arith.cmpf oge, %110, %111 : vector<80x32xf32>
    %cst_62 = arith.constant 0.00999999977 : f32
    %113 = vector.broadcast %cst_62 : f32 to vector<80x32xf32>
    %114 = arith.mulf %113, %110 : vector<80x32xf32>
    %115 = arith.select %112, %110, %114 : vector<80x32xi1>, vector<80x32xf32>
    %116 = arith.truncf %115 : vector<80x32xf32> to vector<80x32xbf16>
    %cst_63 = arith.constant dense<0.000000e+00> : vector<48x32xf32>
    %117 = tpu.matmul %41, %116, %cst_63 {dimension_numbers = #tpu.dot_dimension_numbers<[1], [0], [0], [1], [0, 0, 1, 1], [], []>} : vector<48x80xbf16>, vector<80x32xbf16>, vector<48x32xf32> -> vector<48x32xf32>
    %118 = arith.addf %117, %99 : vector<48x32xf32>
    %119 = vector.extract_strided_slice %96 {offsets = [1, 0], sizes = [1, 32], strides = [1, 1]} : vector<2x32xf32> to vector<1x32xf32>
    %120 = vector.broadcast %119 : vector<1x32xf32> to vector<48x32xf32>
    %121 = arith.addf %118, %120 : vector<48x32xf32>
    %122 = arith.truncf %121 : vector<48x32xf32> to vector<48x32xbf16>
    %c0_64 = arith.constant 0 : index
    %c0_65 = arith.constant 0 : index
    %123 = vector.load %arg10[%c0_64, %c0_65] : memref<32x192xbf16, #tpu.memory_space<vmem>>, vector<32x192xbf16>
    %cst_66 = arith.constant dense<0.000000e+00> : vector<48x192xf32>
    %124 = tpu.matmul %122, %123, %cst_66 {dimension_numbers = #tpu.dot_dimension_numbers<[1], [0], [0], [1], [0, 0, 1, 1], [], []>} : vector<48x32xbf16>, vector<32x192xbf16>, vector<48x192xf32> -> vector<48x192xf32>
    %c0_67 = arith.constant 0 : index
    %c0_68 = arith.constant 0 : index
    %125 = vector.load %arg11[%c0_67, %c0_68] : memref<3x64xbf16, #tpu.memory_space<vmem>>, vector<3x64xbf16>
    %c0_69 = arith.constant 0 : index
    %c0_70 = arith.constant 0 : index
    %126 = vector.load %arg12[%c0_69, %c0_70] : memref<2x64xf32, #tpu.memory_space<vmem>>, vector<2x64xf32>
    %127 = vector.extract_strided_slice %124 {offsets = [0, 0], sizes = [48, 64], strides = [1, 1]} : vector<48x192xf32> to vector<48x64xf32>
    %128 = vector.extract_strided_slice %124 {offsets = [0, 64], sizes = [48, 64], strides = [1, 1]} : vector<48x192xf32> to vector<48x64xf32>
    %129 = vector.extract_strided_slice %124 {offsets = [0, 128], sizes = [48, 64], strides = [1, 1]} : vector<48x192xf32> to vector<48x64xf32>
    %130 = arith.truncf %127 : vector<48x64xf32> to vector<48x64xbf16>
    %cst_71 = arith.constant dense<0.000000e+00> : vector<80x64xf32>
    %131 = tpu.matmul %34, %130, %cst_71 {dimension_numbers = #tpu.dot_dimension_numbers<[1], [0], [0], [1], [0, 0, 1, 1], [], []>} : vector<80x48xbf16>, vector<48x64xbf16>, vector<80x64xf32> -> vector<80x64xf32>
    %132 = arith.truncf %128 : vector<48x64xf32> to vector<48x64xbf16>
    %cst_72 = arith.constant dense<0.000000e+00> : vector<80x64xf32>
    %133 = tpu.matmul %28, %132, %cst_72 {dimension_numbers = #tpu.dot_dimension_numbers<[1], [0], [0], [1], [0, 0, 1, 1], [], []>} : vector<80x48xbf16>, vector<48x64xbf16>, vector<80x64xf32> -> vector<80x64xf32>
    %134 = arith.addf %131, %133 : vector<80x64xf32>
    %135 = arith.truncf %7 : vector<80x3xf32> to vector<80x3xbf16>
    %cst_73 = arith.constant dense<0.000000e+00> : vector<80x64xf32>
    %136 = tpu.matmul %135, %125, %cst_73 {dimension_numbers = #tpu.dot_dimension_numbers<[1], [0], [0], [1], [0, 0, 1, 1], [], []>} : vector<80x3xbf16>, vector<3x64xbf16>, vector<80x64xf32> -> vector<80x64xf32>
    %137 = arith.addf %134, %136 : vector<80x64xf32>
    %138 = vector.extract_strided_slice %126 {offsets = [0, 0], sizes = [1, 64], strides = [1, 1]} : vector<2x64xf32> to vector<1x64xf32>
    %139 = vector.broadcast %138 : vector<1x64xf32> to vector<80x64xf32>
    %140 = arith.addf %137, %139 : vector<80x64xf32>
    %cst_74 = arith.constant 0.000000e+00 : f32
    %141 = vector.broadcast %cst_74 : f32 to vector<80x64xf32>
    %142 = arith.cmpf oge, %140, %141 : vector<80x64xf32>
    %cst_75 = arith.constant 0.00999999977 : f32
    %143 = vector.broadcast %cst_75 : f32 to vector<80x64xf32>
    %144 = arith.mulf %143, %140 : vector<80x64xf32>
    %145 = arith.select %142, %140, %144 : vector<80x64xi1>, vector<80x64xf32>
    %146 = arith.truncf %145 : vector<80x64xf32> to vector<80x64xbf16>
    %cst_76 = arith.constant dense<0.000000e+00> : vector<48x64xf32>
    %147 = tpu.matmul %41, %146, %cst_76 {dimension_numbers = #tpu.dot_dimension_numbers<[1], [0], [0], [1], [0, 0, 1, 1], [], []>} : vector<48x80xbf16>, vector<80x64xbf16>, vector<48x64xf32> -> vector<48x64xf32>
    %148 = arith.addf %147, %129 : vector<48x64xf32>
    %149 = vector.extract_strided_slice %126 {offsets = [1, 0], sizes = [1, 64], strides = [1, 1]} : vector<2x64xf32> to vector<1x64xf32>
    %150 = vector.broadcast %149 : vector<1x64xf32> to vector<48x64xf32>
    %151 = arith.addf %148, %150 : vector<48x64xf32>
    %c0_77 = arith.constant 0 : index
    %c0_78 = arith.constant 0 : index
    %152 = vector.load %arg14[%c0_77, %c0_78] : memref<1x896xf32, #tpu.memory_space<vmem>>, vector<1x896xf32>
    %153 = vector.extract_strided_slice %151 {offsets = [0, 0], sizes = [8, 64], strides = [1, 1]} : vector<48x64xf32> to vector<8x64xf32>
    %154 = arith.truncf %153 : vector<8x64xf32> to vector<8x64xbf16>
    %c0_79 = arith.constant 0 : index
    %c0_80 = arith.constant 0 : index
    %155 = vector.load %arg13[%c0_79, %c0_80] : memref<384x896xbf16, #tpu.memory_space<vmem>>, vector<64x896xbf16>
    %cst_81 = arith.constant dense<0.000000e+00> : vector<8x896xf32>
    %156 = tpu.matmul %154, %155, %cst_81 {dimension_numbers = #tpu.dot_dimension_numbers<[1], [0], [0], [1], [0, 0, 1, 1], [], []>} : vector<8x64xbf16>, vector<64x896xbf16>, vector<8x896xf32> -> vector<8x896xf32>
    %157 = vector.broadcast %152 : vector<1x896xf32> to vector<8x896xf32>
    %158 = arith.addf %157, %156 : vector<8x896xf32>
    %159 = vector.extract_strided_slice %151 {offsets = [8, 0], sizes = [8, 64], strides = [1, 1]} : vector<48x64xf32> to vector<8x64xf32>
    %160 = arith.truncf %159 : vector<8x64xf32> to vector<8x64xbf16>
    %c64 = arith.constant 64 : index
    %c0_82 = arith.constant 0 : index
    %161 = vector.load %arg13[%c64, %c0_82] : memref<384x896xbf16, #tpu.memory_space<vmem>>, vector<64x896xbf16>
    %cst_83 = arith.constant dense<0.000000e+00> : vector<8x896xf32>
    %162 = tpu.matmul %160, %161, %cst_83 {dimension_numbers = #tpu.dot_dimension_numbers<[1], [0], [0], [1], [0, 0, 1, 1], [], []>} : vector<8x64xbf16>, vector<64x896xbf16>, vector<8x896xf32> -> vector<8x896xf32>
    %163 = arith.addf %158, %162 : vector<8x896xf32>
    %164 = vector.extract_strided_slice %151 {offsets = [16, 0], sizes = [8, 64], strides = [1, 1]} : vector<48x64xf32> to vector<8x64xf32>
    %165 = arith.truncf %164 : vector<8x64xf32> to vector<8x64xbf16>
    %c128 = arith.constant 128 : index
    %c0_84 = arith.constant 0 : index
    %166 = vector.load %arg13[%c128, %c0_84] : memref<384x896xbf16, #tpu.memory_space<vmem>>, vector<64x896xbf16>
    %cst_85 = arith.constant dense<0.000000e+00> : vector<8x896xf32>
    %167 = tpu.matmul %165, %166, %cst_85 {dimension_numbers = #tpu.dot_dimension_numbers<[1], [0], [0], [1], [0, 0, 1, 1], [], []>} : vector<8x64xbf16>, vector<64x896xbf16>, vector<8x896xf32> -> vector<8x896xf32>
    %168 = arith.addf %163, %167 : vector<8x896xf32>
    %169 = vector.extract_strided_slice %151 {offsets = [24, 0], sizes = [8, 64], strides = [1, 1]} : vector<48x64xf32> to vector<8x64xf32>
    %170 = arith.truncf %169 : vector<8x64xf32> to vector<8x64xbf16>
    %c192 = arith.constant 192 : index
    %c0_86 = arith.constant 0 : index
    %171 = vector.load %arg13[%c192, %c0_86] : memref<384x896xbf16, #tpu.memory_space<vmem>>, vector<64x896xbf16>
    %cst_87 = arith.constant dense<0.000000e+00> : vector<8x896xf32>
    %172 = tpu.matmul %170, %171, %cst_87 {dimension_numbers = #tpu.dot_dimension_numbers<[1], [0], [0], [1], [0, 0, 1, 1], [], []>} : vector<8x64xbf16>, vector<64x896xbf16>, vector<8x896xf32> -> vector<8x896xf32>
    %173 = arith.addf %168, %172 : vector<8x896xf32>
    %174 = vector.extract_strided_slice %151 {offsets = [32, 0], sizes = [8, 64], strides = [1, 1]} : vector<48x64xf32> to vector<8x64xf32>
    %175 = arith.truncf %174 : vector<8x64xf32> to vector<8x64xbf16>
    %c256 = arith.constant 256 : index
    %c0_88 = arith.constant 0 : index
    %176 = vector.load %arg13[%c256, %c0_88] : memref<384x896xbf16, #tpu.memory_space<vmem>>, vector<64x896xbf16>
    %cst_89 = arith.constant dense<0.000000e+00> : vector<8x896xf32>
    %177 = tpu.matmul %175, %176, %cst_89 {dimension_numbers = #tpu.dot_dimension_numbers<[1], [0], [0], [1], [0, 0, 1, 1], [], []>} : vector<8x64xbf16>, vector<64x896xbf16>, vector<8x896xf32> -> vector<8x896xf32>
    %178 = arith.addf %173, %177 : vector<8x896xf32>
    %179 = vector.extract_strided_slice %151 {offsets = [40, 0], sizes = [8, 64], strides = [1, 1]} : vector<48x64xf32> to vector<8x64xf32>
    %180 = arith.truncf %179 : vector<8x64xf32> to vector<8x64xbf16>
    %c320 = arith.constant 320 : index
    %c0_90 = arith.constant 0 : index
    %181 = vector.load %arg13[%c320, %c0_90] : memref<384x896xbf16, #tpu.memory_space<vmem>>, vector<64x896xbf16>
    %cst_91 = arith.constant dense<0.000000e+00> : vector<8x896xf32>
    %182 = tpu.matmul %180, %181, %cst_91 {dimension_numbers = #tpu.dot_dimension_numbers<[1], [0], [0], [1], [0, 0, 1, 1], [], []>} : vector<8x64xbf16>, vector<64x896xbf16>, vector<8x896xf32> -> vector<8x896xf32>
    %183 = arith.addf %178, %182 : vector<8x896xf32>
    %184 = math.tanh %183 : vector<8x896xf32>
    %cst_92 = arith.constant 0.000000e+00 : f32
    %185 = vector.broadcast %cst_92 : f32 to vector<112x128xf32>
    %c0_93 = arith.constant 0 : index
    %c0_94 = arith.constant 0 : index
    %c0_95 = arith.constant 0 : index
    %186 = vector.load %arg25[%c0_93, %c0_94, %c0_95] : memref<1x112x128xf32, #tpu.memory_space<vmem>>, vector<1x112x128xf32>
    %187 = vector.shape_cast %186 : vector<1x112x128xf32> to vector<112x128xf32>
    %188 = vector.shape_cast %185 : vector<112x128xf32> to vector<1x112x128xf32>
    tpu.vector_store %arg25[%c0_93, %c0_94, %c0_95], %188 {strides = array<i32>} : memref<1x112x128xf32, #tpu.memory_space<vmem>>, vector<1x112x128xf32>,
    %189 = vector.extract_strided_slice %184 {offsets = [0, 0], sizes = [8, 64], strides = [1, 1]} : vector<8x896xf32> to vector<8x64xf32>
    %c0_96 = arith.constant 0 : index
    %c0_97 = arith.constant 0 : index
    %c0_98 = arith.constant 0 : index
    %190 = vector.load %arg25[%c0_96, %c0_97, %c0_98] : memref<1x112x128xf32, #tpu.memory_space<vmem>>, vector<1x8x64xf32>
    %191 = vector.shape_cast %190 : vector<1x8x64xf32> to vector<8x64xf32>
    %192 = vector.shape_cast %189 : vector<8x64xf32> to vector<1x8x64xf32>
    tpu.vector_store %arg25[%c0_96, %c0_97, %c0_98], %192 {strides = array<i32>} : memref<1x112x128xf32, #tpu.memory_space<vmem>>, vector<1x8x64xf32>,
    %193 = vector.extract_strided_slice %184 {offsets = [0, 64], sizes = [8, 64], strides = [1, 1]} : vector<8x896xf32> to vector<8x64xf32>
    %c0_99 = arith.constant 0 : index
    %c8 = arith.constant 8 : index
    %c0_100 = arith.constant 0 : index
    %194 = vector.load %arg25[%c0_99, %c8, %c0_100] : memref<1x112x128xf32, #tpu.memory_space<vmem>>, vector<1x8x64xf32>
    %195 = vector.shape_cast %194 : vector<1x8x64xf32> to vector<8x64xf32>
    %196 = vector.shape_cast %193 : vector<8x64xf32> to vector<1x8x64xf32>
    tpu.vector_store %arg25[%c0_99, %c8, %c0_100], %196 {strides = array<i32>} : memref<1x112x128xf32, #tpu.memory_space<vmem>>, vector<1x8x64xf32>,
    %197 = vector.extract_strided_slice %184 {offsets = [0, 128], sizes = [8, 64], strides = [1, 1]} : vector<8x896xf32> to vector<8x64xf32>
    %c0_101 = arith.constant 0 : index
    %c16 = arith.constant 16 : index
    %c0_102 = arith.constant 0 : index
    %198 = vector.load %arg25[%c0_101, %c16, %c0_102] : memref<1x112x128xf32, #tpu.memory_space<vmem>>, vector<1x8x64xf32>
    %199 = vector.shape_cast %198 : vector<1x8x64xf32> to vector<8x64xf32>
    %200 = vector.shape_cast %197 : vector<8x64xf32> to vector<1x8x64xf32>
    tpu.vector_store %arg25[%c0_101, %c16, %c0_102], %200 {strides = array<i32>} : memref<1x112x128xf32, #tpu.memory_space<vmem>>, vector<1x8x64xf32>,
    %201 = vector.extract_strided_slice %184 {offsets = [0, 192], sizes = [8, 64], strides = [1, 1]} : vector<8x896xf32> to vector<8x64xf32>
    %c0_103 = arith.constant 0 : index
    %c24 = arith.constant 24 : index
    %c0_104 = arith.constant 0 : index
    %202 = vector.load %arg25[%c0_103, %c24, %c0_104] : memref<1x112x128xf32, #tpu.memory_space<vmem>>, vector<1x8x64xf32>
    %203 = vector.shape_cast %202 : vector<1x8x64xf32> to vector<8x64xf32>
    %204 = vector.shape_cast %201 : vector<8x64xf32> to vector<1x8x64xf32>
    tpu.vector_store %arg25[%c0_103, %c24, %c0_104], %204 {strides = array<i32>} : memref<1x112x128xf32, #tpu.memory_space<vmem>>, vector<1x8x64xf32>,
    %205 = vector.extract_strided_slice %184 {offsets = [0, 256], sizes = [8, 64], strides = [1, 1]} : vector<8x896xf32> to vector<8x64xf32>
    %c0_105 = arith.constant 0 : index
    %c32 = arith.constant 32 : index
    %c0_106 = arith.constant 0 : index
    %206 = vector.load %arg25[%c0_105, %c32, %c0_106] : memref<1x112x128xf32, #tpu.memory_space<vmem>>, vector<1x8x64xf32>
    %207 = vector.shape_cast %206 : vector<1x8x64xf32> to vector<8x64xf32>
    %208 = vector.shape_cast %205 : vector<8x64xf32> to vector<1x8x64xf32>
    tpu.vector_store %arg25[%c0_105, %c32, %c0_106], %208 {strides = array<i32>} : memref<1x112x128xf32, #tpu.memory_space<vmem>>, vector<1x8x64xf32>,
    %209 = vector.extract_strided_slice %184 {offsets = [0, 320], sizes = [8, 64], strides = [1, 1]} : vector<8x896xf32> to vector<8x64xf32>
    %c0_107 = arith.constant 0 : index
    %c40 = arith.constant 40 : index
    %c0_108 = arith.constant 0 : index
    %210 = vector.load %arg25[%c0_107, %c40, %c0_108] : memref<1x112x128xf32, #tpu.memory_space<vmem>>, vector<1x8x64xf32>
    %211 = vector.shape_cast %210 : vector<1x8x64xf32> to vector<8x64xf32>
    %212 = vector.shape_cast %209 : vector<8x64xf32> to vector<1x8x64xf32>
    tpu.vector_store %arg25[%c0_107, %c40, %c0_108], %212 {strides = array<i32>} : memref<1x112x128xf32, #tpu.memory_space<vmem>>, vector<1x8x64xf32>,
    %213 = vector.extract_strided_slice %184 {offsets = [0, 384], sizes = [8, 64], strides = [1, 1]} : vector<8x896xf32> to vector<8x64xf32>
    %c0_109 = arith.constant 0 : index
    %c48_110 = arith.constant 48 : index
    %c0_111 = arith.constant 0 : index
    %214 = vector.load %arg25[%c0_109, %c48_110, %c0_111] : memref<1x112x128xf32, #tpu.memory_space<vmem>>, vector<1x8x64xf32>
    %215 = vector.shape_cast %214 : vector<1x8x64xf32> to vector<8x64xf32>
    %216 = vector.shape_cast %213 : vector<8x64xf32> to vector<1x8x64xf32>
    tpu.vector_store %arg25[%c0_109, %c48_110, %c0_111], %216 {strides = array<i32>} : memref<1x112x128xf32, #tpu.memory_space<vmem>>, vector<1x8x64xf32>,
    %217 = vector.extract_strided_slice %184 {offsets = [0, 448], sizes = [8, 64], strides = [1, 1]} : vector<8x896xf32> to vector<8x64xf32>
    %c0_112 = arith.constant 0 : index
    %c56 = arith.constant 56 : index
    %c0_113 = arith.constant 0 : index
    %218 = vector.load %arg25[%c0_112, %c56, %c0_113] : memref<1x112x128xf32, #tpu.memory_space<vmem>>, vector<1x8x64xf32>
    %219 = vector.shape_cast %218 : vector<1x8x64xf32> to vector<8x64xf32>
    %220 = vector.shape_cast %217 : vector<8x64xf32> to vector<1x8x64xf32>
    tpu.vector_store %arg25[%c0_112, %c56, %c0_113], %220 {strides = array<i32>} : memref<1x112x128xf32, #tpu.memory_space<vmem>>, vector<1x8x64xf32>,
    %221 = vector.extract_strided_slice %184 {offsets = [0, 512], sizes = [8, 64], strides = [1, 1]} : vector<8x896xf32> to vector<8x64xf32>
    %c0_114 = arith.constant 0 : index
    %c64_115 = arith.constant 64 : index
    %c0_116 = arith.constant 0 : index
    %222 = vector.load %arg25[%c0_114, %c64_115, %c0_116] : memref<1x112x128xf32, #tpu.memory_space<vmem>>, vector<1x8x64xf32>
    %223 = vector.shape_cast %222 : vector<1x8x64xf32> to vector<8x64xf32>
    %224 = vector.shape_cast %221 : vector<8x64xf32> to vector<1x8x64xf32>
    tpu.vector_store %arg25[%c0_114, %c64_115, %c0_116], %224 {strides = array<i32>} : memref<1x112x128xf32, #tpu.memory_space<vmem>>, vector<1x8x64xf32>,
    %225 = vector.extract_strided_slice %184 {offsets = [0, 576], sizes = [8, 64], strides = [1, 1]} : vector<8x896xf32> to vector<8x64xf32>
    %c0_117 = arith.constant 0 : index
    %c72 = arith.constant 72 : index
    %c0_118 = arith.constant 0 : index
    %226 = vector.load %arg25[%c0_117, %c72, %c0_118] : memref<1x112x128xf32, #tpu.memory_space<vmem>>, vector<1x8x64xf32>
    %227 = vector.shape_cast %226 : vector<1x8x64xf32> to vector<8x64xf32>
    %228 = vector.shape_cast %225 : vector<8x64xf32> to vector<1x8x64xf32>
    tpu.vector_store %arg25[%c0_117, %c72, %c0_118], %228 {strides = array<i32>} : memref<1x112x128xf32, #tpu.memory_space<vmem>>, vector<1x8x64xf32>,
    %229 = vector.extract_strided_slice %184 {offsets = [0, 640], sizes = [8, 64], strides = [1, 1]} : vector<8x896xf32> to vector<8x64xf32>
    %c0_119 = arith.constant 0 : index
    %c80_120 = arith.constant 80 : index
    %c0_121 = arith.constant 0 : index
    %230 = vector.load %arg25[%c0_119, %c80_120, %c0_121] : memref<1x112x128xf32, #tpu.memory_space<vmem>>, vector<1x8x64xf32>
    %231 = vector.shape_cast %230 : vector<1x8x64xf32> to vector<8x64xf32>
    %232 = vector.shape_cast %229 : vector<8x64xf32> to vector<1x8x64xf32>
    tpu.vector_store %arg25[%c0_119, %c80_120, %c0_121], %232 {strides = array<i32>} : memref<1x112x128xf32, #tpu.memory_space<vmem>>, vector<1x8x64xf32>,
    %233 = vector.extract_strided_slice %184 {offsets = [0, 704], sizes = [8, 64], strides = [1, 1]} : vector<8x896xf32> to vector<8x64xf32>
    %c0_122 = arith.constant 0 : index
    %c88 = arith.constant 88 : index
    %c0_123 = arith.constant 0 : index
    %234 = vector.load %arg25[%c0_122, %c88, %c0_123] : memref<1x112x128xf32, #tpu.memory_space<vmem>>, vector<1x8x64xf32>
    %235 = vector.shape_cast %234 : vector<1x8x64xf32> to vector<8x64xf32>
    %236 = vector.shape_cast %233 : vector<8x64xf32> to vector<1x8x64xf32>
    tpu.vector_store %arg25[%c0_122, %c88, %c0_123], %236 {strides = array<i32>} : memref<1x112x128xf32, #tpu.memory_space<vmem>>, vector<1x8x64xf32>,
    %237 = vector.extract_strided_slice %184 {offsets = [0, 768], sizes = [8, 64], strides = [1, 1]} : vector<8x896xf32> to vector<8x64xf32>
    %c0_124 = arith.constant 0 : index
    %c96 = arith.constant 96 : index
    %c0_125 = arith.constant 0 : index
    %238 = vector.load %arg25[%c0_124, %c96, %c0_125] : memref<1x112x128xf32, #tpu.memory_space<vmem>>, vector<1x8x64xf32>
    %239 = vector.shape_cast %238 : vector<1x8x64xf32> to vector<8x64xf32>
    %240 = vector.shape_cast %237 : vector<8x64xf32> to vector<1x8x64xf32>
    tpu.vector_store %arg25[%c0_124, %c96, %c0_125], %240 {strides = array<i32>} : memref<1x112x128xf32, #tpu.memory_space<vmem>>, vector<1x8x64xf32>,
    %241 = vector.extract_strided_slice %184 {offsets = [0, 832], sizes = [8, 64], strides = [1, 1]} : vector<8x896xf32> to vector<8x64xf32>
    %c0_126 = arith.constant 0 : index
    %c104 = arith.constant 104 : index
    %c0_127 = arith.constant 0 : index
    %242 = vector.load %arg25[%c0_126, %c104, %c0_127] : memref<1x112x128xf32, #tpu.memory_space<vmem>>, vector<1x8x64xf32>
    %243 = vector.shape_cast %242 : vector<1x8x64xf32> to vector<8x64xf32>
    %244 = vector.shape_cast %241 : vector<8x64xf32> to vector<1x8x64xf32>
    tpu.vector_store %arg25[%c0_126, %c104, %c0_127], %244 {strides = array<i32>} : memref<1x112x128xf32, #tpu.memory_space<vmem>>, vector<1x8x64xf32>,
    %c0_128 = arith.constant 0 : index
    %c0_129 = arith.constant 0 : index
    %c0_130 = arith.constant 0 : index
    %245 = vector.load %arg25[%c0_128, %c0_129, %c0_130] : memref<1x112x128xf32, #tpu.memory_space<vmem>>, vector<1x112x64xf32>
    %246 = vector.shape_cast %245 : vector<1x112x64xf32> to vector<112x64xf32>
    %247 = arith.truncf %246 : vector<112x64xf32> to vector<112x64xbf16>
    %c0_131 = arith.constant 0 : index
    %c0_132 = arith.constant 0 : index
    %248 = vector.load %arg15[%c0_131, %c0_132] : memref<64x96xbf16, #tpu.memory_space<vmem>>, vector<64x96xbf16>
    %cst_133 = arith.constant dense<0.000000e+00> : vector<112x96xf32>
    %249 = tpu.matmul %247, %248, %cst_133 {dimension_numbers = #tpu.dot_dimension_numbers<[1], [0], [0], [1], [0, 0, 1, 1], [], []>} : vector<112x64xbf16>, vector<64x96xbf16>, vector<112x96xf32> -> vector<112x96xf32>
    %c0_134 = arith.constant 0 : index
    %c0_135 = arith.constant 0 : index
    %250 = vector.load %arg16[%c0_134, %c0_135] : memref<2x96xf32, #tpu.memory_space<vmem>>, vector<1x96xf32>
    %251 = vector.broadcast %3 : vector<112x1xf32> to vector<112x96xf32>
    %252 = vector.broadcast %250 : vector<1x96xf32> to vector<112x96xf32>
    %253 = arith.mulf %251, %252 : vector<112x96xf32>
    %254 = arith.addf %249, %253 : vector<112x96xf32>
    %c1_136 = arith.constant 1 : index
    %c0_137 = arith.constant 0 : index
    %255 = vector.load %arg16[%c1_136, %c0_137] : memref<2x96xf32, #tpu.memory_space<vmem>>, vector<1x96xf32>
    %256 = vector.broadcast %5 : vector<112x1xf32> to vector<112x96xf32>
    %257 = vector.broadcast %255 : vector<1x96xf32> to vector<112x96xf32>
    %258 = arith.mulf %256, %257 : vector<112x96xf32>
    %259 = arith.addf %254, %258 : vector<112x96xf32>
    %c0_138 = arith.constant 0 : index
    %c0_139 = arith.constant 0 : index
    %260 = vector.load %arg17[%c0_138, %c0_139] : memref<6x32xbf16, #tpu.memory_space<vmem>>, vector<6x32xbf16>
    %c0_140 = arith.constant 0 : index
    %c0_141 = arith.constant 0 : index
    %261 = vector.load %arg18[%c0_140, %c0_141] : memref<2x32xf32, #tpu.memory_space<vmem>>, vector<2x32xf32>
    %262 = vector.extract_strided_slice %259 {offsets = [0, 0], sizes = [112, 32], strides = [1, 1]} : vector<112x96xf32> to vector<112x32xf32>
    %263 = vector.extract_strided_slice %259 {offsets = [0, 32], sizes = [112, 32], strides = [1, 1]} : vector<112x96xf32> to vector<112x32xf32>
    %264 = vector.extract_strided_slice %259 {offsets = [0, 64], sizes = [112, 32], strides = [1, 1]} : vector<112x96xf32> to vector<112x32xf32>
    %265 = arith.truncf %262 : vector<112x32xf32> to vector<112x32xbf16>
    %cst_142 = arith.constant dense<0.000000e+00> : vector<208x32xf32>
    %266 = tpu.matmul %54, %265, %cst_142 {dimension_numbers = #tpu.dot_dimension_numbers<[1], [0], [0], [1], [0, 0, 1, 1], [], []>} : vector<208x112xbf16>, vector<112x32xbf16>, vector<208x32xf32> -> vector<208x32xf32>
    %267 = arith.truncf %263 : vector<112x32xf32> to vector<112x32xbf16>
    %cst_143 = arith.constant dense<0.000000e+00> : vector<208x32xf32>
    %268 = tpu.matmul %48, %267, %cst_143 {dimension_numbers = #tpu.dot_dimension_numbers<[1], [0], [0], [1], [0, 0, 1, 1], [], []>} : vector<208x112xbf16>, vector<112x32xbf16>, vector<208x32xf32> -> vector<208x32xf32>
    %269 = arith.addf %266, %268 : vector<208x32xf32>
    %270 = arith.truncf %9 : vector<208x6xf32> to vector<208x6xbf16>
    %cst_144 = arith.constant dense<0.000000e+00> : vector<208x32xf32>
    %271 = tpu.matmul %270, %260, %cst_144 {dimension_numbers = #tpu.dot_dimension_numbers<[1], [0], [0], [1], [0, 0, 1, 1], [], []>} : vector<208x6xbf16>, vector<6x32xbf16>, vector<208x32xf32> -> vector<208x32xf32>
    %272 = arith.addf %269, %271 : vector<208x32xf32>
    %273 = vector.extract_strided_slice %261 {offsets = [0, 0], sizes = [1, 32], strides = [1, 1]} : vector<2x32xf32> to vector<1x32xf32>
    %274 = vector.broadcast %273 : vector<1x32xf32> to vector<208x32xf32>
    %275 = arith.addf %272, %274 : vector<208x32xf32>
    %cst_145 = arith.constant 0.000000e+00 : f32
    %276 = vector.broadcast %cst_145 : f32 to vector<208x32xf32>
    %277 = arith.cmpf oge, %275, %276 : vector<208x32xf32>
    %cst_146 = arith.constant 0.00999999977 : f32
    %278 = vector.broadcast %cst_146 : f32 to vector<208x32xf32>
    %279 = arith.mulf %278, %275 : vector<208x32xf32>
    %280 = arith.select %277, %275, %279 : vector<208x32xi1>, vector<208x32xf32>
    %281 = arith.truncf %280 : vector<208x32xf32> to vector<208x32xbf16>
    %cst_147 = arith.constant dense<0.000000e+00> : vector<112x32xf32>
    %282 = tpu.matmul %61, %281, %cst_147 {dimension_numbers = #tpu.dot_dimension_numbers<[1], [0], [0], [1], [0, 0, 1, 1], [], []>} : vector<112x208xbf16>, vector<208x32xbf16>, vector<112x32xf32> -> vector<112x32xf32>
    %283 = arith.addf %282, %264 : vector<112x32xf32>
    %284 = vector.extract_strided_slice %261 {offsets = [1, 0], sizes = [1, 32], strides = [1, 1]} : vector<2x32xf32> to vector<1x32xf32>
    %285 = vector.broadcast %284 : vector<1x32xf32> to vector<112x32xf32>
    %286 = arith.addf %283, %285 : vector<112x32xf32>
    %287 = arith.truncf %286 : vector<112x32xf32> to vector<112x32xbf16>
    %c0_148 = arith.constant 0 : index
    %c0_149 = arith.constant 0 : index
    %288 = vector.load %arg19[%c0_148, %c0_149] : memref<32x48xbf16, #tpu.memory_space<vmem>>, vector<32x48xbf16>
    %cst_150 = arith.constant dense<0.000000e+00> : vector<112x48xf32>
    %289 = tpu.matmul %287, %288, %cst_150 {dimension_numbers = #tpu.dot_dimension_numbers<[1], [0], [0], [1], [0, 0, 1, 1], [], []>} : vector<112x32xbf16>, vector<32x48xbf16>, vector<112x48xf32> -> vector<112x48xf32>
    %c0_151 = arith.constant 0 : index
    %c0_152 = arith.constant 0 : index
    %290 = vector.load %arg20[%c0_151, %c0_152] : memref<6x16xbf16, #tpu.memory_space<vmem>>, vector<6x16xbf16>
    %c0_153 = arith.constant 0 : index
    %c0_154 = arith.constant 0 : index
    %291 = vector.load %arg21[%c0_153, %c0_154] : memref<2x16xf32, #tpu.memory_space<vmem>>, vector<2x16xf32>
    %292 = vector.extract_strided_slice %289 {offsets = [0, 0], sizes = [112, 16], strides = [1, 1]} : vector<112x48xf32> to vector<112x16xf32>
    %293 = vector.extract_strided_slice %289 {offsets = [0, 16], sizes = [112, 16], strides = [1, 1]} : vector<112x48xf32> to vector<112x16xf32>
    %294 = vector.extract_strided_slice %289 {offsets = [0, 32], sizes = [112, 16], strides = [1, 1]} : vector<112x48xf32> to vector<112x16xf32>
    %295 = arith.truncf %292 : vector<112x16xf32> to vector<112x16xbf16>
    %cst_155 = arith.constant dense<0.000000e+00> : vector<208x16xf32>
    %296 = tpu.matmul %54, %295, %cst_155 {dimension_numbers = #tpu.dot_dimension_numbers<[1], [0], [0], [1], [0, 0, 1, 1], [], []>} : vector<208x112xbf16>, vector<112x16xbf16>, vector<208x16xf32> -> vector<208x16xf32>
    %297 = arith.truncf %293 : vector<112x16xf32> to vector<112x16xbf16>
    %cst_156 = arith.constant dense<0.000000e+00> : vector<208x16xf32>
    %298 = tpu.matmul %48, %297, %cst_156 {dimension_numbers = #tpu.dot_dimension_numbers<[1], [0], [0], [1], [0, 0, 1, 1], [], []>} : vector<208x112xbf16>, vector<112x16xbf16>, vector<208x16xf32> -> vector<208x16xf32>
    %299 = arith.addf %296, %298 : vector<208x16xf32>
    %300 = arith.truncf %9 : vector<208x6xf32> to vector<208x6xbf16>
    %cst_157 = arith.constant dense<0.000000e+00> : vector<208x16xf32>
    %301 = tpu.matmul %300, %290, %cst_157 {dimension_numbers = #tpu.dot_dimension_numbers<[1], [0], [0], [1], [0, 0, 1, 1], [], []>} : vector<208x6xbf16>, vector<6x16xbf16>, vector<208x16xf32> -> vector<208x16xf32>
    %302 = arith.addf %299, %301 : vector<208x16xf32>
    %303 = vector.extract_strided_slice %291 {offsets = [0, 0], sizes = [1, 16], strides = [1, 1]} : vector<2x16xf32> to vector<1x16xf32>
    %304 = vector.broadcast %303 : vector<1x16xf32> to vector<208x16xf32>
    %305 = arith.addf %302, %304 : vector<208x16xf32>
    %cst_158 = arith.constant 0.000000e+00 : f32
    %306 = vector.broadcast %cst_158 : f32 to vector<208x16xf32>
    %307 = arith.cmpf oge, %305, %306 : vector<208x16xf32>
    %cst_159 = arith.constant 0.00999999977 : f32
    %308 = vector.broadcast %cst_159 : f32 to vector<208x16xf32>
    %309 = arith.mulf %308, %305 : vector<208x16xf32>
    %310 = arith.select %307, %305, %309 : vector<208x16xi1>, vector<208x16xf32>
    %311 = arith.truncf %310 : vector<208x16xf32> to vector<208x16xbf16>
    %cst_160 = arith.constant dense<0.000000e+00> : vector<112x16xf32>
    %312 = tpu.matmul %61, %311, %cst_160 {dimension_numbers = #tpu.dot_dimension_numbers<[1], [0], [0], [1], [0, 0, 1, 1], [], []>} : vector<112x208xbf16>, vector<208x16xbf16>, vector<112x16xf32> -> vector<112x16xf32>
    %313 = arith.addf %312, %294 : vector<112x16xf32>
    %314 = vector.extract_strided_slice %291 {offsets = [1, 0], sizes = [1, 16], strides = [1, 1]} : vector<2x16xf32> to vector<1x16xf32>
    %315 = vector.broadcast %314 : vector<1x16xf32> to vector<112x16xf32>
    %316 = arith.addf %313, %315 : vector<112x16xf32>
    %317 = arith.truncf %316 : vector<112x16xf32> to vector<112x16xbf16>
    %c0_161 = arith.constant 0 : index
    %c0_162 = arith.constant 0 : index
    %318 = vector.load %arg22[%c0_161, %c0_162] : memref<16x3xbf16, #tpu.memory_space<vmem>>, vector<16x3xbf16>
    %cst_163 = arith.constant dense<0.000000e+00> : vector<112x3xf32>
    %319 = tpu.matmul %317, %318, %cst_163 {dimension_numbers = #tpu.dot_dimension_numbers<[1], [0], [0], [1], [0, 0, 1, 1], [], []>} : vector<112x16xbf16>, vector<16x3xbf16>, vector<112x3xf32> -> vector<112x3xf32>
    %c0_164 = arith.constant 0 : index
    %c0_165 = arith.constant 0 : index
    %320 = vector.load %arg23[%c0_164, %c0_165] : memref<6x1xbf16, #tpu.memory_space<vmem>>, vector<6x1xbf16>
    %c0_166 = arith.constant 0 : index
    %c0_167 = arith.constant 0 : index
    %321 = vector.load %arg24[%c0_166, %c0_167] : memref<2x1xf32, #tpu.memory_space<vmem>>, vector<2x1xf32>
    %322 = vector.extract_strided_slice %319 {offsets = [0, 0], sizes = [112, 1], strides = [1, 1]} : vector<112x3xf32> to vector<112x1xf32>
    %323 = vector.extract_strided_slice %319 {offsets = [0, 1], sizes = [112, 1], strides = [1, 1]} : vector<112x3xf32> to vector<112x1xf32>
    %324 = vector.extract_strided_slice %319 {offsets = [0, 2], sizes = [112, 1], strides = [1, 1]} : vector<112x3xf32> to vector<112x1xf32>
    %325 = arith.truncf %322 : vector<112x1xf32> to vector<112x1xbf16>
    %cst_168 = arith.constant dense<0.000000e+00> : vector<208x1xf32>
    %326 = tpu.matmul %54, %325, %cst_168 {dimension_numbers = #tpu.dot_dimension_numbers<[1], [0], [0], [1], [0, 0, 1, 1], [], []>} : vector<208x112xbf16>, vector<112x1xbf16>, vector<208x1xf32> -> vector<208x1xf32>
    %327 = arith.truncf %323 : vector<112x1xf32> to vector<112x1xbf16>
    %cst_169 = arith.constant dense<0.000000e+00> : vector<208x1xf32>
    %328 = tpu.matmul %48, %327, %cst_169 {dimension_numbers = #tpu.dot_dimension_numbers<[1], [0], [0], [1], [0, 0, 1, 1], [], []>} : vector<208x112xbf16>, vector<112x1xbf16>, vector<208x1xf32> -> vector<208x1xf32>
    %329 = arith.addf %326, %328 : vector<208x1xf32>
    %330 = arith.truncf %9 : vector<208x6xf32> to vector<208x6xbf16>
    %cst_170 = arith.constant dense<0.000000e+00> : vector<208x1xf32>
    %331 = tpu.matmul %330, %320, %cst_170 {dimension_numbers = #tpu.dot_dimension_numbers<[1], [0], [0], [1], [0, 0, 1, 1], [], []>} : vector<208x6xbf16>, vector<6x1xbf16>, vector<208x1xf32> -> vector<208x1xf32>
    %332 = arith.addf %329, %331 : vector<208x1xf32>
    %333 = vector.extract_strided_slice %321 {offsets = [0, 0], sizes = [1, 1], strides = [1, 1]} : vector<2x1xf32> to vector<1x1xf32>
    %334 = vector.broadcast %333 : vector<1x1xf32> to vector<208x1xf32>
    %335 = arith.addf %332, %334 : vector<208x1xf32>
    %cst_171 = arith.constant 0.000000e+00 : f32
    %336 = vector.broadcast %cst_171 : f32 to vector<208x1xf32>
    %337 = arith.cmpf oge, %335, %336 : vector<208x1xf32>
    %cst_172 = arith.constant 0.00999999977 : f32
    %338 = vector.broadcast %cst_172 : f32 to vector<208x1xf32>
    %339 = arith.mulf %338, %335 : vector<208x1xf32>
    %340 = arith.select %337, %335, %339 : vector<208x1xi1>, vector<208x1xf32>
    %341 = arith.truncf %340 : vector<208x1xf32> to vector<208x1xbf16>
    %cst_173 = arith.constant dense<0.000000e+00> : vector<112x1xf32>
    %342 = tpu.matmul %61, %341, %cst_173 {dimension_numbers = #tpu.dot_dimension_numbers<[1], [0], [0], [1], [0, 0, 1, 1], [], []>} : vector<112x208xbf16>, vector<208x1xbf16>, vector<112x1xf32> -> vector<112x1xf32>
    %343 = arith.addf %342, %324 : vector<112x1xf32>
    %344 = vector.extract_strided_slice %321 {offsets = [1, 0], sizes = [1, 1], strides = [1, 1]} : vector<2x1xf32> to vector<1x1xf32>
    %345 = vector.broadcast %344 : vector<1x1xf32> to vector<112x1xf32>
    %346 = arith.addf %343, %345 : vector<112x1xf32>
    %347 = math.tanh %346 : vector<112x1xf32>
    %348 = arith.subf %5, %3 : vector<112x1xf32>
    %cst_174 = arith.constant 1.000000e+00 : f32
    %349 = vector.broadcast %cst_174 : f32 to vector<112x1xf32>
    %350 = arith.addf %347, %349 : vector<112x1xf32>
    %351 = arith.mulf %348, %350 : vector<112x1xf32>
    %cst_175 = arith.constant 5.000000e-01 : f32
    %352 = vector.broadcast %cst_175 : f32 to vector<112x1xf32>
    %353 = arith.mulf %351, %352 : vector<112x1xf32>
    %354 = arith.addf %3, %353 : vector<112x1xf32>
    %c0_176 = arith.constant 0 : index
    %c0_177 = arith.constant 0 : index
    %c64_178 = arith.constant 64 : index
    %355 = vector.load %arg25[%c0_176, %c0_177, %c64_178] : memref<1x112x128xf32, #tpu.memory_space<vmem>>, vector<1x112x1xf32>
    %356 = vector.shape_cast %355 : vector<1x112x1xf32> to vector<112x1xf32>
    %357 = vector.shape_cast %354 : vector<112x1xf32> to vector<1x112x1xf32>
    tpu.vector_store %arg25[%c0_176, %c0_177, %c64_178], %357 {strides = array<i32>} : memref<1x112x128xf32, #tpu.memory_space<vmem>>, vector<1x112x1xf32>,
    return
  }
  func.func @transform_0(%arg0: i32) -> (i32, i32, i32) {
    %c0_i32 = arith.constant 0 : i32
    %c0_i32_0 = arith.constant 0 : i32
    %c0_i32_1 = arith.constant 0 : i32
    return %arg0, %c0_i32, %c0_i32_0 : i32, i32, i32
  }
  func.func @transform_1(%arg0: i32) -> (i32, i32, i32) {
    %c0_i32 = arith.constant 0 : i32
    %c0_i32_0 = arith.constant 0 : i32
    %c0_i32_1 = arith.constant 0 : i32
    return %arg0, %c0_i32, %c0_i32_0 : i32, i32, i32
  }
  func.func @transform_2(%arg0: i32) -> (i32, i32, i32) {
    %c0_i32 = arith.constant 0 : i32
    %c0_i32_0 = arith.constant 0 : i32
    %c0_i32_1 = arith.constant 0 : i32
    return %arg0, %c0_i32, %c0_i32_0 : i32, i32, i32
  }
  func.func @transform_3(%arg0: i32) -> (i32, i32) {
    %c0_i32 = arith.constant 0 : i32
    %c0_i32_0 = arith.constant 0 : i32
    %c0_i32_1 = arith.constant 0 : i32
    return %c0_i32, %c0_i32_0 : i32, i32
  }
  func.func @transform_4(%arg0: i32) -> (i32, i32) {
    %c0_i32 = arith.constant 0 : i32
    %c0_i32_0 = arith.constant 0 : i32
    %c0_i32_1 = arith.constant 0 : i32
    return %c0_i32, %c0_i32_0 : i32, i32
  }
  func.func @transform_5(%arg0: i32) -> (i32, i32) {
    %c0_i32 = arith.constant 0 : i32
    %c0_i32_0 = arith.constant 0 : i32
    %c0_i32_1 = arith.constant 0 : i32
    return %c0_i32, %c0_i32_0 : i32, i32
  }
  func.func @transform_6(%arg0: i32) -> (i32, i32) {
    %c0_i32 = arith.constant 0 : i32
    %c0_i32_0 = arith.constant 0 : i32
    %c0_i32_1 = arith.constant 0 : i32
    return %c0_i32, %c0_i32_0 : i32, i32
  }
  func.func @transform_7(%arg0: i32) -> (i32, i32) {
    %c0_i32 = arith.constant 0 : i32
    %c0_i32_0 = arith.constant 0 : i32
    %c0_i32_1 = arith.constant 0 : i32
    return %c0_i32, %c0_i32_0 : i32, i32
  }
  func.func @transform_8(%arg0: i32) -> (i32, i32) {
    %c0_i32 = arith.constant 0 : i32
    %c0_i32_0 = arith.constant 0 : i32
    %c0_i32_1 = arith.constant 0 : i32
    return %c0_i32, %c0_i32_0 : i32, i32
  }
  func.func @transform_9(%arg0: i32) -> (i32, i32) {
    %c0_i32 = arith.constant 0 : i32
    %c0_i32_0 = arith.constant 0 : i32
    %c0_i32_1 = arith.constant 0 : i32
    return %c0_i32, %c0_i32_0 : i32, i32
  }
  func.func @transform_10(%arg0: i32) -> (i32, i32) {
    %c0_i32 = arith.constant 0 : i32
    %c0_i32_0 = arith.constant 0 : i32
    %c0_i32_1 = arith.constant 0 : i32
    return %c0_i32, %c0_i32_0 : i32, i32
  }
  func.func @transform_11(%arg0: i32) -> (i32, i32) {
    %c0_i32 = arith.constant 0 : i32
    %c0_i32_0 = arith.constant 0 : i32
    %c0_i32_1 = arith.constant 0 : i32
    return %c0_i32, %c0_i32_0 : i32, i32
  }
  func.func @transform_12(%arg0: i32) -> (i32, i32) {
    %c0_i32 = arith.constant 0 : i32
    %c0_i32_0 = arith.constant 0 : i32
    %c0_i32_1 = arith.constant 0 : i32
    return %c0_i32, %c0_i32_0 : i32, i32
  }
  func.func @transform_13(%arg0: i32) -> (i32, i32) {
    %c0_i32 = arith.constant 0 : i32
    %c0_i32_0 = arith.constant 0 : i32
    %c0_i32_1 = arith.constant 0 : i32
    return %c0_i32, %c0_i32_0 : i32, i32
  }
  func.func @transform_14(%arg0: i32) -> (i32, i32) {
    %c0_i32 = arith.constant 0 : i32
    %c0_i32_0 = arith.constant 0 : i32
    %c0_i32_1 = arith.constant 0 : i32
    return %c0_i32, %c0_i32_0 : i32, i32
  }
  func.func @transform_15(%arg0: i32) -> (i32, i32) {
    %c0_i32 = arith.constant 0 : i32
    %c0_i32_0 = arith.constant 0 : i32
    %c0_i32_1 = arith.constant 0 : i32
    return %c0_i32, %c0_i32_0 : i32, i32
  }
  func.func @transform_16(%arg0: i32) -> (i32, i32) {
    %c0_i32 = arith.constant 0 : i32
    %c0_i32_0 = arith.constant 0 : i32
    %c0_i32_1 = arith.constant 0 : i32
    return %c0_i32, %c0_i32_0 : i32, i32
  }
  func.func @transform_17(%arg0: i32) -> (i32, i32) {
    %c0_i32 = arith.constant 0 : i32
    %c0_i32_0 = arith.constant 0 : i32
    %c0_i32_1 = arith.constant 0 : i32
    return %c0_i32, %c0_i32_0 : i32, i32
  }
  func.func @transform_18(%arg0: i32) -> (i32, i32) {
    %c0_i32 = arith.constant 0 : i32
    %c0_i32_0 = arith.constant 0 : i32
    %c0_i32_1 = arith.constant 0 : i32
    return %c0_i32, %c0_i32_0 : i32, i32
  }
  func.func @transform_19(%arg0: i32) -> (i32, i32) {
    %c0_i32 = arith.constant 0 : i32
    %c0_i32_0 = arith.constant 0 : i32
    %c0_i32_1 = arith.constant 0 : i32
    return %c0_i32, %c0_i32_0 : i32, i32
  }
  func.func @transform_20(%arg0: i32) -> (i32, i32) {
    %c0_i32 = arith.constant 0 : i32
    %c0_i32_0 = arith.constant 0 : i32
    %c0_i32_1 = arith.constant 0 : i32
    return %c0_i32, %c0_i32_0 : i32, i32
  }
  func.func @transform_21(%arg0: i32) -> (i32, i32) {
    %c0_i32 = arith.constant 0 : i32
    %c0_i32_0 = arith.constant 0 : i32
    %c0_i32_1 = arith.constant 0 : i32
    return %c0_i32, %c0_i32_0 : i32, i32
  }
  func.func @transform_22(%arg0: i32) -> (i32, i32) {
    %c0_i32 = arith.constant 0 : i32
    %c0_i32_0 = arith.constant 0 : i32
    %c0_i32_1 = arith.constant 0 : i32
    return %c0_i32, %c0_i32_0 : i32, i32
  }
  func.func @transform_23(%arg0: i32) -> (i32, i32) {
    %c0_i32 = arith.constant 0 : i32
    %c0_i32_0 = arith.constant 0 : i32
    %c0_i32_1 = arith.constant 0 : i32
    return %c0_i32, %c0_i32_0 : i32, i32
  }
  func.func @transform_24(%arg0: i32) -> (i32, i32, i32) {
    %c0_i32 = arith.constant 0 : i32
    %c0_i32_0 = arith.constant 0 : i32
    %c0_i32_1 = arith.constant 0 : i32
    return %arg0, %c0_i32, %c0_i32_0 : i32, i32, i32
  }
}

</mosaic_0001>

<llo_original>
// kernel: tpu_custom_call.1
$region0: #{tpu_custom_call.1}
  #allocation0 [shape = 'u32[]', space=smem, size = 0x4, offset = 0x4, fixed_abs, tag = 'smem constant byte address 0x4 - core index']
  #allocation1 [shape = 'u32[144,128]{1,0:T(1,128)}', space=vmem, size = 0x12000, scoped, tag = 'internal scratch']
  %s0 = inlined_call_operand.vmem [shape: f32[2,448,8], index: 0, kind: input, shape index: {}]
  %s1 = inlined_call_operand.vmem [shape: s32[2,288,2], index: 1, kind: input, shape index: {}]
  %s2 = inlined_call_operand.vmem [shape: s32[2,2,208], index: 2, kind: input, shape index: {}]
  %s3 = inlined_call_operand.vmem [shape: bf16[6,48], index: 3, kind: input, shape index: {}]
  %s4 = inlined_call_operand.vmem [shape: bf16[3,16], index: 4, kind: input, shape index: {}]
  %s5 = inlined_call_operand.vmem [shape: f32[2,16], index: 5, kind: input, shape index: {}]
  %s6 = inlined_call_operand.vmem [shape: bf16[16,96], index: 6, kind: input, shape index: {}]
  %s7 = inlined_call_operand.vmem [shape: bf16[3,32], index: 7, kind: input, shape index: {}]
  %s8 = inlined_call_operand.vmem [shape: f32[2,32], index: 8, kind: input, shape index: {}]
  %s9 = inlined_call_operand.vmem [shape: bf16[32,192], index: 9, kind: input, shape index: {}]
  %s10 = inlined_call_operand.vmem [shape: bf16[3,64], index: 10, kind: input, shape index: {}]
  %s11 = inlined_call_operand.vmem [shape: f32[2,64], index: 11, kind: input, shape index: {}]
  %s12 = inlined_call_operand.vmem [shape: bf16[384,896], index: 12, kind: input, shape index: {}]
  %s13 = inlined_call_operand.vmem [shape: f32[1,896], index: 13, kind: input, shape index: {}]
  %s14 = inlined_call_operand.vmem [shape: bf16[64,96], index: 14, kind: input, shape index: {}]
  %s15 = inlined_call_operand.vmem [shape: f32[2,96], index: 15, kind: input, shape index: {}]
  %s16 = inlined_call_operand.vmem [shape: bf16[6,32], index: 16, kind: input, shape index: {}]
  %s17 = inlined_call_operand.vmem [shape: f32[2,32], index: 17, kind: input, shape index: {}]
  %s18 = inlined_call_operand.vmem [shape: bf16[32,48], index: 18, kind: input, shape index: {}]
  %s19 = inlined_call_operand.vmem [shape: bf16[6,16], index: 19, kind: input, shape index: {}]
  %s20 = inlined_call_operand.vmem [shape: f32[2,16], index: 20, kind: input, shape index: {}]
  %s21 = inlined_call_operand.vmem [shape: bf16[16,3], index: 21, kind: input, shape index: {}]
  %s22 = inlined_call_operand.vmem [shape: bf16[6,1], index: 22, kind: input, shape index: {}]
  %s23 = inlined_call_operand.vmem [shape: f32[2,1], index: 23, kind: input, shape index: {}]
  %s24 = inlined_call_operand.hbm [shape: f32[2,112,128], index: 24, kind: output, shape index: {}]
  %s25 = sld [smem:[#allocation0]]
  $region129: #{tpu_custom_call.1} parent=0
    _
  %s27 = ssub.s32 1, %s25
  %s28 = scalar_select 0, %s27, %s25
  $region1: #{tpu_custom_call.1} parent=0
    #allocation2 [shape = 'u8[114688]{0}', space=vmem, size = 0x1c000, scoped, tag = 'output window, operand 0']
    #allocation3 [shape = 's32[2]{0}', space=sflag, size = 0x8, scoped, tag = 'scoped memory for tpu_custom_call.1']
    %29 = vsyncpa [#allocation3], 0
    %s30 = scalar_lea.sflag [#allocation3], 1
    %31 = vsyncpa %s30, 0
    loop: start=0, step=1, limit=4
    $region2: #{tpu_custom_call.1} parent=1 // loop_pre_header
      _
    $region3: #{tpu_custom_call.1} parent=1 // loop_header
      %s33 = sphi 0, %s37
      %p34 = scmp.ge.s32.totalorder %s33, 4
      %s43 = sphi 0, %s45
      %s46 = sphi 0, %s43
      %s47 = sphi 0, %s46
      %s63 = sphi 0, %s47
      %s69 = sphi 0, %s71
      %s72 = sphi 0, %s69
      %s73 = sphi 0, %s72
      %s89 = sphi 0, %s73
      %s95 = sphi 0, %s97
      %s98 = sphi 0, %s95
      %s99 = sphi 0, %s98
      %s115 = sphi 0, %s99
      %s119 = sphi 0, %s119
      %s121 = sphi 0, %s119
      %s122 = sphi 0, %s121
      %s136 = sphi 0, %s122
      %s140 = sphi 0, %s140
      %s142 = sphi 0, %s140
      %s143 = sphi 0, %s142
      %s157 = sphi 0, %s143
      %s161 = sphi 0, %s161
      %s163 = sphi 0, %s161
      %s164 = sphi 0, %s163
      %s178 = sphi 0, %s164
      %s182 = sphi 0, %s182
      %s184 = sphi 0, %s182
      %s185 = sphi 0, %s184
      %s199 = sphi 0, %s185
      %s203 = sphi 0, %s203
      %s205 = sphi 0, %s203
      %s206 = sphi 0, %s205
      %s220 = sphi 0, %s206
      %s224 = sphi 0, %s224
      %s226 = sphi 0, %s224
      %s227 = sphi 0, %s226
      %s241 = sphi 0, %s227
      %s245 = sphi 0, %s245
      %s247 = sphi 0, %s245
      %s248 = sphi 0, %s247
      %s262 = sphi 0, %s248
      %s266 = sphi 0, %s266
      %s268 = sphi 0, %s266
      %s269 = sphi 0, %s268
      %s283 = sphi 0, %s269
      %s287 = sphi 0, %s287
      %s289 = sphi 0, %s287
      %s290 = sphi 0, %s289
      %s304 = sphi 0, %s290
      %s308 = sphi 0, %s308
      %s310 = sphi 0, %s308
      %s311 = sphi 0, %s310
      %s325 = sphi 0, %s311
      %s329 = sphi 0, %s329
      %s331 = sphi 0, %s329
      %s332 = sphi 0, %s331
      %s346 = sphi 0, %s332
      %s350 = sphi 0, %s350
      %s352 = sphi 0, %s350
      %s353 = sphi 0, %s352
      %s367 = sphi 0, %s353
      %s371 = sphi 0, %s371
      %s373 = sphi 0, %s371
      %s374 = sphi 0, %s373
      %s388 = sphi 0, %s374
      %s392 = sphi 0, %s392
      %s394 = sphi 0, %s392
      %s395 = sphi 0, %s394
      %s409 = sphi 0, %s395
      %s413 = sphi 0, %s413
      %s415 = sphi 0, %s413
      %s416 = sphi 0, %s415
      %s430 = sphi 0, %s416
      %s434 = sphi 0, %s434
      %s436 = sphi 0, %s434
      %s437 = sphi 0, %s436
      %s451 = sphi 0, %s437
      %s455 = sphi 0, %s455
      %s457 = sphi 0, %s455
      %s458 = sphi 0, %s457
      %s472 = sphi 0, %s458
      %s476 = sphi 0, %s476
      %s478 = sphi 0, %s476
      %s479 = sphi 0, %s478
      %s493 = sphi 0, %s479
      %s497 = sphi 0, %s497
      %s499 = sphi 0, %s497
      %s500 = sphi 0, %s499
      %s514 = sphi 0, %s500
      %s518 = sphi 0, %s518
      %s520 = sphi 0, %s518
      %s521 = sphi 0, %s520
      %s535 = sphi 0, %s521
      %s539 = sphi 0, %s539
      %s541 = sphi 0, %s539
      %s542 = sphi 0, %s541
      %s556 = sphi 0, %s542
      %s562 = sphi 0, %s564
      %s565 = sphi 0, %s562
      %s566 = sphi 0, %s565
      %s582 = sphi 0, %s566
    $region4: #{tpu_custom_call.1} parent=1 // loop_header_branch
      %36 = sbr.rel (%p34) target = $region8
    $region5: #{tpu_custom_call.1} parent=1 // loop_body
      %s38 = ssub.s32 %s33, 1
      %s39 = ssub.s32 %s33, 2
      %s40 = sadd.s32 %s33, 1
      %s41 = ssub.s32 %s33, %s40
      %p42 = scmp.eq.s32.totalorder %s41, 0
      %s44 = sadd.s32 %s43, 1
      %s45 = scalar_select %p42, %s43, %s44
      %p48 = pneg %p42
      %p49 = scmp.eq.s32.totalorder %s33, 1
      %p50 = por %p48, %p49
      %p51 = scmp.ne.s32.totalorder %s43, %s46
      %p52 = scmp.eq.s32.totalorder %s33, 0
      %p53 = por %p51, %p52
      %p54 = scmp.ne.s32.totalorder %s43, %s46
      %p55 = scmp.eq.s32.totalorder %s38, 1
      %p56 = por %p54, %p55
      %p57 = scmp.ne.s32.totalorder %s46, %s47
      %p58 = scmp.eq.s32.totalorder %s38, 0
      %p59 = por %p57, %p58
      %p60 = scmp.ne.s32.totalorder %s46, %s47
      %p61 = scmp.eq.s32.totalorder %s39, 1
      %p62 = por %p60, %p61
      %p64 = scmp.ne.s32.totalorder %s47, %s63
      %p65 = scmp.eq.s32.totalorder %s39, 0
      %p66 = por %p64, %p65
      %s67 = ssub.s32 %s33, %s40
      %p68 = scmp.eq.s32.totalorder %s67, 0
      %s70 = sadd.s32 %s69, 1
      %s71 = scalar_select %p68, %s69, %s70
      %p74 = pneg %p68
      %p75 = scmp.eq.s32.totalorder %s33, 1
      %p76 = por %p74, %p75
      %p77 = scmp.ne.s32.totalorder %s69, %s72
      %p78 = scmp.eq.s32.totalorder %s33, 0
      %p79 = por %p77, %p78
      %p80 = scmp.ne.s32.totalorder %s69, %s72
      %p81 = scmp.eq.s32.totalorder %s38, 1
      %p82 = por %p80, %p81
      %p83 = scmp.ne.s32.totalorder %s72, %s73
      %p84 = scmp.eq.s32.totalorder %s38, 0
      %p85 = por %p83, %p84
      %p86 = scmp.ne.s32.totalorder %s72, %s73
      %p87 = scmp.eq.s32.totalorder %s39, 1
      %p88 = por %p86, %p87
      %p90 = scmp.ne.s32.totalorder %s73, %s89
      %p91 = scmp.eq.s32.totalorder %s39, 0
      %p92 = por %p90, %p91
      %s93 = ssub.s32 %s33, %s40
      %p94 = scmp.eq.s32.totalorder %s93, 0
      %s96 = sadd.s32 %s95, 1
      %s97 = scalar_select %p94, %s95, %s96
      %p100 = pneg %p94
      %p101 = scmp.eq.s32.totalorder %s33, 1
      %p102 = por %p100, %p101
      %p103 = scmp.ne.s32.totalorder %s95, %s98
      %p104 = scmp.eq.s32.totalorder %s33, 0
      %p105 = por %p103, %p104
      %p106 = scmp.ne.s32.totalorder %s95, %s98
      %p107 = scmp.eq.s32.totalorder %s38, 1
      %p108 = por %p106, %p107
      %p109 = scmp.ne.s32.totalorder %s98, %s99
      %p110 = scmp.eq.s32.totalorder %s38, 0
      %p111 = por %p109, %p110
      %p112 = scmp.ne.s32.totalorder %s98, %s99
      %p113 = scmp.eq.s32.totalorder %s39, 1
      %p114 = por %p112, %p113
      %p116 = scmp.ne.s32.totalorder %s99, %s115
      %p117 = scmp.eq.s32.totalorder %s39, 0
      %p118 = por %p116, %p117
      %s120 = sadd.s32 %s119, 1
      %p123 = scmp.eq.s32.totalorder %s33, 1
      %p124 = scmp.ne.s32.totalorder %s119, %s121
      %p125 = scmp.eq.s32.totalorder %s33, 0
      %p126 = por %p124, %p125
      %p127 = scmp.ne.s32.totalorder %s119, %s121
      %p128 = scmp.eq.s32.totalorder %s38, 1
      %p129 = por %p127, %p128
      %p130 = scmp.ne.s32.totalorder %s121, %s122
      %p131 = scmp.eq.s32.totalorder %s38, 0
      %p132 = por %p130, %p131
      %p133 = scmp.ne.s32.totalorder %s121, %s122
      %p134 = scmp.eq.s32.totalorder %s39, 1
      %p135 = por %p133, %p134
      %p137 = scmp.ne.s32.totalorder %s122, %s136
      %p138 = scmp.eq.s32.totalorder %s39, 0
      %p139 = por %p137, %p138
      %s141 = sadd.s32 %s140, 1
      %p144 = scmp.eq.s32.totalorder %s33, 1
      %p145 = scmp.ne.s32.totalorder %s140, %s142
      %p146 = scmp.eq.s32.totalorder %s33, 0
      %p147 = por %p145, %p146
      %p148 = scmp.ne.s32.totalorder %s140, %s142
      %p149 = scmp.eq.s32.totalorder %s38, 1
      %p150 = por %p148, %p149
      %p151 = scmp.ne.s32.totalorder %s142, %s143
      %p152 = scmp.eq.s32.totalorder %s38, 0
      %p153 = por %p151, %p152
      %p154 = scmp.ne.s32.totalorder %s142, %s143
      %p155 = scmp.eq.s32.totalorder %s39, 1
      %p156 = por %p154, %p155
      %p158 = scmp.ne.s32.totalorder %s143, %s157
      %p159 = scmp.eq.s32.totalorder %s39, 0
      %p160 = por %p158, %p159
      %s162 = sadd.s32 %s161, 1
      %p165 = scmp.eq.s32.totalorder %s33, 1
      %p166 = scmp.ne.s32.totalorder %s161, %s163
      %p167 = scmp.eq.s32.totalorder %s33, 0
      %p168 = por %p166, %p167
      %p169 = scmp.ne.s32.totalorder %s161, %s163
      %p170 = scmp.eq.s32.totalorder %s38, 1
      %p171 = por %p169, %p170
      %p172 = scmp.ne.s32.totalorder %s163, %s164
      %p173 = scmp.eq.s32.totalorder %s38, 0
      %p174 = por %p172, %p173
      %p175 = scmp.ne.s32.totalorder %s163, %s164
      %p176 = scmp.eq.s32.totalorder %s39, 1
      %p177 = por %p175, %p176
      %p179 = scmp.ne.s32.totalorder %s164, %s178
      %p180 = scmp.eq.s32.totalorder %s39, 0
      %p181 = por %p179, %p180
      %s183 = sadd.s32 %s182, 1
      %p186 = scmp.eq.s32.totalorder %s33, 1
      %p187 = scmp.ne.s32.totalorder %s182, %s184
      %p188 = scmp.eq.s32.totalorder %s33, 0
      %p189 = por %p187, %p188
      %p190 = scmp.ne.s32.totalorder %s182, %s184
      %p191 = scmp.eq.s32.totalorder %s38, 1
      %p192 = por %p190, %p191
      %p193 = scmp.ne.s32.totalorder %s184, %s185
      %p194 = scmp.eq.s32.totalorder %s38, 0
      %p195 = por %p193, %p194
      %p196 = scmp.ne.s32.totalorder %s184, %s185
      %p197 = scmp.eq.s32.totalorder %s39, 1
      %p198 = por %p196, %p197
      %p200 = scmp.ne.s32.totalorder %s185, %s199
      %p201 = scmp.eq.s32.totalorder %s39, 0
      %p202 = por %p200, %p201
      %s204 = sadd.s32 %s203, 1
      %p207 = scmp.eq.s32.totalorder %s33, 1
      %p208 = scmp.ne.s32.totalorder %s203, %s205
      %p209 = scmp.eq.s32.totalorder %s33, 0
      %p210 = por %p208, %p209
      %p211 = scmp.ne.s32.totalorder %s203, %s205
      %p212 = scmp.eq.s32.totalorder %s38, 1
      %p213 = por %p211, %p212
      %p214 = scmp.ne.s32.totalorder %s205, %s206
      %p215 = scmp.eq.s32.totalorder %s38, 0
      %p216 = por %p214, %p215
      %p217 = scmp.ne.s32.totalorder %s205, %s206
      %p218 = scmp.eq.s32.totalorder %s39, 1
      %p219 = por %p217, %p218
      %p221 = scmp.ne.s32.totalorder %s206, %s220
      %p222 = scmp.eq.s32.totalorder %s39, 0
      %p223 = por %p221, %p222
      %s225 = sadd.s32 %s224, 1
      %p228 = scmp.eq.s32.totalorder %s33, 1
      %p229 = scmp.ne.s32.totalorder %s224, %s226
      %p230 = scmp.eq.s32.totalorder %s33, 0
      %p231 = por %p229, %p230
      %p232 = scmp.ne.s32.totalorder %s224, %s226
      %p233 = scmp.eq.s32.totalorder %s38, 1
      %p234 = por %p232, %p233
      %p235 = scmp.ne.s32.totalorder %s226, %s227
      %p236 = scmp.eq.s32.totalorder %s38, 0
      %p237 = por %p235, %p236
      %p238 = scmp.ne.s32.totalorder %s226, %s227
      %p239 = scmp.eq.s32.totalorder %s39, 1
      %p240 = por %p238, %p239
      %p242 = scmp.ne.s32.totalorder %s227, %s241
      %p243 = scmp.eq.s32.totalorder %s39, 0
      %p244 = por %p242, %p243
      %s246 = sadd.s32 %s245, 1
      %p249 = scmp.eq.s32.totalorder %s33, 1
      %p250 = scmp.ne.s32.totalorder %s245, %s247
      %p251 = scmp.eq.s32.totalorder %s33, 0
      %p252 = por %p250, %p251
      %p253 = scmp.ne.s32.totalorder %s245, %s247
      %p254 = scmp.eq.s32.totalorder %s38, 1
      %p255 = por %p253, %p254
      %p256 = scmp.ne.s32.totalorder %s247, %s248
      %p257 = scmp.eq.s32.totalorder %s38, 0
      %p258 = por %p256, %p257
      %p259 = scmp.ne.s32.totalorder %s247, %s248
      %p260 = scmp.eq.s32.totalorder %s39, 1
      %p261 = por %p259, %p260
      %p263 = scmp.ne.s32.totalorder %s248, %s262
      %p264 = scmp.eq.s32.totalorder %s39, 0
      %p265 = por %p263, %p264
      %s267 = sadd.s32 %s266, 1
      %p270 = scmp.eq.s32.totalorder %s33, 1
      %p271 = scmp.ne.s32.totalorder %s266, %s268
      %p272 = scmp.eq.s32.totalorder %s33, 0
      %p273 = por %p271, %p272
      %p274 = scmp.ne.s32.totalorder %s266, %s268
      %p275 = scmp.eq.s32.totalorder %s38, 1
      %p276 = por %p274, %p275
      %p277 = scmp.ne.s32.totalorder %s268, %s269
      %p278 = scmp.eq.s32.totalorder %s38, 0
      %p279 = por %p277, %p278
      %p280 = scmp.ne.s32.totalorder %s268, %s269
      %p281 = scmp.eq.s32.totalorder %s39, 1
      %p282 = por %p280, %p281
      %p284 = scmp.ne.s32.totalorder %s269, %s283
      %p285 = scmp.eq.s32.totalorder %s39, 0
      %p286 = por %p284, %p285
      %s288 = sadd.s32 %s287, 1
      %p291 = scmp.eq.s32.totalorder %s33, 1
      %p292 = scmp.ne.s32.totalorder %s287, %s289
      %p293 = scmp.eq.s32.totalorder %s33, 0
      %p294 = por %p292, %p293
      %p295 = scmp.ne.s32.totalorder %s287, %s289
      %p296 = scmp.eq.s32.totalorder %s38, 1
      %p297 = por %p295, %p296
      %p298 = scmp.ne.s32.totalorder %s289, %s290
      %p299 = scmp.eq.s32.totalorder %s38, 0
      %p300 = por %p298, %p299
      %p301 = scmp.ne.s32.totalorder %s289, %s290
      %p302 = scmp.eq.s32.totalorder %s39, 1
      %p303 = por %p301, %p302
      %p305 = scmp.ne.s32.totalorder %s290, %s304
      %p306 = scmp.eq.s32.totalorder %s39, 0
      %p307 = por %p305, %p306
      %s309 = sadd.s32 %s308, 1
      %p312 = scmp.eq.s32.totalorder %s33, 1
      %p313 = scmp.ne.s32.totalorder %s308, %s310
      %p314 = scmp.eq.s32.totalorder %s33, 0
      %p315 = por %p313, %p314
      %p316 = scmp.ne.s32.totalorder %s308, %s310
      %p317 = scmp.eq.s32.totalorder %s38, 1
      %p318 = por %p316, %p317
      %p319 = scmp.ne.s32.totalorder %s310, %s311
      %p320 = scmp.eq.s32.totalorder %s38, 0
      %p321 = por %p319, %p320
      %p322 = scmp.ne.s32.totalorder %s310, %s311
      %p323 = scmp.eq.s32.totalorder %s39, 1
      %p324 = por %p322, %p323
      %p326 = scmp.ne.s32.totalorder %s311, %s325
      %p327 = scmp.eq.s32.totalorder %s39, 0
      %p328 = por %p326, %p327
      %s330 = sadd.s32 %s329, 1
      %p333 = scmp.eq.s32.totalorder %s33, 1
      %p334 = scmp.ne.s32.totalorder %s329, %s331
      %p335 = scmp.eq.s32.totalorder %s33, 0
      %p336 = por %p334, %p335
      %p337 = scmp.ne.s32.totalorder %s329, %s331
      %p338 = scmp.eq.s32.totalorder %s38, 1
      %p339 = por %p337, %p338
      %p340 = scmp.ne.s32.totalorder %s331, %s332
      %p341 = scmp.eq.s32.totalorder %s38, 0
      %p342 = por %p340, %p341
      %p343 = scmp.ne.s32.totalorder %s331, %s332
      %p344 = scmp.eq.s32.totalorder %s39, 1
      %p345 = por %p343, %p344
      %p347 = scmp.ne.s32.totalorder %s332, %s346
      %p348 = scmp.eq.s32.totalorder %s39, 0
      %p349 = por %p347, %p348
      %s351 = sadd.s32 %s350, 1
      %p354 = scmp.eq.s32.totalorder %s33, 1
      %p355 = scmp.ne.s32.totalorder %s350, %s352
      %p356 = scmp.eq.s32.totalorder %s33, 0
      %p357 = por %p355, %p356
      %p358 = scmp.ne.s32.totalorder %s350, %s352
      %p359 = scmp.eq.s32.totalorder %s38, 1
      %p360 = por %p358, %p359
      %p361 = scmp.ne.s32.totalorder %s352, %s353
      %p362 = scmp.eq.s32.totalorder %s38, 0
      %p363 = por %p361, %p362
      %p364 = scmp.ne.s32.totalorder %s352, %s353
      %p365 = scmp.eq.s32.totalorder %s39, 1
      %p366 = por %p364, %p365
      %p368 = scmp.ne.s32.totalorder %s353, %s367
      %p369 = scmp.eq.s32.totalorder %s39, 0
      %p370 = por %p368, %p369
      %s372 = sadd.s32 %s371, 1
      %p375 = scmp.eq.s32.totalorder %s33, 1
      %p376 = scmp.ne.s32.totalorder %s371, %s373
      %p377 = scmp.eq.s32.totalorder %s33, 0
      %p378 = por %p376, %p377
      %p379 = scmp.ne.s32.totalorder %s371, %s373
      %p380 = scmp.eq.s32.totalorder %s38, 1
      %p381 = por %p379, %p380
      %p382 = scmp.ne.s32.totalorder %s373, %s374
      %p383 = scmp.eq.s32.totalorder %s38, 0
      %p384 = por %p382, %p383
      %p385 = scmp.ne.s32.totalorder %s373, %s374
      %p386 = scmp.eq.s32.totalorder %s39, 1
      %p387 = por %p385, %p386
      %p389 = scmp.ne.s32.totalorder %s374, %s388
      %p390 = scmp.eq.s32.totalorder %s39, 0
      %p391 = por %p389, %p390
      %s393 = sadd.s32 %s392, 1
      %p396 = scmp.eq.s32.totalorder %s33, 1
      %p397 = scmp.ne.s32.totalorder %s392, %s394
      %p398 = scmp.eq.s32.totalorder %s33, 0
      %p399 = por %p397, %p398
      %p400 = scmp.ne.s32.totalorder %s392, %s394
      %p401 = scmp.eq.s32.totalorder %s38, 1
      %p402 = por %p400, %p401
      %p403 = scmp.ne.s32.totalorder %s394, %s395
      %p404 = scmp.eq.s32.totalorder %s38, 0
      %p405 = por %p403, %p404
      %p406 = scmp.ne.s32.totalorder %s394, %s395
      %p407 = scmp.eq.s32.totalorder %s39, 1
      %p408 = por %p406, %p407
      %p410 = scmp.ne.s32.totalorder %s395, %s409
      %p411 = scmp.eq.s32.totalorder %s39, 0
      %p412 = por %p410, %p411
      %s414 = sadd.s32 %s413, 1
      %p417 = scmp.eq.s32.totalorder %s33, 1
      %p418 = scmp.ne.s32.totalorder %s413, %s415
      %p419 = scmp.eq.s32.totalorder %s33, 0
      %p420 = por %p418, %p419
      %p421 = scmp.ne.s32.totalorder %s413, %s415
      %p422 = scmp.eq.s32.totalorder %s38, 1
      %p423 = por %p421, %p422
      %p424 = scmp.ne.s32.totalorder %s415, %s416
      %p425 = scmp.eq.s32.totalorder %s38, 0
      %p426 = por %p424, %p425
      %p427 = scmp.ne.s32.totalorder %s415, %s416
      %p428 = scmp.eq.s32.totalorder %s39, 1
      %p429 = por %p427, %p428
      %p431 = scmp.ne.s32.totalorder %s416, %s430
      %p432 = scmp.eq.s32.totalorder %s39, 0
      %p433 = por %p431, %p432
      %s435 = sadd.s32 %s434, 1
      %p438 = scmp.eq.s32.totalorder %s33, 1
      %p439 = scmp.ne.s32.totalorder %s434, %s436
      %p440 = scmp.eq.s32.totalorder %s33, 0
      %p441 = por %p439, %p440
      %p442 = scmp.ne.s32.totalorder %s434, %s436
      %p443 = scmp.eq.s32.totalorder %s38, 1
      %p444 = por %p442, %p443
      %p445 = scmp.ne.s32.totalorder %s436, %s437
      %p446 = scmp.eq.s32.totalorder %s38, 0
      %p447 = por %p445, %p446
      %p448 = scmp.ne.s32.totalorder %s436, %s437
      %p449 = scmp.eq.s32.totalorder %s39, 1
      %p450 = por %p448, %p449
      %p452 = scmp.ne.s32.totalorder %s437, %s451
      %p453 = scmp.eq.s32.totalorder %s39, 0
      %p454 = por %p452, %p453
      %s456 = sadd.s32 %s455, 1
      %p459 = scmp.eq.s32.totalorder %s33, 1
      %p460 = scmp.ne.s32.totalorder %s455, %s457
      %p461 = scmp.eq.s32.totalorder %s33, 0
      %p462 = por %p460, %p461
      %p463 = scmp.ne.s32.totalorder %s455, %s457
      %p464 = scmp.eq.s32.totalorder %s38, 1
      %p465 = por %p463, %p464
      %p466 = scmp.ne.s32.totalorder %s457, %s458
      %p467 = scmp.eq.s32.totalorder %s38, 0
      %p468 = por %p466, %p467
      %p469 = scmp.ne.s32.totalorder %s457, %s458
      %p470 = scmp.eq.s32.totalorder %s39, 1
      %p471 = por %p469, %p470
      %p473 = scmp.ne.s32.totalorder %s458, %s472
      %p474 = scmp.eq.s32.totalorder %s39, 0
      %p475 = por %p473, %p474
      %s477 = sadd.s32 %s476, 1
      %p480 = scmp.eq.s32.totalorder %s33, 1
      %p481 = scmp.ne.s32.totalorder %s476, %s478
      %p482 = scmp.eq.s32.totalorder %s33, 0
      %p483 = por %p481, %p482
      %p484 = scmp.ne.s32.totalorder %s476, %s478
      %p485 = scmp.eq.s32.totalorder %s38, 1
      %p486 = por %p484, %p485
      %p487 = scmp.ne.s32.totalorder %s478, %s479
      %p488 = scmp.eq.s32.totalorder %s38, 0
      %p489 = por %p487, %p488
      %p490 = scmp.ne.s32.totalorder %s478, %s479
      %p491 = scmp.eq.s32.totalorder %s39, 1
      %p492 = por %p490, %p491
      %p494 = scmp.ne.s32.totalorder %s479, %s493
      %p495 = scmp.eq.s32.totalorder %s39, 0
      %p496 = por %p494, %p495
      %s498 = sadd.s32 %s497, 1
      %p501 = scmp.eq.s32.totalorder %s33, 1
      %p502 = scmp.ne.s32.totalorder %s497, %s499
      %p503 = scmp.eq.s32.totalorder %s33, 0
      %p504 = por %p502, %p503
      %p505 = scmp.ne.s32.totalorder %s497, %s499
      %p506 = scmp.eq.s32.totalorder %s38, 1
      %p507 = por %p505, %p506
      %p508 = scmp.ne.s32.totalorder %s499, %s500
      %p509 = scmp.eq.s32.totalorder %s38, 0
      %p510 = por %p508, %p509
      %p511 = scmp.ne.s32.totalorder %s499, %s500
      %p512 = scmp.eq.s32.totalorder %s39, 1
      %p513 = por %p511, %p512
      %p515 = scmp.ne.s32.totalorder %s500, %s514
      %p516 = scmp.eq.s32.totalorder %s39, 0
      %p517 = por %p515, %p516
      %s519 = sadd.s32 %s518, 1
      %p522 = scmp.eq.s32.totalorder %s33, 1
      %p523 = scmp.ne.s32.totalorder %s518, %s520
      %p524 = scmp.eq.s32.totalorder %s33, 0
      %p525 = por %p523, %p524
      %p526 = scmp.ne.s32.totalorder %s518, %s520
      %p527 = scmp.eq.s32.totalorder %s38, 1
      %p528 = por %p526, %p527
      %p529 = scmp.ne.s32.totalorder %s520, %s521
      %p530 = scmp.eq.s32.totalorder %s38, 0
      %p531 = por %p529, %p530
      %p532 = scmp.ne.s32.totalorder %s520, %s521
      %p533 = scmp.eq.s32.totalorder %s39, 1
      %p534 = por %p532, %p533
      %p536 = scmp.ne.s32.totalorder %s521, %s535
      %p537 = scmp.eq.s32.totalorder %s39, 0
      %p538 = por %p536, %p537
      %s540 = sadd.s32 %s539, 1
      %p543 = scmp.eq.s32.totalorder %s33, 1
      %p544 = scmp.ne.s32.totalorder %s539, %s541
      %p545 = scmp.eq.s32.totalorder %s33, 0
      %p546 = por %p544, %p545
      %p547 = scmp.ne.s32.totalorder %s539, %s541
      %p548 = scmp.eq.s32.totalorder %s38, 1
      %p549 = por %p547, %p548
      %p550 = scmp.ne.s32.totalorder %s541, %s542
      %p551 = scmp.eq.s32.totalorder %s38, 0
      %p552 = por %p550, %p551
      %p553 = scmp.ne.s32.totalorder %s541, %s542
      %p554 = scmp.eq.s32.totalorder %s39, 1
      %p555 = por %p553, %p554
      %p557 = scmp.ne.s32.totalorder %s542, %s556
      %p558 = scmp.eq.s32.totalorder %s39, 0
      %p559 = por %p557, %p558
      %s560 = ssub.s32 %s33, %s40
      %p561 = scmp.eq.s32.totalorder %s560, 0
      %s563 = sadd.s32 %s562, 1
      %s564 = scalar_select %p561, %s562, %s563
      %p567 = pneg %p561
      %p568 = scmp.eq.s32.totalorder %s33, 1
      %p569 = por %p567, %p568
      %p570 = scmp.ne.s32.totalorder %s562, %s565
      %p571 = scmp.eq.s32.totalorder %s33, 0
      %p572 = por %p570, %p571
      %p573 = scmp.ne.s32.totalorder %s562, %s565
      %p574 = scmp.eq.s32.totalorder %s38, 1
      %p575 = por %p573, %p574
      %p576 = scmp.ne.s32.totalorder %s565, %s566
      %p577 = scmp.eq.s32.totalorder %s38, 0
      %p578 = por %p576, %p577
      %p579 = scmp.ne.s32.totalorder %s565, %s566
      %p580 = scmp.eq.s32.totalorder %s39, 1
      %p581 = por %p579, %p580
      %p583 = scmp.ne.s32.totalorder %s566, %s582
      %p584 = scmp.eq.s32.totalorder %s39, 0
      %p585 = por %p583, %p584
      %p586 = scmp.le.s32.totalorder 1, %s33
      %p587 = scmp.lt.s32.totalorder %s33, 3
      %p588 = pnand %p586, %p587
      %p589 = pneg %p588
      // Predicated region
      $region9: #{tpu_custom_call.1} parent=5 // pred_check
        _
      $region10: #{tpu_custom_call.1} parent=5 // pred_check_branch
        %591 = sbr.rel (%p588) target = $region12
      $region11: #{tpu_custom_call.1} parent=5 // pred_region
        %s592 = ssub.s32 %s33, 1
        // Predicated region
        $region13: #{tpu_custom_call.1} parent=11 // pred_check
          %p593 = pneg %p132
        $region14: #{tpu_custom_call.1} parent=11 // pred_check_branch
          %595 = sbr.rel (%p593) target = $region16
        $region15: #{tpu_custom_call.1} parent=11 // pred_region
          _
        $region16: #{tpu_custom_call.1} parent=11 // pred_fallthru
          _
        // Predicated region
        $region17: #{tpu_custom_call.1} parent=11 // pred_check
          %p596 = pneg %p153
        $region18: #{tpu_custom_call.1} parent=11 // pred_check_branch
          %598 = sbr.rel (%p596) target = $region20
        $region19: #{tpu_custom_call.1} parent=11 // pred_region
          _
        $region20: #{tpu_custom_call.1} parent=11 // pred_fallthru
          _
        // Predicated region
        $region21: #{tpu_custom_call.1} parent=11 // pred_check
          %p599 = pneg %p174
        $region22: #{tpu_custom_call.1} parent=11 // pred_check_branch
          %601 = sbr.rel (%p599) target = $region24
        $region23: #{tpu_custom_call.1} parent=11 // pred_region
          _
        $region24: #{tpu_custom_call.1} parent=11 // pred_fallthru
          _
        // Predicated region
        $region25: #{tpu_custom_call.1} parent=11 // pred_check
          %p602 = pneg %p195
        $region26: #{tpu_custom_call.1} parent=11 // pred_check_branch
          %604 = sbr.rel (%p602) target = $region28
        $region27: #{tpu_custom_call.1} parent=11 // pred_region
          _
        $region28: #{tpu_custom_call.1} parent=11 // pred_fallthru
          _
        // Predicated region
        $region29: #{tpu_custom_call.1} parent=11 // pred_check
          %p605 = pneg %p216
        $region30: #{tpu_custom_call.1} parent=11 // pred_check_branch
          %607 = sbr.rel (%p605) target = $region32
        $region31: #{tpu_custom_call.1} parent=11 // pred_region
          _
        $region32: #{tpu_custom_call.1} parent=11 // pred_fallthru
          _
        // Predicated region
        $region33: #{tpu_custom_call.1} parent=11 // pred_check
          %p608 = pneg %p237
        $region34: #{tpu_custom_call.1} parent=11 // pred_check_branch
          %610 = sbr.rel (%p608) target = $region36
        $region35: #{tpu_custom_call.1} parent=11 // pred_region
          _
        $region36: #{tpu_custom_call.1} parent=11 // pred_fallthru
          _
        // Predicated region
        $region37: #{tpu_custom_call.1} parent=11 // pred_check
          %p611 = pneg %p258
        $region38: #{tpu_custom_call.1} parent=11 // pred_check_branch
          %613 = sbr.rel (%p611) target = $region40
        $region39: #{tpu_custom_call.1} parent=11 // pred_region
          _
        $region40: #{tpu_custom_call.1} parent=11 // pred_fallthru
          _
        // Predicated region
        $region41: #{tpu_custom_call.1} parent=11 // pred_check
          %p614 = pneg %p279
        $region42: #{tpu_custom_call.1} parent=11 // pred_check_branch
          %616 = sbr.rel (%p614) target = $region44
        $region43: #{tpu_custom_call.1} parent=11 // pred_region
          _
        $region44: #{tpu_custom_call.1} parent=11 // pred_fallthru
          _
        // Predicated region
        $region45: #{tpu_custom_call.1} parent=11 // pred_check
          %p617 = pneg %p300
        $region46: #{tpu_custom_call.1} parent=11 // pred_check_branch
          %619 = sbr.rel (%p617) target = $region48
        $region47: #{tpu_custom_call.1} parent=11 // pred_region
          _
        $region48: #{tpu_custom_call.1} parent=11 // pred_fallthru
          _
        // Predicated region
        $region49: #{tpu_custom_call.1} parent=11 // pred_check
          %p620 = pneg %p321
        $region50: #{tpu_custom_call.1} parent=11 // pred_check_branch
          %622 = sbr.rel (%p620) target = $region52
        $region51: #{tpu_custom_call.1} parent=11 // pred_region
          _
        $region52: #{tpu_custom_call.1} parent=11 // pred_fallthru
          _
        // Predicated region
        $region53: #{tpu_custom_call.1} parent=11 // pred_check
          %p623 = pneg %p342
        $region54: #{tpu_custom_call.1} parent=11 // pred_check_branch
          %625 = sbr.rel (%p623) target = $region56
        $region55: #{tpu_custom_call.1} parent=11 // pred_region
          _
        $region56: #{tpu_custom_call.1} parent=11 // pred_fallthru
          _
        // Predicated region
        $region57: #{tpu_custom_call.1} parent=11 // pred_check
          %p626 = pneg %p363
        $region58: #{tpu_custom_call.1} parent=11 // pred_check_branch
          %628 = sbr.rel (%p626) target = $region60
        $region59: #{tpu_custom_call.1} parent=11 // pred_region
          _
        $region60: #{tpu_custom_call.1} parent=11 // pred_fallthru
          _
        // Predicated region
        $region61: #{tpu_custom_call.1} parent=11 // pred_check
          %p629 = pneg %p384
        $region62: #{tpu_custom_call.1} parent=11 // pred_check_branch
          %631 = sbr.rel (%p629) target = $region64
        $region63: #{tpu_custom_call.1} parent=11 // pred_region
          _
        $region64: #{tpu_custom_call.1} parent=11 // pred_fallthru
          _
        // Predicated region
        $region65: #{tpu_custom_call.1} parent=11 // pred_check
          %p632 = pneg %p405
        $region66: #{tpu_custom_call.1} parent=11 // pred_check_branch
          %634 = sbr.rel (%p632) target = $region68
        $region67: #{tpu_custom_call.1} parent=11 // pred_region
          _
        $region68: #{tpu_custom_call.1} parent=11 // pred_fallthru
          _
        // Predicated region
        $region69: #{tpu_custom_call.1} parent=11 // pred_check
          %p635 = pneg %p426
        $region70: #{tpu_custom_call.1} parent=11 // pred_check_branch
          %637 = sbr.rel (%p635) target = $region72
        $region71: #{tpu_custom_call.1} parent=11 // pred_region
          _
        $region72: #{tpu_custom_call.1} parent=11 // pred_fallthru
          _
        // Predicated region
        $region73: #{tpu_custom_call.1} parent=11 // pred_check
          %p638 = pneg %p447
        $region74: #{tpu_custom_call.1} parent=11 // pred_check_branch
          %640 = sbr.rel (%p638) target = $region76
        $region75: #{tpu_custom_call.1} parent=11 // pred_region
          _
        $region76: #{tpu_custom_call.1} parent=11 // pred_fallthru
          _
        // Predicated region
        $region77: #{tpu_custom_call.1} parent=11 // pred_check
          %p641 = pneg %p468
        $region78: #{tpu_custom_call.1} parent=11 // pred_check_branch
          %643 = sbr.rel (%p641) target = $region80
        $region79: #{tpu_custom_call.1} parent=11 // pred_region
          _
        $region80: #{tpu_custom_call.1} parent=11 // pred_fallthru
          _
        // Predicated region
        $region81: #{tpu_custom_call.1} parent=11 // pred_check
          %p644 = pneg %p489
        $region82: #{tpu_custom_call.1} parent=11 // pred_check_branch
          %646 = sbr.rel (%p644) target = $region84
        $region83: #{tpu_custom_call.1} parent=11 // pred_region
          _
        $region84: #{tpu_custom_call.1} parent=11 // pred_fallthru
          _
        // Predicated region
        $region85: #{tpu_custom_call.1} parent=11 // pred_check
          %p647 = pneg %p510
        $region86: #{tpu_custom_call.1} parent=11 // pred_check_branch
          %649 = sbr.rel (%p647) target = $region88
        $region87: #{tpu_custom_call.1} parent=11 // pred_region
          _
        $region88: #{tpu_custom_call.1} parent=11 // pred_fallthru
          _
        // Predicated region
        $region89: #{tpu_custom_call.1} parent=11 // pred_check
          %p650 = pneg %p531
        $region90: #{tpu_custom_call.1} parent=11 // pred_check_branch
          %652 = sbr.rel (%p650) target = $region92
        $region91: #{tpu_custom_call.1} parent=11 // pred_region
          _
        $region92: #{tpu_custom_call.1} parent=11 // pred_fallthru
          _
        // Predicated region
        $region93: #{tpu_custom_call.1} parent=11 // pred_check
          %p653 = pneg %p552
        $region94: #{tpu_custom_call.1} parent=11 // pred_check_branch
          %655 = sbr.rel (%p653) target = $region96
        $region95: #{tpu_custom_call.1} parent=11 // pred_region
          _
        $region96: #{tpu_custom_call.1} parent=11 // pred_fallthru
          _
      $region12: #{tpu_custom_call.1} parent=5 // pred_fallthru
        _
      %p656 = scmp.lt.s32.totalorder %s33, 2
      // Predicated region
      $region97: #{tpu_custom_call.1} parent=5 // pred_check
        %p657 = pneg %p656
      $region98: #{tpu_custom_call.1} parent=5 // pred_check_branch
        %659 = sbr.rel (%p657) target = $region100
      $region99: #{tpu_custom_call.1} parent=5 // pred_region
        // Predicated region
        $region101: #{tpu_custom_call.1} parent=99 // pred_check
          %p660 = pneg %p53
        $region102: #{tpu_custom_call.1} parent=99 // pred_check_branch
          %662 = sbr.rel (%p660) target = $region104
        $region103: #{tpu_custom_call.1} parent=99 // pred_region
          %p663 = scmp.lt.s32.totalorder %s33, 1
          %s664 = scalar_select %p663, %s33, 1
          %s665 = smul.addr %s664, 56
          %s666 = smul.addr %s665, 8
          %s667 = scalar_lea.vmem %s0, %s666
        $region104: #{tpu_custom_call.1} parent=99 // pred_fallthru
          _
        // Predicated region
        $region105: #{tpu_custom_call.1} parent=99 // pred_check
          %p668 = pneg %p79
        $region106: #{tpu_custom_call.1} parent=99 // pred_check_branch
          %670 = sbr.rel (%p668) target = $region108
        $region107: #{tpu_custom_call.1} parent=99 // pred_region
          %p671 = scmp.lt.s32.totalorder %s33, 1
          %s672 = scalar_select %p671, %s33, 1
          %s673 = smul.addr %s672, 36
          %s674 = smul.addr %s673, 8
          %s675 = scalar_lea.vmem %s1, %s674
        $region108: #{tpu_custom_call.1} parent=99 // pred_fallthru
          _
        // Predicated region
        $region109: #{tpu_custom_call.1} parent=99 // pred_check
          %p676 = pneg %p105
        $region110: #{tpu_custom_call.1} parent=99 // pred_check_branch
          %678 = sbr.rel (%p676) target = $region112
        $region111: #{tpu_custom_call.1} parent=99 // pred_region
          %p679 = scmp.lt.s32.totalorder %s33, 1
          %s680 = scalar_select %p679, %s33, 1
          %s681 = smul.addr %s680, 2
          %s682 = smul.addr %s681, 2
          %s683 = scalar_lea.vmem %s2, %s682
        $region112: #{tpu_custom_call.1} parent=99 // pred_fallthru
          _
      $region100: #{tpu_custom_call.1} parent=5 // pred_fallthru
        _
      %p684 = scmp.le.s32.totalorder 1, %s33
      %p685 = scmp.lt.s32.totalorder %s33, 3
      %p686 = pnand %p684, %p685
      %p687 = pneg %p686
      // Predicated region
      $region113: #{tpu_custom_call.1} parent=5 // pred_check
        _
      $region114: #{tpu_custom_call.1} parent=5 // pred_check_branch
        %689 = sbr.rel (%p686) target = $region116
      $region115: #{tpu_custom_call.1} parent=5 // pred_region
        %s690 = ssub.s32 %s33, 1
        %p691 = scmp.lt.s32.totalorder %s38, 1
        %s692 = scalar_select %p691, %s38, 1
        %s693 = smul.addr %s692, 56
        %s694 = smul.addr %s693, 8
        %s695 = scalar_lea.vmem %s0, %s694
        %p696 = pneg %p59
        %p697 = pneg %p56
        %p698 = scmp.lt.s32.totalorder %s38, 1
        %s699 = scalar_select %p698, %s38, 1
        %s700 = smul.addr %s699, 36
        %s701 = smul.addr %s700, 8
        %s702 = scalar_lea.vmem %s1, %s701
        %p703 = pneg %p85
        %p704 = pneg %p82
        %p705 = scmp.lt.s32.totalorder %s38, 1
        %s706 = scalar_select %p705, %s38, 1
        %s707 = smul.addr %s706, 2
        %s708 = smul.addr %s707, 2
        %s709 = scalar_lea.vmem %s2, %s708
        %p710 = pneg %p111
        %p711 = pneg %p108
        %p712 = pneg %p132
        %p713 = pneg %p129
        %p714 = pneg %p153
        %p715 = pneg %p150
        %p716 = pneg %p174
        %p717 = pneg %p171
        %p718 = pneg %p195
        %p719 = pneg %p192
        %p720 = pneg %p216
        %p721 = pneg %p213
        %p722 = pneg %p237
        %p723 = pneg %p234
        %p724 = pneg %p258
        %p725 = pneg %p255
        %p726 = pneg %p279
        %p727 = pneg %p276
        %p728 = pneg %p300
        %p729 = pneg %p297
        %p730 = pneg %p321
        %p731 = pneg %p318
        %p732 = pneg %p342
        %p733 = pneg %p339
        %p734 = pneg %p363
        %p735 = pneg %p360
        %p736 = pneg %p384
        %p737 = pneg %p381
        %p738 = pneg %p405
        %p739 = pneg %p402
        %p740 = pneg %p426
        %p741 = pneg %p423
        %p742 = pneg %p447
        %p743 = pneg %p444
        %p744 = pneg %p468
        %p745 = pneg %p465
        %p746 = pneg %p489
        %p747 = pneg %p486
        %p748 = pneg %p510
        %p749 = pneg %p507
        %p750 = pneg %p531
        %p751 = pneg %p528
        %p752 = pneg %p552
        %p753 = pneg %p549
        %p754 = pneg %p578
        %p755 = pneg %p575
        %s756 = sand.u32 %s565, 1
        %s757 = scalar_lea.sflag [#allocation3], %s756
        %s758 = sand.u32 %s565, 1
        %s759 = smul.addr %s758, 112
        %s760 = scalar_lea.vmem [#allocation2], %s759
        %p761 = scmp.lt.s32.totalorder %s38, 1
        %s762 = scalar_select %p761, %s38, 1
        %s763 = smul.addr %s762, 56
        %s764 = smul.addr %s763, 8
        %s765 = scalar_lea.vmem %s0, %s764
        %p766 = scmp.lt.s32.totalorder %s38, 1
        %s767 = scalar_select %p766, %s38, 1
        %s768 = smul.addr %s767, 36
        %s769 = smul.addr %s768, 8
        %s770 = scalar_lea.vmem %s1, %s769
        %p771 = scmp.lt.s32.totalorder %s38, 1
        %s772 = scalar_select %p771, %s38, 1
        %s773 = smul.addr %s772, 2
        %s774 = smul.addr %s773, 2
        %s775 = scalar_lea.vmem %s2, %s774
        %v777 = vld [vmem:[%s765] sm:$0xff]
        %v778 = vld [vmem:[%s765 + $0x8] sm:$0xff]
        %v779 = vld [vmem:[%s765 + $0x10] sm:$0xff]
        %v780 = vld [vmem:[%s765 + $0x18] sm:$0xff]
        %v781 = vld [vmem:[%s765 + $0x20] sm:$0xff]
        %v782 = vld [vmem:[%s765 + $0x28] sm:$0xff]
        %v783 = vld [vmem:[%s765 + $0x30] sm:$0xff]
        %v784 = vld [vmem:[%s765 + $0x38] sm:$0xff]
        %v785 = vld [vmem:[%s765 + $0x40] sm:$0xff]
        %v786 = vld [vmem:[%s765 + $0x48] sm:$0xff]
        %v787 = vld [vmem:[%s765 + $0x50] sm:$0xff]
        %v788 = vld [vmem:[%s765 + $0x58] sm:$0xff]
        %v789 = vld [vmem:[%s765 + $0x60] sm:$0xff]
        %v790 = vld [vmem:[%s765 + $0x68] sm:$0xff]
        %v791 = vld [vmem:[%s765 + $0x70] sm:$0xff]
        %v792 = vld [vmem:[%s765 + $0x78] sm:$0xff]
        %v793 = vld [vmem:[%s765 + $0x80] sm:$0xff]
        %v794 = vld [vmem:[%s765 + $0x88] sm:$0xff]
        %v795 = vld [vmem:[%s765 + $0x90] sm:$0xff]
        %v796 = vld [vmem:[%s765 + $0x98] sm:$0xff]
        %v797 = vld [vmem:[%s765 + $0xa0] sm:$0xff]
        %v798 = vld [vmem:[%s765 + $0xa8] sm:$0xff]
        %v799 = vld [vmem:[%s765 + $0xb0] sm:$0xff]
        %v800 = vld [vmem:[%s765 + $0xb8] sm:$0xff]
        %v801 = vld [vmem:[%s765 + $0xc0] sm:$0xff]
        %v802 = vld [vmem:[%s765 + $0xc8] sm:$0xff]
        %v803 = vld [vmem:[%s765 + $0xd0] sm:$0xff]
        %v804 = vld [vmem:[%s765 + $0xd8] sm:$0xff]
        %v805 = vld [vmem:[%s765 + $0xe0] sm:$0xff]
        %v806 = vld [vmem:[%s765 + $0xe8] sm:$0xff]
        %v807 = vld [vmem:[%s765 + $0xf0] sm:$0xff]
        %v808 = vld [vmem:[%s765 + $0xf8] sm:$0xff]
        %v809 = vld [vmem:[%s765 + $0x100] sm:$0xff]
        %v810 = vld [vmem:[%s765 + $0x108] sm:$0xff]
        %v811 = vld [vmem:[%s765 + $0x110] sm:$0xff]
        %v812 = vld [vmem:[%s765 + $0x118] sm:$0xff]
        %v813 = vld [vmem:[%s765 + $0x120] sm:$0xff]
        %v814 = vld [vmem:[%s765 + $0x128] sm:$0xff]
        %v815 = vld [vmem:[%s765 + $0x130] sm:$0xff]
        %v816 = vld [vmem:[%s765 + $0x138] sm:$0xff]
        %v817 = vld [vmem:[%s765 + $0x140] sm:$0xff]
        %v818 = vld [vmem:[%s765 + $0x148] sm:$0xff]
        %v819 = vld [vmem:[%s765 + $0x150] sm:$0xff]
        %v820 = vld [vmem:[%s765 + $0x158] sm:$0xff]
        %v821 = vld [vmem:[%s765 + $0x160] sm:$0xff]
        %v822 = vld [vmem:[%s765 + $0x168] sm:$0xff]
        %v823 = vld [vmem:[%s765 + $0x170] sm:$0xff]
        %v824 = vld [vmem:[%s765 + $0x178] sm:$0xff]
        %v825 = vld [vmem:[%s765 + $0x180] sm:$0xff]
        %v826 = vld [vmem:[%s765 + $0x188] sm:$0xff]
        %v827 = vld [vmem:[%s765 + $0x190] sm:$0xff]
        %v828 = vld [vmem:[%s765 + $0x198] sm:$0xff]
        %v829 = vld [vmem:[%s765 + $0x1a0] sm:$0xff]
        %v830 = vld [vmem:[%s765 + $0x1a8] sm:$0xff]
        %v831 = vld [vmem:[%s765 + $0x1b0] sm:$0xff]
        %v832 = vld [vmem:[%s765 + $0x1b8] sm:$0xff]
        %v833 = vld [vmem:[%s770] sm:$0xff]
        %v834 = vld [vmem:[%s770 + $0x8] sm:$0xff]
        %v835 = vld [vmem:[%s770 + $0x10] sm:$0xff]
        %v836 = vld [vmem:[%s770 + $0x18] sm:$0xff]
        %v837 = vld [vmem:[%s770 + $0x20] sm:$0xff]
        %v838 = vld [vmem:[%s770 + $0x28] sm:$0xff]
        %v839 = vld [vmem:[%s770 + $0x30] sm:$0xff]
        %v840 = vld [vmem:[%s770 + $0x38] sm:$0xff]
        %v841 = vld [vmem:[%s770 + $0x40] sm:$0xff]
        %v842 = vld [vmem:[%s770 + $0x48] sm:$0xff]
        %v843 = vld [vmem:[%s770 + $0x50] sm:$0xff]
        %v844 = vld [vmem:[%s770 + $0x58] sm:$0xff]
        %v845 = vld [vmem:[%s770 + $0x60] sm:$0xff]
        %v846 = vld [vmem:[%s770 + $0x68] sm:$0xff]
        %v847 = vld [vmem:[%s770 + $0x70] sm:$0xff]
        %v848 = vld [vmem:[%s770 + $0x78] sm:$0xff]
        %v849 = vld [vmem:[%s770 + $0x80] sm:$0xff]
        %v850 = vld [vmem:[%s770 + $0x88] sm:$0xff]
        %v851 = vld [vmem:[%s770 + $0x90] sm:$0xff]
        %v852 = vld [vmem:[%s770 + $0x98] sm:$0xff]
        %v853 = vld [vmem:[%s770 + $0xa0] sm:$0xff]
        %v854 = vld [vmem:[%s770 + $0xa8] sm:$0xff]
        %v855 = vld [vmem:[%s770 + $0xb0] sm:$0xff]
        %v856 = vld [vmem:[%s770 + $0xb8] sm:$0xff]
        %v857 = vld [vmem:[%s770 + $0xc0] sm:$0xff]
        %v858 = vld [vmem:[%s770 + $0xc8] sm:$0xff]
        %v859 = vld [vmem:[%s770 + $0xd0] sm:$0xff]
        %v860 = vld [vmem:[%s770 + $0xd8] sm:$0xff]
        %v861 = vld [vmem:[%s770 + $0xe0] sm:$0xff]
        %v862 = vld [vmem:[%s770 + $0xe8] sm:$0xff]
        %v863 = vld [vmem:[%s770 + $0xf0] sm:$0xff]
        %v864 = vld [vmem:[%s770 + $0xf8] sm:$0xff]
        %v865 = vld [vmem:[%s770 + $0x100] sm:$0xff]
        %v866 = vld [vmem:[%s770 + $0x108] sm:$0xff]
        %v867 = vld [vmem:[%s770 + $0x110] sm:$0xff]
        %v868 = vld [vmem:[%s770 + $0x118] sm:$0xff]
        %v869 = vld [vmem:[%s775] sm:$0x1]
        %s870 = scalar_lea.vmem %s775, 1
        %v871 = vld [vmem:[%s870] ss:$2 sm:$0x3]
        %v872 = vlaneseq
        %v873 = vand.u32 %v872, 127
        %874 = vset.pattern.permute.xlu0 0
        %875 = vperm.xlu0 %874, %v833
        %v876 = vpop.permute.xlu0 %875
        %877 = vset.pattern.permute.xlu0 0
        %878 = vperm.xlu0 %877, %v834
        %v879 = vpop.permute.xlu0 %878
        %880 = vset.pattern.permute.xlu0 0
        %881 = vperm.xlu0 %880, %v835
        %v882 = vpop.permute.xlu0 %881
        %883 = vset.pattern.permute.xlu0 0
        %884 = vperm.xlu0 %883, %v836
        %v885 = vpop.permute.xlu0 %884
        %886 = vset.pattern.permute.xlu0 0
        %887 = vperm.xlu0 %886, %v837
        %v888 = vpop.permute.xlu0 %887
        %889 = vset.pattern.permute.xlu0 0
        %890 = vperm.xlu0 %889, %v838
        %v891 = vpop.permute.xlu0 %890
        %892 = vset.pattern.permute.xlu0 0
        %893 = vperm.xlu0 %892, %v839
        %v894 = vpop.permute.xlu0 %893
        %895 = vset.pattern.permute.xlu0 0
        %896 = vperm.xlu0 %895, %v840
        %v897 = vpop.permute.xlu0 %896
        %898 = vset.pattern.permute.xlu0 0
        %899 = vperm.xlu0 %898, %v841
        %v900 = vpop.permute.xlu0 %899
        %901 = vset.pattern.permute.xlu0 0
        %902 = vperm.xlu0 %901, %v842
        %v903 = vpop.permute.xlu0 %902
        %vm904 = vcmp.eq.s32.totalorder %v873, %v876
        %vm905 = vcmp.eq.s32.totalorder %v873, %v879
        %vm906 = vcmp.eq.s32.totalorder %v873, %v882
        %vm907 = vcmp.eq.s32.totalorder %v873, %v885
        %vm908 = vcmp.eq.s32.totalorder %v873, %v888
        %vm909 = vcmp.eq.s32.totalorder %v873, %v891
        %vm910 = vcmp.eq.s32.totalorder %v873, %v894
        %vm911 = vcmp.eq.s32.totalorder %v873, %v897
        %vm912 = vcmp.eq.s32.totalorder %v873, %v900
        %vm913 = vcmp.eq.s32.totalorder %v873, %v903
        %v914 = vsel %vm904, 1.0, 0.0
        %v915 = vsel %vm905, 1.0, 0.0
        %v916 = vsel %vm906, 1.0, 0.0
        %v917 = vsel %vm907, 1.0, 0.0
        %v918 = vsel %vm908, 1.0, 0.0
        %v919 = vsel %vm909, 1.0, 0.0
        %v920 = vsel %vm910, 1.0, 0.0
        %v921 = vsel %vm911, 1.0, 0.0
        %v922 = vsel %vm912, 1.0, 0.0
        %v923 = vsel %vm913, 1.0, 0.0
        %v924 = vpack.c.bf16 %v915, %v914
        %v925 = vpack.c.bf16 %v917, %v916
        %v926 = vpack.c.bf16 %v919, %v918
        %v927 = vpack.c.bf16 %v921, %v920
        %v928 = vpack.c.bf16 %v923, %v922
        %929 = vset.pattern.permute.xlu0 1
        %930 = vperm.xlu0 %929, %v833
        %v931 = vpop.permute.xlu0 %930
        %932 = vset.pattern.permute.xlu0 1
        %933 = vperm.xlu0 %932, %v834
        %v934 = vpop.permute.xlu0 %933
        %935 = vset.pattern.permute.xlu0 1
        %936 = vperm.xlu0 %935, %v835
        %v937 = vpop.permute.xlu0 %936
        %938 = vset.pattern.permute.xlu0 1
        %939 = vperm.xlu0 %938, %v836
        %v940 = vpop.permute.xlu0 %939
        %941 = vset.pattern.permute.xlu0 1
        %942 = vperm.xlu0 %941, %v837
        %v943 = vpop.permute.xlu0 %942
        %944 = vset.pattern.permute.xlu0 1
        %945 = vperm.xlu0 %944, %v838
        %v946 = vpop.permute.xlu0 %945
        %947 = vset.pattern.permute.xlu0 1
        %948 = vperm.xlu0 %947, %v839
        %v949 = vpop.permute.xlu0 %948
        %950 = vset.pattern.permute.xlu0 1
        %951 = vperm.xlu0 %950, %v840
        %v952 = vpop.permute.xlu0 %951
        %953 = vset.pattern.permute.xlu0 1
        %954 = vperm.xlu0 %953, %v841
        %v955 = vpop.permute.xlu0 %954
        %956 = vset.pattern.permute.xlu0 1
        %957 = vperm.xlu0 %956, %v842
        %v958 = vpop.permute.xlu0 %957
        %vm959 = vcmp.eq.s32.totalorder %v873, %v931
        %vm960 = vcmp.eq.s32.totalorder %v873, %v934
        %vm961 = vcmp.eq.s32.totalorder %v873, %v937
        %vm962 = vcmp.eq.s32.totalorder %v873, %v940
        %vm963 = vcmp.eq.s32.totalorder %v873, %v943
        %vm964 = vcmp.eq.s32.totalorder %v873, %v946
        %vm965 = vcmp.eq.s32.totalorder %v873, %v949
        %vm966 = vcmp.eq.s32.totalorder %v873, %v952
        %vm967 = vcmp.eq.s32.totalorder %v873, %v955
        %vm968 = vcmp.eq.s32.totalorder %v873, %v958
        %v969 = vsel %vm959, 1.0, 0.0
        %v970 = vsel %vm960, 1.0, 0.0
        %v971 = vsel %vm961, 1.0, 0.0
        %v972 = vsel %vm962, 1.0, 0.0
        %v973 = vsel %vm963, 1.0, 0.0
        %v974 = vsel %vm964, 1.0, 0.0
        %v975 = vsel %vm965, 1.0, 0.0
        %v976 = vsel %vm966, 1.0, 0.0
        %v977 = vsel %vm967, 1.0, 0.0
        %v978 = vsel %vm968, 1.0, 0.0
        %v979 = vpack.c.bf16 %v970, %v969
        %v980 = vpack.c.bf16 %v972, %v971
        %v981 = vpack.c.bf16 %v974, %v973
        %v982 = vpack.c.bf16 %v976, %v975
        %v983 = vpack.c.bf16 %v978, %v977
        %v984 = vlaneseq
        %v985 = vshrl.u32 %v984, 7
        %v986 = vadd.s32 %v985, 8
        %v987 = vadd.s32 %v985, 16
        %v988 = vadd.s32 %v985, 24
        %v989 = vadd.s32 %v985, 32
        %v990 = vadd.s32 %v985, 40
        %v991 = vlaneseq
        %v992 = vshrl.u32 %v991, 7
        %v993 = vsub.s32 0, %v992
        %v994 = vrot.slane %v869, %v993
        %vm995 = vcmp.eq.s32.totalorder %v985, %v994
        %vm996 = vcmp.eq.s32.totalorder %v986, %v994
        %vm997 = vcmp.eq.s32.totalorder %v987, %v994
        %vm998 = vcmp.eq.s32.totalorder %v988, %v994
        %vm999 = vcmp.eq.s32.totalorder %v989, %v994
        %vm1000 = vcmp.eq.s32.totalorder %v990, %v994
        %v1001 = vsel %vm995, 1.0, 0.0
        %v1002 = vsel %vm996, 1.0, 0.0
        %v1003 = vsel %vm997, 1.0, 0.0
        %v1004 = vsel %vm998, 1.0, 0.0
        %v1005 = vsel %vm999, 1.0, 0.0
        %v1006 = vsel %vm1000, 1.0, 0.0
        %v1007 = vpack.c.bf16 %v1002, %v1001
        %v1008 = vpack.c.bf16 %v1004, %v1003
        %v1009 = vpack.c.bf16 %v1006, %v1005
        %1010 = vset.pattern.permute.xlu0 0
        %1011 = vperm.xlu0 %1010, %v843
        %v1012 = vpop.permute.xlu0 %1011
        %1013 = vset.pattern.permute.xlu0 0
        %1014 = vperm.xlu0 %1013, %v844
        %v1015 = vpop.permute.xlu0 %1014
        %1016 = vset.pattern.permute.xlu0 0
        %1017 = vperm.xlu0 %1016, %v845
        %v1018 = vpop.permute.xlu0 %1017
        %1019 = vset.pattern.permute.xlu0 0
        %1020 = vperm.xlu0 %1019, %v846
        %v1021 = vpop.permute.xlu0 %1020
        %1022 = vset.pattern.permute.xlu0 0
        %1023 = vperm.xlu0 %1022, %v847
        %v1024 = vpop.permute.xlu0 %1023
        %1025 = vset.pattern.permute.xlu0 0
        %1026 = vperm.xlu0 %1025, %v848
        %v1027 = vpop.permute.xlu0 %1026
        %1028 = vset.pattern.permute.xlu0 0
        %1029 = vperm.xlu0 %1028, %v849
        %v1030 = vpop.permute.xlu0 %1029
        %1031 = vset.pattern.permute.xlu0 0
        %1032 = vperm.xlu0 %1031, %v850
        %v1033 = vpop.permute.xlu0 %1032
        %1034 = vset.pattern.permute.xlu0 0
        %1035 = vperm.xlu0 %1034, %v851
        %v1036 = vpop.permute.xlu0 %1035
        %1037 = vset.pattern.permute.xlu0 0
        %1038 = vperm.xlu0 %1037, %v852
        %v1039 = vpop.permute.xlu0 %1038
        %1040 = vset.pattern.permute.xlu0 0
        %1041 = vperm.xlu0 %1040, %v853
        %v1042 = vpop.permute.xlu0 %1041
        %1043 = vset.pattern.permute.xlu0 0
        %1044 = vperm.xlu0 %1043, %v854
        %v1045 = vpop.permute.xlu0 %1044
        %1046 = vset.pattern.permute.xlu0 0
        %1047 = vperm.xlu0 %1046, %v855
        %v1048 = vpop.permute.xlu0 %1047
        %1049 = vset.pattern.permute.xlu0 0
        %1050 = vperm.xlu0 %1049, %v856
        %v1051 = vpop.permute.xlu0 %1050
        %1052 = vset.pattern.permute.xlu0 0
        %1053 = vperm.xlu0 %1052, %v857
        %v1054 = vpop.permute.xlu0 %1053
        %1055 = vset.pattern.permute.xlu0 0
        %1056 = vperm.xlu0 %1055, %v858
        %v1057 = vpop.permute.xlu0 %1056
        %1058 = vset.pattern.permute.xlu0 0
        %1059 = vperm.xlu0 %1058, %v859
        %v1060 = vpop.permute.xlu0 %1059
        %1061 = vset.pattern.permute.xlu0 0
        %1062 = vperm.xlu0 %1061, %v860
        %v1063 = vpop.permute.xlu0 %1062
        %1064 = vset.pattern.permute.xlu0 0
        %1065 = vperm.xlu0 %1064, %v861
        %v1066 = vpop.permute.xlu0 %1065
        %1067 = vset.pattern.permute.xlu0 0
        %1068 = vperm.xlu0 %1067, %v862
        %v1069 = vpop.permute.xlu0 %1068
        %1070 = vset.pattern.permute.xlu0 0
        %1071 = vperm.xlu0 %1070, %v863
        %v1072 = vpop.permute.xlu0 %1071
        %1073 = vset.pattern.permute.xlu0 0
        %1074 = vperm.xlu0 %1073, %v864
        %v1075 = vpop.permute.xlu0 %1074
        %1076 = vset.pattern.permute.xlu0 0
        %1077 = vperm.xlu0 %1076, %v865
        %v1078 = vpop.permute.xlu0 %1077
        %1079 = vset.pattern.permute.xlu0 0
        %1080 = vperm.xlu0 %1079, %v866
        %v1081 = vpop.permute.xlu0 %1080
        %1082 = vset.pattern.permute.xlu0 0
        %1083 = vperm.xlu0 %1082, %v867
        %v1084 = vpop.permute.xlu0 %1083
        %1085 = vset.pattern.permute.xlu0 0
        %1086 = vperm.xlu0 %1085, %v868
        %v1087 = vpop.permute.xlu0 %1086
        %vm1088 = vcmp.eq.s32.totalorder %v873, %v1012
        %vm1089 = vcmp.eq.s32.totalorder %v873, %v1015
        %vm1090 = vcmp.eq.s32.totalorder %v873, %v1018
        %vm1091 = vcmp.eq.s32.totalorder %v873, %v1021
        %vm1092 = vcmp.eq.s32.totalorder %v873, %v1024
        %vm1093 = vcmp.eq.s32.totalorder %v873, %v1027
        %vm1094 = vcmp.eq.s32.totalorder %v873, %v1030
        %vm1095 = vcmp.eq.s32.totalorder %v873, %v1033
        %vm1096 = vcmp.eq.s32.totalorder %v873, %v1036
        %vm1097 = vcmp.eq.s32.totalorder %v873, %v1039
        %vm1098 = vcmp.eq.s32.totalorder %v873, %v1042
        %vm1099 = vcmp.eq.s32.totalorder %v873, %v1045
        %vm1100 = vcmp.eq.s32.totalorder %v873, %v1048
        %vm1101 = vcmp.eq.s32.totalorder %v873, %v1051
        %vm1102 = vcmp.eq.s32.totalorder %v873, %v1054
        %vm1103 = vcmp.eq.s32.totalorder %v873, %v1057
        %vm1104 = vcmp.eq.s32.totalorder %v873, %v1060
        %vm1105 = vcmp.eq.s32.totalorder %v873, %v1063
        %vm1106 = vcmp.eq.s32.totalorder %v873, %v1066
        %vm1107 = vcmp.eq.s32.totalorder %v873, %v1069
        %vm1108 = vcmp.eq.s32.totalorder %v873, %v1072
        %vm1109 = vcmp.eq.s32.totalorder %v873, %v1075
        %vm1110 = vcmp.eq.s32.totalorder %v873, %v1078
        %vm1111 = vcmp.eq.s32.totalorder %v873, %v1081
        %vm1112 = vcmp.eq.s32.totalorder %v873, %v1084
        %vm1113 = vcmp.eq.s32.totalorder %v873, %v1087
        %v1114 = vsel %vm1088, 1.0, 0.0
        %v1115 = vsel %vm1089, 1.0, 0.0
        %v1116 = vsel %vm1090, 1.0, 0.0
        %v1117 = vsel %vm1091, 1.0, 0.0
        %v1118 = vsel %vm1092, 1.0, 0.0
        %v1119 = vsel %vm1093, 1.0, 0.0
        %v1120 = vsel %vm1094, 1.0, 0.0
        %v1121 = vsel %vm1095, 1.0, 0.0
        %v1122 = vsel %vm1096, 1.0, 0.0
        %v1123 = vsel %vm1097, 1.0, 0.0
        %v1124 = vsel %vm1098, 1.0, 0.0
        %v1125 = vsel %vm1099, 1.0, 0.0
        %v1126 = vsel %vm1100, 1.0, 0.0
        %v1127 = vsel %vm1101, 1.0, 0.0
        %v1128 = vsel %vm1102, 1.0, 0.0
        %v1129 = vsel %vm1103, 1.0, 0.0
        %v1130 = vsel %vm1104, 1.0, 0.0
        %v1131 = vsel %vm1105, 1.0, 0.0
        %v1132 = vsel %vm1106, 1.0, 0.0
        %v1133 = vsel %vm1107, 1.0, 0.0
        %v1134 = vsel %vm1108, 1.0, 0.0
        %v1135 = vsel %vm1109, 1.0, 0.0
        %v1136 = vsel %vm1110, 1.0, 0.0
        %v1137 = vsel %vm1111, 1.0, 0.0
        %v1138 = vsel %vm1112, 1.0, 0.0
        %v1139 = vsel %vm1113, 1.0, 0.0
        %v1140 = vpack.c.bf16 %v1115, %v1114
        %v1141 = vpack.c.bf16 %v1117, %v1116
        %v1142 = vpack.c.bf16 %v1119, %v1118
        %v1143 = vpack.c.bf16 %v1121, %v1120
        %v1144 = vpack.c.bf16 %v1123, %v1122
        %v1145 = vpack.c.bf16 %v1125, %v1124
        %v1146 = vpack.c.bf16 %v1127, %v1126
        %v1147 = vpack.c.bf16 %v1129, %v1128
        %v1148 = vpack.c.bf16 %v1131, %v1130
        %v1149 = vpack.c.bf16 %v1133, %v1132
        %v1150 = vpack.c.bf16 %v1135, %v1134
        %v1151 = vpack.c.bf16 %v1137, %v1136
        %v1152 = vpack.c.bf16 %v1139, %v1138
        %1153 = vset.pattern.permute.xlu0 1
        %1154 = vperm.xlu0 %1153, %v843
        %v1155 = vpop.permute.xlu0 %1154
        %1156 = vset.pattern.permute.xlu0 1
        %1157 = vperm.xlu0 %1156, %v844
        %v1158 = vpop.permute.xlu0 %1157
        %1159 = vset.pattern.permute.xlu0 1
        %1160 = vperm.xlu0 %1159, %v845
        %v1161 = vpop.permute.xlu0 %1160
        %1162 = vset.pattern.permute.xlu0 1
        %1163 = vperm.xlu0 %1162, %v846
        %v1164 = vpop.permute.xlu0 %1163
        %1165 = vset.pattern.permute.xlu0 1
        %1166 = vperm.xlu0 %1165, %v847
        %v1167 = vpop.permute.xlu0 %1166
        %1168 = vset.pattern.permute.xlu0 1
        %1169 = vperm.xlu0 %1168, %v848
        %v1170 = vpop.permute.xlu0 %1169
        %1171 = vset.pattern.permute.xlu0 1
        %1172 = vperm.xlu0 %1171, %v849
        %v1173 = vpop.permute.xlu0 %1172
        %1174 = vset.pattern.permute.xlu0 1
        %1175 = vperm.xlu0 %1174, %v850
        %v1176 = vpop.permute.xlu0 %1175
        %1177 = vset.pattern.permute.xlu0 1
        %1178 = vperm.xlu0 %1177, %v851
        %v1179 = vpop.permute.xlu0 %1178
        %1180 = vset.pattern.permute.xlu0 1
        %1181 = vperm.xlu0 %1180, %v852
        %v1182 = vpop.permute.xlu0 %1181
        %1183 = vset.pattern.permute.xlu0 1
        %1184 = vperm.xlu0 %1183, %v853
        %v1185 = vpop.permute.xlu0 %1184
        %1186 = vset.pattern.permute.xlu0 1
        %1187 = vperm.xlu0 %1186, %v854
        %v1188 = vpop.permute.xlu0 %1187
        %1189 = vset.pattern.permute.xlu0 1
        %1190 = vperm.xlu0 %1189, %v855
        %v1191 = vpop.permute.xlu0 %1190
        %1192 = vset.pattern.permute.xlu0 1
        %1193 = vperm.xlu0 %1192, %v856
        %v1194 = vpop.permute.xlu0 %1193
        %1195 = vset.pattern.permute.xlu0 1
        %1196 = vperm.xlu0 %1195, %v857
        %v1197 = vpop.permute.xlu0 %1196
        %1198 = vset.pattern.permute.xlu0 1
        %1199 = vperm.xlu0 %1198, %v858
        %v1200 = vpop.permute.xlu0 %1199
        %1201 = vset.pattern.permute.xlu0 1
        %1202 = vperm.xlu0 %1201, %v859
        %v1203 = vpop.permute.xlu0 %1202
        %1204 = vset.pattern.permute.xlu0 1
        %1205 = vperm.xlu0 %1204, %v860
        %v1206 = vpop.permute.xlu0 %1205
        %1207 = vset.pattern.permute.xlu0 1
        %1208 = vperm.xlu0 %1207, %v861
        %v1209 = vpop.permute.xlu0 %1208
        %1210 = vset.pattern.permute.xlu0 1
        %1211 = vperm.xlu0 %1210, %v862
        %v1212 = vpop.permute.xlu0 %1211
        %1213 = vset.pattern.permute.xlu0 1
        %1214 = vperm.xlu0 %1213, %v863
        %v1215 = vpop.permute.xlu0 %1214
        %1216 = vset.pattern.permute.xlu0 1
        %1217 = vperm.xlu0 %1216, %v864
        %v1218 = vpop.permute.xlu0 %1217
        %1219 = vset.pattern.permute.xlu0 1
        %1220 = vperm.xlu0 %1219, %v865
        %v1221 = vpop.permute.xlu0 %1220
        %1222 = vset.pattern.permute.xlu0 1
        %1223 = vperm.xlu0 %1222, %v866
        %v1224 = vpop.permute.xlu0 %1223
        %1225 = vset.pattern.permute.xlu0 1
        %1226 = vperm.xlu0 %1225, %v867
        %v1227 = vpop.permute.xlu0 %1226
        %1228 = vset.pattern.permute.xlu0 1
        %1229 = vperm.xlu0 %1228, %v868
        %v1230 = vpop.permute.xlu0 %1229
        %vm1231 = vcmp.eq.s32.totalorder %v873, %v1155
        %vm1232 = vcmp.eq.s32.totalorder %v873, %v1158
        %vm1233 = vcmp.eq.s32.totalorder %v873, %v1161
        %vm1234 = vcmp.eq.s32.totalorder %v873, %v1164
        %vm1235 = vcmp.eq.s32.totalorder %v873, %v1167
        %vm1236 = vcmp.eq.s32.totalorder %v873, %v1170
        %vm1237 = vcmp.eq.s32.totalorder %v873, %v1173
        %vm1238 = vcmp.eq.s32.totalorder %v873, %v1176
        %vm1239 = vcmp.eq.s32.totalorder %v873, %v1179
        %vm1240 = vcmp.eq.s32.totalorder %v873, %v1182
        %vm1241 = vcmp.eq.s32.totalorder %v873, %v1185
        %vm1242 = vcmp.eq.s32.totalorder %v873, %v1188
        %vm1243 = vcmp.eq.s32.totalorder %v873, %v1191
        %vm1244 = vcmp.eq.s32.totalorder %v873, %v1194
        %vm1245 = vcmp.eq.s32.totalorder %v873, %v1197
        %vm1246 = vcmp.eq.s32.totalorder %v873, %v1200
        %vm1247 = vcmp.eq.s32.totalorder %v873, %v1203
        %vm1248 = vcmp.eq.s32.totalorder %v873, %v1206
        %vm1249 = vcmp.eq.s32.totalorder %v873, %v1209
        %vm1250 = vcmp.eq.s32.totalorder %v873, %v1212
        %vm1251 = vcmp.eq.s32.totalorder %v873, %v1215
        %vm1252 = vcmp.eq.s32.totalorder %v873, %v1218
        %vm1253 = vcmp.eq.s32.totalorder %v873, %v1221
        %vm1254 = vcmp.eq.s32.totalorder %v873, %v1224
        %vm1255 = vcmp.eq.s32.totalorder %v873, %v1227
        %vm1256 = vcmp.eq.s32.totalorder %v873, %v1230
        %v1257 = vsel %vm1231, 1.0, 0.0
        %v1258 = vsel %vm1232, 1.0, 0.0
        %v1259 = vsel %vm1233, 1.0, 0.0
        %v1260 = vsel %vm1234, 1.0, 0.0
        %v1261 = vsel %vm1235, 1.0, 0.0
        %v1262 = vsel %vm1236, 1.0, 0.0
        %v1263 = vsel %vm1237, 1.0, 0.0
        %v1264 = vsel %vm1238, 1.0, 0.0
        %v1265 = vsel %vm1239, 1.0, 0.0
        %v1266 = vsel %vm1240, 1.0, 0.0
        %v1267 = vsel %vm1241, 1.0, 0.0
        %v1268 = vsel %vm1242, 1.0, 0.0
        %v1269 = vsel %vm1243, 1.0, 0.0
        %v1270 = vsel %vm1244, 1.0, 0.0
        %v1271 = vsel %vm1245, 1.0, 0.0
        %v1272 = vsel %vm1246, 1.0, 0.0
        %v1273 = vsel %vm1247, 1.0, 0.0
        %v1274 = vsel %vm1248, 1.0, 0.0
        %v1275 = vsel %vm1249, 1.0, 0.0
        %v1276 = vsel %vm1250, 1.0, 0.0
        %v1277 = vsel %vm1251, 1.0, 0.0
        %v1278 = vsel %vm1252, 1.0, 0.0
        %v1279 = vsel %vm1253, 1.0, 0.0
        %v1280 = vsel %vm1254, 1.0, 0.0
        %v1281 = vsel %vm1255, 1.0, 0.0
        %v1282 = vsel %vm1256, 1.0, 0.0
        %v1283 = vpack.c.bf16 %v1258, %v1257
        %v1284 = vpack.c.bf16 %v1260, %v1259
        %v1285 = vpack.c.bf16 %v1262, %v1261
        %v1286 = vpack.c.bf16 %v1264, %v1263
        %v1287 = vpack.c.bf16 %v1266, %v1265
        %v1288 = vpack.c.bf16 %v1268, %v1267
        %v1289 = vpack.c.bf16 %v1270, %v1269
        %v1290 = vpack.c.bf16 %v1272, %v1271
        %v1291 = vpack.c.bf16 %v1274, %v1273
        %v1292 = vpack.c.bf16 %v1276, %v1275
        %v1293 = vpack.c.bf16 %v1278, %v1277
        %v1294 = vpack.c.bf16 %v1280, %v1279
        %v1295 = vpack.c.bf16 %v1282, %v1281
        %v1296 = vadd.s32 %v985, 48
        %v1297 = vadd.s32 %v985, 56
        %v1298 = vadd.s32 %v985, 64
        %v1299 = vadd.s32 %v985, 72
        %v1300 = vadd.s32 %v985, 80
        %v1301 = vadd.s32 %v985, 88
        %v1302 = vadd.s32 %v985, 96
        %v1303 = vadd.s32 %v985, 104
        %v1304 = vlaneseq
        %v1305 = vshrl.u32 %v1304, 7
        %v1306 = vsub.s32 0, %v1305
        %v1307 = vrot.slane %v871, %v1306
        %v1308 = vlaneseq
        %v1309 = vshrl.u32 %v1308, 7
        %v1310 = vsub.s32 1, %v1309
        %v1311 = vrot.slane %v871, %v1310
        %vm1312 = vcmp.eq.s32.totalorder %v985, %v1307
        %vm1313 = vcmp.eq.s32.totalorder %v985, %v1311
        %vm1314 = vcmp.eq.s32.totalorder %v986, %v1307
        %vm1315 = vcmp.eq.s32.totalorder %v986, %v1311
        %vm1316 = vcmp.eq.s32.totalorder %v987, %v1307
        %vm1317 = vcmp.eq.s32.totalorder %v987, %v1311
        %vm1318 = vcmp.eq.s32.totalorder %v988, %v1307
        %vm1319 = vcmp.eq.s32.totalorder %v988, %v1311
        %vm1320 = vcmp.eq.s32.totalorder %v989, %v1307
        %vm1321 = vcmp.eq.s32.totalorder %v989, %v1311
        %vm1322 = vcmp.eq.s32.totalorder %v990, %v1307
        %vm1323 = vcmp.eq.s32.totalorder %v990, %v1311
        %vm1324 = vcmp.eq.s32.totalorder %v1296, %v1307
        %vm1325 = vcmp.eq.s32.totalorder %v1296, %v1311
        %vm1326 = vcmp.eq.s32.totalorder %v1297, %v1307
        %vm1327 = vcmp.eq.s32.totalorder %v1297, %v1311
        %vm1328 = vcmp.eq.s32.totalorder %v1298, %v1307
        %vm1329 = vcmp.eq.s32.totalorder %v1298, %v1311
        %vm1330 = vcmp.eq.s32.totalorder %v1299, %v1307
        %vm1331 = vcmp.eq.s32.totalorder %v1299, %v1311
        %vm1332 = vcmp.eq.s32.totalorder %v1300, %v1307
        %vm1333 = vcmp.eq.s32.totalorder %v1300, %v1311
        %vm1334 = vcmp.eq.s32.totalorder %v1301, %v1307
        %vm1335 = vcmp.eq.s32.totalorder %v1301, %v1311
        %vm1336 = vcmp.eq.s32.totalorder %v1302, %v1307
        %vm1337 = vcmp.eq.s32.totalorder %v1302, %v1311
        %vm1338 = vcmp.eq.s32.totalorder %v1303, %v1307
        %vm1339 = vcmp.eq.s32.totalorder %v1303, %v1311
        %v1340 = vsel %vm1312, 1.0, 0.0
        %v1341 = vsel %vm1313, 1.0, 0.0
        %v1342 = vsel %vm1314, 1.0, 0.0
        %v1343 = vsel %vm1315, 1.0, 0.0
        %v1344 = vsel %vm1316, 1.0, 0.0
        %v1345 = vsel %vm1317, 1.0, 0.0
        %v1346 = vsel %vm1318, 1.0, 0.0
        %v1347 = vsel %vm1319, 1.0, 0.0
        %v1348 = vsel %vm1320, 1.0, 0.0
        %v1349 = vsel %vm1321, 1.0, 0.0
        %v1350 = vsel %vm1322, 1.0, 0.0
        %v1351 = vsel %vm1323, 1.0, 0.0
        %v1352 = vsel %vm1324, 1.0, 0.0
        %v1353 = vsel %vm1325, 1.0, 0.0
        %v1354 = vsel %vm1326, 1.0, 0.0
        %v1355 = vsel %vm1327, 1.0, 0.0
        %v1356 = vsel %vm1328, 1.0, 0.0
        %v1357 = vsel %vm1329, 1.0, 0.0
        %v1358 = vsel %vm1330, 1.0, 0.0
        %v1359 = vsel %vm1331, 1.0, 0.0
        %v1360 = vsel %vm1332, 1.0, 0.0
        %v1361 = vsel %vm1333, 1.0, 0.0
        %v1362 = vsel %vm1334, 1.0, 0.0
        %v1363 = vsel %vm1335, 1.0, 0.0
        %v1364 = vsel %vm1336, 1.0, 0.0
        %v1365 = vsel %vm1337, 1.0, 0.0
        %v1366 = vsel %vm1338, 1.0, 0.0
        %v1367 = vsel %vm1339, 1.0, 0.0
        %v1368 = vpack.c.bf16 %v1342, %v1340
        %v1369 = vpack.c.bf16 %v1343, %v1341
        %v1370 = vpack.c.bf16 %v1346, %v1344
        %v1371 = vpack.c.bf16 %v1347, %v1345
        %v1372 = vpack.c.bf16 %v1350, %v1348
        %v1373 = vpack.c.bf16 %v1351, %v1349
        %v1374 = vpack.c.bf16 %v1354, %v1352
        %v1375 = vpack.c.bf16 %v1355, %v1353
        %v1376 = vpack.c.bf16 %v1358, %v1356
        %v1377 = vpack.c.bf16 %v1359, %v1357
        %v1378 = vpack.c.bf16 %v1362, %v1360
        %v1379 = vpack.c.bf16 %v1363, %v1361
        %v1380 = vpack.c.bf16 %v1366, %v1364
        %v1381 = vpack.c.bf16 %v1367, %v1365
        %v1382 = vpack.c.bf16 %v778, %v777
        %v1383 = vpack.c.bf16 %v780, %v779
        %v1384 = vpack.c.bf16 %v782, %v781
        %v1385 = vld [vmem:[%s3] sm:$0x7]
        %vm1386 = vcmask 48128
        %v1388 = vsel %vm1386, %v1382, 0
        %v1391 = vsel %vm1386, %v1383, 0
        %v1394 = vsel %vm1386, %v1384, 0
        %vm1396 = vcmask 1042432
        %v1398 = vsel %vm1396, %v1385, 0
        %1400 = vmatprep.subr.bf16.mxu0 0
        %1401 = vmatpush1.bf16.msra.mxu0 0
        %1402 = vmatprep.subr.bf16.mxu0 0
        %1403 = vmatpush1.bf16.msra.mxu0 0
        %1404 = vmatprep.subr.bf16.mxu0 0
        %1405 = vmatpush1.bf16.msra.mxu0 0
        %1406 = vmatprep.subr.bf16.mxu0 0
        %1407 = vmatpush1.bf16.msra.mxu0 0
        %1408 = vmatprep.subr.bf16.mxu0 0
        %1409 = vmatpush1.bf16.msra.mxu0 0
        %1410 = vmatprep.subr.bf16.mxu0 0
        %1411 = vmatpush1.bf16.msra.mxu0 0
        %1412 = vmatprep.subr.bf16.mxu0 0
        %1413 = vmatpush1.bf16.msra.mxu0 0
        %1414 = vmatprep.subr.bf16.mxu0 0
        %1415 = vmatpush1.bf16.msra.mxu0 %v1398
        %1416 = vmatprep.subr.bf16.mxu0 0
        %1417 = vmatpush2.bf16.msra.mxu0 0
        %1418 = vmatprep.subr.bf16.mxu0 0
        %1419 = vmatpush2.bf16.msra.mxu0 0
        %1420 = vmatprep.subr.bf16.mxu0 0
        %1421 = vmatpush2.bf16.msra.mxu0 0
        %1422 = vmatprep.subr.bf16.mxu0 0
        %1423 = vmatpush2.bf16.msra.mxu0 0
        %1424 = vmatprep.subr.bf16.mxu0 0
        %1425 = vmatpush2.bf16.msra.mxu0 0
        %1426 = vmatprep.subr.bf16.mxu0 0
        %1427 = vmatpush2.bf16.msra.mxu0 0
        %1428 = vmatprep.subr.bf16.mxu0 0
        %1429 = vmatpush2.bf16.msra.mxu0 0
        %1430 = vmatprep.subr.bf16.mxu0 0
        %1431 = vmatpush2.bf16.msra.mxu0 0
        %1432 = vmatprep.mubr.bf16.mxu0 0
        %1433 = vmatmul.mubr.bf16.gmra.mxu0 %v1388
        %v1434 = vpop.f32.mrf.mxu0
        %v1435 = vadd.f32 0.0, %v1434
        %v1436 = vpop.f32.mrf.mxu0
        %v1437 = vpop.f32.mrf.mxu0
        %v1438 = vadd.f32 0.0, %v1437
        %v1439 = vpop.f32.mrf.mxu0
        %1440 = vmatprep.mubr.bf16.mxu0 0
        %1441 = vmatmul.mubr.bf16.gmra.mxu0 %v1391
        %v1442 = vpop.f32.mrf.mxu0
        %v1443 = vadd.f32 0.0, %v1442
        %v1444 = vpop.f32.mrf.mxu0
        %v1445 = vpop.f32.mrf.mxu0
        %v1446 = vadd.f32 0.0, %v1445
        %v1447 = vpop.f32.mrf.mxu0
        %1448 = vmatprep.mubr.bf16.mxu0 0
        %1449 = vmatmul.mubr.bf16.gmra.mxu0 %v1394
        %v1450 = vpop.f32.mrf.mxu0
        %v1451 = vadd.f32 0.0, %v1450
        %v1452 = vpop.f32.mrf.mxu0
        %v1453 = vpop.f32.mrf.mxu0
        %v1454 = vadd.f32 0.0, %v1453
        %v1455 = vpop.f32.mrf.mxu0
        %1456 = vdwg.mxu0
        %v1457 = vld [vmem:[%s4] sm:$0x3]
        %v1458 = vld [vmem:[%s5] sm:$0x3]
        %v1459 = vpack.c.bf16 %v1438, %v1435
        %v1460 = vpack.c.bf16 %v1446, %v1443
        %v1461 = vpack.c.bf16 %v1454, %v1451
        %1465 = vrot.lane.b32.xlu0 %v1459, 112
        %v1466 = vpop.permute.xlu0 %1465
        %1467 = vrot.lane.b32.xlu0 %v1460, 112
        %v1468 = vpop.permute.xlu0 %1467
        %1469 = vrot.lane.b32.xlu0 %v1461, 112
        %v1470 = vpop.permute.xlu0 %1469
        %vm1474 = vcmask 392192
        %v1476 = vsel %vm1474, %v924, 0
        %v1479 = vsel %vm1474, %v925, 0
        %v1482 = vsel %vm1474, %v926, 0
        %v1485 = vsel %vm1474, %v927, 0
        %v1488 = vsel %vm1474, %v928, 0
        %1490 = vmatprep.subr.bf16.mxu0 0
        %1491 = vmatpush1.bf16.msra.mxu0 0
        %1492 = vmatprep.subr.bf16.mxu0 0
        %1493 = vmatpush1.bf16.msra.mxu0 0
        %1494 = vmatprep.subr.bf16.mxu0 0
        %1495 = vmatpush1.bf16.msra.mxu0 0
        %1496 = vmatprep.subr.bf16.mxu0 0
        %1497 = vmatpush1.bf16.msra.mxu0 0
        %1498 = vmatprep.subr.bf16.mxu0 0
        %1499 = vmatpush1.bf16.msra.mxu0 0
        %1500 = vmatprep.subr.bf16.mxu0 0
        %1501 = vmatpush1.bf16.msra.mxu0 %v1470
        %1502 = vmatprep.subr.bf16.mxu0 0
        %1503 = vmatpush1.bf16.msra.mxu0 %v1468
        %1504 = vmatprep.subr.bf16.mxu0 0
        %1505 = vmatpush1.bf16.msra.mxu0 %v1466
        %1506 = vmatprep.subr.bf16.mxu0 0
        %1507 = vmatpush2.bf16.msra.mxu0 0
        %1508 = vmatprep.subr.bf16.mxu0 0
        %1509 = vmatpush2.bf16.msra.mxu0 0
        %1510 = vmatprep.subr.bf16.mxu0 0
        %1511 = vmatpush2.bf16.msra.mxu0 0
        %1512 = vmatprep.subr.bf16.mxu0 0
        %1513 = vmatpush2.bf16.msra.mxu0 0
        %1514 = vmatprep.subr.bf16.mxu0 0
        %1515 = vmatpush2.bf16.msra.mxu0 0
        %1516 = vmatprep.subr.bf16.mxu0 0
        %1517 = vmatpush2.bf16.msra.mxu0 0
        %1518 = vmatprep.subr.bf16.mxu0 0
        %1519 = vmatpush2.bf16.msra.mxu0 0
        %1520 = vmatprep.subr.bf16.mxu0 0
        %1521 = vmatpush2.bf16.msra.mxu0 0
        %1522 = vmatprep.mubr.bf16.mxu0 0
        %1523 = vmatmul.mubr.bf16.gmra.mxu0 %v1476
        %v1524 = vpop.f32.mrf.mxu0
        %v1525 = vadd.f32 0.0, %v1524
        %v1526 = vpop.f32.mrf.mxu0
        %v1527 = vpop.f32.mrf.mxu0
        %v1528 = vadd.f32 0.0, %v1527
        %v1529 = vpop.f32.mrf.mxu0
        %1530 = vmatprep.mubr.bf16.mxu0 0
        %1531 = vmatmul.mubr.bf16.gmra.mxu0 %v1479
        %v1532 = vpop.f32.mrf.mxu0
        %v1533 = vadd.f32 0.0, %v1532
        %v1534 = vpop.f32.mrf.mxu0
        %v1535 = vpop.f32.mrf.mxu0
        %v1536 = vadd.f32 0.0, %v1535
        %v1537 = vpop.f32.mrf.mxu0
        %1538 = vmatprep.mubr.bf16.mxu0 0
        %1539 = vmatmul.mubr.bf16.gmra.mxu0 %v1482
        %v1540 = vpop.f32.mrf.mxu0
        %v1541 = vadd.f32 0.0, %v1540
        %v1542 = vpop.f32.mrf.mxu0
        %v1543 = vpop.f32.mrf.mxu0
        %v1544 = vadd.f32 0.0, %v1543
        %v1545 = vpop.f32.mrf.mxu0
        %1546 = vmatprep.mubr.bf16.mxu0 0
        %1547 = vmatmul.mubr.bf16.gmra.mxu0 %v1485
        %v1548 = vpop.f32.mrf.mxu0
        %v1549 = vadd.f32 0.0, %v1548
        %v1550 = vpop.f32.mrf.mxu0
        %v1551 = vpop.f32.mrf.mxu0
        %v1552 = vadd.f32 0.0, %v1551
        %v1553 = vpop.f32.mrf.mxu0
        %1554 = vmatprep.mubr.bf16.mxu0 0
        %1555 = vmatmul.mubr.bf16.gmra.mxu0 %v1488
        %v1556 = vpop.f32.mrf.mxu0
        %v1557 = vadd.f32 0.0, %v1556
        %v1558 = vpop.f32.mrf.mxu0
        %v1559 = vpop.f32.mrf.mxu0
        %v1560 = vadd.f32 0.0, %v1559
        %v1561 = vpop.f32.mrf.mxu0
        %1562 = vdwg.mxu0
        %v1564 = vsel %vm1474, %v979, 0
        %v1567 = vsel %vm1474, %v980, 0
        %v1570 = vsel %vm1474, %v981, 0
        %v1573 = vsel %vm1474, %v982, 0
        %v1576 = vsel %vm1474, %v983, 0
        %1578 = vmatprep.subr.bf16.mxu0 0
        %1579 = vmatpush1.bf16.msra.mxu0 0
        %1580 = vmatprep.subr.bf16.mxu0 0
        %1581 = vmatpush1.bf16.msra.mxu0 0
        %1582 = vmatprep.subr.bf16.mxu0 0
        %1583 = vmatpush1.bf16.msra.mxu0 0
        %1584 = vmatprep.subr.bf16.mxu0 0
        %1585 = vmatpush1.bf16.msra.mxu0 0
        %1586 = vmatprep.subr.bf16.mxu0 0
        %1587 = vmatpush1.bf16.msra.mxu0 0
        %1588 = vmatprep.subr.bf16.mxu0 0
        %1589 = vmatpush1.bf16.msra.mxu0 %v1461
        %1590 = vmatprep.subr.bf16.mxu0 0
        %1591 = vmatpush1.bf16.msra.mxu0 %v1460
        %1592 = vmatprep.subr.bf16.mxu0 0
        %1593 = vmatpush1.bf16.msra.mxu0 %v1459
        %1594 = vmatprep.subr.bf16.mxu0 0
        %1595 = vmatpush2.bf16.msra.mxu0 0
        %1596 = vmatprep.subr.bf16.mxu0 0
        %1597 = vmatpush2.bf16.msra.mxu0 0
        %1598 = vmatprep.subr.bf16.mxu0 0
        %1599 = vmatpush2.bf16.msra.mxu0 0
        %1600 = vmatprep.subr.bf16.mxu0 0
        %1601 = vmatpush2.bf16.msra.mxu0 0
        %1602 = vmatprep.subr.bf16.mxu0 0
        %1603 = vmatpush2.bf16.msra.mxu0 0
        %1604 = vmatprep.subr.bf16.mxu0 0
        %1605 = vmatpush2.bf16.msra.mxu0 0
        %1606 = vmatprep.subr.bf16.mxu0 0
        %1607 = vmatpush2.bf16.msra.mxu0 0
        %1608 = vmatprep.subr.bf16.mxu0 0
        %1609 = vmatpush2.bf16.msra.mxu0 0
        %1610 = vmatprep.mubr.bf16.mxu0 0
        %1611 = vmatmul.mubr.bf16.gmra.mxu0 %v1564
        %v1612 = vpop.f32.mrf.mxu0
        %v1613 = vadd.f32 %v1525, %v1612
        %v1614 = vpop.f32.mrf.mxu0
        %v1615 = vpop.f32.mrf.mxu0
        %v1616 = vadd.f32 %v1528, %v1615
        %v1617 = vpop.f32.mrf.mxu0
        %1618 = vmatprep.mubr.bf16.mxu0 0
        %1619 = vmatmul.mubr.bf16.gmra.mxu0 %v1567
        %v1620 = vpop.f32.mrf.mxu0
        %v1621 = vadd.f32 %v1533, %v1620
        %v1622 = vpop.f32.mrf.mxu0
        %v1623 = vpop.f32.mrf.mxu0
        %v1624 = vadd.f32 %v1536, %v1623
        %v1625 = vpop.f32.mrf.mxu0
        %1626 = vmatprep.mubr.bf16.mxu0 0
        %1627 = vmatmul.mubr.bf16.gmra.mxu0 %v1570
        %v1628 = vpop.f32.mrf.mxu0
        %v1629 = vadd.f32 %v1541, %v1628
        %v1630 = vpop.f32.mrf.mxu0
        %v1631 = vpop.f32.mrf.mxu0
        %v1632 = vadd.f32 %v1544, %v1631
        %v1633 = vpop.f32.mrf.mxu0
        %1634 = vmatprep.mubr.bf16.mxu0 0
        %1635 = vmatmul.mubr.bf16.gmra.mxu0 %v1573
        %v1636 = vpop.f32.mrf.mxu0
        %v1637 = vadd.f32 %v1549, %v1636
        %v1638 = vpop.f32.mrf.mxu0
        %v1639 = vpop.f32.mrf.mxu0
        %v1640 = vadd.f32 %v1552, %v1639
        %v1641 = vpop.f32.mrf.mxu0
        %1642 = vmatprep.mubr.bf16.mxu0 0
        %1643 = vmatmul.mubr.bf16.gmra.mxu0 %v1576
        %v1644 = vpop.f32.mrf.mxu0
        %v1645 = vadd.f32 %v1557, %v1644
        %v1646 = vpop.f32.mrf.mxu0
        %v1647 = vpop.f32.mrf.mxu0
        %v1648 = vadd.f32 %v1560, %v1647
        %v1649 = vpop.f32.mrf.mxu0
        %1650 = vdwg.mxu0
        %v1651 = vpack.c.bf16 %v798, %v797
        %v1652 = vpack.c.bf16 %v800, %v799
        %v1653 = vpack.c.bf16 %v802, %v801
        %v1654 = vpack.c.bf16 %v804, %v803
        %v1655 = vpack.c.bf16 %v806, %v805
        %vm1656 = vcmask 23552
        %v1658 = vsel %vm1656, %v1651, 0
        %v1661 = vsel %vm1656, %v1652, 0
        %v1664 = vsel %vm1656, %v1653, 0
        %v1667 = vsel %vm1656, %v1654, 0
        %v1670 = vsel %vm1656, %v1655, 0
        %vm1672 = vcmask 1040384
        %vm1673 = vcmask 1041408
        %v1674 = vsel %vm1672, 4294967295, 65535
        %v1675 = vsel %vm1673, %v1674, 0
        %v1677 = vand.u32 %v1457, %v1675
        %1679 = vmatprep.subr.bf16.mxu0 0
        %1680 = vmatpush1.bf16.msra.mxu0 0
        %1681 = vmatprep.subr.bf16.mxu0 0
        %1682 = vmatpush1.bf16.msra.mxu0 0
        %1683 = vmatprep.subr.bf16.mxu0 0
        %1684 = vmatpush1.bf16.msra.mxu0 0
        %1685 = vmatprep.subr.bf16.mxu0 0
        %1686 = vmatpush1.bf16.msra.mxu0 0
        %1687 = vmatprep.subr.bf16.mxu0 0
        %1688 = vmatpush1.bf16.msra.mxu0 0
        %1689 = vmatprep.subr.bf16.mxu0 0
        %1690 = vmatpush1.bf16.msra.mxu0 0
        %1691 = vmatprep.subr.bf16.mxu0 0
        %1692 = vmatpush1.bf16.msra.mxu0 0
        %1693 = vmatprep.subr.bf16.mxu0 0
        %1694 = vmatpush1.bf16.msra.mxu0 %v1677
        %1695 = vmatprep.subr.bf16.mxu0 0
        %1696 = vmatpush2.bf16.msra.mxu0 0
        %1697 = vmatprep.subr.bf16.mxu0 0
        %1698 = vmatpush2.bf16.msra.mxu0 0
        %1699 = vmatprep.subr.bf16.mxu0 0
        %1700 = vmatpush2.bf16.msra.mxu0 0
        %1701 = vmatprep.subr.bf16.mxu0 0
        %1702 = vmatpush2.bf16.msra.mxu0 0
        %1703 = vmatprep.subr.bf16.mxu0 0
        %1704 = vmatpush2.bf16.msra.mxu0 0
        %1705 = vmatprep.subr.bf16.mxu0 0
        %1706 = vmatpush2.bf16.msra.mxu0 0
        %1707 = vmatprep.subr.bf16.mxu0 0
        %1708 = vmatpush2.bf16.msra.mxu0 0
        %1709 = vmatprep.subr.bf16.mxu0 0
        %1710 = vmatpush2.bf16.msra.mxu0 0
        %1711 = vmatprep.mubr.bf16.mxu0 0
        %1712 = vmatmul.mubr.bf16.gmra.mxu0 %v1658
        %v1713 = vpop.f32.mrf.mxu0
        %v1714 = vadd.f32 0.0, %v1713
        %v1715 = vpop.f32.mrf.mxu0
        %v1716 = vpop.f32.mrf.mxu0
        %v1717 = vadd.f32 0.0, %v1716
        %v1718 = vpop.f32.mrf.mxu0
        %1719 = vmatprep.mubr.bf16.mxu0 0
        %1720 = vmatmul.mubr.bf16.gmra.mxu0 %v1661
        %v1721 = vpop.f32.mrf.mxu0
        %v1722 = vadd.f32 0.0, %v1721
        %v1723 = vpop.f32.mrf.mxu0
        %v1724 = vpop.f32.mrf.mxu0
        %v1725 = vadd.f32 0.0, %v1724
        %v1726 = vpop.f32.mrf.mxu0
        %1727 = vmatprep.mubr.bf16.mxu0 0
        %1728 = vmatmul.mubr.bf16.gmra.mxu0 %v1664
        %v1729 = vpop.f32.mrf.mxu0
        %v1730 = vadd.f32 0.0, %v1729
        %v1731 = vpop.f32.mrf.mxu0
        %v1732 = vpop.f32.mrf.mxu0
        %v1733 = vadd.f32 0.0, %v1732
        %v1734 = vpop.f32.mrf.mxu0
        %1735 = vmatprep.mubr.bf16.mxu0 0
        %1736 = vmatmul.mubr.bf16.gmra.mxu0 %v1667
        %v1737 = vpop.f32.mrf.mxu0
        %v1738 = vadd.f32 0.0, %v1737
        %v1739 = vpop.f32.mrf.mxu0
        %v1740 = vpop.f32.mrf.mxu0
        %v1741 = vadd.f32 0.0, %v1740
        %v1742 = vpop.f32.mrf.mxu0
        %1743 = vmatprep.mubr.bf16.mxu0 0
        %1744 = vmatmul.mubr.bf16.gmra.mxu0 %v1670
        %v1745 = vpop.f32.mrf.mxu0
        %v1746 = vadd.f32 0.0, %v1745
        %v1747 = vpop.f32.mrf.mxu0
        %v1748 = vpop.f32.mrf.mxu0
        %v1749 = vadd.f32 0.0, %v1748
        %v1750 = vpop.f32.mrf.mxu0
        %1751 = vdwg.mxu0
        %v1752 = vadd.f32 %v1613, %v1714
        %v1753 = vadd.f32 %v1616, %v1717
        %v1754 = vadd.f32 %v1621, %v1722
        %v1755 = vadd.f32 %v1624, %v1725
        %v1756 = vadd.f32 %v1629, %v1730
        %v1757 = vadd.f32 %v1632, %v1733
        %v1758 = vadd.f32 %v1637, %v1738
        %v1759 = vadd.f32 %v1640, %v1741
        %v1760 = vadd.f32 %v1645, %v1746
        %v1761 = vadd.f32 %v1648, %v1749
        %v1762 = vlaneseq
        %v1763 = vshrl.u32 %v1762, 7
        %v1764 = vsub.s32 0, %v1763
        %v1765 = vrot.slane %v1458, %v1764
        %v1766 = vadd.f32 %v1752, %v1765
        %v1767 = vadd.f32 %v1753, %v1765
        %v1768 = vadd.f32 %v1754, %v1765
        %v1769 = vadd.f32 %v1755, %v1765
        %v1770 = vadd.f32 %v1756, %v1765
        %v1771 = vadd.f32 %v1757, %v1765
        %v1772 = vadd.f32 %v1758, %v1765
        %v1773 = vadd.f32 %v1759, %v1765
        %v1774 = vadd.f32 %v1760, %v1765
        %v1775 = vadd.f32 %v1761, %v1765
        %vm1776 = vcmp.ge.f32.partialorder %v1766, 0.0
        %vm1777 = vcmp.ge.f32.partialorder %v1767, 0.0
        %vm1778 = vcmp.ge.f32.partialorder %v1768, 0.0
        %vm1779 = vcmp.ge.f32.partialorder %v1769, 0.0
        %vm1780 = vcmp.ge.f32.partialorder %v1770, 0.0
        %vm1781 = vcmp.ge.f32.partialorder %v1771, 0.0
        %vm1782 = vcmp.ge.f32.partialorder %v1772, 0.0
        %vm1783 = vcmp.ge.f32.partialorder %v1773, 0.0
        %vm1784 = vcmp.ge.f32.partialorder %v1774, 0.0
        %vm1785 = vcmp.ge.f32.partialorder %v1775, 0.0
        %v1786 = vmul.f32 %v1766, 0.01
        %v1787 = vmul.f32 %v1767, 0.01
        %v1788 = vmul.f32 %v1768, 0.01
        %v1789 = vmul.f32 %v1769, 0.01
        %v1790 = vmul.f32 %v1770, 0.01
        %v1791 = vmul.f32 %v1771, 0.01
        %v1792 = vmul.f32 %v1772, 0.01
        %v1793 = vmul.f32 %v1773, 0.01
        %v1794 = vmul.f32 %v1774, 0.01
        %v1795 = vmul.f32 %v1775, 0.01
        %v1796 = vsel %vm1776, %v1766, %v1786
        %v1797 = vsel %vm1777, %v1767, %v1787
        %v1798 = vsel %vm1778, %v1768, %v1788
        %v1799 = vsel %vm1779, %v1769, %v1789
        %v1800 = vsel %vm1780, %v1770, %v1790
        %v1801 = vsel %vm1781, %v1771, %v1791
        %v1802 = vsel %vm1782, %v1772, %v1792
        %v1803 = vsel %vm1783, %v1773, %v1793
        %v1804 = vsel %vm1784, %v1774, %v1794
        %v1805 = vsel %vm1785, %v1775, %v1795
        %v1806 = vpack.c.bf16 %v1797, %v1796
        %v1807 = vpack.c.bf16 %v1799, %v1798
        %v1808 = vpack.c.bf16 %v1801, %v1800
        %v1809 = vpack.c.bf16 %v1803, %v1802
        %v1810 = vpack.c.bf16 %v1805, %v1804
        %1817 = vrot.lane.b32.xlu0 %v1435, 96
        %v1818 = vpop.permute.xlu0 %1817
        %1819 = vrot.lane.b32.xlu0 %v1438, 96
        %v1820 = vpop.permute.xlu0 %1819
        %1821 = vrot.lane.b32.xlu0 %v1443, 96
        %v1822 = vpop.permute.xlu0 %1821
        %1823 = vrot.lane.b32.xlu0 %v1446, 96
        %v1824 = vpop.permute.xlu0 %1823
        %1825 = vrot.lane.b32.xlu0 %v1451, 96
        %v1826 = vpop.permute.xlu0 %1825
        %1827 = vrot.lane.b32.xlu0 %v1454, 96
        %v1828 = vpop.permute.xlu0 %1827
        %vm1835 = vcmask 654336
        %v1837 = vsel %vm1835, %v1007, 0
        %v1840 = vsel %vm1835, %v1008, 0
        %v1843 = vsel %vm1835, %v1009, 0
        %1845 = vmatprep.subr.bf16.mxu0 0
        %1846 = vmatpush1.bf16.msra.mxu0 0
        %1847 = vmatprep.subr.bf16.mxu0 0
        %1848 = vmatpush1.bf16.msra.mxu0 0
        %1849 = vmatprep.subr.bf16.mxu0 0
        %1850 = vmatpush1.bf16.msra.mxu0 0
        %1851 = vmatprep.subr.bf16.mxu0 0
        %1852 = vmatpush1.bf16.msra.mxu0 %v1810
        %1853 = vmatprep.subr.bf16.mxu0 0
        %1854 = vmatpush1.bf16.msra.mxu0 %v1809
        %1855 = vmatprep.subr.bf16.mxu0 0
        %1856 = vmatpush1.bf16.msra.mxu0 %v1808
        %1857 = vmatprep.subr.bf16.mxu0 0
        %1858 = vmatpush1.bf16.msra.mxu0 %v1807
        %1859 = vmatprep.subr.bf16.mxu0 0
        %1860 = vmatpush1.bf16.msra.mxu0 %v1806
        %1861 = vmatprep.subr.bf16.mxu0 0
        %1862 = vmatpush2.bf16.msra.mxu0 0
        %1863 = vmatprep.subr.bf16.mxu0 0
        %1864 = vmatpush2.bf16.msra.mxu0 0
        %1865 = vmatprep.subr.bf16.mxu0 0
        %1866 = vmatpush2.bf16.msra.mxu0 0
        %1867 = vmatprep.subr.bf16.mxu0 0
        %1868 = vmatpush2.bf16.msra.mxu0 0
        %1869 = vmatprep.subr.bf16.mxu0 0
        %1870 = vmatpush2.bf16.msra.mxu0 0
        %1871 = vmatprep.subr.bf16.mxu0 0
        %1872 = vmatpush2.bf16.msra.mxu0 0
        %1873 = vmatprep.subr.bf16.mxu0 0
        %1874 = vmatpush2.bf16.msra.mxu0 0
        %1875 = vmatprep.subr.bf16.mxu0 0
        %1876 = vmatpush2.bf16.msra.mxu0 0
        %1877 = vmatprep.mubr.bf16.mxu0 0
        %1878 = vmatmul.mubr.bf16.gmra.mxu0 %v1837
        %v1879 = vpop.f32.mrf.mxu0
        %v1880 = vadd.f32 %v1818, %v1879
        %v1881 = vpop.f32.mrf.mxu0
        %v1882 = vpop.f32.mrf.mxu0
        %v1883 = vadd.f32 %v1820, %v1882
        %v1884 = vpop.f32.mrf.mxu0
        %1885 = vmatprep.mubr.bf16.mxu0 0
        %1886 = vmatmul.mubr.bf16.gmra.mxu0 %v1840
        %v1887 = vpop.f32.mrf.mxu0
        %v1888 = vadd.f32 %v1822, %v1887
        %v1889 = vpop.f32.mrf.mxu0
        %v1890 = vpop.f32.mrf.mxu0
        %v1891 = vadd.f32 %v1824, %v1890
        %v1892 = vpop.f32.mrf.mxu0
        %1893 = vmatprep.mubr.bf16.mxu0 0
        %1894 = vmatmul.mubr.bf16.gmra.mxu0 %v1843
        %v1895 = vpop.f32.mrf.mxu0
        %v1896 = vadd.f32 %v1826, %v1895
        %v1897 = vpop.f32.mrf.mxu0
        %v1898 = vpop.f32.mrf.mxu0
        %v1899 = vadd.f32 %v1828, %v1898
        %v1900 = vpop.f32.mrf.mxu0
        %1901 = vdwg.mxu0
        %v1902 = vlaneseq
        %v1903 = vshrl.u32 %v1902, 7
        %v1904 = vsub.s32 1, %v1903
        %v1905 = vrot.slane %v1458, %v1904
        %v1906 = vadd.f32 %v1880, %v1905
        %v1907 = vadd.f32 %v1883, %v1905
        %v1908 = vadd.f32 %v1888, %v1905
        %v1909 = vadd.f32 %v1891, %v1905
        %v1910 = vadd.f32 %v1896, %v1905
        %v1911 = vadd.f32 %v1899, %v1905
        %v1912 = vpack.c.bf16 %v1907, %v1906
        %v1913 = vpack.c.bf16 %v1909, %v1908
        %v1914 = vpack.c.bf16 %v1911, %v1910
        %v1915 = vld [vmem:[%s6] sm:$0xf]
        %v1916 = vld [vmem:[%s6 + $0x4] sm:$0xf]
        %v1919 = vunpack.c.l.b16 %v1915
        %v1920 = vunpack.c.l.b16 %v1916
        %v1921 = vpack.c.b16 %v1920, %v1919
        %vm1923 = vcmask 130048
        %v1925 = vsel %vm1923, %v1912, 0
        %v1928 = vsel %vm1923, %v1913, 0
        %v1931 = vsel %vm1923, %v1914, 0
        %1933 = vmatprep.subr.bf16.mxu0 0
        %1934 = vmatpush1.bf16.msra.mxu0 0
        %1935 = vmatprep.subr.bf16.mxu0 0
        %1936 = vmatpush1.bf16.msra.mxu0 0
        %1937 = vmatprep.subr.bf16.mxu0 0
        %1938 = vmatpush1.bf16.msra.mxu0 0
        %1939 = vmatprep.subr.bf16.mxu0 0
        %1940 = vmatpush1.bf16.msra.mxu0 0
        %1941 = vmatprep.subr.bf16.mxu0 0
        %1942 = vmatpush1.bf16.msra.mxu0 0
        %1943 = vmatprep.subr.bf16.mxu0 0
        %1944 = vmatpush1.bf16.msra.mxu0 0
        %1945 = vmatprep.subr.bf16.mxu0 0
        %1946 = vmatpush1.bf16.msra.mxu0 0
        %1947 = vmatprep.subr.bf16.mxu0 0
        %1948 = vmatpush1.bf16.msra.mxu0 %v1921
        %1949 = vmatprep.subr.bf16.mxu0 0
        %1950 = vmatpush2.bf16.msra.mxu0 0
        %1951 = vmatprep.subr.bf16.mxu0 0
        %1952 = vmatpush2.bf16.msra.mxu0 0
        %1953 = vmatprep.subr.bf16.mxu0 0
        %1954 = vmatpush2.bf16.msra.mxu0 0
        %1955 = vmatprep.subr.bf16.mxu0 0
        %1956 = vmatpush2.bf16.msra.mxu0 0
        %1957 = vmatprep.subr.bf16.mxu0 0
        %1958 = vmatpush2.bf16.msra.mxu0 0
        %1959 = vmatprep.subr.bf16.mxu0 0
        %1960 = vmatpush2.bf16.msra.mxu0 0
        %1961 = vmatprep.subr.bf16.mxu0 0
        %1962 = vmatpush2.bf16.msra.mxu0 0
        %1963 = vmatprep.subr.bf16.mxu0 0
        %1964 = vmatpush2.bf16.msra.mxu0 0
        %1965 = vmatprep.mubr.bf16.mxu0 0
        %1966 = vmatmul.mubr.bf16.gmra.mxu0 %v1925
        %v1967 = vpop.f32.mrf.mxu0
        %v1968 = vadd.f32 0.0, %v1967
        %v1969 = vpop.f32.mrf.mxu0
        %v1970 = vpop.f32.mrf.mxu0
        %v1971 = vadd.f32 0.0, %v1970
        %v1972 = vpop.f32.mrf.mxu0
        %1973 = vmatprep.mubr.bf16.mxu0 0
        %1974 = vmatmul.mubr.bf16.gmra.mxu0 %v1928
        %v1975 = vpop.f32.mrf.mxu0
        %v1976 = vadd.f32 0.0, %v1975
        %v1977 = vpop.f32.mrf.mxu0
        %v1978 = vpop.f32.mrf.mxu0
        %v1979 = vadd.f32 0.0, %v1978
        %v1980 = vpop.f32.mrf.mxu0
        %1981 = vmatprep.mubr.bf16.mxu0 0
        %1982 = vmatmul.mubr.bf16.gmra.mxu0 %v1931
        %v1983 = vpop.f32.mrf.mxu0
        %v1984 = vadd.f32 0.0, %v1983
        %v1985 = vpop.f32.mrf.mxu0
        %v1986 = vpop.f32.mrf.mxu0
        %v1987 = vadd.f32 0.0, %v1986
        %v1988 = vpop.f32.mrf.mxu0
        %1989 = vdwg.mxu0
        %v1990 = vld [vmem:[%s7] sm:$0x3]
        %v1991 = vld [vmem:[%s8] sm:$0x3]
        %v1992 = vpack.c.bf16 %v1971, %v1968
        %v1993 = vpack.c.bf16 %v1979, %v1976
        %v1994 = vpack.c.bf16 %v1987, %v1984
        %1998 = vrot.lane.b32.xlu0 %v1992, 96
        %v1999 = vpop.permute.xlu0 %1998
        %2000 = vrot.lane.b32.xlu0 %v1993, 96
        %v2001 = vpop.permute.xlu0 %2000
        %2002 = vrot.lane.b32.xlu0 %v1994, 96
        %v2003 = vpop.permute.xlu0 %2002
        %2007 = vmatprep.subr.bf16.mxu0 0
        %2008 = vmatpush1.bf16.msra.mxu0 0
        %2009 = vmatprep.subr.bf16.mxu0 0
        %2010 = vmatpush1.bf16.msra.mxu0 0
        %2011 = vmatprep.subr.bf16.mxu0 0
        %2012 = vmatpush1.bf16.msra.mxu0 0
        %2013 = vmatprep.subr.bf16.mxu0 0
        %2014 = vmatpush1.bf16.msra.mxu0 0
        %2015 = vmatprep.subr.bf16.mxu0 0
        %2016 = vmatpush1.bf16.msra.mxu0 0
        %2017 = vmatprep.subr.bf16.mxu0 0
        %2018 = vmatpush1.bf16.msra.mxu0 %v2003
        %2019 = vmatprep.subr.bf16.mxu0 0
        %2020 = vmatpush1.bf16.msra.mxu0 %v2001
        %2021 = vmatprep.subr.bf16.mxu0 0
        %2022 = vmatpush1.bf16.msra.mxu0 %v1999
        %2023 = vmatprep.subr.bf16.mxu0 0
        %2024 = vmatpush2.bf16.msra.mxu0 0
        %2025 = vmatprep.subr.bf16.mxu0 0
        %2026 = vmatpush2.bf16.msra.mxu0 0
        %2027 = vmatprep.subr.bf16.mxu0 0
        %2028 = vmatpush2.bf16.msra.mxu0 0
        %2029 = vmatprep.subr.bf16.mxu0 0
        %2030 = vmatpush2.bf16.msra.mxu0 0
        %2031 = vmatprep.subr.bf16.mxu0 0
        %2032 = vmatpush2.bf16.msra.mxu0 0
        %2033 = vmatprep.subr.bf16.mxu0 0
        %2034 = vmatpush2.bf16.msra.mxu0 0
        %2035 = vmatprep.subr.bf16.mxu0 0
        %2036 = vmatpush2.bf16.msra.mxu0 0
        %2037 = vmatprep.subr.bf16.mxu0 0
        %2038 = vmatpush2.bf16.msra.mxu0 0
        %2039 = vmatprep.mubr.bf16.mxu0 0
        %2040 = vmatmul.mubr.bf16.gmra.mxu0 %v1476
        %v2041 = vpop.f32.mrf.mxu0
        %v2042 = vadd.f32 0.0, %v2041
        %v2043 = vpop.f32.mrf.mxu0
        %v2044 = vpop.f32.mrf.mxu0
        %v2045 = vadd.f32 0.0, %v2044
        %v2046 = vpop.f32.mrf.mxu0
        %2047 = vmatprep.mubr.bf16.mxu0 0
        %2048 = vmatmul.mubr.bf16.gmra.mxu0 %v1479
        %v2049 = vpop.f32.mrf.mxu0
        %v2050 = vadd.f32 0.0, %v2049
        %v2051 = vpop.f32.mrf.mxu0
        %v2052 = vpop.f32.mrf.mxu0
        %v2053 = vadd.f32 0.0, %v2052
        %v2054 = vpop.f32.mrf.mxu0
        %2055 = vmatprep.mubr.bf16.mxu0 0
        %2056 = vmatmul.mubr.bf16.gmra.mxu0 %v1482
        %v2057 = vpop.f32.mrf.mxu0
        %v2058 = vadd.f32 0.0, %v2057
        %v2059 = vpop.f32.mrf.mxu0
        %v2060 = vpop.f32.mrf.mxu0
        %v2061 = vadd.f32 0.0, %v2060
        %v2062 = vpop.f32.mrf.mxu0
        %2063 = vmatprep.mubr.bf16.mxu0 0
        %2064 = vmatmul.mubr.bf16.gmra.mxu0 %v1485
        %v2065 = vpop.f32.mrf.mxu0
        %v2066 = vadd.f32 0.0, %v2065
        %v2067 = vpop.f32.mrf.mxu0
        %v2068 = vpop.f32.mrf.mxu0
        %v2069 = vadd.f32 0.0, %v2068
        %v2070 = vpop.f32.mrf.mxu0
        %2071 = vmatprep.mubr.bf16.mxu0 0
        %2072 = vmatmul.mubr.bf16.gmra.mxu0 %v1488
        %v2073 = vpop.f32.mrf.mxu0
        %v2074 = vadd.f32 0.0, %v2073
        %v2075 = vpop.f32.mrf.mxu0
        %v2076 = vpop.f32.mrf.mxu0
        %v2077 = vadd.f32 0.0, %v2076
        %v2078 = vpop.f32.mrf.mxu0
        %2079 = vdwg.mxu0
        %2080 = vmatprep.subr.bf16.mxu0 0
        %2081 = vmatpush1.bf16.msra.mxu0 0
        %2082 = vmatprep.subr.bf16.mxu0 0
        %2083 = vmatpush1.bf16.msra.mxu0 0
        %2084 = vmatprep.subr.bf16.mxu0 0
        %2085 = vmatpush1.bf16.msra.mxu0 0
        %2086 = vmatprep.subr.bf16.mxu0 0
        %2087 = vmatpush1.bf16.msra.mxu0 0
        %2088 = vmatprep.subr.bf16.mxu0 0
        %2089 = vmatpush1.bf16.msra.mxu0 0
        %2090 = vmatprep.subr.bf16.mxu0 0
        %2091 = vmatpush1.bf16.msra.mxu0 %v1994
        %2092 = vmatprep.subr.bf16.mxu0 0
        %2093 = vmatpush1.bf16.msra.mxu0 %v1993
        %2094 = vmatprep.subr.bf16.mxu0 0
        %2095 = vmatpush1.bf16.msra.mxu0 %v1992
        %2096 = vmatprep.subr.bf16.mxu0 0
        %2097 = vmatpush2.bf16.msra.mxu0 0
        %2098 = vmatprep.subr.bf16.mxu0 0
        %2099 = vmatpush2.bf16.msra.mxu0 0
        %2100 = vmatprep.subr.bf16.mxu0 0
        %2101 = vmatpush2.bf16.msra.mxu0 0
        %2102 = vmatprep.subr.bf16.mxu0 0
        %2103 = vmatpush2.bf16.msra.mxu0 0
        %2104 = vmatprep.subr.bf16.mxu0 0
        %2105 = vmatpush2.bf16.msra.mxu0 0
        %2106 = vmatprep.subr.bf16.mxu0 0
        %2107 = vmatpush2.bf16.msra.mxu0 0
        %2108 = vmatprep.subr.bf16.mxu0 0
        %2109 = vmatpush2.bf16.msra.mxu0 0
        %2110 = vmatprep.subr.bf16.mxu0 0
        %2111 = vmatpush2.bf16.msra.mxu0 0
        %2112 = vmatprep.mubr.bf16.mxu0 0
        %2113 = vmatmul.mubr.bf16.gmra.mxu0 %v1564
        %v2114 = vpop.f32.mrf.mxu0
        %v2115 = vadd.f32 %v2042, %v2114
        %v2116 = vpop.f32.mrf.mxu0
        %v2117 = vpop.f32.mrf.mxu0
        %v2118 = vadd.f32 %v2045, %v2117
        %v2119 = vpop.f32.mrf.mxu0
        %2120 = vmatprep.mubr.bf16.mxu0 0
        %2121 = vmatmul.mubr.bf16.gmra.mxu0 %v1567
        %v2122 = vpop.f32.mrf.mxu0
        %v2123 = vadd.f32 %v2050, %v2122
        %v2124 = vpop.f32.mrf.mxu0
        %v2125 = vpop.f32.mrf.mxu0
        %v2126 = vadd.f32 %v2053, %v2125
        %v2127 = vpop.f32.mrf.mxu0
        %2128 = vmatprep.mubr.bf16.mxu0 0
        %2129 = vmatmul.mubr.bf16.gmra.mxu0 %v1570
        %v2130 = vpop.f32.mrf.mxu0
        %v2131 = vadd.f32 %v2058, %v2130
        %v2132 = vpop.f32.mrf.mxu0
        %v2133 = vpop.f32.mrf.mxu0
        %v2134 = vadd.f32 %v2061, %v2133
        %v2135 = vpop.f32.mrf.mxu0
        %2136 = vmatprep.mubr.bf16.mxu0 0
        %2137 = vmatmul.mubr.bf16.gmra.mxu0 %v1573
        %v2138 = vpop.f32.mrf.mxu0
        %v2139 = vadd.f32 %v2066, %v2138
        %v2140 = vpop.f32.mrf.mxu0
        %v2141 = vpop.f32.mrf.mxu0
        %v2142 = vadd.f32 %v2069, %v2141
        %v2143 = vpop.f32.mrf.mxu0
        %2144 = vmatprep.mubr.bf16.mxu0 0
        %2145 = vmatmul.mubr.bf16.gmra.mxu0 %v1576
        %v2146 = vpop.f32.mrf.mxu0
        %v2147 = vadd.f32 %v2074, %v2146
        %v2148 = vpop.f32.mrf.mxu0
        %v2149 = vpop.f32.mrf.mxu0
        %v2150 = vadd.f32 %v2077, %v2149
        %v2151 = vpop.f32.mrf.mxu0
        %2152 = vdwg.mxu0
        %v2154 = vand.u32 %v1990, %v1675
        %2156 = vmatprep.subr.bf16.mxu0 0
        %2157 = vmatpush1.bf16.msra.mxu0 0
        %2158 = vmatprep.subr.bf16.mxu0 0
        %2159 = vmatpush1.bf16.msra.mxu0 0
        %2160 = vmatprep.subr.bf16.mxu0 0
        %2161 = vmatpush1.bf16.msra.mxu0 0
        %2162 = vmatprep.subr.bf16.mxu0 0
        %2163 = vmatpush1.bf16.msra.mxu0 0
        %2164 = vmatprep.subr.bf16.mxu0 0
        %2165 = vmatpush1.bf16.msra.mxu0 0
        %2166 = vmatprep.subr.bf16.mxu0 0
        %2167 = vmatpush1.bf16.msra.mxu0 0
        %2168 = vmatprep.subr.bf16.mxu0 0
        %2169 = vmatpush1.bf16.msra.mxu0 0
        %2170 = vmatprep.subr.bf16.mxu0 0
        %2171 = vmatpush1.bf16.msra.mxu0 %v2154
        %2172 = vmatprep.subr.bf16.mxu0 0
        %2173 = vmatpush2.bf16.msra.mxu0 0
        %2174 = vmatprep.subr.bf16.mxu0 0
        %2175 = vmatpush2.bf16.msra.mxu0 0
        %2176 = vmatprep.subr.bf16.mxu0 0
        %2177 = vmatpush2.bf16.msra.mxu0 0
        %2178 = vmatprep.subr.bf16.mxu0 0
        %2179 = vmatpush2.bf16.msra.mxu0 0
        %2180 = vmatprep.subr.bf16.mxu0 0
        %2181 = vmatpush2.bf16.msra.mxu0 0
        %2182 = vmatprep.subr.bf16.mxu0 0
        %2183 = vmatpush2.bf16.msra.mxu0 0
        %2184 = vmatprep.subr.bf16.mxu0 0
        %2185 = vmatpush2.bf16.msra.mxu0 0
        %2186 = vmatprep.subr.bf16.mxu0 0
        %2187 = vmatpush2.bf16.msra.mxu0 0
        %2188 = vmatprep.mubr.bf16.mxu0 0
        %2189 = vmatmul.mubr.bf16.gmra.mxu0 %v1658
        %v2190 = vpop.f32.mrf.mxu0
        %v2191 = vadd.f32 0.0, %v2190
        %v2192 = vpop.f32.mrf.mxu0
        %v2193 = vpop.f32.mrf.mxu0
        %v2194 = vadd.f32 0.0, %v2193
        %v2195 = vpop.f32.mrf.mxu0
        %2196 = vmatprep.mubr.bf16.mxu0 0
        %2197 = vmatmul.mubr.bf16.gmra.mxu0 %v1661
        %v2198 = vpop.f32.mrf.mxu0
        %v2199 = vadd.f32 0.0, %v2198
        %v2200 = vpop.f32.mrf.mxu0
        %v2201 = vpop.f32.mrf.mxu0
        %v2202 = vadd.f32 0.0, %v2201
        %v2203 = vpop.f32.mrf.mxu0
        %2204 = vmatprep.mubr.bf16.mxu0 0
        %2205 = vmatmul.mubr.bf16.gmra.mxu0 %v1664
        %v2206 = vpop.f32.mrf.mxu0
        %v2207 = vadd.f32 0.0, %v2206
        %v2208 = vpop.f32.mrf.mxu0
        %v2209 = vpop.f32.mrf.mxu0
        %v2210 = vadd.f32 0.0, %v2209
        %v2211 = vpop.f32.mrf.mxu0
        %2212 = vmatprep.mubr.bf16.mxu0 0
        %2213 = vmatmul.mubr.bf16.gmra.mxu0 %v1667
        %v2214 = vpop.f32.mrf.mxu0
        %v2215 = vadd.f32 0.0, %v2214
        %v2216 = vpop.f32.mrf.mxu0
        %v2217 = vpop.f32.mrf.mxu0
        %v2218 = vadd.f32 0.0, %v2217
        %v2219 = vpop.f32.mrf.mxu0
        %2220 = vmatprep.mubr.bf16.mxu0 0
        %2221 = vmatmul.mubr.bf16.gmra.mxu0 %v1670
        %v2222 = vpop.f32.mrf.mxu0
        %v2223 = vadd.f32 0.0, %v2222
        %v2224 = vpop.f32.mrf.mxu0
        %v2225 = vpop.f32.mrf.mxu0
        %v2226 = vadd.f32 0.0, %v2225
        %v2227 = vpop.f32.mrf.mxu0
        %2228 = vdwg.mxu0
        %v2229 = vadd.f32 %v2115, %v2191
        %v2230 = vadd.f32 %v2118, %v2194
        %v2231 = vadd.f32 %v2123, %v2199
        %v2232 = vadd.f32 %v2126, %v2202
        %v2233 = vadd.f32 %v2131, %v2207
        %v2234 = vadd.f32 %v2134, %v2210
        %v2235 = vadd.f32 %v2139, %v2215
        %v2236 = vadd.f32 %v2142, %v2218
        %v2237 = vadd.f32 %v2147, %v2223
        %v2238 = vadd.f32 %v2150, %v2226
        %v2239 = vlaneseq
        %v2240 = vshrl.u32 %v2239, 7
        %v2241 = vsub.s32 0, %v2240
        %v2242 = vrot.slane %v1991, %v2241
        %v2243 = vadd.f32 %v2229, %v2242
        %v2244 = vadd.f32 %v2230, %v2242
        %v2245 = vadd.f32 %v2231, %v2242
        %v2246 = vadd.f32 %v2232, %v2242
        %v2247 = vadd.f32 %v2233, %v2242
        %v2248 = vadd.f32 %v2234, %v2242
        %v2249 = vadd.f32 %v2235, %v2242
        %v2250 = vadd.f32 %v2236, %v2242
        %v2251 = vadd.f32 %v2237, %v2242
        %v2252 = vadd.f32 %v2238, %v2242
        %vm2253 = vcmp.ge.f32.partialorder %v2243, 0.0
        %vm2254 = vcmp.ge.f32.partialorder %v2244, 0.0
        %vm2255 = vcmp.ge.f32.partialorder %v2245, 0.0
        %vm2256 = vcmp.ge.f32.partialorder %v2246, 0.0
        %vm2257 = vcmp.ge.f32.partialorder %v2247, 0.0
        %vm2258 = vcmp.ge.f32.partialorder %v2248, 0.0
        %vm2259 = vcmp.ge.f32.partialorder %v2249, 0.0
        %vm2260 = vcmp.ge.f32.partialorder %v2250, 0.0
        %vm2261 = vcmp.ge.f32.partialorder %v2251, 0.0
        %vm2262 = vcmp.ge.f32.partialorder %v2252, 0.0
        %v2263 = vmul.f32 %v2243, 0.01
        %v2264 = vmul.f32 %v2244, 0.01
        %v2265 = vmul.f32 %v2245, 0.01
        %v2266 = vmul.f32 %v2246, 0.01
        %v2267 = vmul.f32 %v2247, 0.01
        %v2268 = vmul.f32 %v2248, 0.01
        %v2269 = vmul.f32 %v2249, 0.01
        %v2270 = vmul.f32 %v2250, 0.01
        %v2271 = vmul.f32 %v2251, 0.01
        %v2272 = vmul.f32 %v2252, 0.01
        %v2273 = vsel %vm2253, %v2243, %v2263
        %v2274 = vsel %vm2254, %v2244, %v2264
        %v2275 = vsel %vm2255, %v2245, %v2265
        %v2276 = vsel %vm2256, %v2246, %v2266
        %v2277 = vsel %vm2257, %v2247, %v2267
        %v2278 = vsel %vm2258, %v2248, %v2268
        %v2279 = vsel %vm2259, %v2249, %v2269
        %v2280 = vsel %vm2260, %v2250, %v2270
        %v2281 = vsel %vm2261, %v2251, %v2271
        %v2282 = vsel %vm2262, %v2252, %v2272
        %v2283 = vpack.c.bf16 %v2274, %v2273
        %v2284 = vpack.c.bf16 %v2276, %v2275
        %v2285 = vpack.c.bf16 %v2278, %v2277
        %v2286 = vpack.c.bf16 %v2280, %v2279
        %v2287 = vpack.c.bf16 %v2282, %v2281
        %2294 = vrot.lane.b32.xlu0 %v1968, 64
        %v2295 = vpop.permute.xlu0 %2294
        %2296 = vrot.lane.b32.xlu0 %v1971, 64
        %v2297 = vpop.permute.xlu0 %2296
        %2298 = vrot.lane.b32.xlu0 %v1976, 64
        %v2299 = vpop.permute.xlu0 %2298
        %2300 = vrot.lane.b32.xlu0 %v1979, 64
        %v2301 = vpop.permute.xlu0 %2300
        %2302 = vrot.lane.b32.xlu0 %v1984, 64
        %v2303 = vpop.permute.xlu0 %2302
        %2304 = vrot.lane.b32.xlu0 %v1987, 64
        %v2305 = vpop.permute.xlu0 %2304
        %2312 = vmatprep.subr.bf16.mxu0 0
        %2313 = vmatpush1.bf16.msra.mxu0 0
        %2314 = vmatprep.subr.bf16.mxu0 0
        %2315 = vmatpush1.bf16.msra.mxu0 0
        %2316 = vmatprep.subr.bf16.mxu0 0
        %2317 = vmatpush1.bf16.msra.mxu0 0
        %2318 = vmatprep.subr.bf16.mxu0 0
        %2319 = vmatpush1.bf16.msra.mxu0 %v2287
        %2320 = vmatprep.subr.bf16.mxu0 0
        %2321 = vmatpush1.bf16.msra.mxu0 %v2286
        %2322 = vmatprep.subr.bf16.mxu0 0
        %2323 = vmatpush1.bf16.msra.mxu0 %v2285
        %2324 = vmatprep.subr.bf16.mxu0 0
        %2325 = vmatpush1.bf16.msra.mxu0 %v2284
        %2326 = vmatprep.subr.bf16.mxu0 0
        %2327 = vmatpush1.bf16.msra.mxu0 %v2283
        %2328 = vmatprep.subr.bf16.mxu0 0
        %2329 = vmatpush2.bf16.msra.mxu0 0
        %2330 = vmatprep.subr.bf16.mxu0 0
        %2331 = vmatpush2.bf16.msra.mxu0 0
        %2332 = vmatprep.subr.bf16.mxu0 0
        %2333 = vmatpush2.bf16.msra.mxu0 0
        %2334 = vmatprep.subr.bf16.mxu0 0
        %2335 = vmatpush2.bf16.msra.mxu0 0
        %2336 = vmatprep.subr.bf16.mxu0 0
        %2337 = vmatpush2.bf16.msra.mxu0 0
        %2338 = vmatprep.subr.bf16.mxu0 0
        %2339 = vmatpush2.bf16.msra.mxu0 0
        %2340 = vmatprep.subr.bf16.mxu0 0
        %2341 = vmatpush2.bf16.msra.mxu0 0
        %2342 = vmatprep.subr.bf16.mxu0 0
        %2343 = vmatpush2.bf16.msra.mxu0 0
        %2344 = vmatprep.mubr.bf16.mxu0 0
        %2345 = vmatmul.mubr.bf16.gmra.mxu0 %v1837
        %v2346 = vpop.f32.mrf.mxu0
        %v2347 = vadd.f32 %v2295, %v2346
        %v2348 = vpop.f32.mrf.mxu0
        %v2349 = vpop.f32.mrf.mxu0
        %v2350 = vadd.f32 %v2297, %v2349
        %v2351 = vpop.f32.mrf.mxu0
        %2352 = vmatprep.mubr.bf16.mxu0 0
        %2353 = vmatmul.mubr.bf16.gmra.mxu0 %v1840
        %v2354 = vpop.f32.mrf.mxu0
        %v2355 = vadd.f32 %v2299, %v2354
        %v2356 = vpop.f32.mrf.mxu0
        %v2357 = vpop.f32.mrf.mxu0
        %v2358 = vadd.f32 %v2301, %v2357
        %v2359 = vpop.f32.mrf.mxu0
        %2360 = vmatprep.mubr.bf16.mxu0 0
        %2361 = vmatmul.mubr.bf16.gmra.mxu0 %v1843
        %v2362 = vpop.f32.mrf.mxu0
        %v2363 = vadd.f32 %v2303, %v2362
        %v2364 = vpop.f32.mrf.mxu0
        %v2365 = vpop.f32.mrf.mxu0
        %v2366 = vadd.f32 %v2305, %v2365
        %v2367 = vpop.f32.mrf.mxu0
        %2368 = vdwg.mxu0
        %v2369 = vlaneseq
        %v2370 = vshrl.u32 %v2369, 7
        %v2371 = vsub.s32 1, %v2370
        %v2372 = vrot.slane %v1991, %v2371
        %v2373 = vadd.f32 %v2347, %v2372
        %v2374 = vadd.f32 %v2350, %v2372
        %v2375 = vadd.f32 %v2355, %v2372
        %v2376 = vadd.f32 %v2358, %v2372
        %v2377 = vadd.f32 %v2363, %v2372
        %v2378 = vadd.f32 %v2366, %v2372
        %v2379 = vpack.c.bf16 %v2374, %v2373
        %v2380 = vpack.c.bf16 %v2376, %v2375
        %v2381 = vpack.c.bf16 %v2378, %v2377
        %v2382 = vld [vmem:[%s9] sm:$0xff]
        %v2383 = vld [vmem:[%s9 + $0x8] sm:$0xff]
        %v2384 = vld [vmem:[%s9 + $0x10] sm:$0xff]
        %v2385 = vld [vmem:[%s9 + $0x18] sm:$0xff]
        %v2390 = vunpack.c.l.b16 %v2382
        %v2391 = vunpack.c.h.b16 %v2382
        %v2392 = vunpack.c.l.b16 %v2383
        %v2393 = vunpack.c.h.b16 %v2383
        %v2394 = vunpack.c.l.b16 %v2384
        %v2395 = vunpack.c.h.b16 %v2384
        %v2396 = vunpack.c.l.b16 %v2385
        %v2397 = vunpack.c.h.b16 %v2385
        %v2398 = vpack.c.b16 %v2392, %v2390
        %v2399 = vpack.c.b16 %v2393, %v2391
        %v2400 = vpack.c.b16 %v2396, %v2394
        %v2401 = vpack.c.b16 %v2397, %v2395
        %vm2406 = vcmask 261120
        %v2408 = vsel %vm2406, %v2379, 0
        %v2411 = vsel %vm2406, %v2380, 0
        %v2414 = vsel %vm2406, %v2381, 0
        %2416 = vmatprep.subr.bf16.mxu0 0
        %2417 = vmatpush1.bf16.msra.mxu0 0
        %2418 = vmatprep.subr.bf16.mxu0 0
        %2419 = vmatpush1.bf16.msra.mxu0 0
        %2420 = vmatprep.subr.bf16.mxu0 0
        %2421 = vmatpush1.bf16.msra.mxu0 0
        %2422 = vmatprep.subr.bf16.mxu0 0
        %2423 = vmatpush1.bf16.msra.mxu0 0
        %2424 = vmatprep.subr.bf16.mxu0 0
        %2425 = vmatpush1.bf16.msra.mxu0 0
        %2426 = vmatprep.subr.bf16.mxu0 0
        %2427 = vmatpush1.bf16.msra.mxu0 0
        %2428 = vmatprep.subr.bf16.mxu0 %v2401
        %2429 = vmatpush1.bf16.msra.mxu0 %v2400
        %2430 = vmatprep.subr.bf16.mxu0 %v2399
        %2431 = vmatpush1.bf16.msra.mxu0 %v2398
        %2432 = vmatprep.subr.bf16.mxu0 0
        %2433 = vmatpush2.bf16.msra.mxu0 0
        %2434 = vmatprep.subr.bf16.mxu0 0
        %2435 = vmatpush2.bf16.msra.mxu0 0
        %2436 = vmatprep.subr.bf16.mxu0 0
        %2437 = vmatpush2.bf16.msra.mxu0 0
        %2438 = vmatprep.subr.bf16.mxu0 0
        %2439 = vmatpush2.bf16.msra.mxu0 0
        %2440 = vmatprep.subr.bf16.mxu0 0
        %2441 = vmatpush2.bf16.msra.mxu0 0
        %2442 = vmatprep.subr.bf16.mxu0 0
        %2443 = vmatpush2.bf16.msra.mxu0 0
        %2444 = vmatprep.subr.bf16.mxu0 0
        %2445 = vmatpush2.bf16.msra.mxu0 0
        %2446 = vmatprep.subr.bf16.mxu0 0
        %2447 = vmatpush2.bf16.msra.mxu0 0
        %2448 = vmatprep.mubr.bf16.mxu0 0
        %2449 = vmatmul.mubr.bf16.gmra.mxu0 %v2408
        %v2450 = vpop.f32.mrf.mxu0
        %v2451 = vadd.f32 0.0, %v2450
        %v2452 = vpop.f32.mrf.mxu0
        %v2453 = vadd.f32 0.0, %v2452
        %v2454 = vpop.f32.mrf.mxu0
        %v2455 = vadd.f32 0.0, %v2454
        %v2456 = vpop.f32.mrf.mxu0
        %v2457 = vadd.f32 0.0, %v2456
        %2458 = vmatprep.mubr.bf16.mxu0 0
        %2459 = vmatmul.mubr.bf16.gmra.mxu0 %v2411
        %v2460 = vpop.f32.mrf.mxu0
        %v2461 = vadd.f32 0.0, %v2460
        %v2462 = vpop.f32.mrf.mxu0
        %v2463 = vadd.f32 0.0, %v2462
        %v2464 = vpop.f32.mrf.mxu0
        %v2465 = vadd.f32 0.0, %v2464
        %v2466 = vpop.f32.mrf.mxu0
        %v2467 = vadd.f32 0.0, %v2466
        %2468 = vmatprep.mubr.bf16.mxu0 0
        %2469 = vmatmul.mubr.bf16.gmra.mxu0 %v2414
        %v2470 = vpop.f32.mrf.mxu0
        %v2471 = vadd.f32 0.0, %v2470
        %v2472 = vpop.f32.mrf.mxu0
        %v2473 = vadd.f32 0.0, %v2472
        %v2474 = vpop.f32.mrf.mxu0
        %v2475 = vadd.f32 0.0, %v2474
        %v2476 = vpop.f32.mrf.mxu0
        %v2477 = vadd.f32 0.0, %v2476
        %2478 = vdwg.mxu0
        %v2479 = vld [vmem:[%s10] sm:$0x3]
        %v2480 = vld [vmem:[%s11] sm:$0x3]
        %v2481 = vpack.c.bf16 %v2455, %v2451
        %v2482 = vpack.c.bf16 %v2465, %v2461
        %v2483 = vpack.c.bf16 %v2475, %v2471
        %2487 = vrot.lane.b32.xlu0 %v2481, 64
        %v2488 = vpop.permute.xlu0 %2487
        %2489 = vrot.lane.b32.xlu0 %v2482, 64
        %v2490 = vpop.permute.xlu0 %2489
        %2491 = vrot.lane.b32.xlu0 %v2483, 64
        %v2492 = vpop.permute.xlu0 %2491
        %2496 = vmatprep.subr.bf16.mxu0 0
        %2497 = vmatpush1.bf16.msra.mxu0 0
        %2498 = vmatprep.subr.bf16.mxu0 0
        %2499 = vmatpush1.bf16.msra.mxu0 0
        %2500 = vmatprep.subr.bf16.mxu0 0
        %2501 = vmatpush1.bf16.msra.mxu0 0
        %2502 = vmatprep.subr.bf16.mxu0 0
        %2503 = vmatpush1.bf16.msra.mxu0 0
        %2504 = vmatprep.subr.bf16.mxu0 0
        %2505 = vmatpush1.bf16.msra.mxu0 0
        %2506 = vmatprep.subr.bf16.mxu0 0
        %2507 = vmatpush1.bf16.msra.mxu0 %v2492
        %2508 = vmatprep.subr.bf16.mxu0 0
        %2509 = vmatpush1.bf16.msra.mxu0 %v2490
        %2510 = vmatprep.subr.bf16.mxu0 0
        %2511 = vmatpush1.bf16.msra.mxu0 %v2488
        %2512 = vmatprep.subr.bf16.mxu0 0
        %2513 = vmatpush2.bf16.msra.mxu0 0
        %2514 = vmatprep.subr.bf16.mxu0 0
        %2515 = vmatpush2.bf16.msra.mxu0 0
        %2516 = vmatprep.subr.bf16.mxu0 0
        %2517 = vmatpush2.bf16.msra.mxu0 0
        %2518 = vmatprep.subr.bf16.mxu0 0
        %2519 = vmatpush2.bf16.msra.mxu0 0
        %2520 = vmatprep.subr.bf16.mxu0 0
        %2521 = vmatpush2.bf16.msra.mxu0 0
        %2522 = vmatprep.subr.bf16.mxu0 0
        %2523 = vmatpush2.bf16.msra.mxu0 0
        %2524 = vmatprep.subr.bf16.mxu0 0
        %2525 = vmatpush2.bf16.msra.mxu0 0
        %2526 = vmatprep.subr.bf16.mxu0 0
        %2527 = vmatpush2.bf16.msra.mxu0 0
        %2528 = vmatprep.mubr.bf16.mxu0 0
        %2529 = vmatmul.mubr.bf16.gmra.mxu0 %v1476
        %v2530 = vpop.f32.mrf.mxu0
        %v2531 = vadd.f32 0.0, %v2530
        %v2532 = vpop.f32.mrf.mxu0
        %v2533 = vpop.f32.mrf.mxu0
        %v2534 = vadd.f32 0.0, %v2533
        %v2535 = vpop.f32.mrf.mxu0
        %2536 = vmatprep.mubr.bf16.mxu0 0
        %2537 = vmatmul.mubr.bf16.gmra.mxu0 %v1479
        %v2538 = vpop.f32.mrf.mxu0
        %v2539 = vadd.f32 0.0, %v2538
        %v2540 = vpop.f32.mrf.mxu0
        %v2541 = vpop.f32.mrf.mxu0
        %v2542 = vadd.f32 0.0, %v2541
        %v2543 = vpop.f32.mrf.mxu0
        %2544 = vmatprep.mubr.bf16.mxu0 0
        %2545 = vmatmul.mubr.bf16.gmra.mxu0 %v1482
        %v2546 = vpop.f32.mrf.mxu0
        %v2547 = vadd.f32 0.0, %v2546
        %v2548 = vpop.f32.mrf.mxu0
        %v2549 = vpop.f32.mrf.mxu0
        %v2550 = vadd.f32 0.0, %v2549
        %v2551 = vpop.f32.mrf.mxu0
        %2552 = vmatprep.mubr.bf16.mxu0 0
        %2553 = vmatmul.mubr.bf16.gmra.mxu0 %v1485
        %v2554 = vpop.f32.mrf.mxu0
        %v2555 = vadd.f32 0.0, %v2554
        %v2556 = vpop.f32.mrf.mxu0
        %v2557 = vpop.f32.mrf.mxu0
        %v2558 = vadd.f32 0.0, %v2557
        %v2559 = vpop.f32.mrf.mxu0
        %2560 = vmatprep.mubr.bf16.mxu0 0
        %2561 = vmatmul.mubr.bf16.gmra.mxu0 %v1488
        %v2562 = vpop.f32.mrf.mxu0
        %v2563 = vadd.f32 0.0, %v2562
        %v2564 = vpop.f32.mrf.mxu0
        %v2565 = vpop.f32.mrf.mxu0
        %v2566 = vadd.f32 0.0, %v2565
        %v2567 = vpop.f32.mrf.mxu0
        %2568 = vdwg.mxu0
        %2569 = vmatprep.subr.bf16.mxu0 0
        %2570 = vmatpush1.bf16.msra.mxu0 0
        %2571 = vmatprep.subr.bf16.mxu0 0
        %2572 = vmatpush1.bf16.msra.mxu0 0
        %2573 = vmatprep.subr.bf16.mxu0 0
        %2574 = vmatpush1.bf16.msra.mxu0 0
        %2575 = vmatprep.subr.bf16.mxu0 0
        %2576 = vmatpush1.bf16.msra.mxu0 0
        %2577 = vmatprep.subr.bf16.mxu0 0
        %2578 = vmatpush1.bf16.msra.mxu0 0
        %2579 = vmatprep.subr.bf16.mxu0 0
        %2580 = vmatpush1.bf16.msra.mxu0 %v2483
        %2581 = vmatprep.subr.bf16.mxu0 0
        %2582 = vmatpush1.bf16.msra.mxu0 %v2482
        %2583 = vmatprep.subr.bf16.mxu0 0
        %2584 = vmatpush1.bf16.msra.mxu0 %v2481
        %2585 = vmatprep.subr.bf16.mxu0 0
        %2586 = vmatpush2.bf16.msra.mxu0 0
        %2587 = vmatprep.subr.bf16.mxu0 0
        %2588 = vmatpush2.bf16.msra.mxu0 0
        %2589 = vmatprep.subr.bf16.mxu0 0
        %2590 = vmatpush2.bf16.msra.mxu0 0
        %2591 = vmatprep.subr.bf16.mxu0 0
        %2592 = vmatpush2.bf16.msra.mxu0 0
        %2593 = vmatprep.subr.bf16.mxu0 0
        %2594 = vmatpush2.bf16.msra.mxu0 0
        %2595 = vmatprep.subr.bf16.mxu0 0
        %2596 = vmatpush2.bf16.msra.mxu0 0
        %2597 = vmatprep.subr.bf16.mxu0 0
        %2598 = vmatpush2.bf16.msra.mxu0 0
        %2599 = vmatprep.subr.bf16.mxu0 0
        %2600 = vmatpush2.bf16.msra.mxu0 0
        %2601 = vmatprep.mubr.bf16.mxu0 0
        %2602 = vmatmul.mubr.bf16.gmra.mxu0 %v1564
        %v2603 = vpop.f32.mrf.mxu0
        %v2604 = vadd.f32 %v2531, %v2603
        %v2605 = vpop.f32.mrf.mxu0
        %v2606 = vpop.f32.mrf.mxu0
        %v2607 = vadd.f32 %v2534, %v2606
        %v2608 = vpop.f32.mrf.mxu0
        %2609 = vmatprep.mubr.bf16.mxu0 0
        %2610 = vmatmul.mubr.bf16.gmra.mxu0 %v1567
        %v2611 = vpop.f32.mrf.mxu0
        %v2612 = vadd.f32 %v2539, %v2611
        %v2613 = vpop.f32.mrf.mxu0
        %v2614 = vpop.f32.mrf.mxu0
        %v2615 = vadd.f32 %v2542, %v2614
        %v2616 = vpop.f32.mrf.mxu0
        %2617 = vmatprep.mubr.bf16.mxu0 0
        %2618 = vmatmul.mubr.bf16.gmra.mxu0 %v1570
        %v2619 = vpop.f32.mrf.mxu0
        %v2620 = vadd.f32 %v2547, %v2619
        %v2621 = vpop.f32.mrf.mxu0
        %v2622 = vpop.f32.mrf.mxu0
        %v2623 = vadd.f32 %v2550, %v2622
        %v2624 = vpop.f32.mrf.mxu0
        %2625 = vmatprep.mubr.bf16.mxu0 0
        %2626 = vmatmul.mubr.bf16.gmra.mxu0 %v1573
        %v2627 = vpop.f32.mrf.mxu0
        %v2628 = vadd.f32 %v2555, %v2627
        %v2629 = vpop.f32.mrf.mxu0
        %v2630 = vpop.f32.mrf.mxu0
        %v2631 = vadd.f32 %v2558, %v2630
        %v2632 = vpop.f32.mrf.mxu0
        %2633 = vmatprep.mubr.bf16.mxu0 0
        %2634 = vmatmul.mubr.bf16.gmra.mxu0 %v1576
        %v2635 = vpop.f32.mrf.mxu0
        %v2636 = vadd.f32 %v2563, %v2635
        %v2637 = vpop.f32.mrf.mxu0
        %v2638 = vpop.f32.mrf.mxu0
        %v2639 = vadd.f32 %v2566, %v2638
        %v2640 = vpop.f32.mrf.mxu0
        %2641 = vdwg.mxu0
        %v2643 = vand.u32 %v2479, %v1675
        %2645 = vmatprep.subr.bf16.mxu0 0
        %2646 = vmatpush1.bf16.msra.mxu0 0
        %2647 = vmatprep.subr.bf16.mxu0 0
        %2648 = vmatpush1.bf16.msra.mxu0 0
        %2649 = vmatprep.subr.bf16.mxu0 0
        %2650 = vmatpush1.bf16.msra.mxu0 0
        %2651 = vmatprep.subr.bf16.mxu0 0
        %2652 = vmatpush1.bf16.msra.mxu0 0
        %2653 = vmatprep.subr.bf16.mxu0 0
        %2654 = vmatpush1.bf16.msra.mxu0 0
        %2655 = vmatprep.subr.bf16.mxu0 0
        %2656 = vmatpush1.bf16.msra.mxu0 0
        %2657 = vmatprep.subr.bf16.mxu0 0
        %2658 = vmatpush1.bf16.msra.mxu0 0
        %2659 = vmatprep.subr.bf16.mxu0 0
        %2660 = vmatpush1.bf16.msra.mxu0 %v2643
        %2661 = vmatprep.subr.bf16.mxu0 0
        %2662 = vmatpush2.bf16.msra.mxu0 0
        %2663 = vmatprep.subr.bf16.mxu0 0
        %2664 = vmatpush2.bf16.msra.mxu0 0
        %2665 = vmatprep.subr.bf16.mxu0 0
        %2666 = vmatpush2.bf16.msra.mxu0 0
        %2667 = vmatprep.subr.bf16.mxu0 0
        %2668 = vmatpush2.bf16.msra.mxu0 0
        %2669 = vmatprep.subr.bf16.mxu0 0
        %2670 = vmatpush2.bf16.msra.mxu0 0
        %2671 = vmatprep.subr.bf16.mxu0 0
        %2672 = vmatpush2.bf16.msra.mxu0 0
        %2673 = vmatprep.subr.bf16.mxu0 0
        %2674 = vmatpush2.bf16.msra.mxu0 0
        %2675 = vmatprep.subr.bf16.mxu0 0
        %2676 = vmatpush2.bf16.msra.mxu0 0
        %2677 = vmatprep.mubr.bf16.mxu0 0
        %2678 = vmatmul.mubr.bf16.gmra.mxu0 %v1658
        %v2679 = vpop.f32.mrf.mxu0
        %v2680 = vadd.f32 0.0, %v2679
        %v2681 = vpop.f32.mrf.mxu0
        %v2682 = vpop.f32.mrf.mxu0
        %v2683 = vadd.f32 0.0, %v2682
        %v2684 = vpop.f32.mrf.mxu0
        %2685 = vmatprep.mubr.bf16.mxu0 0
        %2686 = vmatmul.mubr.bf16.gmra.mxu0 %v1661
        %v2687 = vpop.f32.mrf.mxu0
        %v2688 = vadd.f32 0.0, %v2687
        %v2689 = vpop.f32.mrf.mxu0
        %v2690 = vpop.f32.mrf.mxu0
        %v2691 = vadd.f32 0.0, %v2690
        %v2692 = vpop.f32.mrf.mxu0
        %2693 = vmatprep.mubr.bf16.mxu0 0
        %2694 = vmatmul.mubr.bf16.gmra.mxu0 %v1664
        %v2695 = vpop.f32.mrf.mxu0
        %v2696 = vadd.f32 0.0, %v2695
        %v2697 = vpop.f32.mrf.mxu0
        %v2698 = vpop.f32.mrf.mxu0
        %v2699 = vadd.f32 0.0, %v2698
        %v2700 = vpop.f32.mrf.mxu0
        %2701 = vmatprep.mubr.bf16.mxu0 0
        %2702 = vmatmul.mubr.bf16.gmra.mxu0 %v1667
        %v2703 = vpop.f32.mrf.mxu0
        %v2704 = vadd.f32 0.0, %v2703
        %v2705 = vpop.f32.mrf.mxu0
        %v2706 = vpop.f32.mrf.mxu0
        %v2707 = vadd.f32 0.0, %v2706
        %v2708 = vpop.f32.mrf.mxu0
        %2709 = vmatprep.mubr.bf16.mxu0 0
        %2710 = vmatmul.mubr.bf16.gmra.mxu0 %v1670
        %v2711 = vpop.f32.mrf.mxu0
        %v2712 = vadd.f32 0.0, %v2711
        %v2713 = vpop.f32.mrf.mxu0
        %v2714 = vpop.f32.mrf.mxu0
        %v2715 = vadd.f32 0.0, %v2714
        %v2716 = vpop.f32.mrf.mxu0
        %2717 = vdwg.mxu0
        %v2718 = vadd.f32 %v2604, %v2680
        %v2719 = vadd.f32 %v2607, %v2683
        %v2720 = vadd.f32 %v2612, %v2688
        %v2721 = vadd.f32 %v2615, %v2691
        %v2722 = vadd.f32 %v2620, %v2696
        %v2723 = vadd.f32 %v2623, %v2699
        %v2724 = vadd.f32 %v2628, %v2704
        %v2725 = vadd.f32 %v2631, %v2707
        %v2726 = vadd.f32 %v2636, %v2712
        %v2727 = vadd.f32 %v2639, %v2715
        %v2728 = vlaneseq
        %v2729 = vshrl.u32 %v2728, 7
        %v2730 = vsub.s32 0, %v2729
        %v2731 = vrot.slane %v2480, %v2730
        %v2732 = vadd.f32 %v2718, %v2731
        %v2733 = vadd.f32 %v2719, %v2731
        %v2734 = vadd.f32 %v2720, %v2731
        %v2735 = vadd.f32 %v2721, %v2731
        %v2736 = vadd.f32 %v2722, %v2731
        %v2737 = vadd.f32 %v2723, %v2731
        %v2738 = vadd.f32 %v2724, %v2731
        %v2739 = vadd.f32 %v2725, %v2731
        %v2740 = vadd.f32 %v2726, %v2731
        %v2741 = vadd.f32 %v2727, %v2731
        %vm2742 = vcmp.ge.f32.partialorder %v2732, 0.0
        %vm2743 = vcmp.ge.f32.partialorder %v2733, 0.0
        %vm2744 = vcmp.ge.f32.partialorder %v2734, 0.0
        %vm2745 = vcmp.ge.f32.partialorder %v2735, 0.0
        %vm2746 = vcmp.ge.f32.partialorder %v2736, 0.0
        %vm2747 = vcmp.ge.f32.partialorder %v2737, 0.0
        %vm2748 = vcmp.ge.f32.partialorder %v2738, 0.0
        %vm2749 = vcmp.ge.f32.partialorder %v2739, 0.0
        %vm2750 = vcmp.ge.f32.partialorder %v2740, 0.0
        %vm2751 = vcmp.ge.f32.partialorder %v2741, 0.0
        %v2752 = vmul.f32 %v2732, 0.01
        %v2753 = vmul.f32 %v2733, 0.01
        %v2754 = vmul.f32 %v2734, 0.01
        %v2755 = vmul.f32 %v2735, 0.01
        %v2756 = vmul.f32 %v2736, 0.01
        %v2757 = vmul.f32 %v2737, 0.01
        %v2758 = vmul.f32 %v2738, 0.01
        %v2759 = vmul.f32 %v2739, 0.01
        %v2760 = vmul.f32 %v2740, 0.01
        %v2761 = vmul.f32 %v2741, 0.01
        %v2762 = vsel %vm2742, %v2732, %v2752
        %v2763 = vsel %vm2743, %v2733, %v2753
        %v2764 = vsel %vm2744, %v2734, %v2754
        %v2765 = vsel %vm2745, %v2735, %v2755
        %v2766 = vsel %vm2746, %v2736, %v2756
        %v2767 = vsel %vm2747, %v2737, %v2757
        %v2768 = vsel %vm2748, %v2738, %v2758
        %v2769 = vsel %vm2749, %v2739, %v2759
        %v2770 = vsel %vm2750, %v2740, %v2760
        %v2771 = vsel %vm2751, %v2741, %v2761
        %v2772 = vpack.c.bf16 %v2763, %v2762
        %v2773 = vpack.c.bf16 %v2765, %v2764
        %v2774 = vpack.c.bf16 %v2767, %v2766
        %v2775 = vpack.c.bf16 %v2769, %v2768
        %v2776 = vpack.c.bf16 %v2771, %v2770
        %2777 = vmatprep.subr.bf16.mxu0 0
        %2778 = vmatpush1.bf16.msra.mxu0 0
        %2779 = vmatprep.subr.bf16.mxu0 0
        %2780 = vmatpush1.bf16.msra.mxu0 0
        %2781 = vmatprep.subr.bf16.mxu0 0
        %2782 = vmatpush1.bf16.msra.mxu0 0
        %2783 = vmatprep.subr.bf16.mxu0 0
        %2784 = vmatpush1.bf16.msra.mxu0 %v2776
        %2785 = vmatprep.subr.bf16.mxu0 0
        %2786 = vmatpush1.bf16.msra.mxu0 %v2775
        %2787 = vmatprep.subr.bf16.mxu0 0
        %2788 = vmatpush1.bf16.msra.mxu0 %v2774
        %2789 = vmatprep.subr.bf16.mxu0 0
        %2790 = vmatpush1.bf16.msra.mxu0 %v2773
        %2791 = vmatprep.subr.bf16.mxu0 0
        %2792 = vmatpush1.bf16.msra.mxu0 %v2772
        %2793 = vmatprep.subr.bf16.mxu0 0
        %2794 = vmatpush2.bf16.msra.mxu0 0
        %2795 = vmatprep.subr.bf16.mxu0 0
        %2796 = vmatpush2.bf16.msra.mxu0 0
        %2797 = vmatprep.subr.bf16.mxu0 0
        %2798 = vmatpush2.bf16.msra.mxu0 0
        %2799 = vmatprep.subr.bf16.mxu0 0
        %2800 = vmatpush2.bf16.msra.mxu0 0
        %2801 = vmatprep.subr.bf16.mxu0 0
        %2802 = vmatpush2.bf16.msra.mxu0 0
        %2803 = vmatprep.subr.bf16.mxu0 0
        %2804 = vmatpush2.bf16.msra.mxu0 0
        %2805 = vmatprep.subr.bf16.mxu0 0
        %2806 = vmatpush2.bf16.msra.mxu0 0
        %2807 = vmatprep.subr.bf16.mxu0 0
        %2808 = vmatpush2.bf16.msra.mxu0 0
        %2809 = vmatprep.mubr.bf16.mxu0 0
        %2810 = vmatmul.mubr.bf16.gmra.mxu0 %v1837
        %v2811 = vpop.f32.mrf.mxu0
        %v2812 = vadd.f32 %v2453, %v2811
        %v2813 = vpop.f32.mrf.mxu0
        %v2814 = vpop.f32.mrf.mxu0
        %v2815 = vadd.f32 %v2457, %v2814
        %v2816 = vpop.f32.mrf.mxu0
        %2817 = vmatprep.mubr.bf16.mxu0 0
        %2818 = vmatmul.mubr.bf16.gmra.mxu0 %v1840
        %v2819 = vpop.f32.mrf.mxu0
        %v2820 = vadd.f32 %v2463, %v2819
        %v2821 = vpop.f32.mrf.mxu0
        %v2822 = vpop.f32.mrf.mxu0
        %v2823 = vadd.f32 %v2467, %v2822
        %v2824 = vpop.f32.mrf.mxu0
        %2825 = vmatprep.mubr.bf16.mxu0 0
        %2826 = vmatmul.mubr.bf16.gmra.mxu0 %v1843
        %v2827 = vpop.f32.mrf.mxu0
        %v2828 = vadd.f32 %v2473, %v2827
        %v2829 = vpop.f32.mrf.mxu0
        %v2830 = vpop.f32.mrf.mxu0
        %v2831 = vadd.f32 %v2477, %v2830
        %v2832 = vpop.f32.mrf.mxu0
        %2833 = vdwg.mxu0
        %v2834 = vlaneseq
        %v2835 = vshrl.u32 %v2834, 7
        %v2836 = vsub.s32 1, %v2835
        %v2837 = vrot.slane %v2480, %v2836
        %v2838 = vadd.f32 %v2812, %v2837
        %v2839 = vadd.f32 %v2815, %v2837
        %v2840 = vadd.f32 %v2820, %v2837
        %v2841 = vadd.f32 %v2823, %v2837
        %v2842 = vadd.f32 %v2828, %v2837
        %v2843 = vadd.f32 %v2831, %v2837
        %v2844 = vld [vmem:[%s13] sm:$0xff]
        %v2845 = vpack.c.bf16 %v2838, %v2838
        %v2846 = vld [vmem:[%s12] sm:$0xff]
        %v2847 = vld [vmem:[%s12 + $0x8] sm:$0xff]
        %v2848 = vld [vmem:[%s12 + $0x10] sm:$0xff]
        %v2849 = vld [vmem:[%s12 + $0x18] sm:$0xf]
        %v2850 = vld [vmem:[%s12 + $0x1c] sm:$0xff]
        %v2851 = vld [vmem:[%s12 + $0x24] sm:$0xff]
        %v2852 = vld [vmem:[%s12 + $0x2c] sm:$0xff]
        %v2853 = vld [vmem:[%s12 + $0x34] sm:$0xf]
        %v2854 = vld [vmem:[%s12 + $0x38] sm:$0xff]
        %v2855 = vld [vmem:[%s12 + $0x40] sm:$0xff]
        %v2856 = vld [vmem:[%s12 + $0x48] sm:$0xff]
        %v2857 = vld [vmem:[%s12 + $0x50] sm:$0xf]
        %v2858 = vld [vmem:[%s12 + $0x54] sm:$0xff]
        %v2859 = vld [vmem:[%s12 + $0x5c] sm:$0xff]
        %v2860 = vld [vmem:[%s12 + $0x64] sm:$0xff]
        %v2861 = vld [vmem:[%s12 + $0x6c] sm:$0xf]
        %v2862 = vld [vmem:[%s12 + $0x70] sm:$0xff]
        %v2863 = vld [vmem:[%s12 + $0x78] sm:$0xff]
        %v2864 = vld [vmem:[%s12 + $0x80] sm:$0xff]
        %v2865 = vld [vmem:[%s12 + $0x88] sm:$0xf]
        %v2866 = vld [vmem:[%s12 + $0x8c] sm:$0xff]
        %v2867 = vld [vmem:[%s12 + $0x94] sm:$0xff]
        %v2868 = vld [vmem:[%s12 + $0x9c] sm:$0xff]
        %v2869 = vld [vmem:[%s12 + $0xa4] sm:$0xf]
        %v2870 = vld [vmem:[%s12 + $0xa8] sm:$0xff]
        %v2871 = vld [vmem:[%s12 + $0xb0] sm:$0xff]
        %v2872 = vld [vmem:[%s12 + $0xb8] sm:$0xff]
        %v2873 = vld [vmem:[%s12 + $0xc0] sm:$0xf]
        %v2874 = vld [vmem:[%s12 + $0xc4] sm:$0xff]
        %v2875 = vld [vmem:[%s12 + $0xcc] sm:$0xff]
        %v2876 = vld [vmem:[%s12 + $0xd4] sm:$0xff]
        %v2877 = vld [vmem:[%s12 + $0xdc] sm:$0xf]
        %v2910 = vunpack.c.l.b16 %v2846
        %v2911 = vunpack.c.h.b16 %v2846
        %v2912 = vunpack.c.l.b16 %v2847
        %v2913 = vunpack.c.h.b16 %v2847
        %v2914 = vunpack.c.l.b16 %v2848
        %v2915 = vunpack.c.h.b16 %v2848
        %v2916 = vunpack.c.l.b16 %v2849
        %v2917 = vunpack.c.l.b16 %v2850
        %v2918 = vunpack.c.h.b16 %v2850
        %v2919 = vunpack.c.l.b16 %v2851
        %v2920 = vunpack.c.h.b16 %v2851
        %v2921 = vunpack.c.l.b16 %v2852
        %v2922 = vunpack.c.h.b16 %v2852
        %v2923 = vunpack.c.l.b16 %v2853
        %v2924 = vunpack.c.l.b16 %v2854
        %v2925 = vunpack.c.h.b16 %v2854
        %v2926 = vunpack.c.l.b16 %v2855
        %v2927 = vunpack.c.h.b16 %v2855
        %v2928 = vunpack.c.l.b16 %v2856
        %v2929 = vunpack.c.h.b16 %v2856
        %v2930 = vunpack.c.l.b16 %v2857
        %v2931 = vunpack.c.l.b16 %v2858
        %v2932 = vunpack.c.h.b16 %v2858
        %v2933 = vunpack.c.l.b16 %v2859
        %v2934 = vunpack.c.h.b16 %v2859
        %v2935 = vunpack.c.l.b16 %v2860
        %v2936 = vunpack.c.h.b16 %v2860
        %v2937 = vunpack.c.l.b16 %v2861
        %v2938 = vunpack.c.l.b16 %v2862
        %v2939 = vunpack.c.h.b16 %v2862
        %v2940 = vunpack.c.l.b16 %v2863
        %v2941 = vunpack.c.h.b16 %v2863
        %v2942 = vunpack.c.l.b16 %v2864
        %v2943 = vunpack.c.h.b16 %v2864
        %v2944 = vunpack.c.l.b16 %v2865
        %v2945 = vunpack.c.l.b16 %v2866
        %v2946 = vunpack.c.h.b16 %v2866
        %v2947 = vunpack.c.l.b16 %v2867
        %v2948 = vunpack.c.h.b16 %v2867
        %v2949 = vunpack.c.l.b16 %v2868
        %v2950 = vunpack.c.h.b16 %v2868
        %v2951 = vunpack.c.l.b16 %v2869
        %v2952 = vunpack.c.l.b16 %v2870
        %v2953 = vunpack.c.h.b16 %v2870
        %v2954 = vunpack.c.l.b16 %v2871
        %v2955 = vunpack.c.h.b16 %v2871
        %v2956 = vunpack.c.l.b16 %v2872
        %v2957 = vunpack.c.h.b16 %v2872
        %v2958 = vunpack.c.l.b16 %v2873
        %v2959 = vunpack.c.l.b16 %v2874
        %v2960 = vunpack.c.h.b16 %v2874
        %v2961 = vunpack.c.l.b16 %v2875
        %v2962 = vunpack.c.h.b16 %v2875
        %v2963 = vunpack.c.l.b16 %v2876
        %v2964 = vunpack.c.h.b16 %v2876
        %v2965 = vunpack.c.l.b16 %v2877
        %v2966 = vpack.c.b16 %v2917, %v2910
        %v2967 = vpack.c.b16 %v2918, %v2911
        %v2968 = vpack.c.b16 %v2919, %v2912
        %v2969 = vpack.c.b16 %v2920, %v2913
        %v2970 = vpack.c.b16 %v2921, %v2914
        %v2971 = vpack.c.b16 %v2922, %v2915
        %v2972 = vpack.c.b16 %v2923, %v2916
        %v2973 = vpack.c.b16 %v2931, %v2924
        %v2974 = vpack.c.b16 %v2932, %v2925
        %v2975 = vpack.c.b16 %v2933, %v2926
        %v2976 = vpack.c.b16 %v2934, %v2927
        %v2977 = vpack.c.b16 %v2935, %v2928
        %v2978 = vpack.c.b16 %v2936, %v2929
        %v2979 = vpack.c.b16 %v2937, %v2930
        %v2980 = vpack.c.b16 %v2945, %v2938
        %v2981 = vpack.c.b16 %v2946, %v2939
        %v2982 = vpack.c.b16 %v2947, %v2940
        %v2983 = vpack.c.b16 %v2948, %v2941
        %v2984 = vpack.c.b16 %v2949, %v2942
        %v2985 = vpack.c.b16 %v2950, %v2943
        %v2986 = vpack.c.b16 %v2951, %v2944
        %v2987 = vpack.c.b16 %v2959, %v2952
        %v2988 = vpack.c.b16 %v2960, %v2953
        %v2989 = vpack.c.b16 %v2961, %v2954
        %v2990 = vpack.c.b16 %v2962, %v2955
        %v2991 = vpack.c.b16 %v2963, %v2956
        %v2992 = vpack.c.b16 %v2964, %v2957
        %v2993 = vpack.c.b16 %v2965, %v2958
        %vm3022 = vcmask 523264
        %v3024 = vsel %vm3022, %v2845, 0
        %3026 = vmatprep.subr.bf16.mxu0 0
        %3027 = vmatpush1.bf16.msra.mxu0 0
        %3028 = vmatprep.subr.bf16.mxu0 0
        %3029 = vmatpush1.bf16.msra.mxu0 0
        %3030 = vmatprep.subr.bf16.mxu0 0
        %3031 = vmatpush1.bf16.msra.mxu0 0
        %3032 = vmatprep.subr.bf16.mxu0 0
        %3033 = vmatpush1.bf16.msra.mxu0 0
        %3034 = vmatprep.subr.bf16.mxu0 %v2988
        %3035 = vmatpush1.bf16.msra.mxu0 %v2987
        %3036 = vmatprep.subr.bf16.mxu0 %v2981
        %3037 = vmatpush1.bf16.msra.mxu0 %v2980
        %3038 = vmatprep.subr.bf16.mxu0 %v2974
        %3039 = vmatpush1.bf16.msra.mxu0 %v2973
        %3040 = vmatprep.subr.bf16.mxu0 %v2967
        %3041 = vmatpush1.bf16.msra.mxu0 %v2966
        %3042 = vmatprep.subr.bf16.mxu0 0
        %3043 = vmatpush2.bf16.msra.mxu0 0
        %3044 = vmatprep.subr.bf16.mxu0 0
        %3045 = vmatpush2.bf16.msra.mxu0 0
        %3046 = vmatprep.subr.bf16.mxu0 0
        %3047 = vmatpush2.bf16.msra.mxu0 0
        %3048 = vmatprep.subr.bf16.mxu0 0
        %3049 = vmatpush2.bf16.msra.mxu0 0
        %3050 = vmatprep.subr.bf16.mxu0 0
        %3051 = vmatpush2.bf16.msra.mxu0 0
        %3052 = vmatprep.subr.bf16.mxu0 0
        %3053 = vmatpush2.bf16.msra.mxu0 0
        %3054 = vmatprep.subr.bf16.mxu0 0
        %3055 = vmatpush2.bf16.msra.mxu0 0
        %3056 = vmatprep.subr.bf16.mxu0 0
        %3057 = vmatpush2.bf16.msra.mxu0 0
        %3058 = vmatprep.mubr.bf16.mxu0 0
        %3059 = vmatmul.mubr.bf16.gmra.mxu0 %v3024
        %v3060 = vpop.f32.mrf.mxu0
        %v3061 = vadd.f32 0.0, %v3060
        %v3062 = vpop.f32.mrf.mxu0
        %v3063 = vadd.f32 0.0, %v3062
        %v3064 = vpop.f32.mrf.mxu0
        %v3065 = vpop.f32.mrf.mxu0
        %3066 = vdwg.mxu0
        %3067 = vmatprep.subr.bf16.mxu0 0
        %3068 = vmatpush1.bf16.msra.mxu0 0
        %3069 = vmatprep.subr.bf16.mxu0 0
        %3070 = vmatpush1.bf16.msra.mxu0 0
        %3071 = vmatprep.subr.bf16.mxu0 0
        %3072 = vmatpush1.bf16.msra.mxu0 0
        %3073 = vmatprep.subr.bf16.mxu0 0
        %3074 = vmatpush1.bf16.msra.mxu0 0
        %3075 = vmatprep.subr.bf16.mxu0 %v2990
        %3076 = vmatpush1.bf16.msra.mxu0 %v2989
        %3077 = vmatprep.subr.bf16.mxu0 %v2983
        %3078 = vmatpush1.bf16.msra.mxu0 %v2982
        %3079 = vmatprep.subr.bf16.mxu0 %v2976
        %3080 = vmatpush1.bf16.msra.mxu0 %v2975
        %3081 = vmatprep.subr.bf16.mxu0 %v2969
        %3082 = vmatpush1.bf16.msra.mxu0 %v2968
        %3083 = vmatprep.subr.bf16.mxu0 0
        %3084 = vmatpush2.bf16.msra.mxu0 0
        %3085 = vmatprep.subr.bf16.mxu0 0
        %3086 = vmatpush2.bf16.msra.mxu0 0
        %3087 = vmatprep.subr.bf16.mxu0 0
        %3088 = vmatpush2.bf16.msra.mxu0 0
        %3089 = vmatprep.subr.bf16.mxu0 0
        %3090 = vmatpush2.bf16.msra.mxu0 0
        %3091 = vmatprep.subr.bf16.mxu0 0
        %3092 = vmatpush2.bf16.msra.mxu0 0
        %3093 = vmatprep.subr.bf16.mxu0 0
        %3094 = vmatpush2.bf16.msra.mxu0 0
        %3095 = vmatprep.subr.bf16.mxu0 0
        %3096 = vmatpush2.bf16.msra.mxu0 0
        %3097 = vmatprep.subr.bf16.mxu0 0
        %3098 = vmatpush2.bf16.msra.mxu0 0
        %3099 = vmatprep.mubr.bf16.mxu0 0
        %3100 = vmatmul.mubr.bf16.gmra.mxu0 %v3024
        %v3101 = vpop.f32.mrf.mxu0
        %v3102 = vadd.f32 0.0, %v3101
        %v3103 = vpop.f32.mrf.mxu0
        %v3104 = vadd.f32 0.0, %v3103
        %v3105 = vpop.f32.mrf.mxu0
        %v3106 = vpop.f32.mrf.mxu0
        %3107 = vdwg.mxu0
        %3108 = vmatprep.subr.bf16.mxu0 0
        %3109 = vmatpush1.bf16.msra.mxu0 0
        %3110 = vmatprep.subr.bf16.mxu0 0
        %3111 = vmatpush1.bf16.msra.mxu0 0
        %3112 = vmatprep.subr.bf16.mxu0 0
        %3113 = vmatpush1.bf16.msra.mxu0 0
        %3114 = vmatprep.subr.bf16.mxu0 0
        %3115 = vmatpush1.bf16.msra.mxu0 0
        %3116 = vmatprep.subr.bf16.mxu0 %v2992
        %3117 = vmatpush1.bf16.msra.mxu0 %v2991
        %3118 = vmatprep.subr.bf16.mxu0 %v2985
        %3119 = vmatpush1.bf16.msra.mxu0 %v2984
        %3120 = vmatprep.subr.bf16.mxu0 %v2978
        %3121 = vmatpush1.bf16.msra.mxu0 %v2977
        %3122 = vmatprep.subr.bf16.mxu0 %v2971
        %3123 = vmatpush1.bf16.msra.mxu0 %v2970
        %3124 = vmatprep.subr.bf16.mxu0 0
        %3125 = vmatpush2.bf16.msra.mxu0 0
        %3126 = vmatprep.subr.bf16.mxu0 0
        %3127 = vmatpush2.bf16.msra.mxu0 0
        %3128 = vmatprep.subr.bf16.mxu0 0
        %3129 = vmatpush2.bf16.msra.mxu0 0
        %3130 = vmatprep.subr.bf16.mxu0 0
        %3131 = vmatpush2.bf16.msra.mxu0 0
        %3132 = vmatprep.subr.bf16.mxu0 0
        %3133 = vmatpush2.bf16.msra.mxu0 0
        %3134 = vmatprep.subr.bf16.mxu0 0
        %3135 = vmatpush2.bf16.msra.mxu0 0
        %3136 = vmatprep.subr.bf16.mxu0 0
        %3137 = vmatpush2.bf16.msra.mxu0 0
        %3138 = vmatprep.subr.bf16.mxu0 0
        %3139 = vmatpush2.bf16.msra.mxu0 0
        %3140 = vmatprep.mubr.bf16.mxu0 0
        %3141 = vmatmul.mubr.bf16.gmra.mxu0 %v3024
        %v3142 = vpop.f32.mrf.mxu0
        %v3143 = vadd.f32 0.0, %v3142
        %v3144 = vpop.f32.mrf.mxu0
        %v3145 = vadd.f32 0.0, %v3144
        %v3146 = vpop.f32.mrf.mxu0
        %v3147 = vpop.f32.mrf.mxu0
        %3148 = vdwg.mxu0
        %3149 = vmatprep.subr.bf16.mxu0 0
        %3150 = vmatpush1.bf16.msra.mxu0 0
        %3151 = vmatprep.subr.bf16.mxu0 0
        %3152 = vmatpush1.bf16.msra.mxu0 0
        %3153 = vmatprep.subr.bf16.mxu0 0
        %3154 = vmatpush1.bf16.msra.mxu0 0
        %3155 = vmatprep.subr.bf16.mxu0 0
        %3156 = vmatpush1.bf16.msra.mxu0 0
        %3157 = vmatprep.subr.bf16.mxu0 0
        %3158 = vmatpush1.bf16.msra.mxu0 %v2993
        %3159 = vmatprep.subr.bf16.mxu0 0
        %3160 = vmatpush1.bf16.msra.mxu0 %v2986
        %3161 = vmatprep.subr.bf16.mxu0 0
        %3162 = vmatpush1.bf16.msra.mxu0 %v2979
        %3163 = vmatprep.subr.bf16.mxu0 0
        %3164 = vmatpush1.bf16.msra.mxu0 %v2972
        %3165 = vmatprep.subr.bf16.mxu0 0
        %3166 = vmatpush2.bf16.msra.mxu0 0
        %3167 = vmatprep.subr.bf16.mxu0 0
        %3168 = vmatpush2.bf16.msra.mxu0 0
        %3169 = vmatprep.subr.bf16.mxu0 0
        %3170 = vmatpush2.bf16.msra.mxu0 0
        %3171 = vmatprep.subr.bf16.mxu0 0
        %3172 = vmatpush2.bf16.msra.mxu0 0
        %3173 = vmatprep.subr.bf16.mxu0 0
        %3174 = vmatpush2.bf16.msra.mxu0 0
        %3175 = vmatprep.subr.bf16.mxu0 0
        %3176 = vmatpush2.bf16.msra.mxu0 0
        %3177 = vmatprep.subr.bf16.mxu0 0
        %3178 = vmatpush2.bf16.msra.mxu0 0
        %3179 = vmatprep.subr.bf16.mxu0 0
        %3180 = vmatpush2.bf16.msra.mxu0 0
        %3181 = vmatprep.mubr.bf16.mxu0 0
        %3182 = vmatmul.mubr.bf16.gmra.mxu0 %v3024
        %v3183 = vpop.f32.mrf.mxu0
        %v3184 = vadd.f32 0.0, %v3183
        %v3185 = vpop.f32.mrf.mxu0
        %v3186 = vpop.f32.mrf.mxu0
        %v3187 = vpop.f32.mrf.mxu0
        %3188 = vdwg.mxu0
        %v3190 = vlaneseq
        %v3191 = vshrl.u32 %v3190, 7
        %v3192 = vsub.s32 0, %v3191
        %v3193 = vrot.slane %v2844, %v3192
        %v3194 = vlaneseq
        %v3195 = vshrl.u32 %v3194, 7
        %v3196 = vsub.s32 1, %v3195
        %v3197 = vrot.slane %v2844, %v3196
        %v3198 = vlaneseq
        %v3199 = vshrl.u32 %v3198, 7
        %v3200 = vsub.s32 2, %v3199
        %v3201 = vrot.slane %v2844, %v3200
        %v3202 = vlaneseq
        %v3203 = vshrl.u32 %v3202, 7
        %v3204 = vsub.s32 3, %v3203
        %v3205 = vrot.slane %v2844, %v3204
        %v3206 = vlaneseq
        %v3207 = vshrl.u32 %v3206, 7
        %v3208 = vsub.s32 4, %v3207
        %v3209 = vrot.slane %v2844, %v3208
        %v3210 = vlaneseq
        %v3211 = vshrl.u32 %v3210, 7
        %v3212 = vsub.s32 5, %v3211
        %v3213 = vrot.slane %v2844, %v3212
        %v3214 = vlaneseq
        %v3215 = vshrl.u32 %v3214, 7
        %v3216 = vsub.s32 6, %v3215
        %v3217 = vrot.slane %v2844, %v3216
        %v3225 = vadd.f32 %v3193, %v3061
        %v3226 = vadd.f32 %v3197, %v3063
        %v3227 = vadd.f32 %v3201, %v3102
        %v3228 = vadd.f32 %v3205, %v3104
        %v3229 = vadd.f32 %v3209, %v3143
        %v3230 = vadd.f32 %v3213, %v3145
        %v3231 = vadd.f32 %v3217, %v3184
        %v3232 = vpack.c.bf16 %v2839, %v2839
        %v3233 = vld [vmem:[%s12 + $0xe0] sm:$0xff]
        %v3234 = vld [vmem:[%s12 + $0xe8] sm:$0xff]
        %v3235 = vld [vmem:[%s12 + $0xf0] sm:$0xff]
        %v3236 = vld [vmem:[%s12 + $0xf8] sm:$0xf]
        %v3237 = vld [vmem:[%s12 + $0xfc] sm:$0xff]
        %v3238 = vld [vmem:[%s12 + $0x104] sm:$0xff]
        %v3239 = vld [vmem:[%s12 + $0x10c] sm:$0xff]
        %v3240 = vld [vmem:[%s12 + $0x114] sm:$0xf]
        %v3241 = vld [vmem:[%s12 + $0x118] sm:$0xff]
        %v3242 = vld [vmem:[%s12 + $0x120] sm:$0xff]
        %v3243 = vld [vmem:[%s12 + $0x128] sm:$0xff]
        %v3244 = vld [vmem:[%s12 + $0x130] sm:$0xf]
        %v3245 = vld [vmem:[%s12 + $0x134] sm:$0xff]
        %v3246 = vld [vmem:[%s12 + $0x13c] sm:$0xff]
        %v3247 = vld [vmem:[%s12 + $0x144] sm:$0xff]
        %v3248 = vld [vmem:[%s12 + $0x14c] sm:$0xf]
        %v3249 = vld [vmem:[%s12 + $0x150] sm:$0xff]
        %v3250 = vld [vmem:[%s12 + $0x158] sm:$0xff]
        %v3251 = vld [vmem:[%s12 + $0x160] sm:$0xff]
        %v3252 = vld [vmem:[%s12 + $0x168] sm:$0xf]
        %v3253 = vld [vmem:[%s12 + $0x16c] sm:$0xff]
        %v3254 = vld [vmem:[%s12 + $0x174] sm:$0xff]
        %v3255 = vld [vmem:[%s12 + $0x17c] sm:$0xff]
        %v3256 = vld [vmem:[%s12 + $0x184] sm:$0xf]
        %v3257 = vld [vmem:[%s12 + $0x188] sm:$0xff]
        %v3258 = vld [vmem:[%s12 + $0x190] sm:$0xff]
        %v3259 = vld [vmem:[%s12 + $0x198] sm:$0xff]
        %v3260 = vld [vmem:[%s12 + $0x1a0] sm:$0xf]
        %v3261 = vld [vmem:[%s12 + $0x1a4] sm:$0xff]
        %v3262 = vld [vmem:[%s12 + $0x1ac] sm:$0xff]
        %v3263 = vld [vmem:[%s12 + $0x1b4] sm:$0xff]
        %v3264 = vld [vmem:[%s12 + $0x1bc] sm:$0xf]
        %v3297 = vunpack.c.l.b16 %v3233
        %v3298 = vunpack.c.h.b16 %v3233
        %v3299 = vunpack.c.l.b16 %v3234
        %v3300 = vunpack.c.h.b16 %v3234
        %v3301 = vunpack.c.l.b16 %v3235
        %v3302 = vunpack.c.h.b16 %v3235
        %v3303 = vunpack.c.l.b16 %v3236
        %v3304 = vunpack.c.l.b16 %v3237
        %v3305 = vunpack.c.h.b16 %v3237
        %v3306 = vunpack.c.l.b16 %v3238
        %v3307 = vunpack.c.h.b16 %v3238
        %v3308 = vunpack.c.l.b16 %v3239
        %v3309 = vunpack.c.h.b16 %v3239
        %v3310 = vunpack.c.l.b16 %v3240
        %v3311 = vunpack.c.l.b16 %v3241
        %v3312 = vunpack.c.h.b16 %v3241
        %v3313 = vunpack.c.l.b16 %v3242
        %v3314 = vunpack.c.h.b16 %v3242
        %v3315 = vunpack.c.l.b16 %v3243
        %v3316 = vunpack.c.h.b16 %v3243
        %v3317 = vunpack.c.l.b16 %v3244
        %v3318 = vunpack.c.l.b16 %v3245
        %v3319 = vunpack.c.h.b16 %v3245
        %v3320 = vunpack.c.l.b16 %v3246
        %v3321 = vunpack.c.h.b16 %v3246
        %v3322 = vunpack.c.l.b16 %v3247
        %v3323 = vunpack.c.h.b16 %v3247
        %v3324 = vunpack.c.l.b16 %v3248
        %v3325 = vunpack.c.l.b16 %v3249
        %v3326 = vunpack.c.h.b16 %v3249
        %v3327 = vunpack.c.l.b16 %v3250
        %v3328 = vunpack.c.h.b16 %v3250
        %v3329 = vunpack.c.l.b16 %v3251
        %v3330 = vunpack.c.h.b16 %v3251
        %v3331 = vunpack.c.l.b16 %v3252
        %v3332 = vunpack.c.l.b16 %v3253
        %v3333 = vunpack.c.h.b16 %v3253
        %v3334 = vunpack.c.l.b16 %v3254
        %v3335 = vunpack.c.h.b16 %v3254
        %v3336 = vunpack.c.l.b16 %v3255
        %v3337 = vunpack.c.h.b16 %v3255
        %v3338 = vunpack.c.l.b16 %v3256
        %v3339 = vunpack.c.l.b16 %v3257
        %v3340 = vunpack.c.h.b16 %v3257
        %v3341 = vunpack.c.l.b16 %v3258
        %v3342 = vunpack.c.h.b16 %v3258
        %v3343 = vunpack.c.l.b16 %v3259
        %v3344 = vunpack.c.h.b16 %v3259
        %v3345 = vunpack.c.l.b16 %v3260
        %v3346 = vunpack.c.l.b16 %v3261
        %v3347 = vunpack.c.h.b16 %v3261
        %v3348 = vunpack.c.l.b16 %v3262
        %v3349 = vunpack.c.h.b16 %v3262
        %v3350 = vunpack.c.l.b16 %v3263
        %v3351 = vunpack.c.h.b16 %v3263
        %v3352 = vunpack.c.l.b16 %v3264
        %v3353 = vpack.c.b16 %v3304, %v3297
        %v3354 = vpack.c.b16 %v3305, %v3298
        %v3355 = vpack.c.b16 %v3306, %v3299
        %v3356 = vpack.c.b16 %v3307, %v3300
        %v3357 = vpack.c.b16 %v3308, %v3301
        %v3358 = vpack.c.b16 %v3309, %v3302
        %v3359 = vpack.c.b16 %v3310, %v3303
        %v3360 = vpack.c.b16 %v3318, %v3311
        %v3361 = vpack.c.b16 %v3319, %v3312
        %v3362 = vpack.c.b16 %v3320, %v3313
        %v3363 = vpack.c.b16 %v3321, %v3314
        %v3364 = vpack.c.b16 %v3322, %v3315
        %v3365 = vpack.c.b16 %v3323, %v3316
        %v3366 = vpack.c.b16 %v3324, %v3317
        %v3367 = vpack.c.b16 %v3332, %v3325
        %v3368 = vpack.c.b16 %v3333, %v3326
        %v3369 = vpack.c.b16 %v3334, %v3327
        %v3370 = vpack.c.b16 %v3335, %v3328
        %v3371 = vpack.c.b16 %v3336, %v3329
        %v3372 = vpack.c.b16 %v3337, %v3330
        %v3373 = vpack.c.b16 %v3338, %v3331
        %v3374 = vpack.c.b16 %v3346, %v3339
        %v3375 = vpack.c.b16 %v3347, %v3340
        %v3376 = vpack.c.b16 %v3348, %v3341
        %v3377 = vpack.c.b16 %v3349, %v3342
        %v3378 = vpack.c.b16 %v3350, %v3343
        %v3379 = vpack.c.b16 %v3351, %v3344
        %v3380 = vpack.c.b16 %v3352, %v3345
        %v3410 = vsel %vm3022, %v3232, 0
        %3412 = vmatprep.subr.bf16.mxu0 0
        %3413 = vmatpush1.bf16.msra.mxu0 0
        %3414 = vmatprep.subr.bf16.mxu0 0
        %3415 = vmatpush1.bf16.msra.mxu0 0
        %3416 = vmatprep.subr.bf16.mxu0 0
        %3417 = vmatpush1.bf16.msra.mxu0 0
        %3418 = vmatprep.subr.bf16.mxu0 0
        %3419 = vmatpush1.bf16.msra.mxu0 0
        %3420 = vmatprep.subr.bf16.mxu0 %v3375
        %3421 = vmatpush1.bf16.msra.mxu0 %v3374
        %3422 = vmatprep.subr.bf16.mxu0 %v3368
        %3423 = vmatpush1.bf16.msra.mxu0 %v3367
        %3424 = vmatprep.subr.bf16.mxu0 %v3361
        %3425 = vmatpush1.bf16.msra.mxu0 %v3360
        %3426 = vmatprep.subr.bf16.mxu0 %v3354
        %3427 = vmatpush1.bf16.msra.mxu0 %v3353
        %3428 = vmatprep.subr.bf16.mxu0 0
        %3429 = vmatpush2.bf16.msra.mxu0 0
        %3430 = vmatprep.subr.bf16.mxu0 0
        %3431 = vmatpush2.bf16.msra.mxu0 0
        %3432 = vmatprep.subr.bf16.mxu0 0
        %3433 = vmatpush2.bf16.msra.mxu0 0
        %3434 = vmatprep.subr.bf16.mxu0 0
        %3435 = vmatpush2.bf16.msra.mxu0 0
        %3436 = vmatprep.subr.bf16.mxu0 0
        %3437 = vmatpush2.bf16.msra.mxu0 0
        %3438 = vmatprep.subr.bf16.mxu0 0
        %3439 = vmatpush2.bf16.msra.mxu0 0
        %3440 = vmatprep.subr.bf16.mxu0 0
        %3441 = vmatpush2.bf16.msra.mxu0 0
        %3442 = vmatprep.subr.bf16.mxu0 0
        %3443 = vmatpush2.bf16.msra.mxu0 0
        %3444 = vmatprep.mubr.bf16.mxu0 0
        %3445 = vmatmul.mubr.bf16.gmra.mxu0 %v3410
        %v3446 = vpop.f32.mrf.mxu0
        %v3447 = vadd.f32 0.0, %v3446
        %v3448 = vpop.f32.mrf.mxu0
        %v3449 = vadd.f32 0.0, %v3448
        %v3450 = vpop.f32.mrf.mxu0
        %v3451 = vpop.f32.mrf.mxu0
        %3452 = vdwg.mxu0
        %3453 = vmatprep.subr.bf16.mxu0 0
        %3454 = vmatpush1.bf16.msra.mxu0 0
        %3455 = vmatprep.subr.bf16.mxu0 0
        %3456 = vmatpush1.bf16.msra.mxu0 0
        %3457 = vmatprep.subr.bf16.mxu0 0
        %3458 = vmatpush1.bf16.msra.mxu0 0
        %3459 = vmatprep.subr.bf16.mxu0 0
        %3460 = vmatpush1.bf16.msra.mxu0 0
        %3461 = vmatprep.subr.bf16.mxu0 %v3377
        %3462 = vmatpush1.bf16.msra.mxu0 %v3376
        %3463 = vmatprep.subr.bf16.mxu0 %v3370
        %3464 = vmatpush1.bf16.msra.mxu0 %v3369
        %3465 = vmatprep.subr.bf16.mxu0 %v3363
        %3466 = vmatpush1.bf16.msra.mxu0 %v3362
        %3467 = vmatprep.subr.bf16.mxu0 %v3356
        %3468 = vmatpush1.bf16.msra.mxu0 %v3355
        %3469 = vmatprep.subr.bf16.mxu0 0
        %3470 = vmatpush2.bf16.msra.mxu0 0
        %3471 = vmatprep.subr.bf16.mxu0 0
        %3472 = vmatpush2.bf16.msra.mxu0 0
        %3473 = vmatprep.subr.bf16.mxu0 0
        %3474 = vmatpush2.bf16.msra.mxu0 0
        %3475 = vmatprep.subr.bf16.mxu0 0
        %3476 = vmatpush2.bf16.msra.mxu0 0
        %3477 = vmatprep.subr.bf16.mxu0 0
        %3478 = vmatpush2.bf16.msra.mxu0 0
        %3479 = vmatprep.subr.bf16.mxu0 0
        %3480 = vmatpush2.bf16.msra.mxu0 0
        %3481 = vmatprep.subr.bf16.mxu0 0
        %3482 = vmatpush2.bf16.msra.mxu0 0
        %3483 = vmatprep.subr.bf16.mxu0 0
        %3484 = vmatpush2.bf16.msra.mxu0 0
        %3485 = vmatprep.mubr.bf16.mxu0 0
        %3486 = vmatmul.mubr.bf16.gmra.mxu0 %v3410
        %v3487 = vpop.f32.mrf.mxu0
        %v3488 = vadd.f32 0.0, %v3487
        %v3489 = vpop.f32.mrf.mxu0
        %v3490 = vadd.f32 0.0, %v3489
        %v3491 = vpop.f32.mrf.mxu0
        %v3492 = vpop.f32.mrf.mxu0
        %3493 = vdwg.mxu0
        %3494 = vmatprep.subr.bf16.mxu0 0
        %3495 = vmatpush1.bf16.msra.mxu0 0
        %3496 = vmatprep.subr.bf16.mxu0 0
        %3497 = vmatpush1.bf16.msra.mxu0 0
        %3498 = vmatprep.subr.bf16.mxu0 0
        %3499 = vmatpush1.bf16.msra.mxu0 0
        %3500 = vmatprep.subr.bf16.mxu0 0
        %3501 = vmatpush1.bf16.msra.mxu0 0
        %3502 = vmatprep.subr.bf16.mxu0 %v3379
        %3503 = vmatpush1.bf16.msra.mxu0 %v3378
        %3504 = vmatprep.subr.bf16.mxu0 %v3372
        %3505 = vmatpush1.bf16.msra.mxu0 %v3371
        %3506 = vmatprep.subr.bf16.mxu0 %v3365
        %3507 = vmatpush1.bf16.msra.mxu0 %v3364
        %3508 = vmatprep.subr.bf16.mxu0 %v3358
        %3509 = vmatpush1.bf16.msra.mxu0 %v3357
        %3510 = vmatprep.subr.bf16.mxu0 0
        %3511 = vmatpush2.bf16.msra.mxu0 0
        %3512 = vmatprep.subr.bf16.mxu0 0
        %3513 = vmatpush2.bf16.msra.mxu0 0
        %3514 = vmatprep.subr.bf16.mxu0 0
        %3515 = vmatpush2.bf16.msra.mxu0 0
        %3516 = vmatprep.subr.bf16.mxu0 0
        %3517 = vmatpush2.bf16.msra.mxu0 0
        %3518 = vmatprep.subr.bf16.mxu0 0
        %3519 = vmatpush2.bf16.msra.mxu0 0
        %3520 = vmatprep.subr.bf16.mxu0 0
        %3521 = vmatpush2.bf16.msra.mxu0 0
        %3522 = vmatprep.subr.bf16.mxu0 0
        %3523 = vmatpush2.bf16.msra.mxu0 0
        %3524 = vmatprep.subr.bf16.mxu0 0
        %3525 = vmatpush2.bf16.msra.mxu0 0
        %3526 = vmatprep.mubr.bf16.mxu0 0
        %3527 = vmatmul.mubr.bf16.gmra.mxu0 %v3410
        %v3528 = vpop.f32.mrf.mxu0
        %v3529 = vadd.f32 0.0, %v3528
        %v3530 = vpop.f32.mrf.mxu0
        %v3531 = vadd.f32 0.0, %v3530
        %v3532 = vpop.f32.mrf.mxu0
        %v3533 = vpop.f32.mrf.mxu0
        %3534 = vdwg.mxu0
        %3535 = vmatprep.subr.bf16.mxu0 0
        %3536 = vmatpush1.bf16.msra.mxu0 0
        %3537 = vmatprep.subr.bf16.mxu0 0
        %3538 = vmatpush1.bf16.msra.mxu0 0
        %3539 = vmatprep.subr.bf16.mxu0 0
        %3540 = vmatpush1.bf16.msra.mxu0 0
        %3541 = vmatprep.subr.bf16.mxu0 0
        %3542 = vmatpush1.bf16.msra.mxu0 0
        %3543 = vmatprep.subr.bf16.mxu0 0
        %3544 = vmatpush1.bf16.msra.mxu0 %v3380
        %3545 = vmatprep.subr.bf16.mxu0 0
        %3546 = vmatpush1.bf16.msra.mxu0 %v3373
        %3547 = vmatprep.subr.bf16.mxu0 0
        %3548 = vmatpush1.bf16.msra.mxu0 %v3366
        %3549 = vmatprep.subr.bf16.mxu0 0
        %3550 = vmatpush1.bf16.msra.mxu0 %v3359
        %3551 = vmatprep.subr.bf16.mxu0 0
        %3552 = vmatpush2.bf16.msra.mxu0 0
        %3553 = vmatprep.subr.bf16.mxu0 0
        %3554 = vmatpush2.bf16.msra.mxu0 0
        %3555 = vmatprep.subr.bf16.mxu0 0
        %3556 = vmatpush2.bf16.msra.mxu0 0
        %3557 = vmatprep.subr.bf16.mxu0 0
        %3558 = vmatpush2.bf16.msra.mxu0 0
        %3559 = vmatprep.subr.bf16.mxu0 0
        %3560 = vmatpush2.bf16.msra.mxu0 0
        %3561 = vmatprep.subr.bf16.mxu0 0
        %3562 = vmatpush2.bf16.msra.mxu0 0
        %3563 = vmatprep.subr.bf16.mxu0 0
        %3564 = vmatpush2.bf16.msra.mxu0 0
        %3565 = vmatprep.subr.bf16.mxu0 0
        %3566 = vmatpush2.bf16.msra.mxu0 0
        %3567 = vmatprep.mubr.bf16.mxu0 0
        %3568 = vmatmul.mubr.bf16.gmra.mxu0 %v3410
        %v3569 = vpop.f32.mrf.mxu0
        %v3570 = vadd.f32 0.0, %v3569
        %v3571 = vpop.f32.mrf.mxu0
        %v3572 = vpop.f32.mrf.mxu0
        %v3573 = vpop.f32.mrf.mxu0
        %3574 = vdwg.mxu0
        %v3575 = vadd.f32 %v3225, %v3447
        %v3576 = vadd.f32 %v3226, %v3449
        %v3577 = vadd.f32 %v3227, %v3488
        %v3578 = vadd.f32 %v3228, %v3490
        %v3579 = vadd.f32 %v3229, %v3529
        %v3580 = vadd.f32 %v3230, %v3531
        %v3581 = vadd.f32 %v3231, %v3570
        %v3582 = vpack.c.bf16 %v2840, %v2840
        %v3583 = vld [vmem:[%s12 + $0x1c0] sm:$0xff]
        %v3584 = vld [vmem:[%s12 + $0x1c8] sm:$0xff]
        %v3585 = vld [vmem:[%s12 + $0x1d0] sm:$0xff]
        %v3586 = vld [vmem:[%s12 + $0x1d8] sm:$0xf]
        %v3587 = vld [vmem:[%s12 + $0x1dc] sm:$0xff]
        %v3588 = vld [vmem:[%s12 + $0x1e4] sm:$0xff]
        %v3589 = vld [vmem:[%s12 + $0x1ec] sm:$0xff]
        %v3590 = vld [vmem:[%s12 + $0x1f4] sm:$0xf]
        %v3591 = vld [vmem:[%s12 + $0x1f8] sm:$0xff]
        %v3592 = vld [vmem:[%s12 + $0x200] sm:$0xff]
        %v3593 = vld [vmem:[%s12 + $0x208] sm:$0xff]
        %v3594 = vld [vmem:[%s12 + $0x210] sm:$0xf]
        %v3595 = vld [vmem:[%s12 + $0x214] sm:$0xff]
        %v3596 = vld [vmem:[%s12 + $0x21c] sm:$0xff]
        %v3597 = vld [vmem:[%s12 + $0x224] sm:$0xff]
        %v3598 = vld [vmem:[%s12 + $0x22c] sm:$0xf]
        %v3599 = vld [vmem:[%s12 + $0x230] sm:$0xff]
        %v3600 = vld [vmem:[%s12 + $0x238] sm:$0xff]
        %v3601 = vld [vmem:[%s12 + $0x240] sm:$0xff]
        %v3602 = vld [vmem:[%s12 + $0x248] sm:$0xf]
        %v3603 = vld [vmem:[%s12 + $0x24c] sm:$0xff]
        %v3604 = vld [vmem:[%s12 + $0x254] sm:$0xff]
        %v3605 = vld [vmem:[%s12 + $0x25c] sm:$0xff]
        %v3606 = vld [vmem:[%s12 + $0x264] sm:$0xf]
        %v3607 = vld [vmem:[%s12 + $0x268] sm:$0xff]
        %v3608 = vld [vmem:[%s12 + $0x270] sm:$0xff]
        %v3609 = vld [vmem:[%s12 + $0x278] sm:$0xff]
        %v3610 = vld [vmem:[%s12 + $0x280] sm:$0xf]
        %v3611 = vld [vmem:[%s12 + $0x284] sm:$0xff]
        %v3612 = vld [vmem:[%s12 + $0x28c] sm:$0xff]
        %v3613 = vld [vmem:[%s12 + $0x294] sm:$0xff]
        %v3614 = vld [vmem:[%s12 + $0x29c] sm:$0xf]
        %v3647 = vunpack.c.l.b16 %v3583
        %v3648 = vunpack.c.h.b16 %v3583
        %v3649 = vunpack.c.l.b16 %v3584
        %v3650 = vunpack.c.h.b16 %v3584
        %v3651 = vunpack.c.l.b16 %v3585
        %v3652 = vunpack.c.h.b16 %v3585
        %v3653 = vunpack.c.l.b16 %v3586
        %v3654 = vunpack.c.l.b16 %v3587
        %v3655 = vunpack.c.h.b16 %v3587
        %v3656 = vunpack.c.l.b16 %v3588
        %v3657 = vunpack.c.h.b16 %v3588
        %v3658 = vunpack.c.l.b16 %v3589
        %v3659 = vunpack.c.h.b16 %v3589
        %v3660 = vunpack.c.l.b16 %v3590
        %v3661 = vunpack.c.l.b16 %v3591
        %v3662 = vunpack.c.h.b16 %v3591
        %v3663 = vunpack.c.l.b16 %v3592
        %v3664 = vunpack.c.h.b16 %v3592
        %v3665 = vunpack.c.l.b16 %v3593
        %v3666 = vunpack.c.h.b16 %v3593
        %v3667 = vunpack.c.l.b16 %v3594
        %v3668 = vunpack.c.l.b16 %v3595
        %v3669 = vunpack.c.h.b16 %v3595
        %v3670 = vunpack.c.l.b16 %v3596
        %v3671 = vunpack.c.h.b16 %v3596
        %v3672 = vunpack.c.l.b16 %v3597
        %v3673 = vunpack.c.h.b16 %v3597
        %v3674 = vunpack.c.l.b16 %v3598
        %v3675 = vunpack.c.l.b16 %v3599
        %v3676 = vunpack.c.h.b16 %v3599
        %v3677 = vunpack.c.l.b16 %v3600
        %v3678 = vunpack.c.h.b16 %v3600
        %v3679 = vunpack.c.l.b16 %v3601
        %v3680 = vunpack.c.h.b16 %v3601
        %v3681 = vunpack.c.l.b16 %v3602
        %v3682 = vunpack.c.l.b16 %v3603
        %v3683 = vunpack.c.h.b16 %v3603
        %v3684 = vunpack.c.l.b16 %v3604
        %v3685 = vunpack.c.h.b16 %v3604
        %v3686 = vunpack.c.l.b16 %v3605
        %v3687 = vunpack.c.h.b16 %v3605
        %v3688 = vunpack.c.l.b16 %v3606
        %v3689 = vunpack.c.l.b16 %v3607
        %v3690 = vunpack.c.h.b16 %v3607
        %v3691 = vunpack.c.l.b16 %v3608
        %v3692 = vunpack.c.h.b16 %v3608
        %v3693 = vunpack.c.l.b16 %v3609
        %v3694 = vunpack.c.h.b16 %v3609
        %v3695 = vunpack.c.l.b16 %v3610
        %v3696 = vunpack.c.l.b16 %v3611
        %v3697 = vunpack.c.h.b16 %v3611
        %v3698 = vunpack.c.l.b16 %v3612
        %v3699 = vunpack.c.h.b16 %v3612
        %v3700 = vunpack.c.l.b16 %v3613
        %v3701 = vunpack.c.h.b16 %v3613
        %v3702 = vunpack.c.l.b16 %v3614
        %v3703 = vpack.c.b16 %v3654, %v3647
        %v3704 = vpack.c.b16 %v3655, %v3648
        %v3705 = vpack.c.b16 %v3656, %v3649
        %v3706 = vpack.c.b16 %v3657, %v3650
        %v3707 = vpack.c.b16 %v3658, %v3651
        %v3708 = vpack.c.b16 %v3659, %v3652
        %v3709 = vpack.c.b16 %v3660, %v3653
        %v3710 = vpack.c.b16 %v3668, %v3661
        %v3711 = vpack.c.b16 %v3669, %v3662
        %v3712 = vpack.c.b16 %v3670, %v3663
        %v3713 = vpack.c.b16 %v3671, %v3664
        %v3714 = vpack.c.b16 %v3672, %v3665
        %v3715 = vpack.c.b16 %v3673, %v3666
        %v3716 = vpack.c.b16 %v3674, %v3667
        %v3717 = vpack.c.b16 %v3682, %v3675
        %v3718 = vpack.c.b16 %v3683, %v3676
        %v3719 = vpack.c.b16 %v3684, %v3677
        %v3720 = vpack.c.b16 %v3685, %v3678
        %v3721 = vpack.c.b16 %v3686, %v3679
        %v3722 = vpack.c.b16 %v3687, %v3680
        %v3723 = vpack.c.b16 %v3688, %v3681
        %v3724 = vpack.c.b16 %v3696, %v3689
        %v3725 = vpack.c.b16 %v3697, %v3690
        %v3726 = vpack.c.b16 %v3698, %v3691
        %v3727 = vpack.c.b16 %v3699, %v3692
        %v3728 = vpack.c.b16 %v3700, %v3693
        %v3729 = vpack.c.b16 %v3701, %v3694
        %v3730 = vpack.c.b16 %v3702, %v3695
        %v3760 = vsel %vm3022, %v3582, 0
        %3762 = vmatprep.subr.bf16.mxu0 0
        %3763 = vmatpush1.bf16.msra.mxu0 0
        %3764 = vmatprep.subr.bf16.mxu0 0
        %3765 = vmatpush1.bf16.msra.mxu0 0
        %3766 = vmatprep.subr.bf16.mxu0 0
        %3767 = vmatpush1.bf16.msra.mxu0 0
        %3768 = vmatprep.subr.bf16.mxu0 0
        %3769 = vmatpush1.bf16.msra.mxu0 0
        %3770 = vmatprep.subr.bf16.mxu0 %v3725
        %3771 = vmatpush1.bf16.msra.mxu0 %v3724
        %3772 = vmatprep.subr.bf16.mxu0 %v3718
        %3773 = vmatpush1.bf16.msra.mxu0 %v3717
        %3774 = vmatprep.subr.bf16.mxu0 %v3711
        %3775 = vmatpush1.bf16.msra.mxu0 %v3710
        %3776 = vmatprep.subr.bf16.mxu0 %v3704
        %3777 = vmatpush1.bf16.msra.mxu0 %v3703
        %3778 = vmatprep.subr.bf16.mxu0 0
        %3779 = vmatpush2.bf16.msra.mxu0 0
        %3780 = vmatprep.subr.bf16.mxu0 0
        %3781 = vmatpush2.bf16.msra.mxu0 0
        %3782 = vmatprep.subr.bf16.mxu0 0
        %3783 = vmatpush2.bf16.msra.mxu0 0
        %3784 = vmatprep.subr.bf16.mxu0 0
        %3785 = vmatpush2.bf16.msra.mxu0 0
        %3786 = vmatprep.subr.bf16.mxu0 0
        %3787 = vmatpush2.bf16.msra.mxu0 0
        %3788 = vmatprep.subr.bf16.mxu0 0
        %3789 = vmatpush2.bf16.msra.mxu0 0
        %3790 = vmatprep.subr.bf16.mxu0 0
        %3791 = vmatpush2.bf16.msra.mxu0 0
        %3792 = vmatprep.subr.bf16.mxu0 0
        %3793 = vmatpush2.bf16.msra.mxu0 0
        %3794 = vmatprep.mubr.bf16.mxu0 0
        %3795 = vmatmul.mubr.bf16.gmra.mxu0 %v3760
        %v3796 = vpop.f32.mrf.mxu0
        %v3797 = vadd.f32 0.0, %v3796
        %v3798 = vpop.f32.mrf.mxu0
        %v3799 = vadd.f32 0.0, %v3798
        %v3800 = vpop.f32.mrf.mxu0
        %v3801 = vpop.f32.mrf.mxu0
        %3802 = vdwg.mxu0
        %3803 = vmatprep.subr.bf16.mxu0 0
        %3804 = vmatpush1.bf16.msra.mxu0 0
        %3805 = vmatprep.subr.bf16.mxu0 0
        %3806 = vmatpush1.bf16.msra.mxu0 0
        %3807 = vmatprep.subr.bf16.mxu0 0
        %3808 = vmatpush1.bf16.msra.mxu0 0
        %3809 = vmatprep.subr.bf16.mxu0 0
        %3810 = vmatpush1.bf16.msra.mxu0 0
        %3811 = vmatprep.subr.bf16.mxu0 %v3727
        %3812 = vmatpush1.bf16.msra.mxu0 %v3726
        %3813 = vmatprep.subr.bf16.mxu0 %v3720
        %3814 = vmatpush1.bf16.msra.mxu0 %v3719
        %3815 = vmatprep.subr.bf16.mxu0 %v3713
        %3816 = vmatpush1.bf16.msra.mxu0 %v3712
        %3817 = vmatprep.subr.bf16.mxu0 %v3706
        %3818 = vmatpush1.bf16.msra.mxu0 %v3705
        %3819 = vmatprep.subr.bf16.mxu0 0
        %3820 = vmatpush2.bf16.msra.mxu0 0
        %3821 = vmatprep.subr.bf16.mxu0 0
        %3822 = vmatpush2.bf16.msra.mxu0 0
        %3823 = vmatprep.subr.bf16.mxu0 0
        %3824 = vmatpush2.bf16.msra.mxu0 0
        %3825 = vmatprep.subr.bf16.mxu0 0
        %3826 = vmatpush2.bf16.msra.mxu0 0
        %3827 = vmatprep.subr.bf16.mxu0 0
        %3828 = vmatpush2.bf16.msra.mxu0 0
        %3829 = vmatprep.subr.bf16.mxu0 0
        %3830 = vmatpush2.bf16.msra.mxu0 0
        %3831 = vmatprep.subr.bf16.mxu0 0
        %3832 = vmatpush2.bf16.msra.mxu0 0
        %3833 = vmatprep.subr.bf16.mxu0 0
        %3834 = vmatpush2.bf16.msra.mxu0 0
        %3835 = vmatprep.mubr.bf16.mxu0 0
        %3836 = vmatmul.mubr.bf16.gmra.mxu0 %v3760
        %v3837 = vpop.f32.mrf.mxu0
        %v3838 = vadd.f32 0.0, %v3837
        %v3839 = vpop.f32.mrf.mxu0
        %v3840 = vadd.f32 0.0, %v3839
        %v3841 = vpop.f32.mrf.mxu0
        %v3842 = vpop.f32.mrf.mxu0
        %3843 = vdwg.mxu0
        %3844 = vmatprep.subr.bf16.mxu0 0
        %3845 = vmatpush1.bf16.msra.mxu0 0
        %3846 = vmatprep.subr.bf16.mxu0 0
        %3847 = vmatpush1.bf16.msra.mxu0 0
        %3848 = vmatprep.subr.bf16.mxu0 0
        %3849 = vmatpush1.bf16.msra.mxu0 0
        %3850 = vmatprep.subr.bf16.mxu0 0
        %3851 = vmatpush1.bf16.msra.mxu0 0
        %3852 = vmatprep.subr.bf16.mxu0 %v3729
        %3853 = vmatpush1.bf16.msra.mxu0 %v3728
        %3854 = vmatprep.subr.bf16.mxu0 %v3722
        %3855 = vmatpush1.bf16.msra.mxu0 %v3721
        %3856 = vmatprep.subr.bf16.mxu0 %v3715
        %3857 = vmatpush1.bf16.msra.mxu0 %v3714
        %3858 = vmatprep.subr.bf16.mxu0 %v3708
        %3859 = vmatpush1.bf16.msra.mxu0 %v3707
        %3860 = vmatprep.subr.bf16.mxu0 0
        %3861 = vmatpush2.bf16.msra.mxu0 0
        %3862 = vmatprep.subr.bf16.mxu0 0
        %3863 = vmatpush2.bf16.msra.mxu0 0
        %3864 = vmatprep.subr.bf16.mxu0 0
        %3865 = vmatpush2.bf16.msra.mxu0 0
        %3866 = vmatprep.subr.bf16.mxu0 0
        %3867 = vmatpush2.bf16.msra.mxu0 0
        %3868 = vmatprep.subr.bf16.mxu0 0
        %3869 = vmatpush2.bf16.msra.mxu0 0
        %3870 = vmatprep.subr.bf16.mxu0 0
        %3871 = vmatpush2.bf16.msra.mxu0 0
        %3872 = vmatprep.subr.bf16.mxu0 0
        %3873 = vmatpush2.bf16.msra.mxu0 0
        %3874 = vmatprep.subr.bf16.mxu0 0
        %3875 = vmatpush2.bf16.msra.mxu0 0
        %3876 = vmatprep.mubr.bf16.mxu0 0
        %3877 = vmatmul.mubr.bf16.gmra.mxu0 %v3760
        %v3878 = vpop.f32.mrf.mxu0
        %v3879 = vadd.f32 0.0, %v3878
        %v3880 = vpop.f32.mrf.mxu0
        %v3881 = vadd.f32 0.0, %v3880
        %v3882 = vpop.f32.mrf.mxu0
        %v3883 = vpop.f32.mrf.mxu0
        %3884 = vdwg.mxu0
        %3885 = vmatprep.subr.bf16.mxu0 0
        %3886 = vmatpush1.bf16.msra.mxu0 0
        %3887 = vmatprep.subr.bf16.mxu0 0
        %3888 = vmatpush1.bf16.msra.mxu0 0
        %3889 = vmatprep.subr.bf16.mxu0 0
        %3890 = vmatpush1.bf16.msra.mxu0 0
        %3891 = vmatprep.subr.bf16.mxu0 0
        %3892 = vmatpush1.bf16.msra.mxu0 0
        %3893 = vmatprep.subr.bf16.mxu0 0
        %3894 = vmatpush1.bf16.msra.mxu0 %v3730
        %3895 = vmatprep.subr.bf16.mxu0 0
        %3896 = vmatpush1.bf16.msra.mxu0 %v3723
        %3897 = vmatprep.subr.bf16.mxu0 0
        %3898 = vmatpush1.bf16.msra.mxu0 %v3716
        %3899 = vmatprep.subr.bf16.mxu0 0
        %3900 = vmatpush1.bf16.msra.mxu0 %v3709
        %3901 = vmatprep.subr.bf16.mxu0 0
        %3902 = vmatpush2.bf16.msra.mxu0 0
        %3903 = vmatprep.subr.bf16.mxu0 0
        %3904 = vmatpush2.bf16.msra.mxu0 0
        %3905 = vmatprep.subr.bf16.mxu0 0
        %3906 = vmatpush2.bf16.msra.mxu0 0
        %3907 = vmatprep.subr.bf16.mxu0 0
        %3908 = vmatpush2.bf16.msra.mxu0 0
        %3909 = vmatprep.subr.bf16.mxu0 0
        %3910 = vmatpush2.bf16.msra.mxu0 0
        %3911 = vmatprep.subr.bf16.mxu0 0
        %3912 = vmatpush2.bf16.msra.mxu0 0
        %3913 = vmatprep.subr.bf16.mxu0 0
        %3914 = vmatpush2.bf16.msra.mxu0 0
        %3915 = vmatprep.subr.bf16.mxu0 0
        %3916 = vmatpush2.bf16.msra.mxu0 0
        %3917 = vmatprep.mubr.bf16.mxu0 0
        %3918 = vmatmul.mubr.bf16.gmra.mxu0 %v3760
        %v3919 = vpop.f32.mrf.mxu0
        %v3920 = vadd.f32 0.0, %v3919
        %v3921 = vpop.f32.mrf.mxu0
        %v3922 = vpop.f32.mrf.mxu0
        %v3923 = vpop.f32.mrf.mxu0
        %3924 = vdwg.mxu0
        %v3925 = vadd.f32 %v3575, %v3797
        %v3926 = vadd.f32 %v3576, %v3799
        %v3927 = vadd.f32 %v3577, %v3838
        %v3928 = vadd.f32 %v3578, %v3840
        %v3929 = vadd.f32 %v3579, %v3879
        %v3930 = vadd.f32 %v3580, %v3881
        %v3931 = vadd.f32 %v3581, %v3920
        %v3932 = vpack.c.bf16 %v2841, %v2841
        %v3933 = vld [vmem:[%s12 + $0x2a0] sm:$0xff]
        %v3934 = vld [vmem:[%s12 + $0x2a8] sm:$0xff]
        %v3935 = vld [vmem:[%s12 + $0x2b0] sm:$0xff]
        %v3936 = vld [vmem:[%s12 + $0x2b8] sm:$0xf]
        %v3937 = vld [vmem:[%s12 + $0x2bc] sm:$0xff]
        %v3938 = vld [vmem:[%s12 + $0x2c4] sm:$0xff]
        %v3939 = vld [vmem:[%s12 + $0x2cc] sm:$0xff]
        %v3940 = vld [vmem:[%s12 + $0x2d4] sm:$0xf]
        %v3941 = vld [vmem:[%s12 + $0x2d8] sm:$0xff]
        %v3942 = vld [vmem:[%s12 + $0x2e0] sm:$0xff]
        %v3943 = vld [vmem:[%s12 + $0x2e8] sm:$0xff]
        %v3944 = vld [vmem:[%s12 + $0x2f0] sm:$0xf]
        %v3945 = vld [vmem:[%s12 + $0x2f4] sm:$0xff]
        %v3946 = vld [vmem:[%s12 + $0x2fc] sm:$0xff]
        %v3947 = vld [vmem:[%s12 + $0x304] sm:$0xff]
        %v3948 = vld [vmem:[%s12 + $0x30c] sm:$0xf]
        %v3949 = vld [vmem:[%s12 + $0x310] sm:$0xff]
        %v3950 = vld [vmem:[%s12 + $0x318] sm:$0xff]
        %v3951 = vld [vmem:[%s12 + $0x320] sm:$0xff]
        %v3952 = vld [vmem:[%s12 + $0x328] sm:$0xf]
        %v3953 = vld [vmem:[%s12 + $0x32c] sm:$0xff]
        %v3954 = vld [vmem:[%s12 + $0x334] sm:$0xff]
        %v3955 = vld [vmem:[%s12 + $0x33c] sm:$0xff]
        %v3956 = vld [vmem:[%s12 + $0x344] sm:$0xf]
        %v3957 = vld [vmem:[%s12 + $0x348] sm:$0xff]
        %v3958 = vld [vmem:[%s12 + $0x350] sm:$0xff]
        %v3959 = vld [vmem:[%s12 + $0x358] sm:$0xff]
        %v3960 = vld [vmem:[%s12 + $0x360] sm:$0xf]
        %v3961 = vld [vmem:[%s12 + $0x364] sm:$0xff]
        %v3962 = vld [vmem:[%s12 + $0x36c] sm:$0xff]
        %v3963 = vld [vmem:[%s12 + $0x374] sm:$0xff]
        %v3964 = vld [vmem:[%s12 + $0x37c] sm:$0xf]
        %v3997 = vunpack.c.l.b16 %v3933
        %v3998 = vunpack.c.h.b16 %v3933
        %v3999 = vunpack.c.l.b16 %v3934
        %v4000 = vunpack.c.h.b16 %v3934
        %v4001 = vunpack.c.l.b16 %v3935
        %v4002 = vunpack.c.h.b16 %v3935
        %v4003 = vunpack.c.l.b16 %v3936
        %v4004 = vunpack.c.l.b16 %v3937
        %v4005 = vunpack.c.h.b16 %v3937
        %v4006 = vunpack.c.l.b16 %v3938
        %v4007 = vunpack.c.h.b16 %v3938
        %v4008 = vunpack.c.l.b16 %v3939
        %v4009 = vunpack.c.h.b16 %v3939
        %v4010 = vunpack.c.l.b16 %v3940
        %v4011 = vunpack.c.l.b16 %v3941
        %v4012 = vunpack.c.h.b16 %v3941
        %v4013 = vunpack.c.l.b16 %v3942
        %v4014 = vunpack.c.h.b16 %v3942
        %v4015 = vunpack.c.l.b16 %v3943
        %v4016 = vunpack.c.h.b16 %v3943
        %v4017 = vunpack.c.l.b16 %v3944
        %v4018 = vunpack.c.l.b16 %v3945
        %v4019 = vunpack.c.h.b16 %v3945
        %v4020 = vunpack.c.l.b16 %v3946
        %v4021 = vunpack.c.h.b16 %v3946
        %v4022 = vunpack.c.l.b16 %v3947
        %v4023 = vunpack.c.h.b16 %v3947
        %v4024 = vunpack.c.l.b16 %v3948
        %v4025 = vunpack.c.l.b16 %v3949
        %v4026 = vunpack.c.h.b16 %v3949
        %v4027 = vunpack.c.l.b16 %v3950
        %v4028 = vunpack.c.h.b16 %v3950
        %v4029 = vunpack.c.l.b16 %v3951
        %v4030 = vunpack.c.h.b16 %v3951
        %v4031 = vunpack.c.l.b16 %v3952
        %v4032 = vunpack.c.l.b16 %v3953
        %v4033 = vunpack.c.h.b16 %v3953
        %v4034 = vunpack.c.l.b16 %v3954
        %v4035 = vunpack.c.h.b16 %v3954
        %v4036 = vunpack.c.l.b16 %v3955
        %v4037 = vunpack.c.h.b16 %v3955
        %v4038 = vunpack.c.l.b16 %v3956
        %v4039 = vunpack.c.l.b16 %v3957
        %v4040 = vunpack.c.h.b16 %v3957
        %v4041 = vunpack.c.l.b16 %v3958
        %v4042 = vunpack.c.h.b16 %v3958
        %v4043 = vunpack.c.l.b16 %v3959
        %v4044 = vunpack.c.h.b16 %v3959
        %v4045 = vunpack.c.l.b16 %v3960
        %v4046 = vunpack.c.l.b16 %v3961
        %v4047 = vunpack.c.h.b16 %v3961
        %v4048 = vunpack.c.l.b16 %v3962
        %v4049 = vunpack.c.h.b16 %v3962
        %v4050 = vunpack.c.l.b16 %v3963
        %v4051 = vunpack.c.h.b16 %v3963
        %v4052 = vunpack.c.l.b16 %v3964
        %v4053 = vpack.c.b16 %v4004, %v3997
        %v4054 = vpack.c.b16 %v4005, %v3998
        %v4055 = vpack.c.b16 %v4006, %v3999
        %v4056 = vpack.c.b16 %v4007, %v4000
        %v4057 = vpack.c.b16 %v4008, %v4001
        %v4058 = vpack.c.b16 %v4009, %v4002
        %v4059 = vpack.c.b16 %v4010, %v4003
        %v4060 = vpack.c.b16 %v4018, %v4011
        %v4061 = vpack.c.b16 %v4019, %v4012
        %v4062 = vpack.c.b16 %v4020, %v4013
        %v4063 = vpack.c.b16 %v4021, %v4014
        %v4064 = vpack.c.b16 %v4022, %v4015
        %v4065 = vpack.c.b16 %v4023, %v4016
        %v4066 = vpack.c.b16 %v4024, %v4017
        %v4067 = vpack.c.b16 %v4032, %v4025
        %v4068 = vpack.c.b16 %v4033, %v4026
        %v4069 = vpack.c.b16 %v4034, %v4027
        %v4070 = vpack.c.b16 %v4035, %v4028
        %v4071 = vpack.c.b16 %v4036, %v4029
        %v4072 = vpack.c.b16 %v4037, %v4030
        %v4073 = vpack.c.b16 %v4038, %v4031
        %v4074 = vpack.c.b16 %v4046, %v4039
        %v4075 = vpack.c.b16 %v4047, %v4040
        %v4076 = vpack.c.b16 %v4048, %v4041
        %v4077 = vpack.c.b16 %v4049, %v4042
        %v4078 = vpack.c.b16 %v4050, %v4043
        %v4079 = vpack.c.b16 %v4051, %v4044
        %v4080 = vpack.c.b16 %v4052, %v4045
        %v4110 = vsel %vm3022, %v3932, 0
        %4112 = vmatprep.subr.bf16.mxu0 0
        %4113 = vmatpush1.bf16.msra.mxu0 0
        %4114 = vmatprep.subr.bf16.mxu0 0
        %4115 = vmatpush1.bf16.msra.mxu0 0
        %4116 = vmatprep.subr.bf16.mxu0 0
        %4117 = vmatpush1.bf16.msra.mxu0 0
        %4118 = vmatprep.subr.bf16.mxu0 0
        %4119 = vmatpush1.bf16.msra.mxu0 0
        %4120 = vmatprep.subr.bf16.mxu0 %v4075
        %4121 = vmatpush1.bf16.msra.mxu0 %v4074
        %4122 = vmatprep.subr.bf16.mxu0 %v4068
        %4123 = vmatpush1.bf16.msra.mxu0 %v4067
        %4124 = vmatprep.subr.bf16.mxu0 %v4061
        %4125 = vmatpush1.bf16.msra.mxu0 %v4060
        %4126 = vmatprep.subr.bf16.mxu0 %v4054
        %4127 = vmatpush1.bf16.msra.mxu0 %v4053
        %4128 = vmatprep.subr.bf16.mxu0 0
        %4129 = vmatpush2.bf16.msra.mxu0 0
        %4130 = vmatprep.subr.bf16.mxu0 0
        %4131 = vmatpush2.bf16.msra.mxu0 0
        %4132 = vmatprep.subr.bf16.mxu0 0
        %4133 = vmatpush2.bf16.msra.mxu0 0
        %4134 = vmatprep.subr.bf16.mxu0 0
        %4135 = vmatpush2.bf16.msra.mxu0 0
        %4136 = vmatprep.subr.bf16.mxu0 0
        %4137 = vmatpush2.bf16.msra.mxu0 0
        %4138 = vmatprep.subr.bf16.mxu0 0
        %4139 = vmatpush2.bf16.msra.mxu0 0
        %4140 = vmatprep.subr.bf16.mxu0 0
        %4141 = vmatpush2.bf16.msra.mxu0 0
        %4142 = vmatprep.subr.bf16.mxu0 0
        %4143 = vmatpush2.bf16.msra.mxu0 0
        %4144 = vmatprep.mubr.bf16.mxu0 0
        %4145 = vmatmul.mubr.bf16.gmra.mxu0 %v4110
        %v4146 = vpop.f32.mrf.mxu0
        %v4147 = vadd.f32 0.0, %v4146
        %v4148 = vpop.f32.mrf.mxu0
        %v4149 = vadd.f32 0.0, %v4148
        %v4150 = vpop.f32.mrf.mxu0
        %v4151 = vpop.f32.mrf.mxu0
        %4152 = vdwg.mxu0
        %4153 = vmatprep.subr.bf16.mxu0 0
        %4154 = vmatpush1.bf16.msra.mxu0 0
        %4155 = vmatprep.subr.bf16.mxu0 0
        %4156 = vmatpush1.bf16.msra.mxu0 0
        %4157 = vmatprep.subr.bf16.mxu0 0
        %4158 = vmatpush1.bf16.msra.mxu0 0
        %4159 = vmatprep.subr.bf16.mxu0 0
        %4160 = vmatpush1.bf16.msra.mxu0 0
        %4161 = vmatprep.subr.bf16.mxu0 %v4077
        %4162 = vmatpush1.bf16.msra.mxu0 %v4076
        %4163 = vmatprep.subr.bf16.mxu0 %v4070
        %4164 = vmatpush1.bf16.msra.mxu0 %v4069
        %4165 = vmatprep.subr.bf16.mxu0 %v4063
        %4166 = vmatpush1.bf16.msra.mxu0 %v4062
        %4167 = vmatprep.subr.bf16.mxu0 %v4056
        %4168 = vmatpush1.bf16.msra.mxu0 %v4055
        %4169 = vmatprep.subr.bf16.mxu0 0
        %4170 = vmatpush2.bf16.msra.mxu0 0
        %4171 = vmatprep.subr.bf16.mxu0 0
        %4172 = vmatpush2.bf16.msra.mxu0 0
        %4173 = vmatprep.subr.bf16.mxu0 0
        %4174 = vmatpush2.bf16.msra.mxu0 0
        %4175 = vmatprep.subr.bf16.mxu0 0
        %4176 = vmatpush2.bf16.msra.mxu0 0
        %4177 = vmatprep.subr.bf16.mxu0 0
        %4178 = vmatpush2.bf16.msra.mxu0 0
        %4179 = vmatprep.subr.bf16.mxu0 0
        %4180 = vmatpush2.bf16.msra.mxu0 0
        %4181 = vmatprep.subr.bf16.mxu0 0
        %4182 = vmatpush2.bf16.msra.mxu0 0
        %4183 = vmatprep.subr.bf16.mxu0 0
        %4184 = vmatpush2.bf16.msra.mxu0 0
        %4185 = vmatprep.mubr.bf16.mxu0 0
        %4186 = vmatmul.mubr.bf16.gmra.mxu0 %v4110
        %v4187 = vpop.f32.mrf.mxu0
        %v4188 = vadd.f32 0.0, %v4187
        %v4189 = vpop.f32.mrf.mxu0
        %v4190 = vadd.f32 0.0, %v4189
        %v4191 = vpop.f32.mrf.mxu0
        %v4192 = vpop.f32.mrf.mxu0
        %4193 = vdwg.mxu0
        %4194 = vmatprep.subr.bf16.mxu0 0
        %4195 = vmatpush1.bf16.msra.mxu0 0
        %4196 = vmatprep.subr.bf16.mxu0 0
        %4197 = vmatpush1.bf16.msra.mxu0 0
        %4198 = vmatprep.subr.bf16.mxu0 0
        %4199 = vmatpush1.bf16.msra.mxu0 0
        %4200 = vmatprep.subr.bf16.mxu0 0
        %4201 = vmatpush1.bf16.msra.mxu0 0
        %4202 = vmatprep.subr.bf16.mxu0 %v4079
        %4203 = vmatpush1.bf16.msra.mxu0 %v4078
        %4204 = vmatprep.subr.bf16.mxu0 %v4072
        %4205 = vmatpush1.bf16.msra.mxu0 %v4071
        %4206 = vmatprep.subr.bf16.mxu0 %v4065
        %4207 = vmatpush1.bf16.msra.mxu0 %v4064
        %4208 = vmatprep.subr.bf16.mxu0 %v4058
        %4209 = vmatpush1.bf16.msra.mxu0 %v4057
        %4210 = vmatprep.subr.bf16.mxu0 0
        %4211 = vmatpush2.bf16.msra.mxu0 0
        %4212 = vmatprep.subr.bf16.mxu0 0
        %4213 = vmatpush2.bf16.msra.mxu0 0
        %4214 = vmatprep.subr.bf16.mxu0 0
        %4215 = vmatpush2.bf16.msra.mxu0 0
        %4216 = vmatprep.subr.bf16.mxu0 0
        %4217 = vmatpush2.bf16.msra.mxu0 0
        %4218 = vmatprep.subr.bf16.mxu0 0
        %4219 = vmatpush2.bf16.msra.mxu0 0
        %4220 = vmatprep.subr.bf16.mxu0 0
        %4221 = vmatpush2.bf16.msra.mxu0 0
        %4222 = vmatprep.subr.bf16.mxu0 0
        %4223 = vmatpush2.bf16.msra.mxu0 0
        %4224 = vmatprep.subr.bf16.mxu0 0
        %4225 = vmatpush2.bf16.msra.mxu0 0
        %4226 = vmatprep.mubr.bf16.mxu0 0
        %4227 = vmatmul.mubr.bf16.gmra.mxu0 %v4110
        %v4228 = vpop.f32.mrf.mxu0
        %v4229 = vadd.f32 0.0, %v4228
        %v4230 = vpop.f32.mrf.mxu0
        %v4231 = vadd.f32 0.0, %v4230
        %v4232 = vpop.f32.mrf.mxu0
        %v4233 = vpop.f32.mrf.mxu0
        %4234 = vdwg.mxu0
        %4235 = vmatprep.subr.bf16.mxu0 0
        %4236 = vmatpush1.bf16.msra.mxu0 0
        %4237 = vmatprep.subr.bf16.mxu0 0
        %4238 = vmatpush1.bf16.msra.mxu0 0
        %4239 = vmatprep.subr.bf16.mxu0 0
        %4240 = vmatpush1.bf16.msra.mxu0 0
        %4241 = vmatprep.subr.bf16.mxu0 0
        %4242 = vmatpush1.bf16.msra.mxu0 0
        %4243 = vmatprep.subr.bf16.mxu0 0
        %4244 = vmatpush1.bf16.msra.mxu0 %v4080
        %4245 = vmatprep.subr.bf16.mxu0 0
        %4246 = vmatpush1.bf16.msra.mxu0 %v4073
        %4247 = vmatprep.subr.bf16.mxu0 0
        %4248 = vmatpush1.bf16.msra.mxu0 %v4066
        %4249 = vmatprep.subr.bf16.mxu0 0
        %4250 = vmatpush1.bf16.msra.mxu0 %v4059
        %4251 = vmatprep.subr.bf16.mxu0 0
        %4252 = vmatpush2.bf16.msra.mxu0 0
        %4253 = vmatprep.subr.bf16.mxu0 0
        %4254 = vmatpush2.bf16.msra.mxu0 0
        %4255 = vmatprep.subr.bf16.mxu0 0
        %4256 = vmatpush2.bf16.msra.mxu0 0
        %4257 = vmatprep.subr.bf16.mxu0 0
        %4258 = vmatpush2.bf16.msra.mxu0 0
        %4259 = vmatprep.subr.bf16.mxu0 0
        %4260 = vmatpush2.bf16.msra.mxu0 0
        %4261 = vmatprep.subr.bf16.mxu0 0
        %4262 = vmatpush2.bf16.msra.mxu0 0
        %4263 = vmatprep.subr.bf16.mxu0 0
        %4264 = vmatpush2.bf16.msra.mxu0 0
        %4265 = vmatprep.subr.bf16.mxu0 0
        %4266 = vmatpush2.bf16.msra.mxu0 0
        %4267 = vmatprep.mubr.bf16.mxu0 0
        %4268 = vmatmul.mubr.bf16.gmra.mxu0 %v4110
        %v4269 = vpop.f32.mrf.mxu0
        %v4270 = vadd.f32 0.0, %v4269
        %v4271 = vpop.f32.mrf.mxu0
        %v4272 = vpop.f32.mrf.mxu0
        %v4273 = vpop.f32.mrf.mxu0
        %4274 = vdwg.mxu0
        %v4275 = vadd.f32 %v3925, %v4147
        %v4276 = vadd.f32 %v3926, %v4149
        %v4277 = vadd.f32 %v3927, %v4188
        %v4278 = vadd.f32 %v3928, %v4190
        %v4279 = vadd.f32 %v3929, %v4229
        %v4280 = vadd.f32 %v3930, %v4231
        %v4281 = vadd.f32 %v3931, %v4270
        %v4282 = vpack.c.bf16 %v2842, %v2842
        %v4283 = vld [vmem:[%s12 + $0x380] sm:$0xff]
        %v4284 = vld [vmem:[%s12 + $0x388] sm:$0xff]
        %v4285 = vld [vmem:[%s12 + $0x390] sm:$0xff]
        %v4286 = vld [vmem:[%s12 + $0x398] sm:$0xf]
        %v4287 = vld [vmem:[%s12 + $0x39c] sm:$0xff]
        %v4288 = vld [vmem:[%s12 + $0x3a4] sm:$0xff]
        %v4289 = vld [vmem:[%s12 + $0x3ac] sm:$0xff]
        %v4290 = vld [vmem:[%s12 + $0x3b4] sm:$0xf]
        %v4291 = vld [vmem:[%s12 + $0x3b8] sm:$0xff]
        %v4292 = vld [vmem:[%s12 + $0x3c0] sm:$0xff]
        %v4293 = vld [vmem:[%s12 + $0x3c8] sm:$0xff]
        %v4294 = vld [vmem:[%s12 + $0x3d0] sm:$0xf]
        %v4295 = vld [vmem:[%s12 + $0x3d4] sm:$0xff]
        %v4296 = vld [vmem:[%s12 + $0x3dc] sm:$0xff]
        %v4297 = vld [vmem:[%s12 + $0x3e4] sm:$0xff]
        %v4298 = vld [vmem:[%s12 + $0x3ec] sm:$0xf]
        %v4299 = vld [vmem:[%s12 + $0x3f0] sm:$0xff]
        %v4300 = vld [vmem:[%s12 + $0x3f8] sm:$0xff]
        %v4301 = vld [vmem:[%s12 + $0x400] sm:$0xff]
        %v4302 = vld [vmem:[%s12 + $0x408] sm:$0xf]
        %v4303 = vld [vmem:[%s12 + $0x40c] sm:$0xff]
        %v4304 = vld [vmem:[%s12 + $0x414] sm:$0xff]
        %v4305 = vld [vmem:[%s12 + $0x41c] sm:$0xff]
        %v4306 = vld [vmem:[%s12 + $0x424] sm:$0xf]
        %v4307 = vld [vmem:[%s12 + $0x428] sm:$0xff]
        %v4308 = vld [vmem:[%s12 + $0x430] sm:$0xff]
        %v4309 = vld [vmem:[%s12 + $0x438] sm:$0xff]
        %v4310 = vld [vmem:[%s12 + $0x440] sm:$0xf]
        %v4311 = vld [vmem:[%s12 + $0x444] sm:$0xff]
        %v4312 = vld [vmem:[%s12 + $0x44c] sm:$0xff]
        %v4313 = vld [vmem:[%s12 + $0x454] sm:$0xff]
        %v4314 = vld [vmem:[%s12 + $0x45c] sm:$0xf]
        %v4347 = vunpack.c.l.b16 %v4283
        %v4348 = vunpack.c.h.b16 %v4283
        %v4349 = vunpack.c.l.b16 %v4284
        %v4350 = vunpack.c.h.b16 %v4284
        %v4351 = vunpack.c.l.b16 %v4285
        %v4352 = vunpack.c.h.b16 %v4285
        %v4353 = vunpack.c.l.b16 %v4286
        %v4354 = vunpack.c.l.b16 %v4287
        %v4355 = vunpack.c.h.b16 %v4287
        %v4356 = vunpack.c.l.b16 %v4288
        %v4357 = vunpack.c.h.b16 %v4288
        %v4358 = vunpack.c.l.b16 %v4289
        %v4359 = vunpack.c.h.b16 %v4289
        %v4360 = vunpack.c.l.b16 %v4290
        %v4361 = vunpack.c.l.b16 %v4291
        %v4362 = vunpack.c.h.b16 %v4291
        %v4363 = vunpack.c.l.b16 %v4292
        %v4364 = vunpack.c.h.b16 %v4292
        %v4365 = vunpack.c.l.b16 %v4293
        %v4366 = vunpack.c.h.b16 %v4293
        %v4367 = vunpack.c.l.b16 %v4294
        %v4368 = vunpack.c.l.b16 %v4295
        %v4369 = vunpack.c.h.b16 %v4295
        %v4370 = vunpack.c.l.b16 %v4296
        %v4371 = vunpack.c.h.b16 %v4296
        %v4372 = vunpack.c.l.b16 %v4297
        %v4373 = vunpack.c.h.b16 %v4297
        %v4374 = vunpack.c.l.b16 %v4298
        %v4375 = vunpack.c.l.b16 %v4299
        %v4376 = vunpack.c.h.b16 %v4299
        %v4377 = vunpack.c.l.b16 %v4300
        %v4378 = vunpack.c.h.b16 %v4300
        %v4379 = vunpack.c.l.b16 %v4301
        %v4380 = vunpack.c.h.b16 %v4301
        %v4381 = vunpack.c.l.b16 %v4302
        %v4382 = vunpack.c.l.b16 %v4303
        %v4383 = vunpack.c.h.b16 %v4303
        %v4384 = vunpack.c.l.b16 %v4304
        %v4385 = vunpack.c.h.b16 %v4304
        %v4386 = vunpack.c.l.b16 %v4305
        %v4387 = vunpack.c.h.b16 %v4305
        %v4388 = vunpack.c.l.b16 %v4306
        %v4389 = vunpack.c.l.b16 %v4307
        %v4390 = vunpack.c.h.b16 %v4307
        %v4391 = vunpack.c.l.b16 %v4308
        %v4392 = vunpack.c.h.b16 %v4308
        %v4393 = vunpack.c.l.b16 %v4309
        %v4394 = vunpack.c.h.b16 %v4309
        %v4395 = vunpack.c.l.b16 %v4310
        %v4396 = vunpack.c.l.b16 %v4311
        %v4397 = vunpack.c.h.b16 %v4311
        %v4398 = vunpack.c.l.b16 %v4312
        %v4399 = vunpack.c.h.b16 %v4312
        %v4400 = vunpack.c.l.b16 %v4313
        %v4401 = vunpack.c.h.b16 %v4313
        %v4402 = vunpack.c.l.b16 %v4314
        %v4403 = vpack.c.b16 %v4354, %v4347
        %v4404 = vpack.c.b16 %v4355, %v4348
        %v4405 = vpack.c.b16 %v4356, %v4349
        %v4406 = vpack.c.b16 %v4357, %v4350
        %v4407 = vpack.c.b16 %v4358, %v4351
        %v4408 = vpack.c.b16 %v4359, %v4352
        %v4409 = vpack.c.b16 %v4360, %v4353
        %v4410 = vpack.c.b16 %v4368, %v4361
        %v4411 = vpack.c.b16 %v4369, %v4362
        %v4412 = vpack.c.b16 %v4370, %v4363
        %v4413 = vpack.c.b16 %v4371, %v4364
        %v4414 = vpack.c.b16 %v4372, %v4365
        %v4415 = vpack.c.b16 %v4373, %v4366
        %v4416 = vpack.c.b16 %v4374, %v4367
        %v4417 = vpack.c.b16 %v4382, %v4375
        %v4418 = vpack.c.b16 %v4383, %v4376
        %v4419 = vpack.c.b16 %v4384, %v4377
        %v4420 = vpack.c.b16 %v4385, %v4378
        %v4421 = vpack.c.b16 %v4386, %v4379
        %v4422 = vpack.c.b16 %v4387, %v4380
        %v4423 = vpack.c.b16 %v4388, %v4381
        %v4424 = vpack.c.b16 %v4396, %v4389
        %v4425 = vpack.c.b16 %v4397, %v4390
        %v4426 = vpack.c.b16 %v4398, %v4391
        %v4427 = vpack.c.b16 %v4399, %v4392
        %v4428 = vpack.c.b16 %v4400, %v4393
        %v4429 = vpack.c.b16 %v4401, %v4394
        %v4430 = vpack.c.b16 %v4402, %v4395
        %v4460 = vsel %vm3022, %v4282, 0
        %4462 = vmatprep.subr.bf16.mxu0 0
        %4463 = vmatpush1.bf16.msra.mxu0 0
        %4464 = vmatprep.subr.bf16.mxu0 0
        %4465 = vmatpush1.bf16.msra.mxu0 0
        %4466 = vmatprep.subr.bf16.mxu0 0
        %4467 = vmatpush1.bf16.msra.mxu0 0
        %4468 = vmatprep.subr.bf16.mxu0 0
        %4469 = vmatpush1.bf16.msra.mxu0 0
        %4470 = vmatprep.subr.bf16.mxu0 %v4425
        %4471 = vmatpush1.bf16.msra.mxu0 %v4424
        %4472 = vmatprep.subr.bf16.mxu0 %v4418
        %4473 = vmatpush1.bf16.msra.mxu0 %v4417
        %4474 = vmatprep.subr.bf16.mxu0 %v4411
        %4475 = vmatpush1.bf16.msra.mxu0 %v4410
        %4476 = vmatprep.subr.bf16.mxu0 %v4404
        %4477 = vmatpush1.bf16.msra.mxu0 %v4403
        %4478 = vmatprep.subr.bf16.mxu0 0
        %4479 = vmatpush2.bf16.msra.mxu0 0
        %4480 = vmatprep.subr.bf16.mxu0 0
        %4481 = vmatpush2.bf16.msra.mxu0 0
        %4482 = vmatprep.subr.bf16.mxu0 0
        %4483 = vmatpush2.bf16.msra.mxu0 0
        %4484 = vmatprep.subr.bf16.mxu0 0
        %4485 = vmatpush2.bf16.msra.mxu0 0
        %4486 = vmatprep.subr.bf16.mxu0 0
        %4487 = vmatpush2.bf16.msra.mxu0 0
        %4488 = vmatprep.subr.bf16.mxu0 0
        %4489 = vmatpush2.bf16.msra.mxu0 0
        %4490 = vmatprep.subr.bf16.mxu0 0
        %4491 = vmatpush2.bf16.msra.mxu0 0
        %4492 = vmatprep.subr.bf16.mxu0 0
        %4493 = vmatpush2.bf16.msra.mxu0 0
        %4494 = vmatprep.mubr.bf16.mxu0 0
        %4495 = vmatmul.mubr.bf16.gmra.mxu0 %v4460
        %v4496 = vpop.f32.mrf.mxu0
        %v4497 = vadd.f32 0.0, %v4496
        %v4498 = vpop.f32.mrf.mxu0
        %v4499 = vadd.f32 0.0, %v4498
        %v4500 = vpop.f32.mrf.mxu0
        %v4501 = vpop.f32.mrf.mxu0
        %4502 = vdwg.mxu0
        %4503 = vmatprep.subr.bf16.mxu0 0
        %4504 = vmatpush1.bf16.msra.mxu0 0
        %4505 = vmatprep.subr.bf16.mxu0 0
        %4506 = vmatpush1.bf16.msra.mxu0 0
        %4507 = vmatprep.subr.bf16.mxu0 0
        %4508 = vmatpush1.bf16.msra.mxu0 0
        %4509 = vmatprep.subr.bf16.mxu0 0
        %4510 = vmatpush1.bf16.msra.mxu0 0
        %4511 = vmatprep.subr.bf16.mxu0 %v4427
        %4512 = vmatpush1.bf16.msra.mxu0 %v4426
        %4513 = vmatprep.subr.bf16.mxu0 %v4420
        %4514 = vmatpush1.bf16.msra.mxu0 %v4419
        %4515 = vmatprep.subr.bf16.mxu0 %v4413
        %4516 = vmatpush1.bf16.msra.mxu0 %v4412
        %4517 = vmatprep.subr.bf16.mxu0 %v4406
        %4518 = vmatpush1.bf16.msra.mxu0 %v4405
        %4519 = vmatprep.subr.bf16.mxu0 0
        %4520 = vmatpush2.bf16.msra.mxu0 0
        %4521 = vmatprep.subr.bf16.mxu0 0
        %4522 = vmatpush2.bf16.msra.mxu0 0
        %4523 = vmatprep.subr.bf16.mxu0 0
        %4524 = vmatpush2.bf16.msra.mxu0 0
        %4525 = vmatprep.subr.bf16.mxu0 0
        %4526 = vmatpush2.bf16.msra.mxu0 0
        %4527 = vmatprep.subr.bf16.mxu0 0
        %4528 = vmatpush2.bf16.msra.mxu0 0
        %4529 = vmatprep.subr.bf16.mxu0 0
        %4530 = vmatpush2.bf16.msra.mxu0 0
        %4531 = vmatprep.subr.bf16.mxu0 0
        %4532 = vmatpush2.bf16.msra.mxu0 0
        %4533 = vmatprep.subr.bf16.mxu0 0
        %4534 = vmatpush2.bf16.msra.mxu0 0
        %4535 = vmatprep.mubr.bf16.mxu0 0
        %4536 = vmatmul.mubr.bf16.gmra.mxu0 %v4460
        %v4537 = vpop.f32.mrf.mxu0
        %v4538 = vadd.f32 0.0, %v4537
        %v4539 = vpop.f32.mrf.mxu0
        %v4540 = vadd.f32 0.0, %v4539
        %v4541 = vpop.f32.mrf.mxu0
        %v4542 = vpop.f32.mrf.mxu0
        %4543 = vdwg.mxu0
        %4544 = vmatprep.subr.bf16.mxu0 0
        %4545 = vmatpush1.bf16.msra.mxu0 0
        %4546 = vmatprep.subr.bf16.mxu0 0
        %4547 = vmatpush1.bf16.msra.mxu0 0
        %4548 = vmatprep.subr.bf16.mxu0 0
        %4549 = vmatpush1.bf16.msra.mxu0 0
        %4550 = vmatprep.subr.bf16.mxu0 0
        %4551 = vmatpush1.bf16.msra.mxu0 0
        %4552 = vmatprep.subr.bf16.mxu0 %v4429
        %4553 = vmatpush1.bf16.msra.mxu0 %v4428
        %4554 = vmatprep.subr.bf16.mxu0 %v4422
        %4555 = vmatpush1.bf16.msra.mxu0 %v4421
        %4556 = vmatprep.subr.bf16.mxu0 %v4415
        %4557 = vmatpush1.bf16.msra.mxu0 %v4414
        %4558 = vmatprep.subr.bf16.mxu0 %v4408
        %4559 = vmatpush1.bf16.msra.mxu0 %v4407
        %4560 = vmatprep.subr.bf16.mxu0 0
        %4561 = vmatpush2.bf16.msra.mxu0 0
        %4562 = vmatprep.subr.bf16.mxu0 0
        %4563 = vmatpush2.bf16.msra.mxu0 0
        %4564 = vmatprep.subr.bf16.mxu0 0
        %4565 = vmatpush2.bf16.msra.mxu0 0
        %4566 = vmatprep.subr.bf16.mxu0 0
        %4567 = vmatpush2.bf16.msra.mxu0 0
        %4568 = vmatprep.subr.bf16.mxu0 0
        %4569 = vmatpush2.bf16.msra.mxu0 0
        %4570 = vmatprep.subr.bf16.mxu0 0
        %4571 = vmatpush2.bf16.msra.mxu0 0
        %4572 = vmatprep.subr.bf16.mxu0 0
        %4573 = vmatpush2.bf16.msra.mxu0 0
        %4574 = vmatprep.subr.bf16.mxu0 0
        %4575 = vmatpush2.bf16.msra.mxu0 0
        %4576 = vmatprep.mubr.bf16.mxu0 0
        %4577 = vmatmul.mubr.bf16.gmra.mxu0 %v4460
        %v4578 = vpop.f32.mrf.mxu0
        %v4579 = vadd.f32 0.0, %v4578
        %v4580 = vpop.f32.mrf.mxu0
        %v4581 = vadd.f32 0.0, %v4580
        %v4582 = vpop.f32.mrf.mxu0
        %v4583 = vpop.f32.mrf.mxu0
        %4584 = vdwg.mxu0
        %4585 = vmatprep.subr.bf16.mxu0 0
        %4586 = vmatpush1.bf16.msra.mxu0 0
        %4587 = vmatprep.subr.bf16.mxu0 0
        %4588 = vmatpush1.bf16.msra.mxu0 0
        %4589 = vmatprep.subr.bf16.mxu0 0
        %4590 = vmatpush1.bf16.msra.mxu0 0
        %4591 = vmatprep.subr.bf16.mxu0 0
        %4592 = vmatpush1.bf16.msra.mxu0 0
        %4593 = vmatprep.subr.bf16.mxu0 0
        %4594 = vmatpush1.bf16.msra.mxu0 %v4430
        %4595 = vmatprep.subr.bf16.mxu0 0
        %4596 = vmatpush1.bf16.msra.mxu0 %v4423
        %4597 = vmatprep.subr.bf16.mxu0 0
        %4598 = vmatpush1.bf16.msra.mxu0 %v4416
        %4599 = vmatprep.subr.bf16.mxu0 0
        %4600 = vmatpush1.bf16.msra.mxu0 %v4409
        %4601 = vmatprep.subr.bf16.mxu0 0
        %4602 = vmatpush2.bf16.msra.mxu0 0
        %4603 = vmatprep.subr.bf16.mxu0 0
        %4604 = vmatpush2.bf16.msra.mxu0 0
        %4605 = vmatprep.subr.bf16.mxu0 0
        %4606 = vmatpush2.bf16.msra.mxu0 0
        %4607 = vmatprep.subr.bf16.mxu0 0
        %4608 = vmatpush2.bf16.msra.mxu0 0
        %4609 = vmatprep.subr.bf16.mxu0 0
        %4610 = vmatpush2.bf16.msra.mxu0 0
        %4611 = vmatprep.subr.bf16.mxu0 0
        %4612 = vmatpush2.bf16.msra.mxu0 0
        %4613 = vmatprep.subr.bf16.mxu0 0
        %4614 = vmatpush2.bf16.msra.mxu0 0
        %4615 = vmatprep.subr.bf16.mxu0 0
        %4616 = vmatpush2.bf16.msra.mxu0 0
        %4617 = vmatprep.mubr.bf16.mxu0 0
        %4618 = vmatmul.mubr.bf16.gmra.mxu0 %v4460
        %v4619 = vpop.f32.mrf.mxu0
        %v4620 = vadd.f32 0.0, %v4619
        %v4621 = vpop.f32.mrf.mxu0
        %v4622 = vpop.f32.mrf.mxu0
        %v4623 = vpop.f32.mrf.mxu0
        %4624 = vdwg.mxu0
        %v4625 = vadd.f32 %v4275, %v4497
        %v4626 = vadd.f32 %v4276, %v4499
        %v4627 = vadd.f32 %v4277, %v4538
        %v4628 = vadd.f32 %v4278, %v4540
        %v4629 = vadd.f32 %v4279, %v4579
        %v4630 = vadd.f32 %v4280, %v4581
        %v4631 = vadd.f32 %v4281, %v4620
        %v4632 = vpack.c.bf16 %v2843, %v2843
        %v4633 = vld [vmem:[%s12 + $0x460] sm:$0xff]
        %v4634 = vld [vmem:[%s12 + $0x468] sm:$0xff]
        %v4635 = vld [vmem:[%s12 + $0x470] sm:$0xff]
        %v4636 = vld [vmem:[%s12 + $0x478] sm:$0xf]
        %v4637 = vld [vmem:[%s12 + $0x47c] sm:$0xff]
        %v4638 = vld [vmem:[%s12 + $0x484] sm:$0xff]
        %v4639 = vld [vmem:[%s12 + $0x48c] sm:$0xff]
        %v4640 = vld [vmem:[%s12 + $0x494] sm:$0xf]
        %v4641 = vld [vmem:[%s12 + $0x498] sm:$0xff]
        %v4642 = vld [vmem:[%s12 + $0x4a0] sm:$0xff]
        %v4643 = vld [vmem:[%s12 + $0x4a8] sm:$0xff]
        %v4644 = vld [vmem:[%s12 + $0x4b0] sm:$0xf]
        %v4645 = vld [vmem:[%s12 + $0x4b4] sm:$0xff]
        %v4646 = vld [vmem:[%s12 + $0x4bc] sm:$0xff]
        %v4647 = vld [vmem:[%s12 + $0x4c4] sm:$0xff]
        %v4648 = vld [vmem:[%s12 + $0x4cc] sm:$0xf]
        %v4649 = vld [vmem:[%s12 + $0x4d0] sm:$0xff]
        %v4650 = vld [vmem:[%s12 + $0x4d8] sm:$0xff]
        %v4651 = vld [vmem:[%s12 + $0x4e0] sm:$0xff]
        %v4652 = vld [vmem:[%s12 + $0x4e8] sm:$0xf]
        %v4653 = vld [vmem:[%s12 + $0x4ec] sm:$0xff]
        %v4654 = vld [vmem:[%s12 + $0x4f4] sm:$0xff]
        %v4655 = vld [vmem:[%s12 + $0x4fc] sm:$0xff]
        %v4656 = vld [vmem:[%s12 + $0x504] sm:$0xf]
        %v4657 = vld [vmem:[%s12 + $0x508] sm:$0xff]
        %v4658 = vld [vmem:[%s12 + $0x510] sm:$0xff]
        %v4659 = vld [vmem:[%s12 + $0x518] sm:$0xff]
        %v4660 = vld [vmem:[%s12 + $0x520] sm:$0xf]
        %v4661 = vld [vmem:[%s12 + $0x524] sm:$0xff]
        %v4662 = vld [vmem:[%s12 + $0x52c] sm:$0xff]
        %v4663 = vld [vmem:[%s12 + $0x534] sm:$0xff]
        %v4664 = vld [vmem:[%s12 + $0x53c] sm:$0xf]
        %v4697 = vunpack.c.l.b16 %v4633
        %v4698 = vunpack.c.h.b16 %v4633
        %v4699 = vunpack.c.l.b16 %v4634
        %v4700 = vunpack.c.h.b16 %v4634
        %v4701 = vunpack.c.l.b16 %v4635
        %v4702 = vunpack.c.h.b16 %v4635
        %v4703 = vunpack.c.l.b16 %v4636
        %v4704 = vunpack.c.l.b16 %v4637
        %v4705 = vunpack.c.h.b16 %v4637
        %v4706 = vunpack.c.l.b16 %v4638
        %v4707 = vunpack.c.h.b16 %v4638
        %v4708 = vunpack.c.l.b16 %v4639
        %v4709 = vunpack.c.h.b16 %v4639
        %v4710 = vunpack.c.l.b16 %v4640
        %v4711 = vunpack.c.l.b16 %v4641
        %v4712 = vunpack.c.h.b16 %v4641
        %v4713 = vunpack.c.l.b16 %v4642
        %v4714 = vunpack.c.h.b16 %v4642
        %v4715 = vunpack.c.l.b16 %v4643
        %v4716 = vunpack.c.h.b16 %v4643
        %v4717 = vunpack.c.l.b16 %v4644
        %v4718 = vunpack.c.l.b16 %v4645
        %v4719 = vunpack.c.h.b16 %v4645
        %v4720 = vunpack.c.l.b16 %v4646
        %v4721 = vunpack.c.h.b16 %v4646
        %v4722 = vunpack.c.l.b16 %v4647
        %v4723 = vunpack.c.h.b16 %v4647
        %v4724 = vunpack.c.l.b16 %v4648
        %v4725 = vunpack.c.l.b16 %v4649
        %v4726 = vunpack.c.h.b16 %v4649
        %v4727 = vunpack.c.l.b16 %v4650
        %v4728 = vunpack.c.h.b16 %v4650
        %v4729 = vunpack.c.l.b16 %v4651
        %v4730 = vunpack.c.h.b16 %v4651
        %v4731 = vunpack.c.l.b16 %v4652
        %v4732 = vunpack.c.l.b16 %v4653
        %v4733 = vunpack.c.h.b16 %v4653
        %v4734 = vunpack.c.l.b16 %v4654
        %v4735 = vunpack.c.h.b16 %v4654
        %v4736 = vunpack.c.l.b16 %v4655
        %v4737 = vunpack.c.h.b16 %v4655
        %v4738 = vunpack.c.l.b16 %v4656
        %v4739 = vunpack.c.l.b16 %v4657
        %v4740 = vunpack.c.h.b16 %v4657
        %v4741 = vunpack.c.l.b16 %v4658
        %v4742 = vunpack.c.h.b16 %v4658
        %v4743 = vunpack.c.l.b16 %v4659
        %v4744 = vunpack.c.h.b16 %v4659
        %v4745 = vunpack.c.l.b16 %v4660
        %v4746 = vunpack.c.l.b16 %v4661
        %v4747 = vunpack.c.h.b16 %v4661
        %v4748 = vunpack.c.l.b16 %v4662
        %v4749 = vunpack.c.h.b16 %v4662
        %v4750 = vunpack.c.l.b16 %v4663
        %v4751 = vunpack.c.h.b16 %v4663
        %v4752 = vunpack.c.l.b16 %v4664
        %v4753 = vpack.c.b16 %v4704, %v4697
        %v4754 = vpack.c.b16 %v4705, %v4698
        %v4755 = vpack.c.b16 %v4706, %v4699
        %v4756 = vpack.c.b16 %v4707, %v4700
        %v4757 = vpack.c.b16 %v4708, %v4701
        %v4758 = vpack.c.b16 %v4709, %v4702
        %v4759 = vpack.c.b16 %v4710, %v4703
        %v4760 = vpack.c.b16 %v4718, %v4711
        %v4761 = vpack.c.b16 %v4719, %v4712
        %v4762 = vpack.c.b16 %v4720, %v4713
        %v4763 = vpack.c.b16 %v4721, %v4714
        %v4764 = vpack.c.b16 %v4722, %v4715
        %v4765 = vpack.c.b16 %v4723, %v4716
        %v4766 = vpack.c.b16 %v4724, %v4717
        %v4767 = vpack.c.b16 %v4732, %v4725
        %v4768 = vpack.c.b16 %v4733, %v4726
        %v4769 = vpack.c.b16 %v4734, %v4727
        %v4770 = vpack.c.b16 %v4735, %v4728
        %v4771 = vpack.c.b16 %v4736, %v4729
        %v4772 = vpack.c.b16 %v4737, %v4730
        %v4773 = vpack.c.b16 %v4738, %v4731
        %v4774 = vpack.c.b16 %v4746, %v4739
        %v4775 = vpack.c.b16 %v4747, %v4740
        %v4776 = vpack.c.b16 %v4748, %v4741
        %v4777 = vpack.c.b16 %v4749, %v4742
        %v4778 = vpack.c.b16 %v4750, %v4743
        %v4779 = vpack.c.b16 %v4751, %v4744
        %v4780 = vpack.c.b16 %v4752, %v4745
        %v4810 = vsel %vm3022, %v4632, 0
        %4812 = vmatprep.subr.bf16.mxu0 0
        %4813 = vmatpush1.bf16.msra.mxu0 0
        %4814 = vmatprep.subr.bf16.mxu0 0
        %4815 = vmatpush1.bf16.msra.mxu0 0
        %4816 = vmatprep.subr.bf16.mxu0 0
        %4817 = vmatpush1.bf16.msra.mxu0 0
        %4818 = vmatprep.subr.bf16.mxu0 0
        %4819 = vmatpush1.bf16.msra.mxu0 0
        %4820 = vmatprep.subr.bf16.mxu0 %v4775
        %4821 = vmatpush1.bf16.msra.mxu0 %v4774
        %4822 = vmatprep.subr.bf16.mxu0 %v4768
        %4823 = vmatpush1.bf16.msra.mxu0 %v4767
        %4824 = vmatprep.subr.bf16.mxu0 %v4761
        %4825 = vmatpush1.bf16.msra.mxu0 %v4760
        %4826 = vmatprep.subr.bf16.mxu0 %v4754
        %4827 = vmatpush1.bf16.msra.mxu0 %v4753
        %4828 = vmatprep.subr.bf16.mxu0 0
        %4829 = vmatpush2.bf16.msra.mxu0 0
        %4830 = vmatprep.subr.bf16.mxu0 0
        %4831 = vmatpush2.bf16.msra.mxu0 0
        %4832 = vmatprep.subr.bf16.mxu0 0
        %4833 = vmatpush2.bf16.msra.mxu0 0
        %4834 = vmatprep.subr.bf16.mxu0 0
        %4835 = vmatpush2.bf16.msra.mxu0 0
        %4836 = vmatprep.subr.bf16.mxu0 0
        %4837 = vmatpush2.bf16.msra.mxu0 0
        %4838 = vmatprep.subr.bf16.mxu0 0
        %4839 = vmatpush2.bf16.msra.mxu0 0
        %4840 = vmatprep.subr.bf16.mxu0 0
        %4841 = vmatpush2.bf16.msra.mxu0 0
        %4842 = vmatprep.subr.bf16.mxu0 0
        %4843 = vmatpush2.bf16.msra.mxu0 0
        %4844 = vmatprep.mubr.bf16.mxu0 0
        %4845 = vmatmul.mubr.bf16.gmra.mxu0 %v4810
        %v4846 = vpop.f32.mrf.mxu0
        %v4847 = vadd.f32 0.0, %v4846
        %v4848 = vpop.f32.mrf.mxu0
        %v4849 = vadd.f32 0.0, %v4848
        %v4850 = vpop.f32.mrf.mxu0
        %v4851 = vpop.f32.mrf.mxu0
        %4852 = vdwg.mxu0
        %4853 = vmatprep.subr.bf16.mxu0 0
        %4854 = vmatpush1.bf16.msra.mxu0 0
        %4855 = vmatprep.subr.bf16.mxu0 0
        %4856 = vmatpush1.bf16.msra.mxu0 0
        %4857 = vmatprep.subr.bf16.mxu0 0
        %4858 = vmatpush1.bf16.msra.mxu0 0
        %4859 = vmatprep.subr.bf16.mxu0 0
        %4860 = vmatpush1.bf16.msra.mxu0 0
        %4861 = vmatprep.subr.bf16.mxu0 %v4777
        %4862 = vmatpush1.bf16.msra.mxu0 %v4776
        %4863 = vmatprep.subr.bf16.mxu0 %v4770
        %4864 = vmatpush1.bf16.msra.mxu0 %v4769
        %4865 = vmatprep.subr.bf16.mxu0 %v4763
        %4866 = vmatpush1.bf16.msra.mxu0 %v4762
        %4867 = vmatprep.subr.bf16.mxu0 %v4756
        %4868 = vmatpush1.bf16.msra.mxu0 %v4755
        %4869 = vmatprep.subr.bf16.mxu0 0
        %4870 = vmatpush2.bf16.msra.mxu0 0
        %4871 = vmatprep.subr.bf16.mxu0 0
        %4872 = vmatpush2.bf16.msra.mxu0 0
        %4873 = vmatprep.subr.bf16.mxu0 0
        %4874 = vmatpush2.bf16.msra.mxu0 0
        %4875 = vmatprep.subr.bf16.mxu0 0
        %4876 = vmatpush2.bf16.msra.mxu0 0
        %4877 = vmatprep.subr.bf16.mxu0 0
        %4878 = vmatpush2.bf16.msra.mxu0 0
        %4879 = vmatprep.subr.bf16.mxu0 0
        %4880 = vmatpush2.bf16.msra.mxu0 0
        %4881 = vmatprep.subr.bf16.mxu0 0
        %4882 = vmatpush2.bf16.msra.mxu0 0
        %4883 = vmatprep.subr.bf16.mxu0 0
        %4884 = vmatpush2.bf16.msra.mxu0 0
        %4885 = vmatprep.mubr.bf16.mxu0 0
        %4886 = vmatmul.mubr.bf16.gmra.mxu0 %v4810
        %v4887 = vpop.f32.mrf.mxu0
        %v4888 = vadd.f32 0.0, %v4887
        %v4889 = vpop.f32.mrf.mxu0
        %v4890 = vadd.f32 0.0, %v4889
        %v4891 = vpop.f32.mrf.mxu0
        %v4892 = vpop.f32.mrf.mxu0
        %4893 = vdwg.mxu0
        %4894 = vmatprep.subr.bf16.mxu0 0
        %4895 = vmatpush1.bf16.msra.mxu0 0
        %4896 = vmatprep.subr.bf16.mxu0 0
        %4897 = vmatpush1.bf16.msra.mxu0 0
        %4898 = vmatprep.subr.bf16.mxu0 0
        %4899 = vmatpush1.bf16.msra.mxu0 0
        %4900 = vmatprep.subr.bf16.mxu0 0
        %4901 = vmatpush1.bf16.msra.mxu0 0
        %4902 = vmatprep.subr.bf16.mxu0 %v4779
        %4903 = vmatpush1.bf16.msra.mxu0 %v4778
        %4904 = vmatprep.subr.bf16.mxu0 %v4772
        %4905 = vmatpush1.bf16.msra.mxu0 %v4771
        %4906 = vmatprep.subr.bf16.mxu0 %v4765
        %4907 = vmatpush1.bf16.msra.mxu0 %v4764
        %4908 = vmatprep.subr.bf16.mxu0 %v4758
        %4909 = vmatpush1.bf16.msra.mxu0 %v4757
        %4910 = vmatprep.subr.bf16.mxu0 0
        %4911 = vmatpush2.bf16.msra.mxu0 0
        %4912 = vmatprep.subr.bf16.mxu0 0
        %4913 = vmatpush2.bf16.msra.mxu0 0
        %4914 = vmatprep.subr.bf16.mxu0 0
        %4915 = vmatpush2.bf16.msra.mxu0 0
        %4916 = vmatprep.subr.bf16.mxu0 0
        %4917 = vmatpush2.bf16.msra.mxu0 0
        %4918 = vmatprep.subr.bf16.mxu0 0
        %4919 = vmatpush2.bf16.msra.mxu0 0
        %4920 = vmatprep.subr.bf16.mxu0 0
        %4921 = vmatpush2.bf16.msra.mxu0 0
        %4922 = vmatprep.subr.bf16.mxu0 0
        %4923 = vmatpush2.bf16.msra.mxu0 0
        %4924 = vmatprep.subr.bf16.mxu0 0
        %4925 = vmatpush2.bf16.msra.mxu0 0
        %4926 = vmatprep.mubr.bf16.mxu0 0
        %4927 = vmatmul.mubr.bf16.gmra.mxu0 %v4810
        %v4928 = vpop.f32.mrf.mxu0
        %v4929 = vadd.f32 0.0, %v4928
        %v4930 = vpop.f32.mrf.mxu0
        %v4931 = vadd.f32 0.0, %v4930
        %v4932 = vpop.f32.mrf.mxu0
        %v4933 = vpop.f32.mrf.mxu0
        %4934 = vdwg.mxu0
        %4935 = vmatprep.subr.bf16.mxu0 0
        %4936 = vmatpush1.bf16.msra.mxu0 0
        %4937 = vmatprep.subr.bf16.mxu0 0
        %4938 = vmatpush1.bf16.msra.mxu0 0
        %4939 = vmatprep.subr.bf16.mxu0 0
        %4940 = vmatpush1.bf16.msra.mxu0 0
        %4941 = vmatprep.subr.bf16.mxu0 0
        %4942 = vmatpush1.bf16.msra.mxu0 0
        %4943 = vmatprep.subr.bf16.mxu0 0
        %4944 = vmatpush1.bf16.msra.mxu0 %v4780
        %4945 = vmatprep.subr.bf16.mxu0 0
        %4946 = vmatpush1.bf16.msra.mxu0 %v4773
        %4947 = vmatprep.subr.bf16.mxu0 0
        %4948 = vmatpush1.bf16.msra.mxu0 %v4766
        %4949 = vmatprep.subr.bf16.mxu0 0
        %4950 = vmatpush1.bf16.msra.mxu0 %v4759
        %4951 = vmatprep.subr.bf16.mxu0 0
        %4952 = vmatpush2.bf16.msra.mxu0 0
        %4953 = vmatprep.subr.bf16.mxu0 0
        %4954 = vmatpush2.bf16.msra.mxu0 0
        %4955 = vmatprep.subr.bf16.mxu0 0
        %4956 = vmatpush2.bf16.msra.mxu0 0
        %4957 = vmatprep.subr.bf16.mxu0 0
        %4958 = vmatpush2.bf16.msra.mxu0 0
        %4959 = vmatprep.subr.bf16.mxu0 0
        %4960 = vmatpush2.bf16.msra.mxu0 0
        %4961 = vmatprep.subr.bf16.mxu0 0
        %4962 = vmatpush2.bf16.msra.mxu0 0
        %4963 = vmatprep.subr.bf16.mxu0 0
        %4964 = vmatpush2.bf16.msra.mxu0 0
        %4965 = vmatprep.subr.bf16.mxu0 0
        %4966 = vmatpush2.bf16.msra.mxu0 0
        %4967 = vmatprep.mubr.bf16.mxu0 0
        %4968 = vmatmul.mubr.bf16.gmra.mxu0 %v4810
        %v4969 = vpop.f32.mrf.mxu0
        %v4970 = vadd.f32 0.0, %v4969
        %v4971 = vpop.f32.mrf.mxu0
        %v4972 = vpop.f32.mrf.mxu0
        %v4973 = vpop.f32.mrf.mxu0
        %4974 = vdwg.mxu0
        %v4975 = vadd.f32 %v4625, %v4847
        %v4976 = vadd.f32 %v4626, %v4849
        %v4977 = vadd.f32 %v4627, %v4888
        %v4978 = vadd.f32 %v4628, %v4890
        %v4979 = vadd.f32 %v4629, %v4929
        %v4980 = vadd.f32 %v4630, %v4931
        %v4981 = vadd.f32 %v4631, %v4970
        %v4982 = vtanh.pop %v4975
        %v4983 = vtanh.pop %v4976
        %v4984 = vtanh.pop %v4977
        %v4985 = vtanh.pop %v4978
        %v4986 = vtanh.pop %v4979
        %v4987 = vtanh.pop %v4980
        %v4988 = vtanh.pop %v4981
        %4989 = vst [vmem:[%s760] sm:$0xff] 0.0
        %4990 = vst [vmem:[%s760 + $0x8] sm:$0xff] 0.0
        %4991 = vst [vmem:[%s760 + $0x10] sm:$0xff] 0.0
        %4992 = vst [vmem:[%s760 + $0x18] sm:$0xff] 0.0
        %4993 = vst [vmem:[%s760 + $0x20] sm:$0xff] 0.0
        %4994 = vst [vmem:[%s760 + $0x28] sm:$0xff] 0.0
        %4995 = vst [vmem:[%s760 + $0x30] sm:$0xff] 0.0
        %4996 = vst [vmem:[%s760 + $0x38] sm:$0xff] 0.0
        %4997 = vst [vmem:[%s760 + $0x40] sm:$0xff] 0.0
        %4998 = vst [vmem:[%s760 + $0x48] sm:$0xff] 0.0
        %4999 = vst [vmem:[%s760 + $0x50] sm:$0xff] 0.0
        %5000 = vst [vmem:[%s760 + $0x58] sm:$0xff] 0.0
        %5001 = vst [vmem:[%s760 + $0x60] sm:$0xff] 0.0
        %5002 = vst [vmem:[%s760 + $0x68] sm:$0xff] 0.0
        %5003 = vst.msk [vmem:[%s760] sm:$0xff] %vm3022, %v4982
        %5005 = vrot.lane.b32.xlu0 %v4982, 64
        %v5006 = vpop.permute.xlu0 %5005
        %5008 = vst.msk [vmem:[%s760 + $0x8] sm:$0xff] %vm3022, %v5006
        %5009 = vst.msk [vmem:[%s760 + $0x10] sm:$0xff] %vm3022, %v4983
        %5011 = vrot.lane.b32.xlu0 %v4983, 64
        %v5012 = vpop.permute.xlu0 %5011
        %5014 = vst.msk [vmem:[%s760 + $0x18] sm:$0xff] %vm3022, %v5012
        %5015 = vst.msk [vmem:[%s760 + $0x20] sm:$0xff] %vm3022, %v4984
        %5017 = vrot.lane.b32.xlu0 %v4984, 64
        %v5018 = vpop.permute.xlu0 %5017
        %5020 = vst.msk [vmem:[%s760 + $0x28] sm:$0xff] %vm3022, %v5018
        %5021 = vst.msk [vmem:[%s760 + $0x30] sm:$0xff] %vm3022, %v4985
        %5023 = vrot.lane.b32.xlu0 %v4985, 64
        %v5024 = vpop.permute.xlu0 %5023
        %5026 = vst.msk [vmem:[%s760 + $0x38] sm:$0xff] %vm3022, %v5024
        %5027 = vst.msk [vmem:[%s760 + $0x40] sm:$0xff] %vm3022, %v4986
        %5029 = vrot.lane.b32.xlu0 %v4986, 64
        %v5030 = vpop.permute.xlu0 %5029
        %5032 = vst.msk [vmem:[%s760 + $0x48] sm:$0xff] %vm3022, %v5030
        %5033 = vst.msk [vmem:[%s760 + $0x50] sm:$0xff] %vm3022, %v4987
        %5035 = vrot.lane.b32.xlu0 %v4987, 64
        %v5036 = vpop.permute.xlu0 %5035
        %5038 = vst.msk [vmem:[%s760 + $0x58] sm:$0xff] %vm3022, %v5036
        %5039 = vst.msk [vmem:[%s760 + $0x60] sm:$0xff] %vm3022, %v4988
        %5041 = vrot.lane.b32.xlu0 %v4988, 64
        %v5042 = vpop.permute.xlu0 %5041
        %5044 = vst.msk [vmem:[%s760 + $0x68] sm:$0xff] %vm3022, %v5042
        %v5045 = vld [vmem:[%s760] sm:$0xff]
        %v5046 = vld [vmem:[%s760 + $0x8] sm:$0xff]
        %v5047 = vld [vmem:[%s760 + $0x10] sm:$0xff]
        %v5048 = vld [vmem:[%s760 + $0x18] sm:$0xff]
        %v5049 = vld [vmem:[%s760 + $0x20] sm:$0xff]
        %v5050 = vld [vmem:[%s760 + $0x28] sm:$0xff]
        %v5051 = vld [vmem:[%s760 + $0x30] sm:$0xff]
        %v5052 = vld [vmem:[%s760 + $0x38] sm:$0xff]
        %v5053 = vld [vmem:[%s760 + $0x40] sm:$0xff]
        %v5054 = vld [vmem:[%s760 + $0x48] sm:$0xff]
        %v5055 = vld [vmem:[%s760 + $0x50] sm:$0xff]
        %v5056 = vld [vmem:[%s760 + $0x58] sm:$0xff]
        %v5057 = vld [vmem:[%s760 + $0x60] sm:$0xff]
        %v5058 = vld [vmem:[%s760 + $0x68] sm:$0xff]
        %v5059 = vpack.c.bf16 %v5046, %v5045
        %v5060 = vpack.c.bf16 %v5048, %v5047
        %v5061 = vpack.c.bf16 %v5050, %v5049
        %v5062 = vpack.c.bf16 %v5052, %v5051
        %v5063 = vpack.c.bf16 %v5054, %v5053
        %v5064 = vpack.c.bf16 %v5056, %v5055
        %v5065 = vpack.c.bf16 %v5058, %v5057
        %v5066 = vld [vmem:[%s14] sm:$0xf]
        %v5067 = vld [vmem:[%s14 + $0x4] sm:$0xf]
        %v5068 = vld [vmem:[%s14 + $0x8] sm:$0xf]
        %v5069 = vld [vmem:[%s14 + $0xc] sm:$0xf]
        %v5070 = vld [vmem:[%s14 + $0x10] sm:$0xf]
        %v5071 = vld [vmem:[%s14 + $0x14] sm:$0xf]
        %v5072 = vld [vmem:[%s14 + $0x18] sm:$0xf]
        %v5073 = vld [vmem:[%s14 + $0x1c] sm:$0xf]
        %v5074 = vld [vmem:[%s15] sm:$0x1]
        %5076 = vset.pattern.permute.xlu0 0
        %5077 = vperm.xlu0 %5076, %v783
        %v5078 = vpop.permute.xlu0 %5077
        %5081 = vset.pattern.permute.xlu0 0
        %5082 = vperm.xlu0 %5081, %v784
        %v5083 = vpop.permute.xlu0 %5082
        %5086 = vset.pattern.permute.xlu0 0
        %5087 = vperm.xlu0 %5086, %v785
        %v5088 = vpop.permute.xlu0 %5087
        %5091 = vset.pattern.permute.xlu0 0
        %5092 = vperm.xlu0 %5091, %v786
        %v5093 = vpop.permute.xlu0 %5092
        %5096 = vset.pattern.permute.xlu0 0
        %5097 = vperm.xlu0 %5096, %v787
        %v5098 = vpop.permute.xlu0 %5097
        %5101 = vset.pattern.permute.xlu0 0
        %5102 = vperm.xlu0 %5101, %v788
        %v5103 = vpop.permute.xlu0 %5102
        %5106 = vset.pattern.permute.xlu0 0
        %5107 = vperm.xlu0 %5106, %v789
        %v5108 = vpop.permute.xlu0 %5107
        %5111 = vset.pattern.permute.xlu0 0
        %5112 = vperm.xlu0 %5111, %v790
        %v5113 = vpop.permute.xlu0 %5112
        %5116 = vset.pattern.permute.xlu0 0
        %5117 = vperm.xlu0 %5116, %v791
        %v5118 = vpop.permute.xlu0 %5117
        %5121 = vset.pattern.permute.xlu0 0
        %5122 = vperm.xlu0 %5121, %v792
        %v5123 = vpop.permute.xlu0 %5122
        %5126 = vset.pattern.permute.xlu0 0
        %5127 = vperm.xlu0 %5126, %v793
        %v5128 = vpop.permute.xlu0 %5127
        %5131 = vset.pattern.permute.xlu0 0
        %5132 = vperm.xlu0 %5131, %v794
        %v5133 = vpop.permute.xlu0 %5132
        %5136 = vset.pattern.permute.xlu0 0
        %5137 = vperm.xlu0 %5136, %v795
        %v5138 = vpop.permute.xlu0 %5137
        %5141 = vset.pattern.permute.xlu0 0
        %5142 = vperm.xlu0 %5141, %v796
        %v5143 = vpop.permute.xlu0 %5142
        %v5145 = vlaneseq
        %v5146 = vshrl.u32 %v5145, 7
        %v5147 = vsub.s32 0, %v5146
        %v5148 = vrot.slane %v5074, %v5147
        %v5149 = vmul.f32 %v5078, %v5148
        %v5150 = vmul.f32 %v5083, %v5148
        %v5151 = vmul.f32 %v5088, %v5148
        %v5152 = vmul.f32 %v5093, %v5148
        %v5153 = vmul.f32 %v5098, %v5148
        %v5154 = vmul.f32 %v5103, %v5148
        %v5155 = vmul.f32 %v5108, %v5148
        %v5156 = vmul.f32 %v5113, %v5148
        %v5157 = vmul.f32 %v5118, %v5148
        %v5158 = vmul.f32 %v5123, %v5148
        %v5159 = vmul.f32 %v5128, %v5148
        %v5160 = vmul.f32 %v5133, %v5148
        %v5161 = vmul.f32 %v5138, %v5148
        %v5162 = vmul.f32 %v5143, %v5148
        %v5171 = vunpack.c.l.b16 %v5066
        %v5172 = vunpack.c.l.b16 %v5067
        %v5173 = vunpack.c.l.b16 %v5068
        %v5174 = vunpack.c.l.b16 %v5069
        %v5175 = vunpack.c.l.b16 %v5070
        %v5176 = vunpack.c.l.b16 %v5071
        %v5177 = vunpack.c.l.b16 %v5072
        %v5178 = vunpack.c.l.b16 %v5073
        %v5179 = vpack.c.b16 %v5172, %v5171
        %v5180 = vpack.c.b16 %v5174, %v5173
        %v5181 = vpack.c.b16 %v5176, %v5175
        %v5182 = vpack.c.b16 %v5178, %v5177
        %v5188 = vsel %vm3022, %v5059, 0
        %v5191 = vsel %vm3022, %v5060, 0
        %v5194 = vsel %vm3022, %v5061, 0
        %v5197 = vsel %vm3022, %v5062, 0
        %v5200 = vsel %vm3022, %v5063, 0
        %v5203 = vsel %vm3022, %v5064, 0
        %v5206 = vsel %vm3022, %v5065, 0
        %5208 = vmatprep.subr.bf16.mxu0 0
        %5209 = vmatpush1.bf16.msra.mxu0 0
        %5210 = vmatprep.subr.bf16.mxu0 0
        %5211 = vmatpush1.bf16.msra.mxu0 0
        %5212 = vmatprep.subr.bf16.mxu0 0
        %5213 = vmatpush1.bf16.msra.mxu0 0
        %5214 = vmatprep.subr.bf16.mxu0 0
        %5215 = vmatpush1.bf16.msra.mxu0 0
        %5216 = vmatprep.subr.bf16.mxu0 0
        %5217 = vmatpush1.bf16.msra.mxu0 %v5182
        %5218 = vmatprep.subr.bf16.mxu0 0
        %5219 = vmatpush1.bf16.msra.mxu0 %v5181
        %5220 = vmatprep.subr.bf16.mxu0 0
        %5221 = vmatpush1.bf16.msra.mxu0 %v5180
        %5222 = vmatprep.subr.bf16.mxu0 0
        %5223 = vmatpush1.bf16.msra.mxu0 %v5179
        %5224 = vmatprep.subr.bf16.mxu0 0
        %5225 = vmatpush2.bf16.msra.mxu0 0
        %5226 = vmatprep.subr.bf16.mxu0 0
        %5227 = vmatpush2.bf16.msra.mxu0 0
        %5228 = vmatprep.subr.bf16.mxu0 0
        %5229 = vmatpush2.bf16.msra.mxu0 0
        %5230 = vmatprep.subr.bf16.mxu0 0
        %5231 = vmatpush2.bf16.msra.mxu0 0
        %5232 = vmatprep.subr.bf16.mxu0 0
        %5233 = vmatpush2.bf16.msra.mxu0 0
        %5234 = vmatprep.subr.bf16.mxu0 0
        %5235 = vmatpush2.bf16.msra.mxu0 0
        %5236 = vmatprep.subr.bf16.mxu0 0
        %5237 = vmatpush2.bf16.msra.mxu0 0
        %5238 = vmatprep.subr.bf16.mxu0 0
        %5239 = vmatpush2.bf16.msra.mxu0 0
        %5240 = vmatprep.mubr.bf16.mxu0 0
        %5241 = vmatmul.mubr.bf16.gmra.mxu0 %v5188
        %v5242 = vpop.f32.mrf.mxu0
        %v5243 = vadd.f32 %v5149, %v5242
        %v5244 = vpop.f32.mrf.mxu0
        %v5245 = vpop.f32.mrf.mxu0
        %v5246 = vadd.f32 %v5150, %v5245
        %v5247 = vpop.f32.mrf.mxu0
        %5248 = vmatprep.mubr.bf16.mxu0 0
        %5249 = vmatmul.mubr.bf16.gmra.mxu0 %v5191
        %v5250 = vpop.f32.mrf.mxu0
        %v5251 = vadd.f32 %v5151, %v5250
        %v5252 = vpop.f32.mrf.mxu0
        %v5253 = vpop.f32.mrf.mxu0
        %v5254 = vadd.f32 %v5152, %v5253
        %v5255 = vpop.f32.mrf.mxu0
        %5256 = vmatprep.mubr.bf16.mxu0 0
        %5257 = vmatmul.mubr.bf16.gmra.mxu0 %v5194
        %v5258 = vpop.f32.mrf.mxu0
        %v5259 = vadd.f32 %v5153, %v5258
        %v5260 = vpop.f32.mrf.mxu0
        %v5261 = vpop.f32.mrf.mxu0
        %v5262 = vadd.f32 %v5154, %v5261
        %v5263 = vpop.f32.mrf.mxu0
        %5264 = vmatprep.mubr.bf16.mxu0 0
        %5265 = vmatmul.mubr.bf16.gmra.mxu0 %v5197
        %v5266 = vpop.f32.mrf.mxu0
        %v5267 = vadd.f32 %v5155, %v5266
        %v5268 = vpop.f32.mrf.mxu0
        %v5269 = vpop.f32.mrf.mxu0
        %v5270 = vadd.f32 %v5156, %v5269
        %v5271 = vpop.f32.mrf.mxu0
        %5272 = vmatprep.mubr.bf16.mxu0 0
        %5273 = vmatmul.mubr.bf16.gmra.mxu0 %v5200
        %v5274 = vpop.f32.mrf.mxu0
        %v5275 = vadd.f32 %v5157, %v5274
        %v5276 = vpop.f32.mrf.mxu0
        %v5277 = vpop.f32.mrf.mxu0
        %v5278 = vadd.f32 %v5158, %v5277
        %v5279 = vpop.f32.mrf.mxu0
        %5280 = vmatprep.mubr.bf16.mxu0 0
        %5281 = vmatmul.mubr.bf16.gmra.mxu0 %v5203
        %v5282 = vpop.f32.mrf.mxu0
        %v5283 = vadd.f32 %v5159, %v5282
        %v5284 = vpop.f32.mrf.mxu0
        %v5285 = vpop.f32.mrf.mxu0
        %v5286 = vadd.f32 %v5160, %v5285
        %v5287 = vpop.f32.mrf.mxu0
        %5288 = vmatprep.mubr.bf16.mxu0 0
        %5289 = vmatmul.mubr.bf16.gmra.mxu0 %v5206
        %v5290 = vpop.f32.mrf.mxu0
        %v5291 = vadd.f32 %v5161, %v5290
        %v5292 = vpop.f32.mrf.mxu0
        %v5293 = vpop.f32.mrf.mxu0
        %v5294 = vadd.f32 %v5162, %v5293
        %v5295 = vpop.f32.mrf.mxu0
        %5296 = vdwg.mxu0
        %v5297 = vld [vmem:[%s15 + $0x1] sm:$0x1]
        %5298 = vset.pattern.permute.xlu0 1
        %5299 = vperm.xlu0 %5298, %v783
        %v5300 = vpop.permute.xlu0 %5299
        %5302 = vset.pattern.permute.xlu0 1
        %5303 = vperm.xlu0 %5302, %v784
        %v5304 = vpop.permute.xlu0 %5303
        %5306 = vset.pattern.permute.xlu0 1
        %5307 = vperm.xlu0 %5306, %v785
        %v5308 = vpop.permute.xlu0 %5307
        %5310 = vset.pattern.permute.xlu0 1
        %5311 = vperm.xlu0 %5310, %v786
        %v5312 = vpop.permute.xlu0 %5311
        %5314 = vset.pattern.permute.xlu0 1
        %5315 = vperm.xlu0 %5314, %v787
        %v5316 = vpop.permute.xlu0 %5315
        %5318 = vset.pattern.permute.xlu0 1
        %5319 = vperm.xlu0 %5318, %v788
        %v5320 = vpop.permute.xlu0 %5319
        %5322 = vset.pattern.permute.xlu0 1
        %5323 = vperm.xlu0 %5322, %v789
        %v5324 = vpop.permute.xlu0 %5323
        %5326 = vset.pattern.permute.xlu0 1
        %5327 = vperm.xlu0 %5326, %v790
        %v5328 = vpop.permute.xlu0 %5327
        %5330 = vset.pattern.permute.xlu0 1
        %5331 = vperm.xlu0 %5330, %v791
        %v5332 = vpop.permute.xlu0 %5331
        %5334 = vset.pattern.permute.xlu0 1
        %5335 = vperm.xlu0 %5334, %v792
        %v5336 = vpop.permute.xlu0 %5335
        %5338 = vset.pattern.permute.xlu0 1
        %5339 = vperm.xlu0 %5338, %v793
        %v5340 = vpop.permute.xlu0 %5339
        %5342 = vset.pattern.permute.xlu0 1
        %5343 = vperm.xlu0 %5342, %v794
        %v5344 = vpop.permute.xlu0 %5343
        %5346 = vset.pattern.permute.xlu0 1
        %5347 = vperm.xlu0 %5346, %v795
        %v5348 = vpop.permute.xlu0 %5347
        %5350 = vset.pattern.permute.xlu0 1
        %5351 = vperm.xlu0 %5350, %v796
        %v5352 = vpop.permute.xlu0 %5351
        %v5354 = vlaneseq
        %v5355 = vshrl.u32 %v5354, 7
        %v5356 = vsub.s32 0, %v5355
        %v5357 = vrot.slane %v5297, %v5356
        %v5358 = vmul.f32 %v5300, %v5357
        %v5359 = vmul.f32 %v5304, %v5357
        %v5360 = vmul.f32 %v5308, %v5357
        %v5361 = vmul.f32 %v5312, %v5357
        %v5362 = vmul.f32 %v5316, %v5357
        %v5363 = vmul.f32 %v5320, %v5357
        %v5364 = vmul.f32 %v5324, %v5357
        %v5365 = vmul.f32 %v5328, %v5357
        %v5366 = vmul.f32 %v5332, %v5357
        %v5367 = vmul.f32 %v5336, %v5357
        %v5368 = vmul.f32 %v5340, %v5357
        %v5369 = vmul.f32 %v5344, %v5357
        %v5370 = vmul.f32 %v5348, %v5357
        %v5371 = vmul.f32 %v5352, %v5357
        %v5372 = vadd.f32 %v5243, %v5358
        %v5373 = vadd.f32 %v5246, %v5359
        %v5374 = vadd.f32 %v5251, %v5360
        %v5375 = vadd.f32 %v5254, %v5361
        %v5376 = vadd.f32 %v5259, %v5362
        %v5377 = vadd.f32 %v5262, %v5363
        %v5378 = vadd.f32 %v5267, %v5364
        %v5379 = vadd.f32 %v5270, %v5365
        %v5380 = vadd.f32 %v5275, %v5366
        %v5381 = vadd.f32 %v5278, %v5367
        %v5382 = vadd.f32 %v5283, %v5368
        %v5383 = vadd.f32 %v5286, %v5369
        %v5384 = vadd.f32 %v5291, %v5370
        %v5385 = vadd.f32 %v5294, %v5371
        %v5386 = vld [vmem:[%s16] sm:$0x7]
        %v5387 = vld [vmem:[%s17] sm:$0x3]
        %v5388 = vpack.c.bf16 %v5373, %v5372
        %v5389 = vpack.c.bf16 %v5375, %v5374
        %v5390 = vpack.c.bf16 %v5377, %v5376
        %v5391 = vpack.c.bf16 %v5379, %v5378
        %v5392 = vpack.c.bf16 %v5381, %v5380
        %v5393 = vpack.c.bf16 %v5383, %v5382
        %v5394 = vpack.c.bf16 %v5385, %v5384
        %5402 = vrot.lane.b32.xlu0 %v5388, 96
        %v5403 = vpop.permute.xlu0 %5402
        %5404 = vrot.lane.b32.xlu0 %v5389, 96
        %v5405 = vpop.permute.xlu0 %5404
        %5406 = vrot.lane.b32.xlu0 %v5390, 96
        %v5407 = vpop.permute.xlu0 %5406
        %5408 = vrot.lane.b32.xlu0 %v5391, 96
        %v5409 = vpop.permute.xlu0 %5408
        %5410 = vrot.lane.b32.xlu0 %v5392, 96
        %v5411 = vpop.permute.xlu0 %5410
        %5412 = vrot.lane.b32.xlu0 %v5393, 96
        %v5413 = vpop.permute.xlu0 %5412
        %5414 = vrot.lane.b32.xlu0 %v5394, 96
        %v5415 = vpop.permute.xlu0 %5414
        %vm5423 = vcmask 916480
        %v5425 = vsel %vm5423, %v1140, 0
        %v5428 = vsel %vm5423, %v1141, 0
        %v5431 = vsel %vm5423, %v1142, 0
        %v5434 = vsel %vm5423, %v1143, 0
        %v5437 = vsel %vm5423, %v1144, 0
        %v5440 = vsel %vm5423, %v1145, 0
        %v5443 = vsel %vm5423, %v1146, 0
        %v5446 = vsel %vm5423, %v1147, 0
        %v5449 = vsel %vm5423, %v1148, 0
        %v5452 = vsel %vm5423, %v1149, 0
        %v5455 = vsel %vm5423, %v1150, 0
        %v5458 = vsel %vm5423, %v1151, 0
        %v5461 = vsel %vm5423, %v1152, 0
        %5463 = vmatprep.subr.bf16.mxu0 0
        %5464 = vmatpush1.bf16.msra.mxu0 0
        %5465 = vmatprep.subr.bf16.mxu0 0
        %5466 = vmatpush1.bf16.msra.mxu0 %v5415
        %5467 = vmatprep.subr.bf16.mxu0 0
        %5468 = vmatpush1.bf16.msra.mxu0 %v5413
        %5469 = vmatprep.subr.bf16.mxu0 0
        %5470 = vmatpush1.bf16.msra.mxu0 %v5411
        %5471 = vmatprep.subr.bf16.mxu0 0
        %5472 = vmatpush1.bf16.msra.mxu0 %v5409
        %5473 = vmatprep.subr.bf16.mxu0 0
        %5474 = vmatpush1.bf16.msra.mxu0 %v5407
        %5475 = vmatprep.subr.bf16.mxu0 0
        %5476 = vmatpush1.bf16.msra.mxu0 %v5405
        %5477 = vmatprep.subr.bf16.mxu0 0
        %5478 = vmatpush1.bf16.msra.mxu0 %v5403
        %5479 = vmatprep.subr.bf16.mxu0 0
        %5480 = vmatpush2.bf16.msra.mxu0 0
        %5481 = vmatprep.subr.bf16.mxu0 0
        %5482 = vmatpush2.bf16.msra.mxu0 0
        %5483 = vmatprep.subr.bf16.mxu0 0
        %5484 = vmatpush2.bf16.msra.mxu0 0
        %5485 = vmatprep.subr.bf16.mxu0 0
        %5486 = vmatpush2.bf16.msra.mxu0 0
        %5487 = vmatprep.subr.bf16.mxu0 0
        %5488 = vmatpush2.bf16.msra.mxu0 0
        %5489 = vmatprep.subr.bf16.mxu0 0
        %5490 = vmatpush2.bf16.msra.mxu0 0
        %5491 = vmatprep.subr.bf16.mxu0 0
        %5492 = vmatpush2.bf16.msra.mxu0 0
        %5493 = vmatprep.subr.bf16.mxu0 0
        %5494 = vmatpush2.bf16.msra.mxu0 0
        %5495 = vmatprep.mubr.bf16.mxu0 0
        %5496 = vmatmul.mubr.bf16.gmra.mxu0 %v5425
        %v5497 = vpop.f32.mrf.mxu0
        %v5498 = vadd.f32 0.0, %v5497
        %v5499 = vpop.f32.mrf.mxu0
        %v5500 = vpop.f32.mrf.mxu0
        %v5501 = vadd.f32 0.0, %v5500
        %v5502 = vpop.f32.mrf.mxu0
        %5503 = vmatprep.mubr.bf16.mxu0 0
        %5504 = vmatmul.mubr.bf16.gmra.mxu0 %v5428
        %v5505 = vpop.f32.mrf.mxu0
        %v5506 = vadd.f32 0.0, %v5505
        %v5507 = vpop.f32.mrf.mxu0
        %v5508 = vpop.f32.mrf.mxu0
        %v5509 = vadd.f32 0.0, %v5508
        %v5510 = vpop.f32.mrf.mxu0
        %5511 = vmatprep.mubr.bf16.mxu0 0
        %5512 = vmatmul.mubr.bf16.gmra.mxu0 %v5431
        %v5513 = vpop.f32.mrf.mxu0
        %v5514 = vadd.f32 0.0, %v5513
        %v5515 = vpop.f32.mrf.mxu0
        %v5516 = vpop.f32.mrf.mxu0
        %v5517 = vadd.f32 0.0, %v5516
        %v5518 = vpop.f32.mrf.mxu0
        %5519 = vmatprep.mubr.bf16.mxu0 0
        %5520 = vmatmul.mubr.bf16.gmra.mxu0 %v5434
        %v5521 = vpop.f32.mrf.mxu0
        %v5522 = vadd.f32 0.0, %v5521
        %v5523 = vpop.f32.mrf.mxu0
        %v5524 = vpop.f32.mrf.mxu0
        %v5525 = vadd.f32 0.0, %v5524
        %v5526 = vpop.f32.mrf.mxu0
        %5527 = vmatprep.mubr.bf16.mxu0 0
        %5528 = vmatmul.mubr.bf16.gmra.mxu0 %v5437
        %v5529 = vpop.f32.mrf.mxu0
        %v5530 = vadd.f32 0.0, %v5529
        %v5531 = vpop.f32.mrf.mxu0
        %v5532 = vpop.f32.mrf.mxu0
        %v5533 = vadd.f32 0.0, %v5532
        %v5534 = vpop.f32.mrf.mxu0
        %5535 = vmatprep.mubr.bf16.mxu0 0
        %5536 = vmatmul.mubr.bf16.gmra.mxu0 %v5440
        %v5537 = vpop.f32.mrf.mxu0
        %v5538 = vadd.f32 0.0, %v5537
        %v5539 = vpop.f32.mrf.mxu0
        %v5540 = vpop.f32.mrf.mxu0
        %v5541 = vadd.f32 0.0, %v5540
        %v5542 = vpop.f32.mrf.mxu0
        %5543 = vmatprep.mubr.bf16.mxu0 0
        %5544 = vmatmul.mubr.bf16.gmra.mxu0 %v5443
        %v5545 = vpop.f32.mrf.mxu0
        %v5546 = vadd.f32 0.0, %v5545
        %v5547 = vpop.f32.mrf.mxu0
        %v5548 = vpop.f32.mrf.mxu0
        %v5549 = vadd.f32 0.0, %v5548
        %v5550 = vpop.f32.mrf.mxu0
        %5551 = vmatprep.mubr.bf16.mxu0 0
        %5552 = vmatmul.mubr.bf16.gmra.mxu0 %v5446
        %v5553 = vpop.f32.mrf.mxu0
        %v5554 = vadd.f32 0.0, %v5553
        %v5555 = vpop.f32.mrf.mxu0
        %v5556 = vpop.f32.mrf.mxu0
        %v5557 = vadd.f32 0.0, %v5556
        %v5558 = vpop.f32.mrf.mxu0
        %5559 = vmatprep.mubr.bf16.mxu0 0
        %5560 = vmatmul.mubr.bf16.gmra.mxu0 %v5449
        %v5561 = vpop.f32.mrf.mxu0
        %v5562 = vadd.f32 0.0, %v5561
        %v5563 = vpop.f32.mrf.mxu0
        %v5564 = vpop.f32.mrf.mxu0
        %v5565 = vadd.f32 0.0, %v5564
        %v5566 = vpop.f32.mrf.mxu0
        %5567 = vmatprep.mubr.bf16.mxu0 0
        %5568 = vmatmul.mubr.bf16.gmra.mxu0 %v5452
        %v5569 = vpop.f32.mrf.mxu0
        %v5570 = vadd.f32 0.0, %v5569
        %v5571 = vpop.f32.mrf.mxu0
        %v5572 = vpop.f32.mrf.mxu0
        %v5573 = vadd.f32 0.0, %v5572
        %v5574 = vpop.f32.mrf.mxu0
        %5575 = vmatprep.mubr.bf16.mxu0 0
        %5576 = vmatmul.mubr.bf16.gmra.mxu0 %v5455
        %v5577 = vpop.f32.mrf.mxu0
        %v5578 = vadd.f32 0.0, %v5577
        %v5579 = vpop.f32.mrf.mxu0
        %v5580 = vpop.f32.mrf.mxu0
        %v5581 = vadd.f32 0.0, %v5580
        %v5582 = vpop.f32.mrf.mxu0
        %5583 = vmatprep.mubr.bf16.mxu0 0
        %5584 = vmatmul.mubr.bf16.gmra.mxu0 %v5458
        %v5585 = vpop.f32.mrf.mxu0
        %v5586 = vadd.f32 0.0, %v5585
        %v5587 = vpop.f32.mrf.mxu0
        %v5588 = vpop.f32.mrf.mxu0
        %v5589 = vadd.f32 0.0, %v5588
        %v5590 = vpop.f32.mrf.mxu0
        %5591 = vmatprep.mubr.bf16.mxu0 0
        %5592 = vmatmul.mubr.bf16.gmra.mxu0 %v5461
        %v5593 = vpop.f32.mrf.mxu0
        %v5594 = vadd.f32 0.0, %v5593
        %v5595 = vpop.f32.mrf.mxu0
        %v5596 = vpop.f32.mrf.mxu0
        %v5597 = vadd.f32 0.0, %v5596
        %v5598 = vpop.f32.mrf.mxu0
        %5599 = vdwg.mxu0
        %v5601 = vsel %vm5423, %v1283, 0
        %v5604 = vsel %vm5423, %v1284, 0
        %v5607 = vsel %vm5423, %v1285, 0
        %v5610 = vsel %vm5423, %v1286, 0
        %v5613 = vsel %vm5423, %v1287, 0
        %v5616 = vsel %vm5423, %v1288, 0
        %v5619 = vsel %vm5423, %v1289, 0
        %v5622 = vsel %vm5423, %v1290, 0
        %v5625 = vsel %vm5423, %v1291, 0
        %v5628 = vsel %vm5423, %v1292, 0
        %v5631 = vsel %vm5423, %v1293, 0
        %v5634 = vsel %vm5423, %v1294, 0
        %v5637 = vsel %vm5423, %v1295, 0
        %5639 = vmatprep.subr.bf16.mxu0 0
        %5640 = vmatpush1.bf16.msra.mxu0 0
        %5641 = vmatprep.subr.bf16.mxu0 0
        %5642 = vmatpush1.bf16.msra.mxu0 %v5394
        %5643 = vmatprep.subr.bf16.mxu0 0
        %5644 = vmatpush1.bf16.msra.mxu0 %v5393
        %5645 = vmatprep.subr.bf16.mxu0 0
        %5646 = vmatpush1.bf16.msra.mxu0 %v5392
        %5647 = vmatprep.subr.bf16.mxu0 0
        %5648 = vmatpush1.bf16.msra.mxu0 %v5391
        %5649 = vmatprep.subr.bf16.mxu0 0
        %5650 = vmatpush1.bf16.msra.mxu0 %v5390
        %5651 = vmatprep.subr.bf16.mxu0 0
        %5652 = vmatpush1.bf16.msra.mxu0 %v5389
        %5653 = vmatprep.subr.bf16.mxu0 0
        %5654 = vmatpush1.bf16.msra.mxu0 %v5388
        %5655 = vmatprep.subr.bf16.mxu0 0
        %5656 = vmatpush2.bf16.msra.mxu0 0
        %5657 = vmatprep.subr.bf16.mxu0 0
        %5658 = vmatpush2.bf16.msra.mxu0 0
        %5659 = vmatprep.subr.bf16.mxu0 0
        %5660 = vmatpush2.bf16.msra.mxu0 0
        %5661 = vmatprep.subr.bf16.mxu0 0
        %5662 = vmatpush2.bf16.msra.mxu0 0
        %5663 = vmatprep.subr.bf16.mxu0 0
        %5664 = vmatpush2.bf16.msra.mxu0 0
        %5665 = vmatprep.subr.bf16.mxu0 0
        %5666 = vmatpush2.bf16.msra.mxu0 0
        %5667 = vmatprep.subr.bf16.mxu0 0
        %5668 = vmatpush2.bf16.msra.mxu0 0
        %5669 = vmatprep.subr.bf16.mxu0 0
        %5670 = vmatpush2.bf16.msra.mxu0 0
        %5671 = vmatprep.mubr.bf16.mxu0 0
        %5672 = vmatmul.mubr.bf16.gmra.mxu0 %v5601
        %v5673 = vpop.f32.mrf.mxu0
        %v5674 = vadd.f32 %v5498, %v5673
        %v5675 = vpop.f32.mrf.mxu0
        %v5676 = vpop.f32.mrf.mxu0
        %v5677 = vadd.f32 %v5501, %v5676
        %v5678 = vpop.f32.mrf.mxu0
        %5679 = vmatprep.mubr.bf16.mxu0 0
        %5680 = vmatmul.mubr.bf16.gmra.mxu0 %v5604
        %v5681 = vpop.f32.mrf.mxu0
        %v5682 = vadd.f32 %v5506, %v5681
        %v5683 = vpop.f32.mrf.mxu0
        %v5684 = vpop.f32.mrf.mxu0
        %v5685 = vadd.f32 %v5509, %v5684
        %v5686 = vpop.f32.mrf.mxu0
        %5687 = vmatprep.mubr.bf16.mxu0 0
        %5688 = vmatmul.mubr.bf16.gmra.mxu0 %v5607
        %v5689 = vpop.f32.mrf.mxu0
        %v5690 = vadd.f32 %v5514, %v5689
        %v5691 = vpop.f32.mrf.mxu0
        %v5692 = vpop.f32.mrf.mxu0
        %v5693 = vadd.f32 %v5517, %v5692
        %v5694 = vpop.f32.mrf.mxu0
        %5695 = vmatprep.mubr.bf16.mxu0 0
        %5696 = vmatmul.mubr.bf16.gmra.mxu0 %v5610
        %v5697 = vpop.f32.mrf.mxu0
        %v5698 = vadd.f32 %v5522, %v5697
        %v5699 = vpop.f32.mrf.mxu0
        %v5700 = vpop.f32.mrf.mxu0
        %v5701 = vadd.f32 %v5525, %v5700
        %v5702 = vpop.f32.mrf.mxu0
        %5703 = vmatprep.mubr.bf16.mxu0 0
        %5704 = vmatmul.mubr.bf16.gmra.mxu0 %v5613
        %v5705 = vpop.f32.mrf.mxu0
        %v5706 = vadd.f32 %v5530, %v5705
        %v5707 = vpop.f32.mrf.mxu0
        %v5708 = vpop.f32.mrf.mxu0
        %v5709 = vadd.f32 %v5533, %v5708
        %v5710 = vpop.f32.mrf.mxu0
        %5711 = vmatprep.mubr.bf16.mxu0 0
        %5712 = vmatmul.mubr.bf16.gmra.mxu0 %v5616
        %v5713 = vpop.f32.mrf.mxu0
        %v5714 = vadd.f32 %v5538, %v5713
        %v5715 = vpop.f32.mrf.mxu0
        %v5716 = vpop.f32.mrf.mxu0
        %v5717 = vadd.f32 %v5541, %v5716
        %v5718 = vpop.f32.mrf.mxu0
        %5719 = vmatprep.mubr.bf16.mxu0 0
        %5720 = vmatmul.mubr.bf16.gmra.mxu0 %v5619
        %v5721 = vpop.f32.mrf.mxu0
        %v5722 = vadd.f32 %v5546, %v5721
        %v5723 = vpop.f32.mrf.mxu0
        %v5724 = vpop.f32.mrf.mxu0
        %v5725 = vadd.f32 %v5549, %v5724
        %v5726 = vpop.f32.mrf.mxu0
        %5727 = vmatprep.mubr.bf16.mxu0 0
        %5728 = vmatmul.mubr.bf16.gmra.mxu0 %v5622
        %v5729 = vpop.f32.mrf.mxu0
        %v5730 = vadd.f32 %v5554, %v5729
        %v5731 = vpop.f32.mrf.mxu0
        %v5732 = vpop.f32.mrf.mxu0
        %v5733 = vadd.f32 %v5557, %v5732
        %v5734 = vpop.f32.mrf.mxu0
        %5735 = vmatprep.mubr.bf16.mxu0 0
        %5736 = vmatmul.mubr.bf16.gmra.mxu0 %v5625
        %v5737 = vpop.f32.mrf.mxu0
        %v5738 = vadd.f32 %v5562, %v5737
        %v5739 = vpop.f32.mrf.mxu0
        %v5740 = vpop.f32.mrf.mxu0
        %v5741 = vadd.f32 %v5565, %v5740
        %v5742 = vpop.f32.mrf.mxu0
        %5743 = vmatprep.mubr.bf16.mxu0 0
        %5744 = vmatmul.mubr.bf16.gmra.mxu0 %v5628
        %v5745 = vpop.f32.mrf.mxu0
        %v5746 = vadd.f32 %v5570, %v5745
        %v5747 = vpop.f32.mrf.mxu0
        %v5748 = vpop.f32.mrf.mxu0
        %v5749 = vadd.f32 %v5573, %v5748
        %v5750 = vpop.f32.mrf.mxu0
        %5751 = vmatprep.mubr.bf16.mxu0 0
        %5752 = vmatmul.mubr.bf16.gmra.mxu0 %v5631
        %v5753 = vpop.f32.mrf.mxu0
        %v5754 = vadd.f32 %v5578, %v5753
        %v5755 = vpop.f32.mrf.mxu0
        %v5756 = vpop.f32.mrf.mxu0
        %v5757 = vadd.f32 %v5581, %v5756
        %v5758 = vpop.f32.mrf.mxu0
        %5759 = vmatprep.mubr.bf16.mxu0 0
        %5760 = vmatmul.mubr.bf16.gmra.mxu0 %v5634
        %v5761 = vpop.f32.mrf.mxu0
        %v5762 = vadd.f32 %v5586, %v5761
        %v5763 = vpop.f32.mrf.mxu0
        %v5764 = vpop.f32.mrf.mxu0
        %v5765 = vadd.f32 %v5589, %v5764
        %v5766 = vpop.f32.mrf.mxu0
        %5767 = vmatprep.mubr.bf16.mxu0 0
        %5768 = vmatmul.mubr.bf16.gmra.mxu0 %v5637
        %v5769 = vpop.f32.mrf.mxu0
        %v5770 = vadd.f32 %v5594, %v5769
        %v5771 = vpop.f32.mrf.mxu0
        %v5772 = vpop.f32.mrf.mxu0
        %v5773 = vadd.f32 %v5597, %v5772
        %v5774 = vpop.f32.mrf.mxu0
        %5775 = vdwg.mxu0
        %v5776 = vpack.c.bf16 %v808, %v807
        %v5777 = vpack.c.bf16 %v810, %v809
        %v5778 = vpack.c.bf16 %v812, %v811
        %v5779 = vpack.c.bf16 %v814, %v813
        %v5780 = vpack.c.bf16 %v816, %v815
        %v5781 = vpack.c.bf16 %v818, %v817
        %v5782 = vpack.c.bf16 %v820, %v819
        %v5783 = vpack.c.bf16 %v822, %v821
        %v5784 = vpack.c.bf16 %v824, %v823
        %v5785 = vpack.c.bf16 %v826, %v825
        %v5786 = vpack.c.bf16 %v828, %v827
        %v5787 = vpack.c.bf16 %v830, %v829
        %v5788 = vpack.c.bf16 %v832, %v831
        %v5790 = vsel %vm1386, %v5776, 0
        %v5793 = vsel %vm1386, %v5777, 0
        %v5796 = vsel %vm1386, %v5778, 0
        %v5799 = vsel %vm1386, %v5779, 0
        %v5802 = vsel %vm1386, %v5780, 0
        %v5805 = vsel %vm1386, %v5781, 0
        %v5808 = vsel %vm1386, %v5782, 0
        %v5811 = vsel %vm1386, %v5783, 0
        %v5814 = vsel %vm1386, %v5784, 0
        %v5817 = vsel %vm1386, %v5785, 0
        %v5820 = vsel %vm1386, %v5786, 0
        %v5823 = vsel %vm1386, %v5787, 0
        %v5826 = vsel %vm1386, %v5788, 0
        %v5829 = vsel %vm1396, %v5386, 0
        %5831 = vmatprep.subr.bf16.mxu0 0
        %5832 = vmatpush1.bf16.msra.mxu0 0
        %5833 = vmatprep.subr.bf16.mxu0 0
        %5834 = vmatpush1.bf16.msra.mxu0 0
        %5835 = vmatprep.subr.bf16.mxu0 0
        %5836 = vmatpush1.bf16.msra.mxu0 0
        %5837 = vmatprep.subr.bf16.mxu0 0
        %5838 = vmatpush1.bf16.msra.mxu0 0
        %5839 = vmatprep.subr.bf16.mxu0 0
        %5840 = vmatpush1.bf16.msra.mxu0 0
        %5841 = vmatprep.subr.bf16.mxu0 0
        %5842 = vmatpush1.bf16.msra.mxu0 0
        %5843 = vmatprep.subr.bf16.mxu0 0
        %5844 = vmatpush1.bf16.msra.mxu0 0
        %5845 = vmatprep.subr.bf16.mxu0 0
        %5846 = vmatpush1.bf16.msra.mxu0 %v5829
        %5847 = vmatprep.subr.bf16.mxu0 0
        %5848 = vmatpush2.bf16.msra.mxu0 0
        %5849 = vmatprep.subr.bf16.mxu0 0
        %5850 = vmatpush2.bf16.msra.mxu0 0
        %5851 = vmatprep.subr.bf16.mxu0 0
        %5852 = vmatpush2.bf16.msra.mxu0 0
        %5853 = vmatprep.subr.bf16.mxu0 0
        %5854 = vmatpush2.bf16.msra.mxu0 0
        %5855 = vmatprep.subr.bf16.mxu0 0
        %5856 = vmatpush2.bf16.msra.mxu0 0
        %5857 = vmatprep.subr.bf16.mxu0 0
        %5858 = vmatpush2.bf16.msra.mxu0 0
        %5859 = vmatprep.subr.bf16.mxu0 0
        %5860 = vmatpush2.bf16.msra.mxu0 0
        %5861 = vmatprep.subr.bf16.mxu0 0
        %5862 = vmatpush2.bf16.msra.mxu0 0
        %5863 = vmatprep.mubr.bf16.mxu0 0
        %5864 = vmatmul.mubr.bf16.gmra.mxu0 %v5790
        %v5865 = vpop.f32.mrf.mxu0
        %v5866 = vadd.f32 0.0, %v5865
        %v5867 = vpop.f32.mrf.mxu0
        %v5868 = vpop.f32.mrf.mxu0
        %v5869 = vadd.f32 0.0, %v5868
        %v5870 = vpop.f32.mrf.mxu0
        %5871 = vmatprep.mubr.bf16.mxu0 0
        %5872 = vmatmul.mubr.bf16.gmra.mxu0 %v5793
        %v5873 = vpop.f32.mrf.mxu0
        %v5874 = vadd.f32 0.0, %v5873
        %v5875 = vpop.f32.mrf.mxu0
        %v5876 = vpop.f32.mrf.mxu0
        %v5877 = vadd.f32 0.0, %v5876
        %v5878 = vpop.f32.mrf.mxu0
        %5879 = vmatprep.mubr.bf16.mxu0 0
        %5880 = vmatmul.mubr.bf16.gmra.mxu0 %v5796
        %v5881 = vpop.f32.mrf.mxu0
        %v5882 = vadd.f32 0.0, %v5881
        %v5883 = vpop.f32.mrf.mxu0
        %v5884 = vpop.f32.mrf.mxu0
        %v5885 = vadd.f32 0.0, %v5884
        %v5886 = vpop.f32.mrf.mxu0
        %5887 = vmatprep.mubr.bf16.mxu0 0
        %5888 = vmatmul.mubr.bf16.gmra.mxu0 %v5799
        %v5889 = vpop.f32.mrf.mxu0
        %v5890 = vadd.f32 0.0, %v5889
        %v5891 = vpop.f32.mrf.mxu0
        %v5892 = vpop.f32.mrf.mxu0
        %v5893 = vadd.f32 0.0, %v5892
        %v5894 = vpop.f32.mrf.mxu0
        %5895 = vmatprep.mubr.bf16.mxu0 0
        %5896 = vmatmul.mubr.bf16.gmra.mxu0 %v5802
        %v5897 = vpop.f32.mrf.mxu0
        %v5898 = vadd.f32 0.0, %v5897
        %v5899 = vpop.f32.mrf.mxu0
        %v5900 = vpop.f32.mrf.mxu0
        %v5901 = vadd.f32 0.0, %v5900
        %v5902 = vpop.f32.mrf.mxu0
        %5903 = vmatprep.mubr.bf16.mxu0 0
        %5904 = vmatmul.mubr.bf16.gmra.mxu0 %v5805
        %v5905 = vpop.f32.mrf.mxu0
        %v5906 = vadd.f32 0.0, %v5905
        %v5907 = vpop.f32.mrf.mxu0
        %v5908 = vpop.f32.mrf.mxu0
        %v5909 = vadd.f32 0.0, %v5908
        %v5910 = vpop.f32.mrf.mxu0
        %5911 = vmatprep.mubr.bf16.mxu0 0
        %5912 = vmatmul.mubr.bf16.gmra.mxu0 %v5808
        %v5913 = vpop.f32.mrf.mxu0
        %v5914 = vadd.f32 0.0, %v5913
        %v5915 = vpop.f32.mrf.mxu0
        %v5916 = vpop.f32.mrf.mxu0
        %v5917 = vadd.f32 0.0, %v5916
        %v5918 = vpop.f32.mrf.mxu0
        %5919 = vmatprep.mubr.bf16.mxu0 0
        %5920 = vmatmul.mubr.bf16.gmra.mxu0 %v5811
        %v5921 = vpop.f32.mrf.mxu0
        %v5922 = vadd.f32 0.0, %v5921
        %v5923 = vpop.f32.mrf.mxu0
        %v5924 = vpop.f32.mrf.mxu0
        %v5925 = vadd.f32 0.0, %v5924
        %v5926 = vpop.f32.mrf.mxu0
        %5927 = vmatprep.mubr.bf16.mxu0 0
        %5928 = vmatmul.mubr.bf16.gmra.mxu0 %v5814
        %v5929 = vpop.f32.mrf.mxu0
        %v5930 = vadd.f32 0.0, %v5929
        %v5931 = vpop.f32.mrf.mxu0
        %v5932 = vpop.f32.mrf.mxu0
        %v5933 = vadd.f32 0.0, %v5932
        %v5934 = vpop.f32.mrf.mxu0
        %5935 = vmatprep.mubr.bf16.mxu0 0
        %5936 = vmatmul.mubr.bf16.gmra.mxu0 %v5817
        %v5937 = vpop.f32.mrf.mxu0
        %v5938 = vadd.f32 0.0, %v5937
        %v5939 = vpop.f32.mrf.mxu0
        %v5940 = vpop.f32.mrf.mxu0
        %v5941 = vadd.f32 0.0, %v5940
        %v5942 = vpop.f32.mrf.mxu0
        %5943 = vmatprep.mubr.bf16.mxu0 0
        %5944 = vmatmul.mubr.bf16.gmra.mxu0 %v5820
        %v5945 = vpop.f32.mrf.mxu0
        %v5946 = vadd.f32 0.0, %v5945
        %v5947 = vpop.f32.mrf.mxu0
        %v5948 = vpop.f32.mrf.mxu0
        %v5949 = vadd.f32 0.0, %v5948
        %v5950 = vpop.f32.mrf.mxu0
        %5951 = vmatprep.mubr.bf16.mxu0 0
        %5952 = vmatmul.mubr.bf16.gmra.mxu0 %v5823
        %v5953 = vpop.f32.mrf.mxu0
        %v5954 = vadd.f32 0.0, %v5953
        %v5955 = vpop.f32.mrf.mxu0
        %v5956 = vpop.f32.mrf.mxu0
        %v5957 = vadd.f32 0.0, %v5956
        %v5958 = vpop.f32.mrf.mxu0
        %5959 = vmatprep.mubr.bf16.mxu0 0
        %5960 = vmatmul.mubr.bf16.gmra.mxu0 %v5826
        %v5961 = vpop.f32.mrf.mxu0
        %v5962 = vadd.f32 0.0, %v5961
        %v5963 = vpop.f32.mrf.mxu0
        %v5964 = vpop.f32.mrf.mxu0
        %v5965 = vadd.f32 0.0, %v5964
        %v5966 = vpop.f32.mrf.mxu0
        %5967 = vdwg.mxu0
        %v5968 = vadd.f32 %v5674, %v5866
        %v5969 = vadd.f32 %v5677, %v5869
        %v5970 = vadd.f32 %v5682, %v5874
        %v5971 = vadd.f32 %v5685, %v5877
        %v5972 = vadd.f32 %v5690, %v5882
        %v5973 = vadd.f32 %v5693, %v5885
        %v5974 = vadd.f32 %v5698, %v5890
        %v5975 = vadd.f32 %v5701, %v5893
        %v5976 = vadd.f32 %v5706, %v5898
        %v5977 = vadd.f32 %v5709, %v5901
        %v5978 = vadd.f32 %v5714, %v5906
        %v5979 = vadd.f32 %v5717, %v5909
        %v5980 = vadd.f32 %v5722, %v5914
        %v5981 = vadd.f32 %v5725, %v5917
        %v5982 = vadd.f32 %v5730, %v5922
        %v5983 = vadd.f32 %v5733, %v5925
        %v5984 = vadd.f32 %v5738, %v5930
        %v5985 = vadd.f32 %v5741, %v5933
        %v5986 = vadd.f32 %v5746, %v5938
        %v5987 = vadd.f32 %v5749, %v5941
        %v5988 = vadd.f32 %v5754, %v5946
        %v5989 = vadd.f32 %v5757, %v5949
        %v5990 = vadd.f32 %v5762, %v5954
        %v5991 = vadd.f32 %v5765, %v5957
        %v5992 = vadd.f32 %v5770, %v5962
        %v5993 = vadd.f32 %v5773, %v5965
        %v5994 = vlaneseq
        %v5995 = vshrl.u32 %v5994, 7
        %v5996 = vsub.s32 0, %v5995
        %v5997 = vrot.slane %v5387, %v5996
        %v5998 = vadd.f32 %v5968, %v5997
        %v5999 = vadd.f32 %v5969, %v5997
        %v6000 = vadd.f32 %v5970, %v5997
        %v6001 = vadd.f32 %v5971, %v5997
        %v6002 = vadd.f32 %v5972, %v5997
        %v6003 = vadd.f32 %v5973, %v5997
        %v6004 = vadd.f32 %v5974, %v5997
        %v6005 = vadd.f32 %v5975, %v5997
        %v6006 = vadd.f32 %v5976, %v5997
        %v6007 = vadd.f32 %v5977, %v5997
        %v6008 = vadd.f32 %v5978, %v5997
        %v6009 = vadd.f32 %v5979, %v5997
        %v6010 = vadd.f32 %v5980, %v5997
        %v6011 = vadd.f32 %v5981, %v5997
        %v6012 = vadd.f32 %v5982, %v5997
        %v6013 = vadd.f32 %v5983, %v5997
        %v6014 = vadd.f32 %v5984, %v5997
        %v6015 = vadd.f32 %v5985, %v5997
        %v6016 = vadd.f32 %v5986, %v5997
        %v6017 = vadd.f32 %v5987, %v5997
        %v6018 = vadd.f32 %v5988, %v5997
        %v6019 = vadd.f32 %v5989, %v5997
        %v6020 = vadd.f32 %v5990, %v5997
        %v6021 = vadd.f32 %v5991, %v5997
        %v6022 = vadd.f32 %v5992, %v5997
        %v6023 = vadd.f32 %v5993, %v5997
        %vm6024 = vcmp.ge.f32.partialorder %v5998, 0.0
        %vm6025 = vcmp.ge.f32.partialorder %v5999, 0.0
        %vm6026 = vcmp.ge.f32.partialorder %v6000, 0.0
        %vm6027 = vcmp.ge.f32.partialorder %v6001, 0.0
        %vm6028 = vcmp.ge.f32.partialorder %v6002, 0.0
        %vm6029 = vcmp.ge.f32.partialorder %v6003, 0.0
        %vm6030 = vcmp.ge.f32.partialorder %v6004, 0.0
        %vm6031 = vcmp.ge.f32.partialorder %v6005, 0.0
        %vm6032 = vcmp.ge.f32.partialorder %v6006, 0.0
        %vm6033 = vcmp.ge.f32.partialorder %v6007, 0.0
        %vm6034 = vcmp.ge.f32.partialorder %v6008, 0.0
        %vm6035 = vcmp.ge.f32.partialorder %v6009, 0.0
        %vm6036 = vcmp.ge.f32.partialorder %v6010, 0.0
        %vm6037 = vcmp.ge.f32.partialorder %v6011, 0.0
        %vm6038 = vcmp.ge.f32.partialorder %v6012, 0.0
        %vm6039 = vcmp.ge.f32.partialorder %v6013, 0.0
        %vm6040 = vcmp.ge.f32.partialorder %v6014, 0.0
        %vm6041 = vcmp.ge.f32.partialorder %v6015, 0.0
        %vm6042 = vcmp.ge.f32.partialorder %v6016, 0.0
        %vm6043 = vcmp.ge.f32.partialorder %v6017, 0.0
        %vm6044 = vcmp.ge.f32.partialorder %v6018, 0.0
        %vm6045 = vcmp.ge.f32.partialorder %v6019, 0.0
        %vm6046 = vcmp.ge.f32.partialorder %v6020, 0.0
        %vm6047 = vcmp.ge.f32.partialorder %v6021, 0.0
        %vm6048 = vcmp.ge.f32.partialorder %v6022, 0.0
        %vm6049 = vcmp.ge.f32.partialorder %v6023, 0.0
        %v6050 = vmul.f32 %v5998, 0.01
        %v6051 = vmul.f32 %v5999, 0.01
        %v6052 = vmul.f32 %v6000, 0.01
        %v6053 = vmul.f32 %v6001, 0.01
        %v6054 = vmul.f32 %v6002, 0.01
        %v6055 = vmul.f32 %v6003, 0.01
        %v6056 = vmul.f32 %v6004, 0.01
        %v6057 = vmul.f32 %v6005, 0.01
        %v6058 = vmul.f32 %v6006, 0.01
        %v6059 = vmul.f32 %v6007, 0.01
        %v6060 = vmul.f32 %v6008, 0.01
        %v6061 = vmul.f32 %v6009, 0.01
        %v6062 = vmul.f32 %v6010, 0.01
        %v6063 = vmul.f32 %v6011, 0.01
        %v6064 = vmul.f32 %v6012, 0.01
        %v6065 = vmul.f32 %v6013, 0.01
        %v6066 = vmul.f32 %v6014, 0.01
        %v6067 = vmul.f32 %v6015, 0.01
        %v6068 = vmul.f32 %v6016, 0.01
        %v6069 = vmul.f32 %v6017, 0.01
        %v6070 = vmul.f32 %v6018, 0.01
        %v6071 = vmul.f32 %v6019, 0.01
        %v6072 = vmul.f32 %v6020, 0.01
        %v6073 = vmul.f32 %v6021, 0.01
        %v6074 = vmul.f32 %v6022, 0.01
        %v6075 = vmul.f32 %v6023, 0.01
        %v6076 = vsel %vm6024, %v5998, %v6050
        %v6077 = vsel %vm6025, %v5999, %v6051
        %v6078 = vsel %vm6026, %v6000, %v6052
        %v6079 = vsel %vm6027, %v6001, %v6053
        %v6080 = vsel %vm6028, %v6002, %v6054
        %v6081 = vsel %vm6029, %v6003, %v6055
        %v6082 = vsel %vm6030, %v6004, %v6056
        %v6083 = vsel %vm6031, %v6005, %v6057
        %v6084 = vsel %vm6032, %v6006, %v6058
        %v6085 = vsel %vm6033, %v6007, %v6059
        %v6086 = vsel %vm6034, %v6008, %v6060
        %v6087 = vsel %vm6035, %v6009, %v6061
        %v6088 = vsel %vm6036, %v6010, %v6062
        %v6089 = vsel %vm6037, %v6011, %v6063
        %v6090 = vsel %vm6038, %v6012, %v6064
        %v6091 = vsel %vm6039, %v6013, %v6065
        %v6092 = vsel %vm6040, %v6014, %v6066
        %v6093 = vsel %vm6041, %v6015, %v6067
        %v6094 = vsel %vm6042, %v6016, %v6068
        %v6095 = vsel %vm6043, %v6017, %v6069
        %v6096 = vsel %vm6044, %v6018, %v6070
        %v6097 = vsel %vm6045, %v6019, %v6071
        %v6098 = vsel %vm6046, %v6020, %v6072
        %v6099 = vsel %vm6047, %v6021, %v6073
        %v6100 = vsel %vm6048, %v6022, %v6074
        %v6101 = vsel %vm6049, %v6023, %v6075
        %v6102 = vpack.c.bf16 %v6077, %v6076
        %v6103 = vpack.c.bf16 %v6079, %v6078
        %v6104 = vpack.c.bf16 %v6081, %v6080
        %v6105 = vpack.c.bf16 %v6083, %v6082
        %v6106 = vpack.c.bf16 %v6085, %v6084
        %v6107 = vpack.c.bf16 %v6087, %v6086
        %v6108 = vpack.c.bf16 %v6089, %v6088
        %v6109 = vpack.c.bf16 %v6091, %v6090
        %v6110 = vpack.c.bf16 %v6093, %v6092
        %v6111 = vpack.c.bf16 %v6095, %v6094
        %v6112 = vpack.c.bf16 %v6097, %v6096
        %v6113 = vpack.c.bf16 %v6099, %v6098
        %v6114 = vpack.c.bf16 %v6101, %v6100
        %6129 = vrot.lane.b32.xlu0 %v5372, 64
        %v6130 = vpop.permute.xlu0 %6129
        %6131 = vrot.lane.b32.xlu0 %v5373, 64
        %v6132 = vpop.permute.xlu0 %6131
        %6133 = vrot.lane.b32.xlu0 %v5374, 64
        %v6134 = vpop.permute.xlu0 %6133
        %6135 = vrot.lane.b32.xlu0 %v5375, 64
        %v6136 = vpop.permute.xlu0 %6135
        %6137 = vrot.lane.b32.xlu0 %v5376, 64
        %v6138 = vpop.permute.xlu0 %6137
        %6139 = vrot.lane.b32.xlu0 %v5377, 64
        %v6140 = vpop.permute.xlu0 %6139
        %6141 = vrot.lane.b32.xlu0 %v5378, 64
        %v6142 = vpop.permute.xlu0 %6141
        %6143 = vrot.lane.b32.xlu0 %v5379, 64
        %v6144 = vpop.permute.xlu0 %6143
        %6145 = vrot.lane.b32.xlu0 %v5380, 64
        %v6146 = vpop.permute.xlu0 %6145
        %6147 = vrot.lane.b32.xlu0 %v5381, 64
        %v6148 = vpop.permute.xlu0 %6147
        %6149 = vrot.lane.b32.xlu0 %v5382, 64
        %v6150 = vpop.permute.xlu0 %6149
        %6151 = vrot.lane.b32.xlu0 %v5383, 64
        %v6152 = vpop.permute.xlu0 %6151
        %6153 = vrot.lane.b32.xlu0 %v5384, 64
        %v6154 = vpop.permute.xlu0 %6153
        %6155 = vrot.lane.b32.xlu0 %v5385, 64
        %v6156 = vpop.permute.xlu0 %6155
        %v6172 = vsel %vm1835, %v1369, 0
        %v6175 = vsel %vm1835, %v1371, 0
        %v6178 = vsel %vm1835, %v1373, 0
        %v6181 = vsel %vm1835, %v1375, 0
        %v6184 = vsel %vm1835, %v1377, 0
        %v6187 = vsel %vm1835, %v1379, 0
        %v6190 = vsel %vm1835, %v1381, 0
        %6192 = vmatprep.subr.bf16.mxu0 0
        %6193 = vmatpush1.bf16.msra.mxu0 %v6109
        %6194 = vmatprep.subr.bf16.mxu0 0
        %6195 = vmatpush1.bf16.msra.mxu0 %v6108
        %6196 = vmatprep.subr.bf16.mxu0 0
        %6197 = vmatpush1.bf16.msra.mxu0 %v6107
        %6198 = vmatprep.subr.bf16.mxu0 0
        %6199 = vmatpush1.bf16.msra.mxu0 %v6106
        %6200 = vmatprep.subr.bf16.mxu0 0
        %6201 = vmatpush1.bf16.msra.mxu0 %v6105
        %6202 = vmatprep.subr.bf16.mxu0 0
        %6203 = vmatpush1.bf16.msra.mxu0 %v6104
        %6204 = vmatprep.subr.bf16.mxu0 0
        %6205 = vmatpush1.bf16.msra.mxu0 %v6103
        %6206 = vmatprep.subr.bf16.mxu0 0
        %6207 = vmatpush1.bf16.msra.mxu0 %v6102
        %6208 = vmatprep.subr.bf16.mxu0 0
        %6209 = vmatpush2.bf16.msra.mxu0 0
        %6210 = vmatprep.subr.bf16.mxu0 0
        %6211 = vmatpush2.bf16.msra.mxu0 0
        %6212 = vmatprep.subr.bf16.mxu0 0
        %6213 = vmatpush2.bf16.msra.mxu0 0
        %6214 = vmatprep.subr.bf16.mxu0 0
        %6215 = vmatpush2.bf16.msra.mxu0 %v6114
        %6216 = vmatprep.subr.bf16.mxu0 0
        %6217 = vmatpush2.bf16.msra.mxu0 %v6113
        %6218 = vmatprep.subr.bf16.mxu0 0
        %6219 = vmatpush2.bf16.msra.mxu0 %v6112
        %6220 = vmatprep.subr.bf16.mxu0 0
        %6221 = vmatpush2.bf16.msra.mxu0 %v6111
        %6222 = vmatprep.subr.bf16.mxu0 0
        %6223 = vmatpush2.bf16.msra.mxu0 %v6110
        %6224 = vmatprep.mubr.bf16.mxu0 %v6172
        %6225 = vmatmul.mubr.bf16.gmra.mxu0 %v1368
        %v6226 = vpop.f32.mrf.mxu0
        %v6227 = vadd.f32 %v6130, %v6226
        %v6228 = vpop.f32.mrf.mxu0
        %v6229 = vpop.f32.mrf.mxu0
        %v6230 = vadd.f32 %v6132, %v6229
        %v6231 = vpop.f32.mrf.mxu0
        %6232 = vmatprep.mubr.bf16.mxu0 %v6175
        %6233 = vmatmul.mubr.bf16.gmra.mxu0 %v1370
        %v6234 = vpop.f32.mrf.mxu0
        %v6235 = vadd.f32 %v6134, %v6234
        %v6236 = vpop.f32.mrf.mxu0
        %v6237 = vpop.f32.mrf.mxu0
        %v6238 = vadd.f32 %v6136, %v6237
        %v6239 = vpop.f32.mrf.mxu0
        %6240 = vmatprep.mubr.bf16.mxu0 %v6178
        %6241 = vmatmul.mubr.bf16.gmra.mxu0 %v1372
        %v6242 = vpop.f32.mrf.mxu0
        %v6243 = vadd.f32 %v6138, %v6242
        %v6244 = vpop.f32.mrf.mxu0
        %v6245 = vpop.f32.mrf.mxu0
        %v6246 = vadd.f32 %v6140, %v6245
        %v6247 = vpop.f32.mrf.mxu0
        %6248 = vmatprep.mubr.bf16.mxu0 %v6181
        %6249 = vmatmul.mubr.bf16.gmra.mxu0 %v1374
        %v6250 = vpop.f32.mrf.mxu0
        %v6251 = vadd.f32 %v6142, %v6250
        %v6252 = vpop.f32.mrf.mxu0
        %v6253 = vpop.f32.mrf.mxu0
        %v6254 = vadd.f32 %v6144, %v6253
        %v6255 = vpop.f32.mrf.mxu0
        %6256 = vmatprep.mubr.bf16.mxu0 %v6184
        %6257 = vmatmul.mubr.bf16.gmra.mxu0 %v1376
        %v6258 = vpop.f32.mrf.mxu0
        %v6259 = vadd.f32 %v6146, %v6258
        %v6260 = vpop.f32.mrf.mxu0
        %v6261 = vpop.f32.mrf.mxu0
        %v6262 = vadd.f32 %v6148, %v6261
        %v6263 = vpop.f32.mrf.mxu0
        %6264 = vmatprep.mubr.bf16.mxu0 %v6187
        %6265 = vmatmul.mubr.bf16.gmra.mxu0 %v1378
        %v6266 = vpop.f32.mrf.mxu0
        %v6267 = vadd.f32 %v6150, %v6266
        %v6268 = vpop.f32.mrf.mxu0
        %v6269 = vpop.f32.mrf.mxu0
        %v6270 = vadd.f32 %v6152, %v6269
        %v6271 = vpop.f32.mrf.mxu0
        %6272 = vmatprep.mubr.bf16.mxu0 %v6190
        %6273 = vmatmul.mubr.bf16.gmra.mxu0 %v1380
        %v6274 = vpop.f32.mrf.mxu0
        %v6275 = vadd.f32 %v6154, %v6274
        %v6276 = vpop.f32.mrf.mxu0
        %v6277 = vpop.f32.mrf.mxu0
        %v6278 = vadd.f32 %v6156, %v6277
        %v6279 = vpop.f32.mrf.mxu0
        %6280 = vdwg.mxu0
        %v6281 = vlaneseq
        %v6282 = vshrl.u32 %v6281, 7
        %v6283 = vsub.s32 1, %v6282
        %v6284 = vrot.slane %v5387, %v6283
        %v6285 = vadd.f32 %v6227, %v6284
        %v6286 = vadd.f32 %v6230, %v6284
        %v6287 = vadd.f32 %v6235, %v6284
        %v6288 = vadd.f32 %v6238, %v6284
        %v6289 = vadd.f32 %v6243, %v6284
        %v6290 = vadd.f32 %v6246, %v6284
        %v6291 = vadd.f32 %v6251, %v6284
        %v6292 = vadd.f32 %v6254, %v6284
        %v6293 = vadd.f32 %v6259, %v6284
        %v6294 = vadd.f32 %v6262, %v6284
        %v6295 = vadd.f32 %v6267, %v6284
        %v6296 = vadd.f32 %v6270, %v6284
        %v6297 = vadd.f32 %v6275, %v6284
        %v6298 = vadd.f32 %v6278, %v6284
        %v6299 = vpack.c.bf16 %v6286, %v6285
        %v6300 = vpack.c.bf16 %v6288, %v6287
        %v6301 = vpack.c.bf16 %v6290, %v6289
        %v6302 = vpack.c.bf16 %v6292, %v6291
        %v6303 = vpack.c.bf16 %v6294, %v6293
        %v6304 = vpack.c.bf16 %v6296, %v6295
        %v6305 = vpack.c.bf16 %v6298, %v6297
        %v6306 = vld [vmem:[%s18] sm:$0xf]
        %v6307 = vld [vmem:[%s18 + $0x4] sm:$0xf]
        %v6308 = vld [vmem:[%s18 + $0x8] sm:$0xf]
        %v6309 = vld [vmem:[%s18 + $0xc] sm:$0xf]
        %v6314 = vunpack.c.l.b16 %v6306
        %v6315 = vunpack.c.l.b16 %v6307
        %v6316 = vunpack.c.l.b16 %v6308
        %v6317 = vunpack.c.l.b16 %v6309
        %v6318 = vpack.c.b16 %v6315, %v6314
        %v6319 = vpack.c.b16 %v6317, %v6316
        %v6323 = vsel %vm2406, %v6299, 0
        %v6326 = vsel %vm2406, %v6300, 0
        %v6329 = vsel %vm2406, %v6301, 0
        %v6332 = vsel %vm2406, %v6302, 0
        %v6335 = vsel %vm2406, %v6303, 0
        %v6338 = vsel %vm2406, %v6304, 0
        %v6341 = vsel %vm2406, %v6305, 0
        %6343 = vmatprep.subr.bf16.mxu0 0
        %6344 = vmatpush1.bf16.msra.mxu0 0
        %6345 = vmatprep.subr.bf16.mxu0 0
        %6346 = vmatpush1.bf16.msra.mxu0 0
        %6347 = vmatprep.subr.bf16.mxu0 0
        %6348 = vmatpush1.bf16.msra.mxu0 0
        %6349 = vmatprep.subr.bf16.mxu0 0
        %6350 = vmatpush1.bf16.msra.mxu0 0
        %6351 = vmatprep.subr.bf16.mxu0 0
        %6352 = vmatpush1.bf16.msra.mxu0 0
        %6353 = vmatprep.subr.bf16.mxu0 0
        %6354 = vmatpush1.bf16.msra.mxu0 0
        %6355 = vmatprep.subr.bf16.mxu0 0
        %6356 = vmatpush1.bf16.msra.mxu0 %v6319
        %6357 = vmatprep.subr.bf16.mxu0 0
        %6358 = vmatpush1.bf16.msra.mxu0 %v6318
        %6359 = vmatprep.subr.bf16.mxu0 0
        %6360 = vmatpush2.bf16.msra.mxu0 0
        %6361 = vmatprep.subr.bf16.mxu0 0
        %6362 = vmatpush2.bf16.msra.mxu0 0
        %6363 = vmatprep.subr.bf16.mxu0 0
        %6364 = vmatpush2.bf16.msra.mxu0 0
        %6365 = vmatprep.subr.bf16.mxu0 0
        %6366 = vmatpush2.bf16.msra.mxu0 0
        %6367 = vmatprep.subr.bf16.mxu0 0
        %6368 = vmatpush2.bf16.msra.mxu0 0
        %6369 = vmatprep.subr.bf16.mxu0 0
        %6370 = vmatpush2.bf16.msra.mxu0 0
        %6371 = vmatprep.subr.bf16.mxu0 0
        %6372 = vmatpush2.bf16.msra.mxu0 0
        %6373 = vmatprep.subr.bf16.mxu0 0
        %6374 = vmatpush2.bf16.msra.mxu0 0
        %6375 = vmatprep.mubr.bf16.mxu0 0
        %6376 = vmatmul.mubr.bf16.gmra.mxu0 %v6323
        %v6377 = vpop.f32.mrf.mxu0
        %v6378 = vadd.f32 0.0, %v6377
        %v6379 = vpop.f32.mrf.mxu0
        %v6380 = vpop.f32.mrf.mxu0
        %v6381 = vadd.f32 0.0, %v6380
        %v6382 = vpop.f32.mrf.mxu0
        %6383 = vmatprep.mubr.bf16.mxu0 0
        %6384 = vmatmul.mubr.bf16.gmra.mxu0 %v6326
        %v6385 = vpop.f32.mrf.mxu0
        %v6386 = vadd.f32 0.0, %v6385
        %v6387 = vpop.f32.mrf.mxu0
        %v6388 = vpop.f32.mrf.mxu0
        %v6389 = vadd.f32 0.0, %v6388
        %v6390 = vpop.f32.mrf.mxu0
        %6391 = vmatprep.mubr.bf16.mxu0 0
        %6392 = vmatmul.mubr.bf16.gmra.mxu0 %v6329
        %v6393 = vpop.f32.mrf.mxu0
        %v6394 = vadd.f32 0.0, %v6393
        %v6395 = vpop.f32.mrf.mxu0
        %v6396 = vpop.f32.mrf.mxu0
        %v6397 = vadd.f32 0.0, %v6396
        %v6398 = vpop.f32.mrf.mxu0
        %6399 = vmatprep.mubr.bf16.mxu0 0
        %6400 = vmatmul.mubr.bf16.gmra.mxu0 %v6332
        %v6401 = vpop.f32.mrf.mxu0
        %v6402 = vadd.f32 0.0, %v6401
        %v6403 = vpop.f32.mrf.mxu0
        %v6404 = vpop.f32.mrf.mxu0
        %v6405 = vadd.f32 0.0, %v6404
        %v6406 = vpop.f32.mrf.mxu0
        %6407 = vmatprep.mubr.bf16.mxu0 0
        %6408 = vmatmul.mubr.bf16.gmra.mxu0 %v6335
        %v6409 = vpop.f32.mrf.mxu0
        %v6410 = vadd.f32 0.0, %v6409
        %v6411 = vpop.f32.mrf.mxu0
        %v6412 = vpop.f32.mrf.mxu0
        %v6413 = vadd.f32 0.0, %v6412
        %v6414 = vpop.f32.mrf.mxu0
        %6415 = vmatprep.mubr.bf16.mxu0 0
        %6416 = vmatmul.mubr.bf16.gmra.mxu0 %v6338
        %v6417 = vpop.f32.mrf.mxu0
        %v6418 = vadd.f32 0.0, %v6417
        %v6419 = vpop.f32.mrf.mxu0
        %v6420 = vpop.f32.mrf.mxu0
        %v6421 = vadd.f32 0.0, %v6420
        %v6422 = vpop.f32.mrf.mxu0
        %6423 = vmatprep.mubr.bf16.mxu0 0
        %6424 = vmatmul.mubr.bf16.gmra.mxu0 %v6341
        %v6425 = vpop.f32.mrf.mxu0
        %v6426 = vadd.f32 0.0, %v6425
        %v6427 = vpop.f32.mrf.mxu0
        %v6428 = vpop.f32.mrf.mxu0
        %v6429 = vadd.f32 0.0, %v6428
        %v6430 = vpop.f32.mrf.mxu0
        %6431 = vdwg.mxu0
        %v6432 = vld [vmem:[%s19] sm:$0x7]
        %v6433 = vld [vmem:[%s20] sm:$0x3]
        %v6434 = vpack.c.bf16 %v6381, %v6378
        %v6435 = vpack.c.bf16 %v6389, %v6386
        %v6436 = vpack.c.bf16 %v6397, %v6394
        %v6437 = vpack.c.bf16 %v6405, %v6402
        %v6438 = vpack.c.bf16 %v6413, %v6410
        %v6439 = vpack.c.bf16 %v6421, %v6418
        %v6440 = vpack.c.bf16 %v6429, %v6426
        %6448 = vrot.lane.b32.xlu0 %v6434, 112
        %v6449 = vpop.permute.xlu0 %6448
        %6450 = vrot.lane.b32.xlu0 %v6435, 112
        %v6451 = vpop.permute.xlu0 %6450
        %6452 = vrot.lane.b32.xlu0 %v6436, 112
        %v6453 = vpop.permute.xlu0 %6452
        %6454 = vrot.lane.b32.xlu0 %v6437, 112
        %v6455 = vpop.permute.xlu0 %6454
        %6456 = vrot.lane.b32.xlu0 %v6438, 112
        %v6457 = vpop.permute.xlu0 %6456
        %6458 = vrot.lane.b32.xlu0 %v6439, 112
        %v6459 = vpop.permute.xlu0 %6458
        %6460 = vrot.lane.b32.xlu0 %v6440, 112
        %v6461 = vpop.permute.xlu0 %6460
        %6469 = vmatprep.subr.bf16.mxu0 0
        %6470 = vmatpush1.bf16.msra.mxu0 0
        %6471 = vmatprep.subr.bf16.mxu0 0
        %6472 = vmatpush1.bf16.msra.mxu0 %v6461
        %6473 = vmatprep.subr.bf16.mxu0 0
        %6474 = vmatpush1.bf16.msra.mxu0 %v6459
        %6475 = vmatprep.subr.bf16.mxu0 0
        %6476 = vmatpush1.bf16.msra.mxu0 %v6457
        %6477 = vmatprep.subr.bf16.mxu0 0
        %6478 = vmatpush1.bf16.msra.mxu0 %v6455
        %6479 = vmatprep.subr.bf16.mxu0 0
        %6480 = vmatpush1.bf16.msra.mxu0 %v6453
        %6481 = vmatprep.subr.bf16.mxu0 0
        %6482 = vmatpush1.bf16.msra.mxu0 %v6451
        %6483 = vmatprep.subr.bf16.mxu0 0
        %6484 = vmatpush1.bf16.msra.mxu0 %v6449
        %6485 = vmatprep.subr.bf16.mxu0 0
        %6486 = vmatpush2.bf16.msra.mxu0 0
        %6487 = vmatprep.subr.bf16.mxu0 0
        %6488 = vmatpush2.bf16.msra.mxu0 0
        %6489 = vmatprep.subr.bf16.mxu0 0
        %6490 = vmatpush2.bf16.msra.mxu0 0
        %6491 = vmatprep.subr.bf16.mxu0 0
        %6492 = vmatpush2.bf16.msra.mxu0 0
        %6493 = vmatprep.subr.bf16.mxu0 0
        %6494 = vmatpush2.bf16.msra.mxu0 0
        %6495 = vmatprep.subr.bf16.mxu0 0
        %6496 = vmatpush2.bf16.msra.mxu0 0
        %6497 = vmatprep.subr.bf16.mxu0 0
        %6498 = vmatpush2.bf16.msra.mxu0 0
        %6499 = vmatprep.subr.bf16.mxu0 0
        %6500 = vmatpush2.bf16.msra.mxu0 0
        %6501 = vmatprep.mubr.bf16.mxu0 0
        %6502 = vmatmul.mubr.bf16.gmra.mxu0 %v5425
        %v6503 = vpop.f32.mrf.mxu0
        %v6504 = vadd.f32 0.0, %v6503
        %v6505 = vpop.f32.mrf.mxu0
        %v6506 = vpop.f32.mrf.mxu0
        %v6507 = vadd.f32 0.0, %v6506
        %v6508 = vpop.f32.mrf.mxu0
        %6509 = vmatprep.mubr.bf16.mxu0 0
        %6510 = vmatmul.mubr.bf16.gmra.mxu0 %v5428
        %v6511 = vpop.f32.mrf.mxu0
        %v6512 = vadd.f32 0.0, %v6511
        %v6513 = vpop.f32.mrf.mxu0
        %v6514 = vpop.f32.mrf.mxu0
        %v6515 = vadd.f32 0.0, %v6514
        %v6516 = vpop.f32.mrf.mxu0
        %6517 = vmatprep.mubr.bf16.mxu0 0
        %6518 = vmatmul.mubr.bf16.gmra.mxu0 %v5431
        %v6519 = vpop.f32.mrf.mxu0
        %v6520 = vadd.f32 0.0, %v6519
        %v6521 = vpop.f32.mrf.mxu0
        %v6522 = vpop.f32.mrf.mxu0
        %v6523 = vadd.f32 0.0, %v6522
        %v6524 = vpop.f32.mrf.mxu0
        %6525 = vmatprep.mubr.bf16.mxu0 0
        %6526 = vmatmul.mubr.bf16.gmra.mxu0 %v5434
        %v6527 = vpop.f32.mrf.mxu0
        %v6528 = vadd.f32 0.0, %v6527
        %v6529 = vpop.f32.mrf.mxu0
        %v6530 = vpop.f32.mrf.mxu0
        %v6531 = vadd.f32 0.0, %v6530
        %v6532 = vpop.f32.mrf.mxu0
        %6533 = vmatprep.mubr.bf16.mxu0 0
        %6534 = vmatmul.mubr.bf16.gmra.mxu0 %v5437
        %v6535 = vpop.f32.mrf.mxu0
        %v6536 = vadd.f32 0.0, %v6535
        %v6537 = vpop.f32.mrf.mxu0
        %v6538 = vpop.f32.mrf.mxu0
        %v6539 = vadd.f32 0.0, %v6538
        %v6540 = vpop.f32.mrf.mxu0
        %6541 = vmatprep.mubr.bf16.mxu0 0
        %6542 = vmatmul.mubr.bf16.gmra.mxu0 %v5440
        %v6543 = vpop.f32.mrf.mxu0
        %v6544 = vadd.f32 0.0, %v6543
        %v6545 = vpop.f32.mrf.mxu0
        %v6546 = vpop.f32.mrf.mxu0
        %v6547 = vadd.f32 0.0, %v6546
        %v6548 = vpop.f32.mrf.mxu0
        %6549 = vmatprep.mubr.bf16.mxu0 0
        %6550 = vmatmul.mubr.bf16.gmra.mxu0 %v5443
        %v6551 = vpop.f32.mrf.mxu0
        %v6552 = vadd.f32 0.0, %v6551
        %v6553 = vpop.f32.mrf.mxu0
        %v6554 = vpop.f32.mrf.mxu0
        %v6555 = vadd.f32 0.0, %v6554
        %v6556 = vpop.f32.mrf.mxu0
        %6557 = vmatprep.mubr.bf16.mxu0 0
        %6558 = vmatmul.mubr.bf16.gmra.mxu0 %v5446
        %v6559 = vpop.f32.mrf.mxu0
        %v6560 = vadd.f32 0.0, %v6559
        %v6561 = vpop.f32.mrf.mxu0
        %v6562 = vpop.f32.mrf.mxu0
        %v6563 = vadd.f32 0.0, %v6562
        %v6564 = vpop.f32.mrf.mxu0
        %6565 = vmatprep.mubr.bf16.mxu0 0
        %6566 = vmatmul.mubr.bf16.gmra.mxu0 %v5449
        %v6567 = vpop.f32.mrf.mxu0
        %v6568 = vadd.f32 0.0, %v6567
        %v6569 = vpop.f32.mrf.mxu0
        %v6570 = vpop.f32.mrf.mxu0
        %v6571 = vadd.f32 0.0, %v6570
        %v6572 = vpop.f32.mrf.mxu0
        %6573 = vmatprep.mubr.bf16.mxu0 0
        %6574 = vmatmul.mubr.bf16.gmra.mxu0 %v5452
        %v6575 = vpop.f32.mrf.mxu0
        %v6576 = vadd.f32 0.0, %v6575
        %v6577 = vpop.f32.mrf.mxu0
        %v6578 = vpop.f32.mrf.mxu0
        %v6579 = vadd.f32 0.0, %v6578
        %v6580 = vpop.f32.mrf.mxu0
        %6581 = vmatprep.mubr.bf16.mxu0 0
        %6582 = vmatmul.mubr.bf16.gmra.mxu0 %v5455
        %v6583 = vpop.f32.mrf.mxu0
        %v6584 = vadd.f32 0.0, %v6583
        %v6585 = vpop.f32.mrf.mxu0
        %v6586 = vpop.f32.mrf.mxu0
        %v6587 = vadd.f32 0.0, %v6586
        %v6588 = vpop.f32.mrf.mxu0
        %6589 = vmatprep.mubr.bf16.mxu0 0
        %6590 = vmatmul.mubr.bf16.gmra.mxu0 %v5458
        %v6591 = vpop.f32.mrf.mxu0
        %v6592 = vadd.f32 0.0, %v6591
        %v6593 = vpop.f32.mrf.mxu0
        %v6594 = vpop.f32.mrf.mxu0
        %v6595 = vadd.f32 0.0, %v6594
        %v6596 = vpop.f32.mrf.mxu0
        %6597 = vmatprep.mubr.bf16.mxu0 0
        %6598 = vmatmul.mubr.bf16.gmra.mxu0 %v5461
        %v6599 = vpop.f32.mrf.mxu0
        %v6600 = vadd.f32 0.0, %v6599
        %v6601 = vpop.f32.mrf.mxu0
        %v6602 = vpop.f32.mrf.mxu0
        %v6603 = vadd.f32 0.0, %v6602
        %v6604 = vpop.f32.mrf.mxu0
        %6605 = vdwg.mxu0
        %6606 = vmatprep.subr.bf16.mxu0 0
        %6607 = vmatpush1.bf16.msra.mxu0 0
        %6608 = vmatprep.subr.bf16.mxu0 0
        %6609 = vmatpush1.bf16.msra.mxu0 %v6440
        %6610 = vmatprep.subr.bf16.mxu0 0
        %6611 = vmatpush1.bf16.msra.mxu0 %v6439
        %6612 = vmatprep.subr.bf16.mxu0 0
        %6613 = vmatpush1.bf16.msra.mxu0 %v6438
        %6614 = vmatprep.subr.bf16.mxu0 0
        %6615 = vmatpush1.bf16.msra.mxu0 %v6437
        %6616 = vmatprep.subr.bf16.mxu0 0
        %6617 = vmatpush1.bf16.msra.mxu0 %v6436
        %6618 = vmatprep.subr.bf16.mxu0 0
        %6619 = vmatpush1.bf16.msra.mxu0 %v6435
        %6620 = vmatprep.subr.bf16.mxu0 0
        %6621 = vmatpush1.bf16.msra.mxu0 %v6434
        %6622 = vmatprep.subr.bf16.mxu0 0
        %6623 = vmatpush2.bf16.msra.mxu0 0
        %6624 = vmatprep.subr.bf16.mxu0 0
        %6625 = vmatpush2.bf16.msra.mxu0 0
        %6626 = vmatprep.subr.bf16.mxu0 0
        %6627 = vmatpush2.bf16.msra.mxu0 0
        %6628 = vmatprep.subr.bf16.mxu0 0
        %6629 = vmatpush2.bf16.msra.mxu0 0
        %6630 = vmatprep.subr.bf16.mxu0 0
        %6631 = vmatpush2.bf16.msra.mxu0 0
        %6632 = vmatprep.subr.bf16.mxu0 0
        %6633 = vmatpush2.bf16.msra.mxu0 0
        %6634 = vmatprep.subr.bf16.mxu0 0
        %6635 = vmatpush2.bf16.msra.mxu0 0
        %6636 = vmatprep.subr.bf16.mxu0 0
        %6637 = vmatpush2.bf16.msra.mxu0 0
        %6638 = vmatprep.mubr.bf16.mxu0 0
        %6639 = vmatmul.mubr.bf16.gmra.mxu0 %v5601
        %v6640 = vpop.f32.mrf.mxu0
        %v6641 = vadd.f32 %v6504, %v6640
        %v6642 = vpop.f32.mrf.mxu0
        %v6643 = vpop.f32.mrf.mxu0
        %v6644 = vadd.f32 %v6507, %v6643
        %v6645 = vpop.f32.mrf.mxu0
        %6646 = vmatprep.mubr.bf16.mxu0 0
        %6647 = vmatmul.mubr.bf16.gmra.mxu0 %v5604
        %v6648 = vpop.f32.mrf.mxu0
        %v6649 = vadd.f32 %v6512, %v6648
        %v6650 = vpop.f32.mrf.mxu0
        %v6651 = vpop.f32.mrf.mxu0
        %v6652 = vadd.f32 %v6515, %v6651
        %v6653 = vpop.f32.mrf.mxu0
        %6654 = vmatprep.mubr.bf16.mxu0 0
        %6655 = vmatmul.mubr.bf16.gmra.mxu0 %v5607
        %v6656 = vpop.f32.mrf.mxu0
        %v6657 = vadd.f32 %v6520, %v6656
        %v6658 = vpop.f32.mrf.mxu0
        %v6659 = vpop.f32.mrf.mxu0
        %v6660 = vadd.f32 %v6523, %v6659
        %v6661 = vpop.f32.mrf.mxu0
        %6662 = vmatprep.mubr.bf16.mxu0 0
        %6663 = vmatmul.mubr.bf16.gmra.mxu0 %v5610
        %v6664 = vpop.f32.mrf.mxu0
        %v6665 = vadd.f32 %v6528, %v6664
        %v6666 = vpop.f32.mrf.mxu0
        %v6667 = vpop.f32.mrf.mxu0
        %v6668 = vadd.f32 %v6531, %v6667
        %v6669 = vpop.f32.mrf.mxu0
        %6670 = vmatprep.mubr.bf16.mxu0 0
        %6671 = vmatmul.mubr.bf16.gmra.mxu0 %v5613
        %v6672 = vpop.f32.mrf.mxu0
        %v6673 = vadd.f32 %v6536, %v6672
        %v6674 = vpop.f32.mrf.mxu0
        %v6675 = vpop.f32.mrf.mxu0
        %v6676 = vadd.f32 %v6539, %v6675
        %v6677 = vpop.f32.mrf.mxu0
        %6678 = vmatprep.mubr.bf16.mxu0 0
        %6679 = vmatmul.mubr.bf16.gmra.mxu0 %v5616
        %v6680 = vpop.f32.mrf.mxu0
        %v6681 = vadd.f32 %v6544, %v6680
        %v6682 = vpop.f32.mrf.mxu0
        %v6683 = vpop.f32.mrf.mxu0
        %v6684 = vadd.f32 %v6547, %v6683
        %v6685 = vpop.f32.mrf.mxu0
        %6686 = vmatprep.mubr.bf16.mxu0 0
        %6687 = vmatmul.mubr.bf16.gmra.mxu0 %v5619
        %v6688 = vpop.f32.mrf.mxu0
        %v6689 = vadd.f32 %v6552, %v6688
        %v6690 = vpop.f32.mrf.mxu0
        %v6691 = vpop.f32.mrf.mxu0
        %v6692 = vadd.f32 %v6555, %v6691
        %v6693 = vpop.f32.mrf.mxu0
        %6694 = vmatprep.mubr.bf16.mxu0 0
        %6695 = vmatmul.mubr.bf16.gmra.mxu0 %v5622
        %v6696 = vpop.f32.mrf.mxu0
        %v6697 = vadd.f32 %v6560, %v6696
        %v6698 = vpop.f32.mrf.mxu0
        %v6699 = vpop.f32.mrf.mxu0
        %v6700 = vadd.f32 %v6563, %v6699
        %v6701 = vpop.f32.mrf.mxu0
        %6702 = vmatprep.mubr.bf16.mxu0 0
        %6703 = vmatmul.mubr.bf16.gmra.mxu0 %v5625
        %v6704 = vpop.f32.mrf.mxu0
        %v6705 = vadd.f32 %v6568, %v6704
        %v6706 = vpop.f32.mrf.mxu0
        %v6707 = vpop.f32.mrf.mxu0
        %v6708 = vadd.f32 %v6571, %v6707
        %v6709 = vpop.f32.mrf.mxu0
        %6710 = vmatprep.mubr.bf16.mxu0 0
        %6711 = vmatmul.mubr.bf16.gmra.mxu0 %v5628
        %v6712 = vpop.f32.mrf.mxu0
        %v6713 = vadd.f32 %v6576, %v6712
        %v6714 = vpop.f32.mrf.mxu0
        %v6715 = vpop.f32.mrf.mxu0
        %v6716 = vadd.f32 %v6579, %v6715
        %v6717 = vpop.f32.mrf.mxu0
        %6718 = vmatprep.mubr.bf16.mxu0 0
        %6719 = vmatmul.mubr.bf16.gmra.mxu0 %v5631
        %v6720 = vpop.f32.mrf.mxu0
        %v6721 = vadd.f32 %v6584, %v6720
        %v6722 = vpop.f32.mrf.mxu0
        %v6723 = vpop.f32.mrf.mxu0
        %v6724 = vadd.f32 %v6587, %v6723
        %v6725 = vpop.f32.mrf.mxu0
        %6726 = vmatprep.mubr.bf16.mxu0 0
        %6727 = vmatmul.mubr.bf16.gmra.mxu0 %v5634
        %v6728 = vpop.f32.mrf.mxu0
        %v6729 = vadd.f32 %v6592, %v6728
        %v6730 = vpop.f32.mrf.mxu0
        %v6731 = vpop.f32.mrf.mxu0
        %v6732 = vadd.f32 %v6595, %v6731
        %v6733 = vpop.f32.mrf.mxu0
        %6734 = vmatprep.mubr.bf16.mxu0 0
        %6735 = vmatmul.mubr.bf16.gmra.mxu0 %v5637
        %v6736 = vpop.f32.mrf.mxu0
        %v6737 = vadd.f32 %v6600, %v6736
        %v6738 = vpop.f32.mrf.mxu0
        %v6739 = vpop.f32.mrf.mxu0
        %v6740 = vadd.f32 %v6603, %v6739
        %v6741 = vpop.f32.mrf.mxu0
        %6742 = vdwg.mxu0
        %v6744 = vsel %vm1396, %v6432, 0
        %6746 = vmatprep.subr.bf16.mxu0 0
        %6747 = vmatpush1.bf16.msra.mxu0 0
        %6748 = vmatprep.subr.bf16.mxu0 0
        %6749 = vmatpush1.bf16.msra.mxu0 0
        %6750 = vmatprep.subr.bf16.mxu0 0
        %6751 = vmatpush1.bf16.msra.mxu0 0
        %6752 = vmatprep.subr.bf16.mxu0 0
        %6753 = vmatpush1.bf16.msra.mxu0 0
        %6754 = vmatprep.subr.bf16.mxu0 0
        %6755 = vmatpush1.bf16.msra.mxu0 0
        %6756 = vmatprep.subr.bf16.mxu0 0
        %6757 = vmatpush1.bf16.msra.mxu0 0
        %6758 = vmatprep.subr.bf16.mxu0 0
        %6759 = vmatpush1.bf16.msra.mxu0 0
        %6760 = vmatprep.subr.bf16.mxu0 0
        %6761 = vmatpush1.bf16.msra.mxu0 %v6744
        %6762 = vmatprep.subr.bf16.mxu0 0
        %6763 = vmatpush2.bf16.msra.mxu0 0
        %6764 = vmatprep.subr.bf16.mxu0 0
        %6765 = vmatpush2.bf16.msra.mxu0 0
        %6766 = vmatprep.subr.bf16.mxu0 0
        %6767 = vmatpush2.bf16.msra.mxu0 0
        %6768 = vmatprep.subr.bf16.mxu0 0
        %6769 = vmatpush2.bf16.msra.mxu0 0
        %6770 = vmatprep.subr.bf16.mxu0 0
        %6771 = vmatpush2.bf16.msra.mxu0 0
        %6772 = vmatprep.subr.bf16.mxu0 0
        %6773 = vmatpush2.bf16.msra.mxu0 0
        %6774 = vmatprep.subr.bf16.mxu0 0
        %6775 = vmatpush2.bf16.msra.mxu0 0
        %6776 = vmatprep.subr.bf16.mxu0 0
        %6777 = vmatpush2.bf16.msra.mxu0 0
        %6778 = vmatprep.mubr.bf16.mxu0 0
        %6779 = vmatmul.mubr.bf16.gmra.mxu0 %v5790
        %v6780 = vpop.f32.mrf.mxu0
        %v6781 = vadd.f32 0.0, %v6780
        %v6782 = vpop.f32.mrf.mxu0
        %v6783 = vpop.f32.mrf.mxu0
        %v6784 = vadd.f32 0.0, %v6783
        %v6785 = vpop.f32.mrf.mxu0
        %6786 = vmatprep.mubr.bf16.mxu0 0
        %6787 = vmatmul.mubr.bf16.gmra.mxu0 %v5793
        %v6788 = vpop.f32.mrf.mxu0
        %v6789 = vadd.f32 0.0, %v6788
        %v6790 = vpop.f32.mrf.mxu0
        %v6791 = vpop.f32.mrf.mxu0
        %v6792 = vadd.f32 0.0, %v6791
        %v6793 = vpop.f32.mrf.mxu0
        %6794 = vmatprep.mubr.bf16.mxu0 0
        %6795 = vmatmul.mubr.bf16.gmra.mxu0 %v5796
        %v6796 = vpop.f32.mrf.mxu0
        %v6797 = vadd.f32 0.0, %v6796
        %v6798 = vpop.f32.mrf.mxu0
        %v6799 = vpop.f32.mrf.mxu0
        %v6800 = vadd.f32 0.0, %v6799
        %v6801 = vpop.f32.mrf.mxu0
        %6802 = vmatprep.mubr.bf16.mxu0 0
        %6803 = vmatmul.mubr.bf16.gmra.mxu0 %v5799
        %v6804 = vpop.f32.mrf.mxu0
        %v6805 = vadd.f32 0.0, %v6804
        %v6806 = vpop.f32.mrf.mxu0
        %v6807 = vpop.f32.mrf.mxu0
        %v6808 = vadd.f32 0.0, %v6807
        %v6809 = vpop.f32.mrf.mxu0
        %6810 = vmatprep.mubr.bf16.mxu0 0
        %6811 = vmatmul.mubr.bf16.gmra.mxu0 %v5802
        %v6812 = vpop.f32.mrf.mxu0
        %v6813 = vadd.f32 0.0, %v6812
        %v6814 = vpop.f32.mrf.mxu0
        %v6815 = vpop.f32.mrf.mxu0
        %v6816 = vadd.f32 0.0, %v6815
        %v6817 = vpop.f32.mrf.mxu0
        %6818 = vmatprep.mubr.bf16.mxu0 0
        %6819 = vmatmul.mubr.bf16.gmra.mxu0 %v5805
        %v6820 = vpop.f32.mrf.mxu0
        %v6821 = vadd.f32 0.0, %v6820
        %v6822 = vpop.f32.mrf.mxu0
        %v6823 = vpop.f32.mrf.mxu0
        %v6824 = vadd.f32 0.0, %v6823
        %v6825 = vpop.f32.mrf.mxu0
        %6826 = vmatprep.mubr.bf16.mxu0 0
        %6827 = vmatmul.mubr.bf16.gmra.mxu0 %v5808
        %v6828 = vpop.f32.mrf.mxu0
        %v6829 = vadd.f32 0.0, %v6828
        %v6830 = vpop.f32.mrf.mxu0
        %v6831 = vpop.f32.mrf.mxu0
        %v6832 = vadd.f32 0.0, %v6831
        %v6833 = vpop.f32.mrf.mxu0
        %6834 = vmatprep.mubr.bf16.mxu0 0
        %6835 = vmatmul.mubr.bf16.gmra.mxu0 %v5811
        %v6836 = vpop.f32.mrf.mxu0
        %v6837 = vadd.f32 0.0, %v6836
        %v6838 = vpop.f32.mrf.mxu0
        %v6839 = vpop.f32.mrf.mxu0
        %v6840 = vadd.f32 0.0, %v6839
        %v6841 = vpop.f32.mrf.mxu0
        %6842 = vmatprep.mubr.bf16.mxu0 0
        %6843 = vmatmul.mubr.bf16.gmra.mxu0 %v5814
        %v6844 = vpop.f32.mrf.mxu0
        %v6845 = vadd.f32 0.0, %v6844
        %v6846 = vpop.f32.mrf.mxu0
        %v6847 = vpop.f32.mrf.mxu0
        %v6848 = vadd.f32 0.0, %v6847
        %v6849 = vpop.f32.mrf.mxu0
        %6850 = vmatprep.mubr.bf16.mxu0 0
        %6851 = vmatmul.mubr.bf16.gmra.mxu0 %v5817
        %v6852 = vpop.f32.mrf.mxu0
        %v6853 = vadd.f32 0.0, %v6852
        %v6854 = vpop.f32.mrf.mxu0
        %v6855 = vpop.f32.mrf.mxu0
        %v6856 = vadd.f32 0.0, %v6855
        %v6857 = vpop.f32.mrf.mxu0
        %6858 = vmatprep.mubr.bf16.mxu0 0
        %6859 = vmatmul.mubr.bf16.gmra.mxu0 %v5820
        %v6860 = vpop.f32.mrf.mxu0
        %v6861 = vadd.f32 0.0, %v6860
        %v6862 = vpop.f32.mrf.mxu0
        %v6863 = vpop.f32.mrf.mxu0
        %v6864 = vadd.f32 0.0, %v6863
        %v6865 = vpop.f32.mrf.mxu0
        %6866 = vmatprep.mubr.bf16.mxu0 0
        %6867 = vmatmul.mubr.bf16.gmra.mxu0 %v5823
        %v6868 = vpop.f32.mrf.mxu0
        %v6869 = vadd.f32 0.0, %v6868
        %v6870 = vpop.f32.mrf.mxu0
        %v6871 = vpop.f32.mrf.mxu0
        %v6872 = vadd.f32 0.0, %v6871
        %v6873 = vpop.f32.mrf.mxu0
        %6874 = vmatprep.mubr.bf16.mxu0 0
        %6875 = vmatmul.mubr.bf16.gmra.mxu0 %v5826
        %v6876 = vpop.f32.mrf.mxu0
        %v6877 = vadd.f32 0.0, %v6876
        %v6878 = vpop.f32.mrf.mxu0
        %v6879 = vpop.f32.mrf.mxu0
        %v6880 = vadd.f32 0.0, %v6879
        %v6881 = vpop.f32.mrf.mxu0
        %6882 = vdwg.mxu0
        %v6883 = vadd.f32 %v6641, %v6781
        %v6884 = vadd.f32 %v6644, %v6784
        %v6885 = vadd.f32 %v6649, %v6789
        %v6886 = vadd.f32 %v6652, %v6792
        %v6887 = vadd.f32 %v6657, %v6797
        %v6888 = vadd.f32 %v6660, %v6800
        %v6889 = vadd.f32 %v6665, %v6805
        %v6890 = vadd.f32 %v6668, %v6808
        %v6891 = vadd.f32 %v6673, %v6813
        %v6892 = vadd.f32 %v6676, %v6816
        %v6893 = vadd.f32 %v6681, %v6821
        %v6894 = vadd.f32 %v6684, %v6824
        %v6895 = vadd.f32 %v6689, %v6829
        %v6896 = vadd.f32 %v6692, %v6832
        %v6897 = vadd.f32 %v6697, %v6837
        %v6898 = vadd.f32 %v6700, %v6840
        %v6899 = vadd.f32 %v6705, %v6845
        %v6900 = vadd.f32 %v6708, %v6848
        %v6901 = vadd.f32 %v6713, %v6853
        %v6902 = vadd.f32 %v6716, %v6856
        %v6903 = vadd.f32 %v6721, %v6861
        %v6904 = vadd.f32 %v6724, %v6864
        %v6905 = vadd.f32 %v6729, %v6869
        %v6906 = vadd.f32 %v6732, %v6872
        %v6907 = vadd.f32 %v6737, %v6877
        %v6908 = vadd.f32 %v6740, %v6880
        %v6909 = vlaneseq
        %v6910 = vshrl.u32 %v6909, 7
        %v6911 = vsub.s32 0, %v6910
        %v6912 = vrot.slane %v6433, %v6911
        %v6913 = vadd.f32 %v6883, %v6912
        %v6914 = vadd.f32 %v6884, %v6912
        %v6915 = vadd.f32 %v6885, %v6912
        %v6916 = vadd.f32 %v6886, %v6912
        %v6917 = vadd.f32 %v6887, %v6912
        %v6918 = vadd.f32 %v6888, %v6912
        %v6919 = vadd.f32 %v6889, %v6912
        %v6920 = vadd.f32 %v6890, %v6912
        %v6921 = vadd.f32 %v6891, %v6912
        %v6922 = vadd.f32 %v6892, %v6912
        %v6923 = vadd.f32 %v6893, %v6912
        %v6924 = vadd.f32 %v6894, %v6912
        %v6925 = vadd.f32 %v6895, %v6912
        %v6926 = vadd.f32 %v6896, %v6912
        %v6927 = vadd.f32 %v6897, %v6912
        %v6928 = vadd.f32 %v6898, %v6912
        %v6929 = vadd.f32 %v6899, %v6912
        %v6930 = vadd.f32 %v6900, %v6912
        %v6931 = vadd.f32 %v6901, %v6912
        %v6932 = vadd.f32 %v6902, %v6912
        %v6933 = vadd.f32 %v6903, %v6912
        %v6934 = vadd.f32 %v6904, %v6912
        %v6935 = vadd.f32 %v6905, %v6912
        %v6936 = vadd.f32 %v6906, %v6912
        %v6937 = vadd.f32 %v6907, %v6912
        %v6938 = vadd.f32 %v6908, %v6912
        %vm6939 = vcmp.ge.f32.partialorder %v6913, 0.0
        %vm6940 = vcmp.ge.f32.partialorder %v6914, 0.0
        %vm6941 = vcmp.ge.f32.partialorder %v6915, 0.0
        %vm6942 = vcmp.ge.f32.partialorder %v6916, 0.0
        %vm6943 = vcmp.ge.f32.partialorder %v6917, 0.0
        %vm6944 = vcmp.ge.f32.partialorder %v6918, 0.0
        %vm6945 = vcmp.ge.f32.partialorder %v6919, 0.0
        %vm6946 = vcmp.ge.f32.partialorder %v6920, 0.0
        %vm6947 = vcmp.ge.f32.partialorder %v6921, 0.0
        %vm6948 = vcmp.ge.f32.partialorder %v6922, 0.0
        %vm6949 = vcmp.ge.f32.partialorder %v6923, 0.0
        %vm6950 = vcmp.ge.f32.partialorder %v6924, 0.0
        %vm6951 = vcmp.ge.f32.partialorder %v6925, 0.0
        %vm6952 = vcmp.ge.f32.partialorder %v6926, 0.0
        %vm6953 = vcmp.ge.f32.partialorder %v6927, 0.0
        %vm6954 = vcmp.ge.f32.partialorder %v6928, 0.0
        %vm6955 = vcmp.ge.f32.partialorder %v6929, 0.0
        %vm6956 = vcmp.ge.f32.partialorder %v6930, 0.0
        %vm6957 = vcmp.ge.f32.partialorder %v6931, 0.0
        %vm6958 = vcmp.ge.f32.partialorder %v6932, 0.0
        %vm6959 = vcmp.ge.f32.partialorder %v6933, 0.0
        %vm6960 = vcmp.ge.f32.partialorder %v6934, 0.0
        %vm6961 = vcmp.ge.f32.partialorder %v6935, 0.0
        %vm6962 = vcmp.ge.f32.partialorder %v6936, 0.0
        %vm6963 = vcmp.ge.f32.partialorder %v6937, 0.0
        %vm6964 = vcmp.ge.f32.partialorder %v6938, 0.0
        %v6965 = vmul.f32 %v6913, 0.01
        %v6966 = vmul.f32 %v6914, 0.01
        %v6967 = vmul.f32 %v6915, 0.01
        %v6968 = vmul.f32 %v6916, 0.01
        %v6969 = vmul.f32 %v6917, 0.01
        %v6970 = vmul.f32 %v6918, 0.01
        %v6971 = vmul.f32 %v6919, 0.01
        %v6972 = vmul.f32 %v6920, 0.01
        %v6973 = vmul.f32 %v6921, 0.01
        %v6974 = vmul.f32 %v6922, 0.01
        %v6975 = vmul.f32 %v6923, 0.01
        %v6976 = vmul.f32 %v6924, 0.01
        %v6977 = vmul.f32 %v6925, 0.01
        %v6978 = vmul.f32 %v6926, 0.01
        %v6979 = vmul.f32 %v6927, 0.01
        %v6980 = vmul.f32 %v6928, 0.01
        %v6981 = vmul.f32 %v6929, 0.01
        %v6982 = vmul.f32 %v6930, 0.01
        %v6983 = vmul.f32 %v6931, 0.01
        %v6984 = vmul.f32 %v6932, 0.01
        %v6985 = vmul.f32 %v6933, 0.01
        %v6986 = vmul.f32 %v6934, 0.01
        %v6987 = vmul.f32 %v6935, 0.01
        %v6988 = vmul.f32 %v6936, 0.01
        %v6989 = vmul.f32 %v6937, 0.01
        %v6990 = vmul.f32 %v6938, 0.01
        %v6991 = vsel %vm6939, %v6913, %v6965
        %v6992 = vsel %vm6940, %v6914, %v6966
        %v6993 = vsel %vm6941, %v6915, %v6967
        %v6994 = vsel %vm6942, %v6916, %v6968
        %v6995 = vsel %vm6943, %v6917, %v6969
        %v6996 = vsel %vm6944, %v6918, %v6970
        %v6997 = vsel %vm6945, %v6919, %v6971
        %v6998 = vsel %vm6946, %v6920, %v6972
        %v6999 = vsel %vm6947, %v6921, %v6973
        %v7000 = vsel %vm6948, %v6922, %v6974
        %v7001 = vsel %vm6949, %v6923, %v6975
        %v7002 = vsel %vm6950, %v6924, %v6976
        %v7003 = vsel %vm6951, %v6925, %v6977
        %v7004 = vsel %vm6952, %v6926, %v6978
        %v7005 = vsel %vm6953, %v6927, %v6979
        %v7006 = vsel %vm6954, %v6928, %v6980
        %v7007 = vsel %vm6955, %v6929, %v6981
        %v7008 = vsel %vm6956, %v6930, %v6982
        %v7009 = vsel %vm6957, %v6931, %v6983
        %v7010 = vsel %vm6958, %v6932, %v6984
        %v7011 = vsel %vm6959, %v6933, %v6985
        %v7012 = vsel %vm6960, %v6934, %v6986
        %v7013 = vsel %vm6961, %v6935, %v6987
        %v7014 = vsel %vm6962, %v6936, %v6988
        %v7015 = vsel %vm6963, %v6937, %v6989
        %v7016 = vsel %vm6964, %v6938, %v6990
        %v7017 = vpack.c.bf16 %v6992, %v6991
        %v7018 = vpack.c.bf16 %v6994, %v6993
        %v7019 = vpack.c.bf16 %v6996, %v6995
        %v7020 = vpack.c.bf16 %v6998, %v6997
        %v7021 = vpack.c.bf16 %v7000, %v6999
        %v7022 = vpack.c.bf16 %v7002, %v7001
        %v7023 = vpack.c.bf16 %v7004, %v7003
        %v7024 = vpack.c.bf16 %v7006, %v7005
        %v7025 = vpack.c.bf16 %v7008, %v7007
        %v7026 = vpack.c.bf16 %v7010, %v7009
        %v7027 = vpack.c.bf16 %v7012, %v7011
        %v7028 = vpack.c.bf16 %v7014, %v7013
        %v7029 = vpack.c.bf16 %v7016, %v7015
        %7044 = vrot.lane.b32.xlu0 %v6378, 96
        %v7045 = vpop.permute.xlu0 %7044
        %7046 = vrot.lane.b32.xlu0 %v6381, 96
        %v7047 = vpop.permute.xlu0 %7046
        %7048 = vrot.lane.b32.xlu0 %v6386, 96
        %v7049 = vpop.permute.xlu0 %7048
        %7050 = vrot.lane.b32.xlu0 %v6389, 96
        %v7051 = vpop.permute.xlu0 %7050
        %7052 = vrot.lane.b32.xlu0 %v6394, 96
        %v7053 = vpop.permute.xlu0 %7052
        %7054 = vrot.lane.b32.xlu0 %v6397, 96
        %v7055 = vpop.permute.xlu0 %7054
        %7056 = vrot.lane.b32.xlu0 %v6402, 96
        %v7057 = vpop.permute.xlu0 %7056
        %7058 = vrot.lane.b32.xlu0 %v6405, 96
        %v7059 = vpop.permute.xlu0 %7058
        %7060 = vrot.lane.b32.xlu0 %v6410, 96
        %v7061 = vpop.permute.xlu0 %7060
        %7062 = vrot.lane.b32.xlu0 %v6413, 96
        %v7063 = vpop.permute.xlu0 %7062
        %7064 = vrot.lane.b32.xlu0 %v6418, 96
        %v7065 = vpop.permute.xlu0 %7064
        %7066 = vrot.lane.b32.xlu0 %v6421, 96
        %v7067 = vpop.permute.xlu0 %7066
        %7068 = vrot.lane.b32.xlu0 %v6426, 96
        %v7069 = vpop.permute.xlu0 %7068
        %7070 = vrot.lane.b32.xlu0 %v6429, 96
        %v7071 = vpop.permute.xlu0 %7070
        %7086 = vmatprep.subr.bf16.mxu0 0
        %7087 = vmatpush1.bf16.msra.mxu0 %v7024
        %7088 = vmatprep.subr.bf16.mxu0 0
        %7089 = vmatpush1.bf16.msra.mxu0 %v7023
        %7090 = vmatprep.subr.bf16.mxu0 0
        %7091 = vmatpush1.bf16.msra.mxu0 %v7022
        %7092 = vmatprep.subr.bf16.mxu0 0
        %7093 = vmatpush1.bf16.msra.mxu0 %v7021
        %7094 = vmatprep.subr.bf16.mxu0 0
        %7095 = vmatpush1.bf16.msra.mxu0 %v7020
        %7096 = vmatprep.subr.bf16.mxu0 0
        %7097 = vmatpush1.bf16.msra.mxu0 %v7019
        %7098 = vmatprep.subr.bf16.mxu0 0
        %7099 = vmatpush1.bf16.msra.mxu0 %v7018
        %7100 = vmatprep.subr.bf16.mxu0 0
        %7101 = vmatpush1.bf16.msra.mxu0 %v7017
        %7102 = vmatprep.subr.bf16.mxu0 0
        %7103 = vmatpush2.bf16.msra.mxu0 0
        %7104 = vmatprep.subr.bf16.mxu0 0
        %7105 = vmatpush2.bf16.msra.mxu0 0
        %7106 = vmatprep.subr.bf16.mxu0 0
        %7107 = vmatpush2.bf16.msra.mxu0 0
        %7108 = vmatprep.subr.bf16.mxu0 0
        %7109 = vmatpush2.bf16.msra.mxu0 %v7029
        %7110 = vmatprep.subr.bf16.mxu0 0
        %7111 = vmatpush2.bf16.msra.mxu0 %v7028
        %7112 = vmatprep.subr.bf16.mxu0 0
        %7113 = vmatpush2.bf16.msra.mxu0 %v7027
        %7114 = vmatprep.subr.bf16.mxu0 0
        %7115 = vmatpush2.bf16.msra.mxu0 %v7026
        %7116 = vmatprep.subr.bf16.mxu0 0
        %7117 = vmatpush2.bf16.msra.mxu0 %v7025
        %7118 = vmatprep.mubr.bf16.mxu0 %v6172
        %7119 = vmatmul.mubr.bf16.gmra.mxu0 %v1368
        %v7120 = vpop.f32.mrf.mxu0
        %v7121 = vadd.f32 %v7045, %v7120
        %v7122 = vpop.f32.mrf.mxu0
        %v7123 = vpop.f32.mrf.mxu0
        %v7124 = vadd.f32 %v7047, %v7123
        %v7125 = vpop.f32.mrf.mxu0
        %7126 = vmatprep.mubr.bf16.mxu0 %v6175
        %7127 = vmatmul.mubr.bf16.gmra.mxu0 %v1370
        %v7128 = vpop.f32.mrf.mxu0
        %v7129 = vadd.f32 %v7049, %v7128
        %v7130 = vpop.f32.mrf.mxu0
        %v7131 = vpop.f32.mrf.mxu0
        %v7132 = vadd.f32 %v7051, %v7131
        %v7133 = vpop.f32.mrf.mxu0
        %7134 = vmatprep.mubr.bf16.mxu0 %v6178
        %7135 = vmatmul.mubr.bf16.gmra.mxu0 %v1372
        %v7136 = vpop.f32.mrf.mxu0
        %v7137 = vadd.f32 %v7053, %v7136
        %v7138 = vpop.f32.mrf.mxu0
        %v7139 = vpop.f32.mrf.mxu0
        %v7140 = vadd.f32 %v7055, %v7139
        %v7141 = vpop.f32.mrf.mxu0
        %7142 = vmatprep.mubr.bf16.mxu0 %v6181
        %7143 = vmatmul.mubr.bf16.gmra.mxu0 %v1374
        %v7144 = vpop.f32.mrf.mxu0
        %v7145 = vadd.f32 %v7057, %v7144
        %v7146 = vpop.f32.mrf.mxu0
        %v7147 = vpop.f32.mrf.mxu0
        %v7148 = vadd.f32 %v7059, %v7147
        %v7149 = vpop.f32.mrf.mxu0
        %7150 = vmatprep.mubr.bf16.mxu0 %v6184
        %7151 = vmatmul.mubr.bf16.gmra.mxu0 %v1376
        %v7152 = vpop.f32.mrf.mxu0
        %v7153 = vadd.f32 %v7061, %v7152
        %v7154 = vpop.f32.mrf.mxu0
        %v7155 = vpop.f32.mrf.mxu0
        %v7156 = vadd.f32 %v7063, %v7155
        %v7157 = vpop.f32.mrf.mxu0
        %7158 = vmatprep.mubr.bf16.mxu0 %v6187
        %7159 = vmatmul.mubr.bf16.gmra.mxu0 %v1378
        %v7160 = vpop.f32.mrf.mxu0
        %v7161 = vadd.f32 %v7065, %v7160
        %v7162 = vpop.f32.mrf.mxu0
        %v7163 = vpop.f32.mrf.mxu0
        %v7164 = vadd.f32 %v7067, %v7163
        %v7165 = vpop.f32.mrf.mxu0
        %7166 = vmatprep.mubr.bf16.mxu0 %v6190
        %7167 = vmatmul.mubr.bf16.gmra.mxu0 %v1380
        %v7168 = vpop.f32.mrf.mxu0
        %v7169 = vadd.f32 %v7069, %v7168
        %v7170 = vpop.f32.mrf.mxu0
        %v7171 = vpop.f32.mrf.mxu0
        %v7172 = vadd.f32 %v7071, %v7171
        %v7173 = vpop.f32.mrf.mxu0
        %7174 = vdwg.mxu0
        %v7175 = vlaneseq
        %v7176 = vshrl.u32 %v7175, 7
        %v7177 = vsub.s32 1, %v7176
        %v7178 = vrot.slane %v6433, %v7177
        %v7179 = vadd.f32 %v7121, %v7178
        %v7180 = vadd.f32 %v7124, %v7178
        %v7181 = vadd.f32 %v7129, %v7178
        %v7182 = vadd.f32 %v7132, %v7178
        %v7183 = vadd.f32 %v7137, %v7178
        %v7184 = vadd.f32 %v7140, %v7178
        %v7185 = vadd.f32 %v7145, %v7178
        %v7186 = vadd.f32 %v7148, %v7178
        %v7187 = vadd.f32 %v7153, %v7178
        %v7188 = vadd.f32 %v7156, %v7178
        %v7189 = vadd.f32 %v7161, %v7178
        %v7190 = vadd.f32 %v7164, %v7178
        %v7191 = vadd.f32 %v7169, %v7178
        %v7192 = vadd.f32 %v7172, %v7178
        %v7193 = vpack.c.bf16 %v7180, %v7179
        %v7194 = vpack.c.bf16 %v7182, %v7181
        %v7195 = vpack.c.bf16 %v7184, %v7183
        %v7196 = vpack.c.bf16 %v7186, %v7185
        %v7197 = vpack.c.bf16 %v7188, %v7187
        %v7198 = vpack.c.bf16 %v7190, %v7189
        %v7199 = vpack.c.bf16 %v7192, %v7191
        %v7200 = vld [vmem:[%s21] sm:$0xf]
        %v7201 = vld [vmem:[%s21 + $0x4] sm:$0xf]
        %v7204 = vunpack.c.l.b16 %v7200
        %v7205 = vunpack.c.l.b16 %v7201
        %v7206 = vpack.c.b16 %v7205, %v7204
        %v7209 = vsel %vm1923, %v7193, 0
        %v7212 = vsel %vm1923, %v7194, 0
        %v7215 = vsel %vm1923, %v7195, 0
        %v7218 = vsel %vm1923, %v7196, 0
        %v7221 = vsel %vm1923, %v7197, 0
        %v7224 = vsel %vm1923, %v7198, 0
        %v7227 = vsel %vm1923, %v7199, 0
        %7229 = vmatprep.subr.bf16.mxu0 0
        %7230 = vmatpush1.bf16.msra.mxu0 0
        %7231 = vmatprep.subr.bf16.mxu0 0
        %7232 = vmatpush1.bf16.msra.mxu0 0
        %7233 = vmatprep.subr.bf16.mxu0 0
        %7234 = vmatpush1.bf16.msra.mxu0 0
        %7235 = vmatprep.subr.bf16.mxu0 0
        %7236 = vmatpush1.bf16.msra.mxu0 0
        %7237 = vmatprep.subr.bf16.mxu0 0
        %7238 = vmatpush1.bf16.msra.mxu0 0
        %7239 = vmatprep.subr.bf16.mxu0 0
        %7240 = vmatpush1.bf16.msra.mxu0 0
        %7241 = vmatprep.subr.bf16.mxu0 0
        %7242 = vmatpush1.bf16.msra.mxu0 0
        %7243 = vmatprep.subr.bf16.mxu0 0
        %7244 = vmatpush1.bf16.msra.mxu0 %v7206
        %7245 = vmatprep.subr.bf16.mxu0 0
        %7246 = vmatpush2.bf16.msra.mxu0 0
        %7247 = vmatprep.subr.bf16.mxu0 0
        %7248 = vmatpush2.bf16.msra.mxu0 0
        %7249 = vmatprep.subr.bf16.mxu0 0
        %7250 = vmatpush2.bf16.msra.mxu0 0
        %7251 = vmatprep.subr.bf16.mxu0 0
        %7252 = vmatpush2.bf16.msra.mxu0 0
        %7253 = vmatprep.subr.bf16.mxu0 0
        %7254 = vmatpush2.bf16.msra.mxu0 0
        %7255 = vmatprep.subr.bf16.mxu0 0
        %7256 = vmatpush2.bf16.msra.mxu0 0
        %7257 = vmatprep.subr.bf16.mxu0 0
        %7258 = vmatpush2.bf16.msra.mxu0 0
        %7259 = vmatprep.subr.bf16.mxu0 0
        %7260 = vmatpush2.bf16.msra.mxu0 0
        %7261 = vmatprep.mubr.bf16.mxu0 0
        %7262 = vmatmul.mubr.bf16.gmra.mxu0 %v7209
        %v7263 = vpop.f32.mrf.mxu0
        %v7264 = vadd.f32 0.0, %v7263
        %v7265 = vpop.f32.mrf.mxu0
        %v7266 = vpop.f32.mrf.mxu0
        %v7267 = vadd.f32 0.0, %v7266
        %v7268 = vpop.f32.mrf.mxu0
        %7269 = vmatprep.mubr.bf16.mxu0 0
        %7270 = vmatmul.mubr.bf16.gmra.mxu0 %v7212
        %v7271 = vpop.f32.mrf.mxu0
        %v7272 = vadd.f32 0.0, %v7271
        %v7273 = vpop.f32.mrf.mxu0
        %v7274 = vpop.f32.mrf.mxu0
        %v7275 = vadd.f32 0.0, %v7274
        %v7276 = vpop.f32.mrf.mxu0
        %7277 = vmatprep.mubr.bf16.mxu0 0
        %7278 = vmatmul.mubr.bf16.gmra.mxu0 %v7215
        %v7279 = vpop.f32.mrf.mxu0
        %v7280 = vadd.f32 0.0, %v7279
        %v7281 = vpop.f32.mrf.mxu0
        %v7282 = vpop.f32.mrf.mxu0
        %v7283 = vadd.f32 0.0, %v7282
        %v7284 = vpop.f32.mrf.mxu0
        %7285 = vmatprep.mubr.bf16.mxu0 0
        %7286 = vmatmul.mubr.bf16.gmra.mxu0 %v7218
        %v7287 = vpop.f32.mrf.mxu0
        %v7288 = vadd.f32 0.0, %v7287
        %v7289 = vpop.f32.mrf.mxu0
        %v7290 = vpop.f32.mrf.mxu0
        %v7291 = vadd.f32 0.0, %v7290
        %v7292 = vpop.f32.mrf.mxu0
        %7293 = vmatprep.mubr.bf16.mxu0 0
        %7294 = vmatmul.mubr.bf16.gmra.mxu0 %v7221
        %v7295 = vpop.f32.mrf.mxu0
        %v7296 = vadd.f32 0.0, %v7295
        %v7297 = vpop.f32.mrf.mxu0
        %v7298 = vpop.f32.mrf.mxu0
        %v7299 = vadd.f32 0.0, %v7298
        %v7300 = vpop.f32.mrf.mxu0
        %7301 = vmatprep.mubr.bf16.mxu0 0
        %7302 = vmatmul.mubr.bf16.gmra.mxu0 %v7224
        %v7303 = vpop.f32.mrf.mxu0
        %v7304 = vadd.f32 0.0, %v7303
        %v7305 = vpop.f32.mrf.mxu0
        %v7306 = vpop.f32.mrf.mxu0
        %v7307 = vadd.f32 0.0, %v7306
        %v7308 = vpop.f32.mrf.mxu0
        %7309 = vmatprep.mubr.bf16.mxu0 0
        %7310 = vmatmul.mubr.bf16.gmra.mxu0 %v7227
        %v7311 = vpop.f32.mrf.mxu0
        %v7312 = vadd.f32 0.0, %v7311
        %v7313 = vpop.f32.mrf.mxu0
        %v7314 = vpop.f32.mrf.mxu0
        %v7315 = vadd.f32 0.0, %v7314
        %v7316 = vpop.f32.mrf.mxu0
        %7317 = vdwg.mxu0
        %v7318 = vld [vmem:[%s22] sm:$0x7]
        %v7319 = vld [vmem:[%s23] sm:$0x3]
        %v7320 = vpack.c.bf16 %v7267, %v7264
        %v7321 = vpack.c.bf16 %v7275, %v7272
        %v7322 = vpack.c.bf16 %v7283, %v7280
        %v7323 = vpack.c.bf16 %v7291, %v7288
        %v7324 = vpack.c.bf16 %v7299, %v7296
        %v7325 = vpack.c.bf16 %v7307, %v7304
        %v7326 = vpack.c.bf16 %v7315, %v7312
        %7334 = vrot.lane.b32.xlu0 %v7320, 127
        %v7335 = vpop.permute.xlu0 %7334
        %7336 = vrot.lane.b32.xlu0 %v7321, 127
        %v7337 = vpop.permute.xlu0 %7336
        %7338 = vrot.lane.b32.xlu0 %v7322, 127
        %v7339 = vpop.permute.xlu0 %7338
        %7340 = vrot.lane.b32.xlu0 %v7323, 127
        %v7341 = vpop.permute.xlu0 %7340
        %7342 = vrot.lane.b32.xlu0 %v7324, 127
        %v7343 = vpop.permute.xlu0 %7342
        %7344 = vrot.lane.b32.xlu0 %v7325, 127
        %v7345 = vpop.permute.xlu0 %7344
        %7346 = vrot.lane.b32.xlu0 %v7326, 127
        %v7347 = vpop.permute.xlu0 %7346
        %7355 = vmatprep.subr.bf16.mxu0 0
        %7356 = vmatpush1.bf16.msra.mxu0 0
        %7357 = vmatprep.subr.bf16.mxu0 0
        %7358 = vmatpush1.bf16.msra.mxu0 %v7347
        %7359 = vmatprep.subr.bf16.mxu0 0
        %7360 = vmatpush1.bf16.msra.mxu0 %v7345
        %7361 = vmatprep.subr.bf16.mxu0 0
        %7362 = vmatpush1.bf16.msra.mxu0 %v7343
        %7363 = vmatprep.subr.bf16.mxu0 0
        %7364 = vmatpush1.bf16.msra.mxu0 %v7341
        %7365 = vmatprep.subr.bf16.mxu0 0
        %7366 = vmatpush1.bf16.msra.mxu0 %v7339
        %7367 = vmatprep.subr.bf16.mxu0 0
        %7368 = vmatpush1.bf16.msra.mxu0 %v7337
        %7369 = vmatprep.subr.bf16.mxu0 0
        %7370 = vmatpush1.bf16.msra.mxu0 %v7335
        %7371 = vmatprep.subr.bf16.mxu0 0
        %7372 = vmatpush2.bf16.msra.mxu0 0
        %7373 = vmatprep.subr.bf16.mxu0 0
        %7374 = vmatpush2.bf16.msra.mxu0 0
        %7375 = vmatprep.subr.bf16.mxu0 0
        %7376 = vmatpush2.bf16.msra.mxu0 0
        %7377 = vmatprep.subr.bf16.mxu0 0
        %7378 = vmatpush2.bf16.msra.mxu0 0
        %7379 = vmatprep.subr.bf16.mxu0 0
        %7380 = vmatpush2.bf16.msra.mxu0 0
        %7381 = vmatprep.subr.bf16.mxu0 0
        %7382 = vmatpush2.bf16.msra.mxu0 0
        %7383 = vmatprep.subr.bf16.mxu0 0
        %7384 = vmatpush2.bf16.msra.mxu0 0
        %7385 = vmatprep.subr.bf16.mxu0 0
        %7386 = vmatpush2.bf16.msra.mxu0 0
        %7387 = vmatprep.mubr.bf16.mxu0 0
        %7388 = vmatmul.mubr.bf16.gmra.mxu0 %v5425
        %v7389 = vpop.f32.mrf.mxu0
        %v7390 = vadd.f32 0.0, %v7389
        %v7391 = vpop.f32.mrf.mxu0
        %v7392 = vpop.f32.mrf.mxu0
        %v7393 = vadd.f32 0.0, %v7392
        %v7394 = vpop.f32.mrf.mxu0
        %7395 = vmatprep.mubr.bf16.mxu0 0
        %7396 = vmatmul.mubr.bf16.gmra.mxu0 %v5428
        %v7397 = vpop.f32.mrf.mxu0
        %v7398 = vadd.f32 0.0, %v7397
        %v7399 = vpop.f32.mrf.mxu0
        %v7400 = vpop.f32.mrf.mxu0
        %v7401 = vadd.f32 0.0, %v7400
        %v7402 = vpop.f32.mrf.mxu0
        %7403 = vmatprep.mubr.bf16.mxu0 0
        %7404 = vmatmul.mubr.bf16.gmra.mxu0 %v5431
        %v7405 = vpop.f32.mrf.mxu0
        %v7406 = vadd.f32 0.0, %v7405
        %v7407 = vpop.f32.mrf.mxu0
        %v7408 = vpop.f32.mrf.mxu0
        %v7409 = vadd.f32 0.0, %v7408
        %v7410 = vpop.f32.mrf.mxu0
        %7411 = vmatprep.mubr.bf16.mxu0 0
        %7412 = vmatmul.mubr.bf16.gmra.mxu0 %v5434
        %v7413 = vpop.f32.mrf.mxu0
        %v7414 = vadd.f32 0.0, %v7413
        %v7415 = vpop.f32.mrf.mxu0
        %v7416 = vpop.f32.mrf.mxu0
        %v7417 = vadd.f32 0.0, %v7416
        %v7418 = vpop.f32.mrf.mxu0
        %7419 = vmatprep.mubr.bf16.mxu0 0
        %7420 = vmatmul.mubr.bf16.gmra.mxu0 %v5437
        %v7421 = vpop.f32.mrf.mxu0
        %v7422 = vadd.f32 0.0, %v7421
        %v7423 = vpop.f32.mrf.mxu0
        %v7424 = vpop.f32.mrf.mxu0
        %v7425 = vadd.f32 0.0, %v7424
        %v7426 = vpop.f32.mrf.mxu0
        %7427 = vmatprep.mubr.bf16.mxu0 0
        %7428 = vmatmul.mubr.bf16.gmra.mxu0 %v5440
        %v7429 = vpop.f32.mrf.mxu0
        %v7430 = vadd.f32 0.0, %v7429
        %v7431 = vpop.f32.mrf.mxu0
        %v7432 = vpop.f32.mrf.mxu0
        %v7433 = vadd.f32 0.0, %v7432
        %v7434 = vpop.f32.mrf.mxu0
        %7435 = vmatprep.mubr.bf16.mxu0 0
        %7436 = vmatmul.mubr.bf16.gmra.mxu0 %v5443
        %v7437 = vpop.f32.mrf.mxu0
        %v7438 = vadd.f32 0.0, %v7437
        %v7439 = vpop.f32.mrf.mxu0
        %v7440 = vpop.f32.mrf.mxu0
        %v7441 = vadd.f32 0.0, %v7440
        %v7442 = vpop.f32.mrf.mxu0
        %7443 = vmatprep.mubr.bf16.mxu0 0
        %7444 = vmatmul.mubr.bf16.gmra.mxu0 %v5446
        %v7445 = vpop.f32.mrf.mxu0
        %v7446 = vadd.f32 0.0, %v7445
        %v7447 = vpop.f32.mrf.mxu0
        %v7448 = vpop.f32.mrf.mxu0
        %v7449 = vadd.f32 0.0, %v7448
        %v7450 = vpop.f32.mrf.mxu0
        %7451 = vmatprep.mubr.bf16.mxu0 0
        %7452 = vmatmul.mubr.bf16.gmra.mxu0 %v5449
        %v7453 = vpop.f32.mrf.mxu0
        %v7454 = vadd.f32 0.0, %v7453
        %v7455 = vpop.f32.mrf.mxu0
        %v7456 = vpop.f32.mrf.mxu0
        %v7457 = vadd.f32 0.0, %v7456
        %v7458 = vpop.f32.mrf.mxu0
        %7459 = vmatprep.mubr.bf16.mxu0 0
        %7460 = vmatmul.mubr.bf16.gmra.mxu0 %v5452
        %v7461 = vpop.f32.mrf.mxu0
        %v7462 = vadd.f32 0.0, %v7461
        %v7463 = vpop.f32.mrf.mxu0
        %v7464 = vpop.f32.mrf.mxu0
        %v7465 = vadd.f32 0.0, %v7464
        %v7466 = vpop.f32.mrf.mxu0
        %7467 = vmatprep.mubr.bf16.mxu0 0
        %7468 = vmatmul.mubr.bf16.gmra.mxu0 %v5455
        %v7469 = vpop.f32.mrf.mxu0
        %v7470 = vadd.f32 0.0, %v7469
        %v7471 = vpop.f32.mrf.mxu0
        %v7472 = vpop.f32.mrf.mxu0
        %v7473 = vadd.f32 0.0, %v7472
        %v7474 = vpop.f32.mrf.mxu0
        %7475 = vmatprep.mubr.bf16.mxu0 0
        %7476 = vmatmul.mubr.bf16.gmra.mxu0 %v5458
        %v7477 = vpop.f32.mrf.mxu0
        %v7478 = vadd.f32 0.0, %v7477
        %v7479 = vpop.f32.mrf.mxu0
        %v7480 = vpop.f32.mrf.mxu0
        %v7481 = vadd.f32 0.0, %v7480
        %v7482 = vpop.f32.mrf.mxu0
        %7483 = vmatprep.mubr.bf16.mxu0 0
        %7484 = vmatmul.mubr.bf16.gmra.mxu0 %v5461
        %v7485 = vpop.f32.mrf.mxu0
        %v7486 = vadd.f32 0.0, %v7485
        %v7487 = vpop.f32.mrf.mxu0
        %v7488 = vpop.f32.mrf.mxu0
        %v7489 = vadd.f32 0.0, %v7488
        %v7490 = vpop.f32.mrf.mxu0
        %7491 = vdwg.mxu0
        %7492 = vmatprep.subr.bf16.mxu0 0
        %7493 = vmatpush1.bf16.msra.mxu0 0
        %7494 = vmatprep.subr.bf16.mxu0 0
        %7495 = vmatpush1.bf16.msra.mxu0 %v7326
        %7496 = vmatprep.subr.bf16.mxu0 0
        %7497 = vmatpush1.bf16.msra.mxu0 %v7325
        %7498 = vmatprep.subr.bf16.mxu0 0
        %7499 = vmatpush1.bf16.msra.mxu0 %v7324
        %7500 = vmatprep.subr.bf16.mxu0 0
        %7501 = vmatpush1.bf16.msra.mxu0 %v7323
        %7502 = vmatprep.subr.bf16.mxu0 0
        %7503 = vmatpush1.bf16.msra.mxu0 %v7322
        %7504 = vmatprep.subr.bf16.mxu0 0
        %7505 = vmatpush1.bf16.msra.mxu0 %v7321
        %7506 = vmatprep.subr.bf16.mxu0 0
        %7507 = vmatpush1.bf16.msra.mxu0 %v7320
        %7508 = vmatprep.subr.bf16.mxu0 0
        %7509 = vmatpush2.bf16.msra.mxu0 0
        %7510 = vmatprep.subr.bf16.mxu0 0
        %7511 = vmatpush2.bf16.msra.mxu0 0
        %7512 = vmatprep.subr.bf16.mxu0 0
        %7513 = vmatpush2.bf16.msra.mxu0 0
        %7514 = vmatprep.subr.bf16.mxu0 0
        %7515 = vmatpush2.bf16.msra.mxu0 0
        %7516 = vmatprep.subr.bf16.mxu0 0
        %7517 = vmatpush2.bf16.msra.mxu0 0
        %7518 = vmatprep.subr.bf16.mxu0 0
        %7519 = vmatpush2.bf16.msra.mxu0 0
        %7520 = vmatprep.subr.bf16.mxu0 0
        %7521 = vmatpush2.bf16.msra.mxu0 0
        %7522 = vmatprep.subr.bf16.mxu0 0
        %7523 = vmatpush2.bf16.msra.mxu0 0
        %7524 = vmatprep.mubr.bf16.mxu0 0
        %7525 = vmatmul.mubr.bf16.gmra.mxu0 %v5601
        %v7526 = vpop.f32.mrf.mxu0
        %v7527 = vadd.f32 %v7390, %v7526
        %v7528 = vpop.f32.mrf.mxu0
        %v7529 = vpop.f32.mrf.mxu0
        %v7530 = vadd.f32 %v7393, %v7529
        %v7531 = vpop.f32.mrf.mxu0
        %7532 = vmatprep.mubr.bf16.mxu0 0
        %7533 = vmatmul.mubr.bf16.gmra.mxu0 %v5604
        %v7534 = vpop.f32.mrf.mxu0
        %v7535 = vadd.f32 %v7398, %v7534
        %v7536 = vpop.f32.mrf.mxu0
        %v7537 = vpop.f32.mrf.mxu0
        %v7538 = vadd.f32 %v7401, %v7537
        %v7539 = vpop.f32.mrf.mxu0
        %7540 = vmatprep.mubr.bf16.mxu0 0
        %7541 = vmatmul.mubr.bf16.gmra.mxu0 %v5607
        %v7542 = vpop.f32.mrf.mxu0
        %v7543 = vadd.f32 %v7406, %v7542
        %v7544 = vpop.f32.mrf.mxu0
        %v7545 = vpop.f32.mrf.mxu0
        %v7546 = vadd.f32 %v7409, %v7545
        %v7547 = vpop.f32.mrf.mxu0
        %7548 = vmatprep.mubr.bf16.mxu0 0
        %7549 = vmatmul.mubr.bf16.gmra.mxu0 %v5610
        %v7550 = vpop.f32.mrf.mxu0
        %v7551 = vadd.f32 %v7414, %v7550
        %v7552 = vpop.f32.mrf.mxu0
        %v7553 = vpop.f32.mrf.mxu0
        %v7554 = vadd.f32 %v7417, %v7553
        %v7555 = vpop.f32.mrf.mxu0
        %7556 = vmatprep.mubr.bf16.mxu0 0
        %7557 = vmatmul.mubr.bf16.gmra.mxu0 %v5613
        %v7558 = vpop.f32.mrf.mxu0
        %v7559 = vadd.f32 %v7422, %v7558
        %v7560 = vpop.f32.mrf.mxu0
        %v7561 = vpop.f32.mrf.mxu0
        %v7562 = vadd.f32 %v7425, %v7561
        %v7563 = vpop.f32.mrf.mxu0
        %7564 = vmatprep.mubr.bf16.mxu0 0
        %7565 = vmatmul.mubr.bf16.gmra.mxu0 %v5616
        %v7566 = vpop.f32.mrf.mxu0
        %v7567 = vadd.f32 %v7430, %v7566
        %v7568 = vpop.f32.mrf.mxu0
        %v7569 = vpop.f32.mrf.mxu0
        %v7570 = vadd.f32 %v7433, %v7569
        %v7571 = vpop.f32.mrf.mxu0
        %7572 = vmatprep.mubr.bf16.mxu0 0
        %7573 = vmatmul.mubr.bf16.gmra.mxu0 %v5619
        %v7574 = vpop.f32.mrf.mxu0
        %v7575 = vadd.f32 %v7438, %v7574
        %v7576 = vpop.f32.mrf.mxu0
        %v7577 = vpop.f32.mrf.mxu0
        %v7578 = vadd.f32 %v7441, %v7577
        %v7579 = vpop.f32.mrf.mxu0
        %7580 = vmatprep.mubr.bf16.mxu0 0
        %7581 = vmatmul.mubr.bf16.gmra.mxu0 %v5622
        %v7582 = vpop.f32.mrf.mxu0
        %v7583 = vadd.f32 %v7446, %v7582
        %v7584 = vpop.f32.mrf.mxu0
        %v7585 = vpop.f32.mrf.mxu0
        %v7586 = vadd.f32 %v7449, %v7585
        %v7587 = vpop.f32.mrf.mxu0
        %7588 = vmatprep.mubr.bf16.mxu0 0
        %7589 = vmatmul.mubr.bf16.gmra.mxu0 %v5625
        %v7590 = vpop.f32.mrf.mxu0
        %v7591 = vadd.f32 %v7454, %v7590
        %v7592 = vpop.f32.mrf.mxu0
        %v7593 = vpop.f32.mrf.mxu0
        %v7594 = vadd.f32 %v7457, %v7593
        %v7595 = vpop.f32.mrf.mxu0
        %7596 = vmatprep.mubr.bf16.mxu0 0
        %7597 = vmatmul.mubr.bf16.gmra.mxu0 %v5628
        %v7598 = vpop.f32.mrf.mxu0
        %v7599 = vadd.f32 %v7462, %v7598
        %v7600 = vpop.f32.mrf.mxu0
        %v7601 = vpop.f32.mrf.mxu0
        %v7602 = vadd.f32 %v7465, %v7601
        %v7603 = vpop.f32.mrf.mxu0
        %7604 = vmatprep.mubr.bf16.mxu0 0
        %7605 = vmatmul.mubr.bf16.gmra.mxu0 %v5631
        %v7606 = vpop.f32.mrf.mxu0
        %v7607 = vadd.f32 %v7470, %v7606
        %v7608 = vpop.f32.mrf.mxu0
        %v7609 = vpop.f32.mrf.mxu0
        %v7610 = vadd.f32 %v7473, %v7609
        %v7611 = vpop.f32.mrf.mxu0
        %7612 = vmatprep.mubr.bf16.mxu0 0
        %7613 = vmatmul.mubr.bf16.gmra.mxu0 %v5634
        %v7614 = vpop.f32.mrf.mxu0
        %v7615 = vadd.f32 %v7478, %v7614
        %v7616 = vpop.f32.mrf.mxu0
        %v7617 = vpop.f32.mrf.mxu0
        %v7618 = vadd.f32 %v7481, %v7617
        %v7619 = vpop.f32.mrf.mxu0
        %7620 = vmatprep.mubr.bf16.mxu0 0
        %7621 = vmatmul.mubr.bf16.gmra.mxu0 %v5637
        %v7622 = vpop.f32.mrf.mxu0
        %v7623 = vadd.f32 %v7486, %v7622
        %v7624 = vpop.f32.mrf.mxu0
        %v7625 = vpop.f32.mrf.mxu0
        %v7626 = vadd.f32 %v7489, %v7625
        %v7627 = vpop.f32.mrf.mxu0
        %7628 = vdwg.mxu0
        %v7630 = vsel %vm1396, %v7318, 0
        %7632 = vmatprep.subr.bf16.mxu0 0
        %7633 = vmatpush1.bf16.msra.mxu0 0
        %7634 = vmatprep.subr.bf16.mxu0 0
        %7635 = vmatpush1.bf16.msra.mxu0 0
        %7636 = vmatprep.subr.bf16.mxu0 0
        %7637 = vmatpush1.bf16.msra.mxu0 0
        %7638 = vmatprep.subr.bf16.mxu0 0
        %7639 = vmatpush1.bf16.msra.mxu0 0
        %7640 = vmatprep.subr.bf16.mxu0 0
        %7641 = vmatpush1.bf16.msra.mxu0 0
        %7642 = vmatprep.subr.bf16.mxu0 0
        %7643 = vmatpush1.bf16.msra.mxu0 0
        %7644 = vmatprep.subr.bf16.mxu0 0
        %7645 = vmatpush1.bf16.msra.mxu0 0
        %7646 = vmatprep.subr.bf16.mxu0 0
        %7647 = vmatpush1.bf16.msra.mxu0 %v7630
        %7648 = vmatprep.subr.bf16.mxu0 0
        %7649 = vmatpush2.bf16.msra.mxu0 0
        %7650 = vmatprep.subr.bf16.mxu0 0
        %7651 = vmatpush2.bf16.msra.mxu0 0
        %7652 = vmatprep.subr.bf16.mxu0 0
        %7653 = vmatpush2.bf16.msra.mxu0 0
        %7654 = vmatprep.subr.bf16.mxu0 0
        %7655 = vmatpush2.bf16.msra.mxu0 0
        %7656 = vmatprep.subr.bf16.mxu0 0
        %7657 = vmatpush2.bf16.msra.mxu0 0
        %7658 = vmatprep.subr.bf16.mxu0 0
        %7659 = vmatpush2.bf16.msra.mxu0 0
        %7660 = vmatprep.subr.bf16.mxu0 0
        %7661 = vmatpush2.bf16.msra.mxu0 0
        %7662 = vmatprep.subr.bf16.mxu0 0
        %7663 = vmatpush2.bf16.msra.mxu0 0
        %7664 = vmatprep.mubr.bf16.mxu0 0
        %7665 = vmatmul.mubr.bf16.gmra.mxu0 %v5790
        %v7666 = vpop.f32.mrf.mxu0
        %v7667 = vadd.f32 0.0, %v7666
        %v7668 = vpop.f32.mrf.mxu0
        %v7669 = vpop.f32.mrf.mxu0
        %v7670 = vadd.f32 0.0, %v7669
        %v7671 = vpop.f32.mrf.mxu0
        %7672 = vmatprep.mubr.bf16.mxu0 0
        %7673 = vmatmul.mubr.bf16.gmra.mxu0 %v5793
        %v7674 = vpop.f32.mrf.mxu0
        %v7675 = vadd.f32 0.0, %v7674
        %v7676 = vpop.f32.mrf.mxu0
        %v7677 = vpop.f32.mrf.mxu0
        %v7678 = vadd.f32 0.0, %v7677
        %v7679 = vpop.f32.mrf.mxu0
        %7680 = vmatprep.mubr.bf16.mxu0 0
        %7681 = vmatmul.mubr.bf16.gmra.mxu0 %v5796
        %v7682 = vpop.f32.mrf.mxu0
        %v7683 = vadd.f32 0.0, %v7682
        %v7684 = vpop.f32.mrf.mxu0
        %v7685 = vpop.f32.mrf.mxu0
        %v7686 = vadd.f32 0.0, %v7685
        %v7687 = vpop.f32.mrf.mxu0
        %7688 = vmatprep.mubr.bf16.mxu0 0
        %7689 = vmatmul.mubr.bf16.gmra.mxu0 %v5799
        %v7690 = vpop.f32.mrf.mxu0
        %v7691 = vadd.f32 0.0, %v7690
        %v7692 = vpop.f32.mrf.mxu0
        %v7693 = vpop.f32.mrf.mxu0
        %v7694 = vadd.f32 0.0, %v7693
        %v7695 = vpop.f32.mrf.mxu0
        %7696 = vmatprep.mubr.bf16.mxu0 0
        %7697 = vmatmul.mubr.bf16.gmra.mxu0 %v5802
        %v7698 = vpop.f32.mrf.mxu0
        %v7699 = vadd.f32 0.0, %v7698
        %v7700 = vpop.f32.mrf.mxu0
        %v7701 = vpop.f32.mrf.mxu0
        %v7702 = vadd.f32 0.0, %v7701
        %v7703 = vpop.f32.mrf.mxu0
        %7704 = vmatprep.mubr.bf16.mxu0 0
        %7705 = vmatmul.mubr.bf16.gmra.mxu0 %v5805
        %v7706 = vpop.f32.mrf.mxu0
        %v7707 = vadd.f32 0.0, %v7706
        %v7708 = vpop.f32.mrf.mxu0
        %v7709 = vpop.f32.mrf.mxu0
        %v7710 = vadd.f32 0.0, %v7709
        %v7711 = vpop.f32.mrf.mxu0
        %7712 = vmatprep.mubr.bf16.mxu0 0
        %7713 = vmatmul.mubr.bf16.gmra.mxu0 %v5808
        %v7714 = vpop.f32.mrf.mxu0
        %v7715 = vadd.f32 0.0, %v7714
        %v7716 = vpop.f32.mrf.mxu0
        %v7717 = vpop.f32.mrf.mxu0
        %v7718 = vadd.f32 0.0, %v7717
        %v7719 = vpop.f32.mrf.mxu0
        %7720 = vmatprep.mubr.bf16.mxu0 0
        %7721 = vmatmul.mubr.bf16.gmra.mxu0 %v5811
        %v7722 = vpop.f32.mrf.mxu0
        %v7723 = vadd.f32 0.0, %v7722
        %v7724 = vpop.f32.mrf.mxu0
        %v7725 = vpop.f32.mrf.mxu0
        %v7726 = vadd.f32 0.0, %v7725
        %v7727 = vpop.f32.mrf.mxu0
        %7728 = vmatprep.mubr.bf16.mxu0 0
        %7729 = vmatmul.mubr.bf16.gmra.mxu0 %v5814
        %v7730 = vpop.f32.mrf.mxu0
        %v7731 = vadd.f32 0.0, %v7730
        %v7732 = vpop.f32.mrf.mxu0
        %v7733 = vpop.f32.mrf.mxu0
        %v7734 = vadd.f32 0.0, %v7733
        %v7735 = vpop.f32.mrf.mxu0
        %7736 = vmatprep.mubr.bf16.mxu0 0
        %7737 = vmatmul.mubr.bf16.gmra.mxu0 %v5817
        %v7738 = vpop.f32.mrf.mxu0
        %v7739 = vadd.f32 0.0, %v7738
        %v7740 = vpop.f32.mrf.mxu0
        %v7741 = vpop.f32.mrf.mxu0
        %v7742 = vadd.f32 0.0, %v7741
        %v7743 = vpop.f32.mrf.mxu0
        %7744 = vmatprep.mubr.bf16.mxu0 0
        %7745 = vmatmul.mubr.bf16.gmra.mxu0 %v5820
        %v7746 = vpop.f32.mrf.mxu0
        %v7747 = vadd.f32 0.0, %v7746
        %v7748 = vpop.f32.mrf.mxu0
        %v7749 = vpop.f32.mrf.mxu0
        %v7750 = vadd.f32 0.0, %v7749
        %v7751 = vpop.f32.mrf.mxu0
        %7752 = vmatprep.mubr.bf16.mxu0 0
        %7753 = vmatmul.mubr.bf16.gmra.mxu0 %v5823
        %v7754 = vpop.f32.mrf.mxu0
        %v7755 = vadd.f32 0.0, %v7754
        %v7756 = vpop.f32.mrf.mxu0
        %v7757 = vpop.f32.mrf.mxu0
        %v7758 = vadd.f32 0.0, %v7757
        %v7759 = vpop.f32.mrf.mxu0
        %7760 = vmatprep.mubr.bf16.mxu0 0
        %7761 = vmatmul.mubr.bf16.gmra.mxu0 %v5826
        %v7762 = vpop.f32.mrf.mxu0
        %v7763 = vadd.f32 0.0, %v7762
        %v7764 = vpop.f32.mrf.mxu0
        %v7765 = vpop.f32.mrf.mxu0
        %v7766 = vadd.f32 0.0, %v7765
        %v7767 = vpop.f32.mrf.mxu0
        %7768 = vdwg.mxu0
        %v7769 = vadd.f32 %v7527, %v7667
        %v7770 = vadd.f32 %v7530, %v7670
        %v7771 = vadd.f32 %v7535, %v7675
        %v7772 = vadd.f32 %v7538, %v7678
        %v7773 = vadd.f32 %v7543, %v7683
        %v7774 = vadd.f32 %v7546, %v7686
        %v7775 = vadd.f32 %v7551, %v7691
        %v7776 = vadd.f32 %v7554, %v7694
        %v7777 = vadd.f32 %v7559, %v7699
        %v7778 = vadd.f32 %v7562, %v7702
        %v7779 = vadd.f32 %v7567, %v7707
        %v7780 = vadd.f32 %v7570, %v7710
        %v7781 = vadd.f32 %v7575, %v7715
        %v7782 = vadd.f32 %v7578, %v7718
        %v7783 = vadd.f32 %v7583, %v7723
        %v7784 = vadd.f32 %v7586, %v7726
        %v7785 = vadd.f32 %v7591, %v7731
        %v7786 = vadd.f32 %v7594, %v7734
        %v7787 = vadd.f32 %v7599, %v7739
        %v7788 = vadd.f32 %v7602, %v7742
        %v7789 = vadd.f32 %v7607, %v7747
        %v7790 = vadd.f32 %v7610, %v7750
        %v7791 = vadd.f32 %v7615, %v7755
        %v7792 = vadd.f32 %v7618, %v7758
        %v7793 = vadd.f32 %v7623, %v7763
        %v7794 = vadd.f32 %v7626, %v7766
        %v7795 = vlaneseq
        %v7796 = vshrl.u32 %v7795, 7
        %v7797 = vsub.s32 0, %v7796
        %v7798 = vrot.slane %v7319, %v7797
        %v7799 = vadd.f32 %v7769, %v7798
        %v7800 = vadd.f32 %v7770, %v7798
        %v7801 = vadd.f32 %v7771, %v7798
        %v7802 = vadd.f32 %v7772, %v7798
        %v7803 = vadd.f32 %v7773, %v7798
        %v7804 = vadd.f32 %v7774, %v7798
        %v7805 = vadd.f32 %v7775, %v7798
        %v7806 = vadd.f32 %v7776, %v7798
        %v7807 = vadd.f32 %v7777, %v7798
        %v7808 = vadd.f32 %v7778, %v7798
        %v7809 = vadd.f32 %v7779, %v7798
        %v7810 = vadd.f32 %v7780, %v7798
        %v7811 = vadd.f32 %v7781, %v7798
        %v7812 = vadd.f32 %v7782, %v7798
        %v7813 = vadd.f32 %v7783, %v7798
        %v7814 = vadd.f32 %v7784, %v7798
        %v7815 = vadd.f32 %v7785, %v7798
        %v7816 = vadd.f32 %v7786, %v7798
        %v7817 = vadd.f32 %v7787, %v7798
        %v7818 = vadd.f32 %v7788, %v7798
        %v7819 = vadd.f32 %v7789, %v7798
        %v7820 = vadd.f32 %v7790, %v7798
        %v7821 = vadd.f32 %v7791, %v7798
        %v7822 = vadd.f32 %v7792, %v7798
        %v7823 = vadd.f32 %v7793, %v7798
        %v7824 = vadd.f32 %v7794, %v7798
        %vm7825 = vcmp.ge.f32.partialorder %v7799, 0.0
        %vm7826 = vcmp.ge.f32.partialorder %v7800, 0.0
        %vm7827 = vcmp.ge.f32.partialorder %v7801, 0.0
        %vm7828 = vcmp.ge.f32.partialorder %v7802, 0.0
        %vm7829 = vcmp.ge.f32.partialorder %v7803, 0.0
        %vm7830 = vcmp.ge.f32.partialorder %v7804, 0.0
        %vm7831 = vcmp.ge.f32.partialorder %v7805, 0.0
        %vm7832 = vcmp.ge.f32.partialorder %v7806, 0.0
        %vm7833 = vcmp.ge.f32.partialorder %v7807, 0.0
        %vm7834 = vcmp.ge.f32.partialorder %v7808, 0.0
        %vm7835 = vcmp.ge.f32.partialorder %v7809, 0.0
        %vm7836 = vcmp.ge.f32.partialorder %v7810, 0.0
        %vm7837 = vcmp.ge.f32.partialorder %v7811, 0.0
        %vm7838 = vcmp.ge.f32.partialorder %v7812, 0.0
        %vm7839 = vcmp.ge.f32.partialorder %v7813, 0.0
        %vm7840 = vcmp.ge.f32.partialorder %v7814, 0.0
        %vm7841 = vcmp.ge.f32.partialorder %v7815, 0.0
        %vm7842 = vcmp.ge.f32.partialorder %v7816, 0.0
        %vm7843 = vcmp.ge.f32.partialorder %v7817, 0.0
        %vm7844 = vcmp.ge.f32.partialorder %v7818, 0.0
        %vm7845 = vcmp.ge.f32.partialorder %v7819, 0.0
        %vm7846 = vcmp.ge.f32.partialorder %v7820, 0.0
        %vm7847 = vcmp.ge.f32.partialorder %v7821, 0.0
        %vm7848 = vcmp.ge.f32.partialorder %v7822, 0.0
        %vm7849 = vcmp.ge.f32.partialorder %v7823, 0.0
        %vm7850 = vcmp.ge.f32.partialorder %v7824, 0.0
        %v7851 = vmul.f32 %v7799, 0.01
        %v7852 = vmul.f32 %v7800, 0.01
        %v7853 = vmul.f32 %v7801, 0.01
        %v7854 = vmul.f32 %v7802, 0.01
        %v7855 = vmul.f32 %v7803, 0.01
        %v7856 = vmul.f32 %v7804, 0.01
        %v7857 = vmul.f32 %v7805, 0.01
        %v7858 = vmul.f32 %v7806, 0.01
        %v7859 = vmul.f32 %v7807, 0.01
        %v7860 = vmul.f32 %v7808, 0.01
        %v7861 = vmul.f32 %v7809, 0.01
        %v7862 = vmul.f32 %v7810, 0.01
        %v7863 = vmul.f32 %v7811, 0.01
        %v7864 = vmul.f32 %v7812, 0.01
        %v7865 = vmul.f32 %v7813, 0.01
        %v7866 = vmul.f32 %v7814, 0.01
        %v7867 = vmul.f32 %v7815, 0.01
        %v7868 = vmul.f32 %v7816, 0.01
        %v7869 = vmul.f32 %v7817, 0.01
        %v7870 = vmul.f32 %v7818, 0.01
        %v7871 = vmul.f32 %v7819, 0.01
        %v7872 = vmul.f32 %v7820, 0.01
        %v7873 = vmul.f32 %v7821, 0.01
        %v7874 = vmul.f32 %v7822, 0.01
        %v7875 = vmul.f32 %v7823, 0.01
        %v7876 = vmul.f32 %v7824, 0.01
        %v7877 = vsel %vm7825, %v7799, %v7851
        %v7878 = vsel %vm7826, %v7800, %v7852
        %v7879 = vsel %vm7827, %v7801, %v7853
        %v7880 = vsel %vm7828, %v7802, %v7854
        %v7881 = vsel %vm7829, %v7803, %v7855
        %v7882 = vsel %vm7830, %v7804, %v7856
        %v7883 = vsel %vm7831, %v7805, %v7857
        %v7884 = vsel %vm7832, %v7806, %v7858
        %v7885 = vsel %vm7833, %v7807, %v7859
        %v7886 = vsel %vm7834, %v7808, %v7860
        %v7887 = vsel %vm7835, %v7809, %v7861
        %v7888 = vsel %vm7836, %v7810, %v7862
        %v7889 = vsel %vm7837, %v7811, %v7863
        %v7890 = vsel %vm7838, %v7812, %v7864
        %v7891 = vsel %vm7839, %v7813, %v7865
        %v7892 = vsel %vm7840, %v7814, %v7866
        %v7893 = vsel %vm7841, %v7815, %v7867
        %v7894 = vsel %vm7842, %v7816, %v7868
        %v7895 = vsel %vm7843, %v7817, %v7869
        %v7896 = vsel %vm7844, %v7818, %v7870
        %v7897 = vsel %vm7845, %v7819, %v7871
        %v7898 = vsel %vm7846, %v7820, %v7872
        %v7899 = vsel %vm7847, %v7821, %v7873
        %v7900 = vsel %vm7848, %v7822, %v7874
        %v7901 = vsel %vm7849, %v7823, %v7875
        %v7902 = vsel %vm7850, %v7824, %v7876
        %v7903 = vpack.c.bf16 %v7878, %v7877
        %v7904 = vpack.c.bf16 %v7880, %v7879
        %v7905 = vpack.c.bf16 %v7882, %v7881
        %v7906 = vpack.c.bf16 %v7884, %v7883
        %v7907 = vpack.c.bf16 %v7886, %v7885
        %v7908 = vpack.c.bf16 %v7888, %v7887
        %v7909 = vpack.c.bf16 %v7890, %v7889
        %v7910 = vpack.c.bf16 %v7892, %v7891
        %v7911 = vpack.c.bf16 %v7894, %v7893
        %v7912 = vpack.c.bf16 %v7896, %v7895
        %v7913 = vpack.c.bf16 %v7898, %v7897
        %v7914 = vpack.c.bf16 %v7900, %v7899
        %v7915 = vpack.c.bf16 %v7902, %v7901
        %7930 = vrot.lane.b32.xlu0 %v7264, 126
        %v7931 = vpop.permute.xlu0 %7930
        %7932 = vrot.lane.b32.xlu0 %v7267, 126
        %v7933 = vpop.permute.xlu0 %7932
        %7934 = vrot.lane.b32.xlu0 %v7272, 126
        %v7935 = vpop.permute.xlu0 %7934
        %7936 = vrot.lane.b32.xlu0 %v7275, 126
        %v7937 = vpop.permute.xlu0 %7936
        %7938 = vrot.lane.b32.xlu0 %v7280, 126
        %v7939 = vpop.permute.xlu0 %7938
        %7940 = vrot.lane.b32.xlu0 %v7283, 126
        %v7941 = vpop.permute.xlu0 %7940
        %7942 = vrot.lane.b32.xlu0 %v7288, 126
        %v7943 = vpop.permute.xlu0 %7942
        %7944 = vrot.lane.b32.xlu0 %v7291, 126
        %v7945 = vpop.permute.xlu0 %7944
        %7946 = vrot.lane.b32.xlu0 %v7296, 126
        %v7947 = vpop.permute.xlu0 %7946
        %7948 = vrot.lane.b32.xlu0 %v7299, 126
        %v7949 = vpop.permute.xlu0 %7948
        %7950 = vrot.lane.b32.xlu0 %v7304, 126
        %v7951 = vpop.permute.xlu0 %7950
        %7952 = vrot.lane.b32.xlu0 %v7307, 126
        %v7953 = vpop.permute.xlu0 %7952
        %7954 = vrot.lane.b32.xlu0 %v7312, 126
        %v7955 = vpop.permute.xlu0 %7954
        %7956 = vrot.lane.b32.xlu0 %v7315, 126
        %v7957 = vpop.permute.xlu0 %7956
        %7972 = vmatprep.subr.bf16.mxu0 0
        %7973 = vmatpush1.bf16.msra.mxu0 %v7910
        %7974 = vmatprep.subr.bf16.mxu0 0
        %7975 = vmatpush1.bf16.msra.mxu0 %v7909
        %7976 = vmatprep.subr.bf16.mxu0 0
        %7977 = vmatpush1.bf16.msra.mxu0 %v7908
        %7978 = vmatprep.subr.bf16.mxu0 0
        %7979 = vmatpush1.bf16.msra.mxu0 %v7907
        %7980 = vmatprep.subr.bf16.mxu0 0
        %7981 = vmatpush1.bf16.msra.mxu0 %v7906
        %7982 = vmatprep.subr.bf16.mxu0 0
        %7983 = vmatpush1.bf16.msra.mxu0 %v7905
        %7984 = vmatprep.subr.bf16.mxu0 0
        %7985 = vmatpush1.bf16.msra.mxu0 %v7904
        %7986 = vmatprep.subr.bf16.mxu0 0
        %7987 = vmatpush1.bf16.msra.mxu0 %v7903
        %7988 = vmatprep.subr.bf16.mxu0 0
        %7989 = vmatpush2.bf16.msra.mxu0 0
        %7990 = vmatprep.subr.bf16.mxu0 0
        %7991 = vmatpush2.bf16.msra.mxu0 0
        %7992 = vmatprep.subr.bf16.mxu0 0
        %7993 = vmatpush2.bf16.msra.mxu0 0
        %7994 = vmatprep.subr.bf16.mxu0 0
        %7995 = vmatpush2.bf16.msra.mxu0 %v7915
        %7996 = vmatprep.subr.bf16.mxu0 0
        %7997 = vmatpush2.bf16.msra.mxu0 %v7914
        %7998 = vmatprep.subr.bf16.mxu0 0
        %7999 = vmatpush2.bf16.msra.mxu0 %v7913
        %8000 = vmatprep.subr.bf16.mxu0 0
        %8001 = vmatpush2.bf16.msra.mxu0 %v7912
        %8002 = vmatprep.subr.bf16.mxu0 0
        %8003 = vmatpush2.bf16.msra.mxu0 %v7911
        %8004 = vmatprep.mubr.bf16.mxu0 %v6172
        %8005 = vmatmul.mubr.bf16.gmra.mxu0 %v1368
        %v8006 = vpop.f32.mrf.mxu0
        %v8007 = vadd.f32 %v7931, %v8006
        %v8008 = vpop.f32.mrf.mxu0
        %v8009 = vpop.f32.mrf.mxu0
        %v8010 = vadd.f32 %v7933, %v8009
        %v8011 = vpop.f32.mrf.mxu0
        %8012 = vmatprep.mubr.bf16.mxu0 %v6175
        %8013 = vmatmul.mubr.bf16.gmra.mxu0 %v1370
        %v8014 = vpop.f32.mrf.mxu0
        %v8015 = vadd.f32 %v7935, %v8014
        %v8016 = vpop.f32.mrf.mxu0
        %v8017 = vpop.f32.mrf.mxu0
        %v8018 = vadd.f32 %v7937, %v8017
        %v8019 = vpop.f32.mrf.mxu0
        %8020 = vmatprep.mubr.bf16.mxu0 %v6178
        %8021 = vmatmul.mubr.bf16.gmra.mxu0 %v1372
        %v8022 = vpop.f32.mrf.mxu0
        %v8023 = vadd.f32 %v7939, %v8022
        %v8024 = vpop.f32.mrf.mxu0
        %v8025 = vpop.f32.mrf.mxu0
        %v8026 = vadd.f32 %v7941, %v8025
        %v8027 = vpop.f32.mrf.mxu0
        %8028 = vmatprep.mubr.bf16.mxu0 %v6181
        %8029 = vmatmul.mubr.bf16.gmra.mxu0 %v1374
        %v8030 = vpop.f32.mrf.mxu0
        %v8031 = vadd.f32 %v7943, %v8030
        %v8032 = vpop.f32.mrf.mxu0
        %v8033 = vpop.f32.mrf.mxu0
        %v8034 = vadd.f32 %v7945, %v8033
        %v8035 = vpop.f32.mrf.mxu0
        %8036 = vmatprep.mubr.bf16.mxu0 %v6184
        %8037 = vmatmul.mubr.bf16.gmra.mxu0 %v1376
        %v8038 = vpop.f32.mrf.mxu0
        %v8039 = vadd.f32 %v7947, %v8038
        %v8040 = vpop.f32.mrf.mxu0
        %v8041 = vpop.f32.mrf.mxu0
        %v8042 = vadd.f32 %v7949, %v8041
        %v8043 = vpop.f32.mrf.mxu0
        %8044 = vmatprep.mubr.bf16.mxu0 %v6187
        %8045 = vmatmul.mubr.bf16.gmra.mxu0 %v1378
        %v8046 = vpop.f32.mrf.mxu0
        %v8047 = vadd.f32 %v7951, %v8046
        %v8048 = vpop.f32.mrf.mxu0
        %v8049 = vpop.f32.mrf.mxu0
        %v8050 = vadd.f32 %v7953, %v8049
        %v8051 = vpop.f32.mrf.mxu0
        %8052 = vmatprep.mubr.bf16.mxu0 %v6190
        %8053 = vmatmul.mubr.bf16.gmra.mxu0 %v1380
        %v8054 = vpop.f32.mrf.mxu0
        %v8055 = vadd.f32 %v7955, %v8054
        %v8056 = vpop.f32.mrf.mxu0
        %v8057 = vpop.f32.mrf.mxu0
        %v8058 = vadd.f32 %v7957, %v8057
        %v8059 = vpop.f32.mrf.mxu0
        %8060 = vdwg.mxu0
        %v8061 = vlaneseq
        %v8062 = vshrl.u32 %v8061, 7
        %v8063 = vsub.s32 1, %v8062
        %v8064 = vrot.slane %v7319, %v8063
        %v8065 = vadd.f32 %v8007, %v8064
        %v8066 = vadd.f32 %v8010, %v8064
        %v8067 = vadd.f32 %v8015, %v8064
        %v8068 = vadd.f32 %v8018, %v8064
        %v8069 = vadd.f32 %v8023, %v8064
        %v8070 = vadd.f32 %v8026, %v8064
        %v8071 = vadd.f32 %v8031, %v8064
        %v8072 = vadd.f32 %v8034, %v8064
        %v8073 = vadd.f32 %v8039, %v8064
        %v8074 = vadd.f32 %v8042, %v8064
        %v8075 = vadd.f32 %v8047, %v8064
        %v8076 = vadd.f32 %v8050, %v8064
        %v8077 = vadd.f32 %v8055, %v8064
        %v8078 = vadd.f32 %v8058, %v8064
        %v8079 = vtanh.pop %v8065
        %v8080 = vtanh.pop %v8066
        %v8081 = vtanh.pop %v8067
        %v8082 = vtanh.pop %v8068
        %v8083 = vtanh.pop %v8069
        %v8084 = vtanh.pop %v8070
        %v8085 = vtanh.pop %v8071
        %v8086 = vtanh.pop %v8072
        %v8087 = vtanh.pop %v8073
        %v8088 = vtanh.pop %v8074
        %v8089 = vtanh.pop %v8075
        %v8090 = vtanh.pop %v8076
        %v8091 = vtanh.pop %v8077
        %v8092 = vtanh.pop %v8078
        %8093 = vrot.lane.b32.xlu0 %v783, 1
        %v8094 = vpop.permute.xlu0 %8093
        %8095 = vrot.lane.b32.xlu0 %v784, 1
        %v8096 = vpop.permute.xlu0 %8095
        %8097 = vrot.lane.b32.xlu0 %v785, 1
        %v8098 = vpop.permute.xlu0 %8097
        %8099 = vrot.lane.b32.xlu0 %v786, 1
        %v8100 = vpop.permute.xlu0 %8099
        %8101 = vrot.lane.b32.xlu0 %v787, 1
        %v8102 = vpop.permute.xlu0 %8101
        %8103 = vrot.lane.b32.xlu0 %v788, 1
        %v8104 = vpop.permute.xlu0 %8103
        %8105 = vrot.lane.b32.xlu0 %v789, 1
        %v8106 = vpop.permute.xlu0 %8105
        %8107 = vrot.lane.b32.xlu0 %v790, 1
        %v8108 = vpop.permute.xlu0 %8107
        %8109 = vrot.lane.b32.xlu0 %v791, 1
        %v8110 = vpop.permute.xlu0 %8109
        %8111 = vrot.lane.b32.xlu0 %v792, 1
        %v8112 = vpop.permute.xlu0 %8111
        %8113 = vrot.lane.b32.xlu0 %v793, 1
        %v8114 = vpop.permute.xlu0 %8113
        %8115 = vrot.lane.b32.xlu0 %v794, 1
        %v8116 = vpop.permute.xlu0 %8115
        %8117 = vrot.lane.b32.xlu0 %v795, 1
        %v8118 = vpop.permute.xlu0 %8117
        %8119 = vrot.lane.b32.xlu0 %v796, 1
        %v8120 = vpop.permute.xlu0 %8119
        %v8135 = vsub.f32 %v783, %v8094
        %v8136 = vsub.f32 %v784, %v8096
        %v8137 = vsub.f32 %v785, %v8098
        %v8138 = vsub.f32 %v786, %v8100
        %v8139 = vsub.f32 %v787, %v8102
        %v8140 = vsub.f32 %v788, %v8104
        %v8141 = vsub.f32 %v789, %v8106
        %v8142 = vsub.f32 %v790, %v8108
        %v8143 = vsub.f32 %v791, %v8110
        %v8144 = vsub.f32 %v792, %v8112
        %v8145 = vsub.f32 %v793, %v8114
        %v8146 = vsub.f32 %v794, %v8116
        %v8147 = vsub.f32 %v795, %v8118
        %v8148 = vsub.f32 %v796, %v8120
        %v8149 = vadd.f32 %v8079, 1.0
        %v8150 = vadd.f32 %v8080, 1.0
        %v8151 = vadd.f32 %v8081, 1.0
        %v8152 = vadd.f32 %v8082, 1.0
        %v8153 = vadd.f32 %v8083, 1.0
        %v8154 = vadd.f32 %v8084, 1.0
        %v8155 = vadd.f32 %v8085, 1.0
        %v8156 = vadd.f32 %v8086, 1.0
        %v8157 = vadd.f32 %v8087, 1.0
        %v8158 = vadd.f32 %v8088, 1.0
        %v8159 = vadd.f32 %v8089, 1.0
        %v8160 = vadd.f32 %v8090, 1.0
        %v8161 = vadd.f32 %v8091, 1.0
        %v8162 = vadd.f32 %v8092, 1.0
        %8177 = vrot.lane.b32.xlu0 %v8149, 1
        %v8178 = vpop.permute.xlu0 %8177
        %8179 = vrot.lane.b32.xlu0 %v8150, 1
        %v8180 = vpop.permute.xlu0 %8179
        %8181 = vrot.lane.b32.xlu0 %v8151, 1
        %v8182 = vpop.permute.xlu0 %8181
        %8183 = vrot.lane.b32.xlu0 %v8152, 1
        %v8184 = vpop.permute.xlu0 %8183
        %8185 = vrot.lane.b32.xlu0 %v8153, 1
        %v8186 = vpop.permute.xlu0 %8185
        %8187 = vrot.lane.b32.xlu0 %v8154, 1
        %v8188 = vpop.permute.xlu0 %8187
        %8189 = vrot.lane.b32.xlu0 %v8155, 1
        %v8190 = vpop.permute.xlu0 %8189
        %8191 = vrot.lane.b32.xlu0 %v8156, 1
        %v8192 = vpop.permute.xlu0 %8191
        %8193 = vrot.lane.b32.xlu0 %v8157, 1
        %v8194 = vpop.permute.xlu0 %8193
        %8195 = vrot.lane.b32.xlu0 %v8158, 1
        %v8196 = vpop.permute.xlu0 %8195
        %8197 = vrot.lane.b32.xlu0 %v8159, 1
        %v8198 = vpop.permute.xlu0 %8197
        %8199 = vrot.lane.b32.xlu0 %v8160, 1
        %v8200 = vpop.permute.xlu0 %8199
        %8201 = vrot.lane.b32.xlu0 %v8161, 1
        %v8202 = vpop.permute.xlu0 %8201
        %8203 = vrot.lane.b32.xlu0 %v8162, 1
        %v8204 = vpop.permute.xlu0 %8203
        %v8219 = vmul.f32 %v8135, %v8178
        %v8220 = vmul.f32 %v8136, %v8180
        %v8221 = vmul.f32 %v8137, %v8182
        %v8222 = vmul.f32 %v8138, %v8184
        %v8223 = vmul.f32 %v8139, %v8186
        %v8224 = vmul.f32 %v8140, %v8188
        %v8225 = vmul.f32 %v8141, %v8190
        %v8226 = vmul.f32 %v8142, %v8192
        %v8227 = vmul.f32 %v8143, %v8194
        %v8228 = vmul.f32 %v8144, %v8196
        %v8229 = vmul.f32 %v8145, %v8198
        %v8230 = vmul.f32 %v8146, %v8200
        %v8231 = vmul.f32 %v8147, %v8202
        %v8232 = vmul.f32 %v8148, %v8204
        %v8233 = vmul.f32 %v8219, 0.5
        %v8234 = vmul.f32 %v8220, 0.5
        %v8235 = vmul.f32 %v8221, 0.5
        %v8236 = vmul.f32 %v8222, 0.5
        %v8237 = vmul.f32 %v8223, 0.5
        %v8238 = vmul.f32 %v8224, 0.5
        %v8239 = vmul.f32 %v8225, 0.5
        %v8240 = vmul.f32 %v8226, 0.5
        %v8241 = vmul.f32 %v8227, 0.5
        %v8242 = vmul.f32 %v8228, 0.5
        %v8243 = vmul.f32 %v8229, 0.5
        %v8244 = vmul.f32 %v8230, 0.5
        %v8245 = vmul.f32 %v8231, 0.5
        %v8246 = vmul.f32 %v8232, 0.5
        %8261 = vrot.lane.b32.xlu0 %v8233, 127
        %v8262 = vpop.permute.xlu0 %8261
        %8263 = vrot.lane.b32.xlu0 %v8234, 127
        %v8264 = vpop.permute.xlu0 %8263
        %8265 = vrot.lane.b32.xlu0 %v8235, 127
        %v8266 = vpop.permute.xlu0 %8265
        %8267 = vrot.lane.b32.xlu0 %v8236, 127
        %v8268 = vpop.permute.xlu0 %8267
        %8269 = vrot.lane.b32.xlu0 %v8237, 127
        %v8270 = vpop.permute.xlu0 %8269
        %8271 = vrot.lane.b32.xlu0 %v8238, 127
        %v8272 = vpop.permute.xlu0 %8271
        %8273 = vrot.lane.b32.xlu0 %v8239, 127
        %v8274 = vpop.permute.xlu0 %8273
        %8275 = vrot.lane.b32.xlu0 %v8240, 127
        %v8276 = vpop.permute.xlu0 %8275
        %8277 = vrot.lane.b32.xlu0 %v8241, 127
        %v8278 = vpop.permute.xlu0 %8277
        %8279 = vrot.lane.b32.xlu0 %v8242, 127
        %v8280 = vpop.permute.xlu0 %8279
        %8281 = vrot.lane.b32.xlu0 %v8243, 127
        %v8282 = vpop.permute.xlu0 %8281
        %8283 = vrot.lane.b32.xlu0 %v8244, 127
        %v8284 = vpop.permute.xlu0 %8283
        %8285 = vrot.lane.b32.xlu0 %v8245, 127
        %v8286 = vpop.permute.xlu0 %8285
        %8287 = vrot.lane.b32.xlu0 %v8246, 127
        %v8288 = vpop.permute.xlu0 %8287
        %v8303 = vadd.f32 %v783, %v8262
        %v8304 = vadd.f32 %v784, %v8264
        %v8305 = vadd.f32 %v785, %v8266
        %v8306 = vadd.f32 %v786, %v8268
        %v8307 = vadd.f32 %v787, %v8270
        %v8308 = vadd.f32 %v788, %v8272
        %v8309 = vadd.f32 %v789, %v8274
        %v8310 = vadd.f32 %v790, %v8276
        %v8311 = vadd.f32 %v791, %v8278
        %v8312 = vadd.f32 %v792, %v8280
        %v8313 = vadd.f32 %v793, %v8282
        %v8314 = vadd.f32 %v794, %v8284
        %v8315 = vadd.f32 %v795, %v8286
        %v8316 = vadd.f32 %v796, %v8288
        %8331 = vrot.lane.b32.xlu0 %v8303, 64
        %v8332 = vpop.permute.xlu0 %8331
        %8333 = vrot.lane.b32.xlu0 %v8304, 64
        %v8334 = vpop.permute.xlu0 %8333
        %8335 = vrot.lane.b32.xlu0 %v8305, 64
        %v8336 = vpop.permute.xlu0 %8335
        %8337 = vrot.lane.b32.xlu0 %v8306, 64
        %v8338 = vpop.permute.xlu0 %8337
        %8339 = vrot.lane.b32.xlu0 %v8307, 64
        %v8340 = vpop.permute.xlu0 %8339
        %8341 = vrot.lane.b32.xlu0 %v8308, 64
        %v8342 = vpop.permute.xlu0 %8341
        %8343 = vrot.lane.b32.xlu0 %v8309, 64
        %v8344 = vpop.permute.xlu0 %8343
        %8345 = vrot.lane.b32.xlu0 %v8310, 64
        %v8346 = vpop.permute.xlu0 %8345
        %8347 = vrot.lane.b32.xlu0 %v8311, 64
        %v8348 = vpop.permute.xlu0 %8347
        %8349 = vrot.lane.b32.xlu0 %v8312, 64
        %v8350 = vpop.permute.xlu0 %8349
        %8351 = vrot.lane.b32.xlu0 %v8313, 64
        %v8352 = vpop.permute.xlu0 %8351
        %8353 = vrot.lane.b32.xlu0 %v8314, 64
        %v8354 = vpop.permute.xlu0 %8353
        %8355 = vrot.lane.b32.xlu0 %v8315, 64
        %v8356 = vpop.permute.xlu0 %8355
        %8357 = vrot.lane.b32.xlu0 %v8316, 64
        %v8358 = vpop.permute.xlu0 %8357
        %vm8373 = vcmask 531968
        %8374 = vst.msk [vmem:[%s760] sm:$0xff] %vm8373, %v8332
        %8375 = vst.msk [vmem:[%s760 + $0x8] sm:$0xff] %vm8373, %v8334
        %8376 = vst.msk [vmem:[%s760 + $0x10] sm:$0xff] %vm8373, %v8336
        %8377 = vst.msk [vmem:[%s760 + $0x18] sm:$0xff] %vm8373, %v8338
        %8378 = vst.msk [vmem:[%s760 + $0x20] sm:$0xff] %vm8373, %v8340
        %8379 = vst.msk [vmem:[%s760 + $0x28] sm:$0xff] %vm8373, %v8342
        %8380 = vst.msk [vmem:[%s760 + $0x30] sm:$0xff] %vm8373, %v8344
        %8381 = vst.msk [vmem:[%s760 + $0x38] sm:$0xff] %vm8373, %v8346
        %8382 = vst.msk [vmem:[%s760 + $0x40] sm:$0xff] %vm8373, %v8348
        %8383 = vst.msk [vmem:[%s760 + $0x48] sm:$0xff] %vm8373, %v8350
        %8384 = vst.msk [vmem:[%s760 + $0x50] sm:$0xff] %vm8373, %v8352
        %8385 = vst.msk [vmem:[%s760 + $0x58] sm:$0xff] %vm8373, %v8354
        %8386 = vst.msk [vmem:[%s760 + $0x60] sm:$0xff] %vm8373, %v8356
        %8387 = vst.msk [vmem:[%s760 + $0x68] sm:$0xff] %vm8373, %v8358
        %s8388 = sand.u32 %s565, 1
        %s8389 = scalar_lea.sflag [#allocation3], %s8388
        %s8390 = sand.u32 %s565, 1
        %s8391 = smul.addr %s8390, 112
        %s8392 = scalar_lea.vmem [#allocation2], %s8391
        // Predicated region
        $region117: #{tpu_custom_call.1} parent=115 // pred_check
          %p8393 = pneg %p575
        $region118: #{tpu_custom_call.1} parent=115 // pred_check_branch
          %8395 = sbr.rel (%p8393) target = $region120
        $region119: #{tpu_custom_call.1} parent=115 // pred_region
          %s8397 = ssub.s32 1792, 1792
          %8398 = vsyncadd %s8389, %s8397
          %s8399 = smul.addr %s38, 14
          %s8400 = smul.addr %s8399, 128
          %s8401 = scalar_lea.hbm %s24, %s8400
          %s8402 = sshll.u32 %s8392, 4
          %s8403 = int_to_ptr.vmem [resolvable:$true] %s8402
          %8408 = dma.vmem_to_hbm [thread:$0]  %s8403, 1792, %s8401, %s8389, 128, 128, 8
        $region120: #{tpu_custom_call.1} parent=115 // pred_fallthru
          _
      $region116: #{tpu_custom_call.1} parent=5 // pred_fallthru
        _
      %p8409 = scmp.le.s32.totalorder 2, %s33
      // Predicated region
      $region121: #{tpu_custom_call.1} parent=5 // pred_check
        %p8410 = pneg %p8409
      $region122: #{tpu_custom_call.1} parent=5 // pred_check_branch
        %8412 = sbr.rel (%p8410) target = $region124
      $region123: #{tpu_custom_call.1} parent=5 // pred_region
        %s8413 = ssub.s32 %s33, 2
        // Predicated region
        $region125: #{tpu_custom_call.1} parent=123 // pred_check
          %p8414 = pneg %p581
        $region126: #{tpu_custom_call.1} parent=123 // pred_check_branch
          %8416 = sbr.rel (%p8414) target = $region128
        $region127: #{tpu_custom_call.1} parent=123 // pred_region
          %s8417 = sand.u32 %s566, 1
          %s8418 = scalar_lea.sflag [#allocation3], %s8417
          %s8419 = sand.u32 %s566, 1
          %s8420 = smul.addr %s8419, 112
          %s8421 = scalar_lea.vmem [#allocation2], %s8420
          %8422 = dma.done %s8418, 1792
        $region128: #{tpu_custom_call.1} parent=123 // pred_fallthru
          _
      $region124: #{tpu_custom_call.1} parent=5 // pred_fallthru
        _
    $region6: #{tpu_custom_call.1} parent=1 // loop_footer
      %s37 = sadd.s32 1, %s33
    $region7: #{tpu_custom_call.1} parent=1 // loop_footer_branch
      %32 = sbr.rel target = $region3
    $region8: #{tpu_custom_call.1} parent=1 // loop_exit
      _
    %8423 = vsyncpa [#allocation3], 1
    %s8424 = scalar_lea.sflag [#allocation3], 1
    %8425 = vsyncpa %s8424, 1

</llo_original>
